<compile_context>
chip_gen: v6e
topology: v6e:2x2x1
jax: 0.10.0
libtpu: 0.0.40
codegen_flags: <defaults>
</compile_context>

<pallas_src>
import jax
import jax.numpy as jnp
from jax.experimental import pallas as pl
from jax.experimental.pallas import tpu as pltpu


_VMEM_LIMIT = 32 * 1024 * 1024  # safe scoped-VMEM budget on v5e/v6e/v7x
_BN_EPS = 1e-5


def _full_spec(shape):
    """BlockSpec covering the whole array (used with grid=(1,))."""
    return pl.BlockSpec(shape, lambda *_: (0,) * len(shape))


def _sigmoid(x):
    # Numerically stable sigmoid; tanh maps to the EUP (free slot vs VPU divide).
    return 0.5 * (jnp.tanh(0.5 * x) + 1.0)


# ----------------------------------------------------------------------------
# Kernel 1: fused Linear(no bias) + BatchNorm1d(batch stats) + GLU.
#   x: (B, nz), w: (nz, 2F), gamma/beta: (1, 2F)  ->  out: (B, F)
# ----------------------------------------------------------------------------
def _fc_bn_glu_kernel(x_ref, w_ref, g_ref, b_ref, o_ref):
    x = x_ref[...]                                                   # (B, nz)
    y = jnp.dot(x, w_ref[...], preferred_element_type=jnp.float32)  # (B, 2F)
    inv_b = 1.0 / x.shape[0]
    mu = jnp.sum(y, axis=0, keepdims=True) * inv_b                   # batch mean
    d = y - mu
    var = jnp.sum(d * d, axis=0, keepdims=True) * inv_b              # biased var
    yn = d * jax.lax.rsqrt(var + _BN_EPS) * g_ref[...] + b_ref[...]
    f = yn.shape[1] // 2
    o_ref[...] = (yn[:, :f] * _sigmoid(yn[:, f:])).astype(o_ref.dtype)


def fc_bn_glu(cz, p):
    B, nz = cz.shape
    F2 = p["w"].shape[1]
    F = F2 // 2
    return pl.pallas_call(
        _fc_bn_glu_kernel,
        out_shape=jax.ShapeDtypeStruct((B, F), jnp.float32),
        grid_spec=pltpu.PrefetchScalarGridSpec(
            num_scalar_prefetch=0,
            grid=(1,),
            in_specs=[
                _full_spec((B, nz)),
                _full_spec((nz, F2)),
                _full_spec((1, F2)),
                _full_spec((1, F2)),
            ],
            out_specs=_full_spec((B, F)),
        ),
        compiler_params=pltpu.CompilerParams(
            dimension_semantics=("arbitrary",),
            vmem_limit_bytes=_VMEM_LIMIT),
    )(cz, p["w"], p["g"], p["b"])


# ----------------------------------------------------------------------------
# Kernel 2: fused conv3x3(pad=1, no bias) + BatchNorm2d(batch stats) + GLU.
#   pt : (9*Cin, M)   im2col patches, TRANSPOSED (M = B*Hp*Wp on the lane axis)
#   w  : (2C, 9*Cin)  merged GLU-a | GLU-gate weight rows
#   g,b: (2C, 1)      BN gamma / beta
#   o  : (C,  M)      GLU output, lane-dense stores (last dim M >= 128)
# ----------------------------------------------------------------------------
def _conv_bn_glu_kernel(pt_ref, w_ref, g_ref, b_ref, o_ref):
    y = jnp.dot(w_ref[...], pt_ref[...],
                preferred_element_type=jnp.float32)                  # (2C, M)
    inv_m = 1.0 / y.shape[1]                                         # 1/(B*Hp*Wp)
    mu = jnp.sum(y, axis=1, keepdims=True) * inv_m                   # (2C, 1)
    d = y - mu
    var = jnp.sum(d * d, axis=1, keepdims=True) * inv_m              # biased var
    yn = d * jax.lax.rsqrt(var + _BN_EPS) * g_ref[...] + b_ref[...]
    c = o_ref.shape[0]
    o_ref[...] = (yn[:c, :] * _sigmoid(yn[c:, :])).astype(o_ref.dtype)


def upblock(x, p):
    """One upBlock. x: (Cin, B, H, W) channels-first -> (Cout, B, 2H, 2W)."""
    Cin, B, H, W = x.shape
    Hp, Wp = 2 * H, 2 * W
    C2, K = p["w"].shape                 # (2*Cout, 9*Cin)
    C = C2 // 2
    M = B * Hp * Wp

    # nearest 2x upsample + 1px halo pad + transposed im2col in XLA (cheap here).
    xu = jnp.repeat(jnp.repeat(x, 2, axis=2), 2, axis=3)             # (Cin,B,Hp,Wp)
    xp = jnp.pad(xu, ((0, 0), (0, 0), (1, 1), (1, 1)))               # (Cin,B,Hp+2,Wp+2)
    taps = [xp[:, :, ky:ky + Hp, kx:kx + Wp].reshape(Cin, M)
            for ky in range(3) for kx in range(3)]
    patches_t = jnp.concatenate(taps, axis=0)                        # (9*Cin, M)

    out = pl.pallas_call(
        _conv_bn_glu_kernel,
        out_shape=jax.ShapeDtypeStruct((C, M), jnp.float32),
        grid_spec=pltpu.PrefetchScalarGridSpec(
            num_scalar_prefetch=0,
            grid=(1,),
            in_specs=[
                _full_spec((K, M)),
                _full_spec((C2, K)),
                _full_spec((C2, 1)),
                _full_spec((C2, 1)),
            ],
            out_specs=_full_spec((C, M)),
        ),
        compiler_params=pltpu.CompilerParams(
            dimension_semantics=("arbitrary",),
            vmem_limit_bytes=_VMEM_LIMIT),
    )(patches_t, p["w"], p["g"], p["b"])

    return out.reshape(C, B, Hp, Wp)


# ----------------------------------------------------------------------------
# Parameter init (deterministic; replaces the PyTorch default/pretrained init).
# Conv weights are generated OIHW and flattened to (2*Cout, 9*Cin) with
# tap-major / channel-minor rows, matching the im2col row order built above.
# BN gamma=1, beta=0 (PyTorch defaults).
# ----------------------------------------------------------------------------
def init_params(key, ngf=64, nz=32):
    params = {}
    F = ngf * 4 * 4
    key, k = jax.random.split(key)
    w_fc = jax.random.normal(k, (nz, 2 * F), jnp.float32) * (1.0 / nz) ** 0.5
    params["fc"] = dict(
        w=w_fc,
        g=jnp.ones((1, 2 * F), jnp.float32),
        b=jnp.zeros((1, 2 * F), jnp.float32))

    chans = [(ngf, ngf // 2), (ngf // 2, ngf // 4),
             (ngf // 4, ngf // 8), (ngf // 8, ngf // 16)]
    ups = []
    for cin, cout in chans:
        key, k = jax.random.split(key)
        w = (jax.random.normal(k, (2 * cout, cin, 3, 3), jnp.float32)  # OIHW
             * (2.0 / (9.0 * cin)) ** 0.5)
        # (o, ci, ky, kx) -> (o, ky, kx, ci) -> (2C, 9*Cin): row = (ky*3+kx)*Cin+ci
        w_t = jnp.transpose(w, (0, 2, 3, 1)).reshape(2 * cout, 9 * cin)
        ups.append(dict(
            w=w_t,
            g=jnp.ones((2 * cout, 1), jnp.float32),
            b=jnp.zeros((2 * cout, 1), jnp.float32)))
    params["up"] = ups
    return params


def init_stage_g_forward(z_code, c_code, params):
    """Mirror of INIT_STAGE_G.forward: returns (B, ngf//16, 64, 64)."""
    c_z = jnp.concatenate([c_code, z_code], axis=1)      # torch.cat((c, z), 1)
    h = fc_bn_glu(c_z, params["fc"])                     # (B, ngf*16)
    B = h.shape[0]
    ngf = h.shape[1] // 16
    x = h.reshape(B, ngf, 4, 4)                          # == .view(-1, ngf, 4, 4)
    x = jnp.transpose(x, (1, 0, 2, 3))                   # NCHW -> (C, B, H, W)
    for p in params["up"]:                               # upsample1..4
        x = upblock(x, p)
    return jnp.transpose(x, (1, 0, 2, 3))                # (C,B,H,W) -> NCHW


if __name__ == "__main__":
    key = jax.random.PRNGKey(0)
    B, Z_DIM, NCF, NGF = 2, 16, 16, 64                   # nz = 32
    key, kz, kc = jax.random.split(key, 3)
    z_code = jax.random.normal(kz, (B, Z_DIM), jnp.float32)
    c_code = jax.random.normal(kc, (B, NCF), jnp.float32)
    params = init_params(key, ngf=NGF, nz=Z_DIM + NCF)

    out = jax.jit(init_stage_g_forward)(z_code, c_code, params)
    out = jax.block_until_ready(out)

    assert out.shape == (B, NGF // 16, 64, 64), out.shape
    assert out.dtype == jnp.float32
    assert bool(jnp.all(jnp.isfinite(out)))
    print("KERNEL_OK")
</pallas_src>

<mosaic_0001>
module attributes {stable_mosaic.version = 11 : i64} {
  func.func @_fc_bn_glu_kernel(%arg0: i32, %arg1: memref<2x32xf32, #tpu.memory_space<vmem>>, %arg2: memref<32x2048xf32, #tpu.memory_space<vmem>>, %arg3: memref<1x2048xf32, #tpu.memory_space<vmem>>, %arg4: memref<1x2048xf32, #tpu.memory_space<vmem>>, %arg5: memref<2x1024xf32, #tpu.memory_space<vmem>>) attributes {dimension_semantics = [#tpu.dimension_semantics<arbitrary>], iteration_bounds = array<i64: 1>, scalar_prefetch = 0 : i64, scratch_operands = 0 : i64, tpu.core_type = #tpu.core_type<tc>, window_params = [{pipeline_mode = #tpu.pipeline_mode<synchronous>, transform_indices = @transform_0, window_bounds = array<i64: 2, 32>}, {pipeline_mode = #tpu.pipeline_mode<synchronous>, transform_indices = @transform_1, window_bounds = array<i64: 32, 2048>}, {pipeline_mode = #tpu.pipeline_mode<synchronous>, transform_indices = @transform_2, window_bounds = array<i64: 1, 2048>}, {pipeline_mode = #tpu.pipeline_mode<synchronous>, transform_indices = @transform_3, window_bounds = array<i64: 1, 2048>}, {pipeline_mode = #tpu.pipeline_mode<synchronous>, transform_indices = @transform_4, window_bounds = array<i64: 2, 1024>}]} {
    %c0 = arith.constant 0 : index
    %c0_0 = arith.constant 0 : index
    %0 = vector.load %arg1[%c0, %c0_0] : memref<2x32xf32, #tpu.memory_space<vmem>>, vector<2x32xf32>
    %c0_1 = arith.constant 0 : index
    %c0_2 = arith.constant 0 : index
    %1 = vector.load %arg2[%c0_1, %c0_2] : memref<32x2048xf32, #tpu.memory_space<vmem>>, vector<32x2048xf32>
    %cst = arith.constant dense<0.000000e+00> : vector<2x2048xf32>
    %2 = tpu.matmul %0, %1, %cst {dimension_numbers = #tpu.dot_dimension_numbers<[1], [0], [0], [1], [0, 0, 1, 1], [], []>} : vector<2x32xf32>, vector<32x2048xf32>, vector<2x2048xf32> -> vector<2x2048xf32>
    %cst_3 = arith.constant dense<0.000000e+00> : vector<2048xf32>
    %3 = vector.multi_reduction <add>, %2, %cst_3 [0] : vector<2x2048xf32> to vector<2048xf32>
    %4 = vector.shape_cast %3 : vector<2048xf32> to vector<1x2048xf32>
    %cst_4 = arith.constant 5.000000e-01 : f32
    %5 = vector.broadcast %cst_4 : f32 to vector<1x2048xf32>
    %6 = arith.mulf %4, %5 : vector<1x2048xf32>
    %7 = vector.broadcast %6 : vector<1x2048xf32> to vector<2x2048xf32>
    %8 = arith.subf %2, %7 : vector<2x2048xf32>
    %9 = arith.mulf %8, %8 : vector<2x2048xf32>
    %cst_5 = arith.constant dense<0.000000e+00> : vector<2048xf32>
    %10 = vector.multi_reduction <add>, %9, %cst_5 [0] : vector<2x2048xf32> to vector<2048xf32>
    %11 = vector.shape_cast %10 : vector<2048xf32> to vector<1x2048xf32>
    %cst_6 = arith.constant 5.000000e-01 : f32
    %12 = vector.broadcast %cst_6 : f32 to vector<1x2048xf32>
    %13 = arith.mulf %11, %12 : vector<1x2048xf32>
    %cst_7 = arith.constant 9.99999974E-6 : f32
    %14 = vector.broadcast %cst_7 : f32 to vector<1x2048xf32>
    %15 = arith.addf %13, %14 : vector<1x2048xf32>
    %16 = math.rsqrt %15 : vector<1x2048xf32>
    %17 = vector.broadcast %16 : vector<1x2048xf32> to vector<2x2048xf32>
    %18 = arith.mulf %8, %17 : vector<2x2048xf32>
    %c0_8 = arith.constant 0 : index
    %c0_9 = arith.constant 0 : index
    %19 = vector.load %arg3[%c0_8, %c0_9] : memref<1x2048xf32, #tpu.memory_space<vmem>>, vector<1x2048xf32>
    %20 = vector.broadcast %19 : vector<1x2048xf32> to vector<2x2048xf32>
    %21 = arith.mulf %18, %20 : vector<2x2048xf32>
    %c0_10 = arith.constant 0 : index
    %c0_11 = arith.constant 0 : index
    %22 = vector.load %arg4[%c0_10, %c0_11] : memref<1x2048xf32, #tpu.memory_space<vmem>>, vector<1x2048xf32>
    %23 = vector.broadcast %22 : vector<1x2048xf32> to vector<2x2048xf32>
    %24 = arith.addf %21, %23 : vector<2x2048xf32>
    %25 = vector.extract_strided_slice %24 {offsets = [0, 0], sizes = [2, 1024], strides = [1, 1]} : vector<2x2048xf32> to vector<2x1024xf32>
    %26 = vector.extract_strided_slice %24 {offsets = [0, 1024], sizes = [2, 1024], strides = [1, 1]} : vector<2x2048xf32> to vector<2x1024xf32>
    %cst_12 = arith.constant 5.000000e-01 : f32
    %27 = vector.broadcast %cst_12 : f32 to vector<2x1024xf32>
    %28 = arith.mulf %27, %26 : vector<2x1024xf32>
    %29 = math.tanh %28 : vector<2x1024xf32>
    %cst_13 = arith.constant 1.000000e+00 : f32
    %30 = vector.broadcast %cst_13 : f32 to vector<2x1024xf32>
    %31 = arith.addf %29, %30 : vector<2x1024xf32>
    %cst_14 = arith.constant 5.000000e-01 : f32
    %32 = vector.broadcast %cst_14 : f32 to vector<2x1024xf32>
    %33 = arith.mulf %32, %31 : vector<2x1024xf32>
    %34 = arith.mulf %25, %33 : vector<2x1024xf32>
    %c0_15 = arith.constant 0 : index
    %c0_16 = arith.constant 0 : index
    %35 = vector.load %arg5[%c0_15, %c0_16] : memref<2x1024xf32, #tpu.memory_space<vmem>>, vector<2x1024xf32>
    tpu.vector_store %arg5[%c0_15, %c0_16], %34 {strides = array<i32>} : memref<2x1024xf32, #tpu.memory_space<vmem>>, vector<2x1024xf32>,
    return
  }
  func.func @transform_0(%arg0: i32) -> (i32, i32) {
    %c0_i32 = arith.constant 0 : i32
    %c0_i32_0 = arith.constant 0 : i32
    %c0_i32_1 = arith.constant 0 : i32
    return %c0_i32, %c0_i32_0 : i32, i32
  }
  func.func @transform_1(%arg0: i32) -> (i32, i32) {
    %c0_i32 = arith.constant 0 : i32
    %c0_i32_0 = arith.constant 0 : i32
    %c0_i32_1 = arith.constant 0 : i32
    return %c0_i32, %c0_i32_0 : i32, i32
  }
  func.func @transform_2(%arg0: i32) -> (i32, i32) {
    %c0_i32 = arith.constant 0 : i32
    %c0_i32_0 = arith.constant 0 : i32
    %c0_i32_1 = arith.constant 0 : i32
    return %c0_i32, %c0_i32_0 : i32, i32
  }
  func.func @transform_3(%arg0: i32) -> (i32, i32) {
    %c0_i32 = arith.constant 0 : i32
    %c0_i32_0 = arith.constant 0 : i32
    %c0_i32_1 = arith.constant 0 : i32
    return %c0_i32, %c0_i32_0 : i32, i32
  }
  func.func @transform_4(%arg0: i32) -> (i32, i32) {
    %c0_i32 = arith.constant 0 : i32
    %c0_i32_0 = arith.constant 0 : i32
    %c0_i32_1 = arith.constant 0 : i32
    return %c0_i32, %c0_i32_0 : i32, i32
  }
}

module attributes {stable_mosaic.version = 11 : i64} {
  func.func @_conv_bn_glu_kernel(%arg0: i32, %arg1: memref<576x128xf32, #tpu.memory_space<vmem>>, %arg2: memref<64x576xf32, #tpu.memory_space<vmem>>, %arg3: memref<64x1xf32, #tpu.memory_space<vmem>>, %arg4: memref<64x1xf32, #tpu.memory_space<vmem>>, %arg5: memref<32x128xf32, #tpu.memory_space<vmem>>) attributes {dimension_semantics = [#tpu.dimension_semantics<arbitrary>], iteration_bounds = array<i64: 1>, scalar_prefetch = 0 : i64, scratch_operands = 0 : i64, tpu.core_type = #tpu.core_type<tc>, window_params = [{pipeline_mode = #tpu.pipeline_mode<synchronous>, transform_indices = @transform_0, window_bounds = array<i64: 576, 128>}, {pipeline_mode = #tpu.pipeline_mode<synchronous>, transform_indices = @transform_1, window_bounds = array<i64: 64, 576>}, {pipeline_mode = #tpu.pipeline_mode<synchronous>, transform_indices = @transform_2, window_bounds = array<i64: 64, 1>}, {pipeline_mode = #tpu.pipeline_mode<synchronous>, transform_indices = @transform_3, window_bounds = array<i64: 64, 1>}, {pipeline_mode = #tpu.pipeline_mode<synchronous>, transform_indices = @transform_4, window_bounds = array<i64: 32, 128>}]} {
    %c0 = arith.constant 0 : index
    %c0_0 = arith.constant 0 : index
    %0 = vector.load %arg2[%c0, %c0_0] : memref<64x576xf32, #tpu.memory_space<vmem>>, vector<64x576xf32>
    %c0_1 = arith.constant 0 : index
    %c0_2 = arith.constant 0 : index
    %1 = vector.load %arg1[%c0_1, %c0_2] : memref<576x128xf32, #tpu.memory_space<vmem>>, vector<576x128xf32>
    %cst = arith.constant dense<0.000000e+00> : vector<64x128xf32>
    %2 = tpu.matmul %0, %1, %cst {dimension_numbers = #tpu.dot_dimension_numbers<[1], [0], [0], [1], [0, 0, 1, 1], [], []>} : vector<64x576xf32>, vector<576x128xf32>, vector<64x128xf32> -> vector<64x128xf32>
    %cst_3 = arith.constant dense<0.000000e+00> : vector<64xf32>
    %3 = vector.multi_reduction <add>, %2, %cst_3 [1] : vector<64x128xf32> to vector<64xf32>
    %4 = vector.shape_cast %3 : vector<64xf32> to vector<64x1xf32>
    %cst_4 = arith.constant 7.812500e-03 : f32
    %5 = vector.broadcast %cst_4 : f32 to vector<64x1xf32>
    %6 = arith.mulf %4, %5 : vector<64x1xf32>
    %7 = vector.broadcast %6 : vector<64x1xf32> to vector<64x128xf32>
    %8 = arith.subf %2, %7 : vector<64x128xf32>
    %9 = arith.mulf %8, %8 : vector<64x128xf32>
    %cst_5 = arith.constant dense<0.000000e+00> : vector<64xf32>
    %10 = vector.multi_reduction <add>, %9, %cst_5 [1] : vector<64x128xf32> to vector<64xf32>
    %11 = vector.shape_cast %10 : vector<64xf32> to vector<64x1xf32>
    %cst_6 = arith.constant 7.812500e-03 : f32
    %12 = vector.broadcast %cst_6 : f32 to vector<64x1xf32>
    %13 = arith.mulf %11, %12 : vector<64x1xf32>
    %cst_7 = arith.constant 9.99999974E-6 : f32
    %14 = vector.broadcast %cst_7 : f32 to vector<64x1xf32>
    %15 = arith.addf %13, %14 : vector<64x1xf32>
    %16 = math.rsqrt %15 : vector<64x1xf32>
    %17 = vector.broadcast %16 : vector<64x1xf32> to vector<64x128xf32>
    %18 = arith.mulf %8, %17 : vector<64x128xf32>
    %c0_8 = arith.constant 0 : index
    %c0_9 = arith.constant 0 : index
    %19 = vector.load %arg3[%c0_8, %c0_9] : memref<64x1xf32, #tpu.memory_space<vmem>>, vector<64x1xf32>
    %20 = vector.broadcast %19 : vector<64x1xf32> to vector<64x128xf32>
    %21 = arith.mulf %18, %20 : vector<64x128xf32>
    %c0_10 = arith.constant 0 : index
    %c0_11 = arith.constant 0 : index
    %22 = vector.load %arg4[%c0_10, %c0_11] : memref<64x1xf32, #tpu.memory_space<vmem>>, vector<64x1xf32>
    %23 = vector.broadcast %22 : vector<64x1xf32> to vector<64x128xf32>
    %24 = arith.addf %21, %23 : vector<64x128xf32>
    %25 = vector.extract_strided_slice %24 {offsets = [0, 0], sizes = [32, 128], strides = [1, 1]} : vector<64x128xf32> to vector<32x128xf32>
    %26 = vector.extract_strided_slice %24 {offsets = [32, 0], sizes = [32, 128], strides = [1, 1]} : vector<64x128xf32> to vector<32x128xf32>
    %cst_12 = arith.constant 5.000000e-01 : f32
    %27 = vector.broadcast %cst_12 : f32 to vector<32x128xf32>
    %28 = arith.mulf %27, %26 : vector<32x128xf32>
    %29 = math.tanh %28 : vector<32x128xf32>
    %cst_13 = arith.constant 1.000000e+00 : f32
    %30 = vector.broadcast %cst_13 : f32 to vector<32x128xf32>
    %31 = arith.addf %29, %30 : vector<32x128xf32>
    %cst_14 = arith.constant 5.000000e-01 : f32
    %32 = vector.broadcast %cst_14 : f32 to vector<32x128xf32>
    %33 = arith.mulf %32, %31 : vector<32x128xf32>
    %34 = arith.mulf %25, %33 : vector<32x128xf32>
    %c0_15 = arith.constant 0 : index
    %c0_16 = arith.constant 0 : index
    %35 = vector.load %arg5[%c0_15, %c0_16] : memref<32x128xf32, #tpu.memory_space<vmem>>, vector<32x128xf32>
    tpu.vector_store %arg5[%c0_15, %c0_16], %34 {strides = array<i32>} : memref<32x128xf32, #tpu.memory_space<vmem>>, vector<32x128xf32>,
    return
  }
  func.func @transform_0(%arg0: i32) -> (i32, i32) {
    %c0_i32 = arith.constant 0 : i32
    %c0_i32_0 = arith.constant 0 : i32
    %c0_i32_1 = arith.constant 0 : i32
    return %c0_i32, %c0_i32_0 : i32, i32
  }
  func.func @transform_1(%arg0: i32) -> (i32, i32) {
    %c0_i32 = arith.constant 0 : i32
    %c0_i32_0 = arith.constant 0 : i32
    %c0_i32_1 = arith.constant 0 : i32
    return %c0_i32, %c0_i32_0 : i32, i32
  }
  func.func @transform_2(%arg0: i32) -> (i32, i32) {
    %c0_i32 = arith.constant 0 : i32
    %c0_i32_0 = arith.constant 0 : i32
    %c0_i32_1 = arith.constant 0 : i32
    return %c0_i32, %c0_i32_0 : i32, i32
  }
  func.func @transform_3(%arg0: i32) -> (i32, i32) {
    %c0_i32 = arith.constant 0 : i32
    %c0_i32_0 = arith.constant 0 : i32
    %c0_i32_1 = arith.constant 0 : i32
    return %c0_i32, %c0_i32_0 : i32, i32
  }
  func.func @transform_4(%arg0: i32) -> (i32, i32) {
    %c0_i32 = arith.constant 0 : i32
    %c0_i32_0 = arith.constant 0 : i32
    %c0_i32_1 = arith.constant 0 : i32
    return %c0_i32, %c0_i32_0 : i32, i32
  }
}

module attributes {stable_mosaic.version = 11 : i64} {
  func.func @_conv_bn_glu_kernel(%arg0: i32, %arg1: memref<288x512xf32, #tpu.memory_space<vmem>>, %arg2: memref<32x288xf32, #tpu.memory_space<vmem>>, %arg3: memref<32x1xf32, #tpu.memory_space<vmem>>, %arg4: memref<32x1xf32, #tpu.memory_space<vmem>>, %arg5: memref<16x512xf32, #tpu.memory_space<vmem>>) attributes {dimension_semantics = [#tpu.dimension_semantics<arbitrary>], iteration_bounds = array<i64: 1>, scalar_prefetch = 0 : i64, scratch_operands = 0 : i64, tpu.core_type = #tpu.core_type<tc>, window_params = [{pipeline_mode = #tpu.pipeline_mode<synchronous>, transform_indices = @transform_0, window_bounds = array<i64: 288, 512>}, {pipeline_mode = #tpu.pipeline_mode<synchronous>, transform_indices = @transform_1, window_bounds = array<i64: 32, 288>}, {pipeline_mode = #tpu.pipeline_mode<synchronous>, transform_indices = @transform_2, window_bounds = array<i64: 32, 1>}, {pipeline_mode = #tpu.pipeline_mode<synchronous>, transform_indices = @transform_3, window_bounds = array<i64: 32, 1>}, {pipeline_mode = #tpu.pipeline_mode<synchronous>, transform_indices = @transform_4, window_bounds = array<i64: 16, 512>}]} {
    %c0 = arith.constant 0 : index
    %c0_0 = arith.constant 0 : index
    %0 = vector.load %arg2[%c0, %c0_0] : memref<32x288xf32, #tpu.memory_space<vmem>>, vector<32x288xf32>
    %c0_1 = arith.constant 0 : index
    %c0_2 = arith.constant 0 : index
    %1 = vector.load %arg1[%c0_1, %c0_2] : memref<288x512xf32, #tpu.memory_space<vmem>>, vector<288x512xf32>
    %cst = arith.constant dense<0.000000e+00> : vector<32x512xf32>
    %2 = tpu.matmul %0, %1, %cst {dimension_numbers = #tpu.dot_dimension_numbers<[1], [0], [0], [1], [0, 0, 1, 1], [], []>} : vector<32x288xf32>, vector<288x512xf32>, vector<32x512xf32> -> vector<32x512xf32>
    %cst_3 = arith.constant dense<0.000000e+00> : vector<32xf32>
    %3 = vector.multi_reduction <add>, %2, %cst_3 [1] : vector<32x512xf32> to vector<32xf32>
    %4 = vector.shape_cast %3 : vector<32xf32> to vector<32x1xf32>
    %cst_4 = arith.constant 0.001953125 : f32
    %5 = vector.broadcast %cst_4 : f32 to vector<32x1xf32>
    %6 = arith.mulf %4, %5 : vector<32x1xf32>
    %7 = vector.broadcast %6 : vector<32x1xf32> to vector<32x512xf32>
    %8 = arith.subf %2, %7 : vector<32x512xf32>
    %9 = arith.mulf %8, %8 : vector<32x512xf32>
    %cst_5 = arith.constant dense<0.000000e+00> : vector<32xf32>
    %10 = vector.multi_reduction <add>, %9, %cst_5 [1] : vector<32x512xf32> to vector<32xf32>
    %11 = vector.shape_cast %10 : vector<32xf32> to vector<32x1xf32>
    %cst_6 = arith.constant 0.001953125 : f32
    %12 = vector.broadcast %cst_6 : f32 to vector<32x1xf32>
    %13 = arith.mulf %11, %12 : vector<32x1xf32>
    %cst_7 = arith.constant 9.99999974E-6 : f32
    %14 = vector.broadcast %cst_7 : f32 to vector<32x1xf32>
    %15 = arith.addf %13, %14 : vector<32x1xf32>
    %16 = math.rsqrt %15 : vector<32x1xf32>
    %17 = vector.broadcast %16 : vector<32x1xf32> to vector<32x512xf32>
    %18 = arith.mulf %8, %17 : vector<32x512xf32>
    %c0_8 = arith.constant 0 : index
    %c0_9 = arith.constant 0 : index
    %19 = vector.load %arg3[%c0_8, %c0_9] : memref<32x1xf32, #tpu.memory_space<vmem>>, vector<32x1xf32>
    %20 = vector.broadcast %19 : vector<32x1xf32> to vector<32x512xf32>
    %21 = arith.mulf %18, %20 : vector<32x512xf32>
    %c0_10 = arith.constant 0 : index
    %c0_11 = arith.constant 0 : index
    %22 = vector.load %arg4[%c0_10, %c0_11] : memref<32x1xf32, #tpu.memory_space<vmem>>, vector<32x1xf32>
    %23 = vector.broadcast %22 : vector<32x1xf32> to vector<32x512xf32>
    %24 = arith.addf %21, %23 : vector<32x512xf32>
    %25 = vector.extract_strided_slice %24 {offsets = [0, 0], sizes = [16, 512], strides = [1, 1]} : vector<32x512xf32> to vector<16x512xf32>
    %26 = vector.extract_strided_slice %24 {offsets = [16, 0], sizes = [16, 512], strides = [1, 1]} : vector<32x512xf32> to vector<16x512xf32>
    %cst_12 = arith.constant 5.000000e-01 : f32
    %27 = vector.broadcast %cst_12 : f32 to vector<16x512xf32>
    %28 = arith.mulf %27, %26 : vector<16x512xf32>
    %29 = math.tanh %28 : vector<16x512xf32>
    %cst_13 = arith.constant 1.000000e+00 : f32
    %30 = vector.broadcast %cst_13 : f32 to vector<16x512xf32>
    %31 = arith.addf %29, %30 : vector<16x512xf32>
    %cst_14 = arith.constant 5.000000e-01 : f32
    %32 = vector.broadcast %cst_14 : f32 to vector<16x512xf32>
    %33 = arith.mulf %32, %31 : vector<16x512xf32>
    %34 = arith.mulf %25, %33 : vector<16x512xf32>
    %c0_15 = arith.constant 0 : index
    %c0_16 = arith.constant 0 : index
    %35 = vector.load %arg5[%c0_15, %c0_16] : memref<16x512xf32, #tpu.memory_space<vmem>>, vector<16x512xf32>
    tpu.vector_store %arg5[%c0_15, %c0_16], %34 {strides = array<i32>} : memref<16x512xf32, #tpu.memory_space<vmem>>, vector<16x512xf32>,
    return
  }
  func.func @transform_0(%arg0: i32) -> (i32, i32) {
    %c0_i32 = arith.constant 0 : i32
    %c0_i32_0 = arith.constant 0 : i32
    %c0_i32_1 = arith.constant 0 : i32
    return %c0_i32, %c0_i32_0 : i32, i32
  }
  func.func @transform_1(%arg0: i32) -> (i32, i32) {
    %c0_i32 = arith.constant 0 : i32
    %c0_i32_0 = arith.constant 0 : i32
    %c0_i32_1 = arith.constant 0 : i32
    return %c0_i32, %c0_i32_0 : i32, i32
  }
  func.func @transform_2(%arg0: i32) -> (i32, i32) {
    %c0_i32 = arith.constant 0 : i32
    %c0_i32_0 = arith.constant 0 : i32
    %c0_i32_1 = arith.constant 0 : i32
    return %c0_i32, %c0_i32_0 : i32, i32
  }
  func.func @transform_3(%arg0: i32) -> (i32, i32) {
    %c0_i32 = arith.constant 0 : i32
    %c0_i32_0 = arith.constant 0 : i32
    %c0_i32_1 = arith.constant 0 : i32
    return %c0_i32, %c0_i32_0 : i32, i32
  }
  func.func @transform_4(%arg0: i32) -> (i32, i32) {
    %c0_i32 = arith.constant 0 : i32
    %c0_i32_0 = arith.constant 0 : i32
    %c0_i32_1 = arith.constant 0 : i32
    return %c0_i32, %c0_i32_0 : i32, i32
  }
}

module attributes {stable_mosaic.version = 11 : i64} {
  func.func @_conv_bn_glu_kernel(%arg0: i32, %arg1: memref<144x2048xf32, #tpu.memory_space<vmem>>, %arg2: memref<16x144xf32, #tpu.memory_space<vmem>>, %arg3: memref<16x1xf32, #tpu.memory_space<vmem>>, %arg4: memref<16x1xf32, #tpu.memory_space<vmem>>, %arg5: memref<8x2048xf32, #tpu.memory_space<vmem>>) attributes {dimension_semantics = [#tpu.dimension_semantics<arbitrary>], iteration_bounds = array<i64: 1>, scalar_prefetch = 0 : i64, scratch_operands = 0 : i64, tpu.core_type = #tpu.core_type<tc>, window_params = [{pipeline_mode = #tpu.pipeline_mode<synchronous>, transform_indices = @transform_0, window_bounds = array<i64: 144, 2048>}, {pipeline_mode = #tpu.pipeline_mode<synchronous>, transform_indices = @transform_1, window_bounds = array<i64: 16, 144>}, {pipeline_mode = #tpu.pipeline_mode<synchronous>, transform_indices = @transform_2, window_bounds = array<i64: 16, 1>}, {pipeline_mode = #tpu.pipeline_mode<synchronous>, transform_indices = @transform_3, window_bounds = array<i64: 16, 1>}, {pipeline_mode = #tpu.pipeline_mode<synchronous>, transform_indices = @transform_4, window_bounds = array<i64: 8, 2048>}]} {
    %c0 = arith.constant 0 : index
    %c0_0 = arith.constant 0 : index
    %0 = vector.load %arg2[%c0, %c0_0] : memref<16x144xf32, #tpu.memory_space<vmem>>, vector<16x144xf32>
    %c0_1 = arith.constant 0 : index
    %c0_2 = arith.constant 0 : index
    %1 = vector.load %arg1[%c0_1, %c0_2] : memref<144x2048xf32, #tpu.memory_space<vmem>>, vector<144x2048xf32>
    %cst = arith.constant dense<0.000000e+00> : vector<16x2048xf32>
    %2 = tpu.matmul %0, %1, %cst {dimension_numbers = #tpu.dot_dimension_numbers<[1], [0], [0], [1], [0, 0, 1, 1], [], []>} : vector<16x144xf32>, vector<144x2048xf32>, vector<16x2048xf32> -> vector<16x2048xf32>
    %cst_3 = arith.constant dense<0.000000e+00> : vector<16xf32>
    %3 = vector.multi_reduction <add>, %2, %cst_3 [1] : vector<16x2048xf32> to vector<16xf32>
    %4 = vector.shape_cast %3 : vector<16xf32> to vector<16x1xf32>
    %cst_4 = arith.constant 4.8828125E-4 : f32
    %5 = vector.broadcast %cst_4 : f32 to vector<16x1xf32>
    %6 = arith.mulf %4, %5 : vector<16x1xf32>
    %7 = vector.broadcast %6 : vector<16x1xf32> to vector<16x2048xf32>
    %8 = arith.subf %2, %7 : vector<16x2048xf32>
    %9 = arith.mulf %8, %8 : vector<16x2048xf32>
    %cst_5 = arith.constant dense<0.000000e+00> : vector<16xf32>
    %10 = vector.multi_reduction <add>, %9, %cst_5 [1] : vector<16x2048xf32> to vector<16xf32>
    %11 = vector.shape_cast %10 : vector<16xf32> to vector<16x1xf32>
    %cst_6 = arith.constant 4.8828125E-4 : f32
    %12 = vector.broadcast %cst_6 : f32 to vector<16x1xf32>
    %13 = arith.mulf %11, %12 : vector<16x1xf32>
    %cst_7 = arith.constant 9.99999974E-6 : f32
    %14 = vector.broadcast %cst_7 : f32 to vector<16x1xf32>
    %15 = arith.addf %13, %14 : vector<16x1xf32>
    %16 = math.rsqrt %15 : vector<16x1xf32>
    %17 = vector.broadcast %16 : vector<16x1xf32> to vector<16x2048xf32>
    %18 = arith.mulf %8, %17 : vector<16x2048xf32>
    %c0_8 = arith.constant 0 : index
    %c0_9 = arith.constant 0 : index
    %19 = vector.load %arg3[%c0_8, %c0_9] : memref<16x1xf32, #tpu.memory_space<vmem>>, vector<16x1xf32>
    %20 = vector.broadcast %19 : vector<16x1xf32> to vector<16x2048xf32>
    %21 = arith.mulf %18, %20 : vector<16x2048xf32>
    %c0_10 = arith.constant 0 : index
    %c0_11 = arith.constant 0 : index
    %22 = vector.load %arg4[%c0_10, %c0_11] : memref<16x1xf32, #tpu.memory_space<vmem>>, vector<16x1xf32>
    %23 = vector.broadcast %22 : vector<16x1xf32> to vector<16x2048xf32>
    %24 = arith.addf %21, %23 : vector<16x2048xf32>
    %25 = vector.extract_strided_slice %24 {offsets = [0, 0], sizes = [8, 2048], strides = [1, 1]} : vector<16x2048xf32> to vector<8x2048xf32>
    %26 = vector.extract_strided_slice %24 {offsets = [8, 0], sizes = [8, 2048], strides = [1, 1]} : vector<16x2048xf32> to vector<8x2048xf32>
    %cst_12 = arith.constant 5.000000e-01 : f32
    %27 = vector.broadcast %cst_12 : f32 to vector<8x2048xf32>
    %28 = arith.mulf %27, %26 : vector<8x2048xf32>
    %29 = math.tanh %28 : vector<8x2048xf32>
    %cst_13 = arith.constant 1.000000e+00 : f32
    %30 = vector.broadcast %cst_13 : f32 to vector<8x2048xf32>
    %31 = arith.addf %29, %30 : vector<8x2048xf32>
    %cst_14 = arith.constant 5.000000e-01 : f32
    %32 = vector.broadcast %cst_14 : f32 to vector<8x2048xf32>
    %33 = arith.mulf %32, %31 : vector<8x2048xf32>
    %34 = arith.mulf %25, %33 : vector<8x2048xf32>
    %c0_15 = arith.constant 0 : index
    %c0_16 = arith.constant 0 : index
    %35 = vector.load %arg5[%c0_15, %c0_16] : memref<8x2048xf32, #tpu.memory_space<vmem>>, vector<8x2048xf32>
    tpu.vector_store %arg5[%c0_15, %c0_16], %34 {strides = array<i32>} : memref<8x2048xf32, #tpu.memory_space<vmem>>, vector<8x2048xf32>,
    return
  }
  func.func @transform_0(%arg0: i32) -> (i32, i32) {
    %c0_i32 = arith.constant 0 : i32
    %c0_i32_0 = arith.constant 0 : i32
    %c0_i32_1 = arith.constant 0 : i32
    return %c0_i32, %c0_i32_0 : i32, i32
  }
  func.func @transform_1(%arg0: i32) -> (i32, i32) {
    %c0_i32 = arith.constant 0 : i32
    %c0_i32_0 = arith.constant 0 : i32
    %c0_i32_1 = arith.constant 0 : i32
    return %c0_i32, %c0_i32_0 : i32, i32
  }
  func.func @transform_2(%arg0: i32) -> (i32, i32) {
    %c0_i32 = arith.constant 0 : i32
    %c0_i32_0 = arith.constant 0 : i32
    %c0_i32_1 = arith.constant 0 : i32
    return %c0_i32, %c0_i32_0 : i32, i32
  }
  func.func @transform_3(%arg0: i32) -> (i32, i32) {
    %c0_i32 = arith.constant 0 : i32
    %c0_i32_0 = arith.constant 0 : i32
    %c0_i32_1 = arith.constant 0 : i32
    return %c0_i32, %c0_i32_0 : i32, i32
  }
  func.func @transform_4(%arg0: i32) -> (i32, i32) {
    %c0_i32 = arith.constant 0 : i32
    %c0_i32_0 = arith.constant 0 : i32
    %c0_i32_1 = arith.constant 0 : i32
    return %c0_i32, %c0_i32_0 : i32, i32
  }
}

module attributes {stable_mosaic.version = 11 : i64} {
  func.func @_conv_bn_glu_kernel(%arg0: i32, %arg1: memref<72x8192xf32, #tpu.memory_space<vmem>>, %arg2: memref<8x72xf32, #tpu.memory_space<vmem>>, %arg3: memref<8x1xf32, #tpu.memory_space<vmem>>, %arg4: memref<8x1xf32, #tpu.memory_space<vmem>>, %arg5: memref<4x8192xf32, #tpu.memory_space<vmem>>) attributes {dimension_semantics = [#tpu.dimension_semantics<arbitrary>], iteration_bounds = array<i64: 1>, scalar_prefetch = 0 : i64, scratch_operands = 0 : i64, tpu.core_type = #tpu.core_type<tc>, window_params = [{pipeline_mode = #tpu.pipeline_mode<synchronous>, transform_indices = @transform_0, window_bounds = array<i64: 72, 8192>}, {pipeline_mode = #tpu.pipeline_mode<synchronous>, transform_indices = @transform_1, window_bounds = array<i64: 8, 72>}, {pipeline_mode = #tpu.pipeline_mode<synchronous>, transform_indices = @transform_2, window_bounds = array<i64: 8, 1>}, {pipeline_mode = #tpu.pipeline_mode<synchronous>, transform_indices = @transform_3, window_bounds = array<i64: 8, 1>}, {pipeline_mode = #tpu.pipeline_mode<synchronous>, transform_indices = @transform_4, window_bounds = array<i64: 4, 8192>}]} {
    %c0 = arith.constant 0 : index
    %c0_0 = arith.constant 0 : index
    %0 = vector.load %arg2[%c0, %c0_0] : memref<8x72xf32, #tpu.memory_space<vmem>>, vector<8x72xf32>
    %c0_1 = arith.constant 0 : index
    %c0_2 = arith.constant 0 : index
    %1 = vector.load %arg1[%c0_1, %c0_2] : memref<72x8192xf32, #tpu.memory_space<vmem>>, vector<72x8192xf32>
    %cst = arith.constant dense<0.000000e+00> : vector<8x8192xf32>
    %2 = tpu.matmul %0, %1, %cst {dimension_numbers = #tpu.dot_dimension_numbers<[1], [0], [0], [1], [0, 0, 1, 1], [], []>} : vector<8x72xf32>, vector<72x8192xf32>, vector<8x8192xf32> -> vector<8x8192xf32>
    %cst_3 = arith.constant dense<0.000000e+00> : vector<8xf32>
    %3 = vector.multi_reduction <add>, %2, %cst_3 [1] : vector<8x8192xf32> to vector<8xf32>
    %4 = vector.shape_cast %3 : vector<8xf32> to vector<8x1xf32>
    %cst_4 = arith.constant 1.22070313E-4 : f32
    %5 = vector.broadcast %cst_4 : f32 to vector<8x1xf32>
    %6 = arith.mulf %4, %5 : vector<8x1xf32>
    %7 = vector.broadcast %6 : vector<8x1xf32> to vector<8x8192xf32>
    %8 = arith.subf %2, %7 : vector<8x8192xf32>
    %9 = arith.mulf %8, %8 : vector<8x8192xf32>
    %cst_5 = arith.constant dense<0.000000e+00> : vector<8xf32>
    %10 = vector.multi_reduction <add>, %9, %cst_5 [1] : vector<8x8192xf32> to vector<8xf32>
    %11 = vector.shape_cast %10 : vector<8xf32> to vector<8x1xf32>
    %cst_6 = arith.constant 1.22070313E-4 : f32
    %12 = vector.broadcast %cst_6 : f32 to vector<8x1xf32>
    %13 = arith.mulf %11, %12 : vector<8x1xf32>
    %cst_7 = arith.constant 9.99999974E-6 : f32
    %14 = vector.broadcast %cst_7 : f32 to vector<8x1xf32>
    %15 = arith.addf %13, %14 : vector<8x1xf32>
    %16 = math.rsqrt %15 : vector<8x1xf32>
    %17 = vector.broadcast %16 : vector<8x1xf32> to vector<8x8192xf32>
    %18 = arith.mulf %8, %17 : vector<8x8192xf32>
    %c0_8 = arith.constant 0 : index
    %c0_9 = arith.constant 0 : index
    %19 = vector.load %arg3[%c0_8, %c0_9] : memref<8x1xf32, #tpu.memory_space<vmem>>, vector<8x1xf32>
    %20 = vector.broadcast %19 : vector<8x1xf32> to vector<8x8192xf32>
    %21 = arith.mulf %18, %20 : vector<8x8192xf32>
    %c0_10 = arith.constant 0 : index
    %c0_11 = arith.constant 0 : index
    %22 = vector.load %arg4[%c0_10, %c0_11] : memref<8x1xf32, #tpu.memory_space<vmem>>, vector<8x1xf32>
    %23 = vector.broadcast %22 : vector<8x1xf32> to vector<8x8192xf32>
    %24 = arith.addf %21, %23 : vector<8x8192xf32>
    %25 = vector.extract_strided_slice %24 {offsets = [0, 0], sizes = [4, 8192], strides = [1, 1]} : vector<8x8192xf32> to vector<4x8192xf32>
    %26 = vector.extract_strided_slice %24 {offsets = [4, 0], sizes = [4, 8192], strides = [1, 1]} : vector<8x8192xf32> to vector<4x8192xf32>
    %cst_12 = arith.constant 5.000000e-01 : f32
    %27 = vector.broadcast %cst_12 : f32 to vector<4x8192xf32>
    %28 = arith.mulf %27, %26 : vector<4x8192xf32>
    %29 = math.tanh %28 : vector<4x8192xf32>
    %cst_13 = arith.constant 1.000000e+00 : f32
    %30 = vector.broadcast %cst_13 : f32 to vector<4x8192xf32>
    %31 = arith.addf %29, %30 : vector<4x8192xf32>
    %cst_14 = arith.constant 5.000000e-01 : f32
    %32 = vector.broadcast %cst_14 : f32 to vector<4x8192xf32>
    %33 = arith.mulf %32, %31 : vector<4x8192xf32>
    %34 = arith.mulf %25, %33 : vector<4x8192xf32>
    %c0_15 = arith.constant 0 : index
    %c0_16 = arith.constant 0 : index
    %35 = vector.load %arg5[%c0_15, %c0_16] : memref<4x8192xf32, #tpu.memory_space<vmem>>, vector<4x8192xf32>
    tpu.vector_store %arg5[%c0_15, %c0_16], %34 {strides = array<i32>} : memref<4x8192xf32, #tpu.memory_space<vmem>>, vector<4x8192xf32>,
    return
  }
  func.func @transform_0(%arg0: i32) -> (i32, i32) {
    %c0_i32 = arith.constant 0 : i32
    %c0_i32_0 = arith.constant 0 : i32
    %c0_i32_1 = arith.constant 0 : i32
    return %c0_i32, %c0_i32_0 : i32, i32
  }
  func.func @transform_1(%arg0: i32) -> (i32, i32) {
    %c0_i32 = arith.constant 0 : i32
    %c0_i32_0 = arith.constant 0 : i32
    %c0_i32_1 = arith.constant 0 : i32
    return %c0_i32, %c0_i32_0 : i32, i32
  }
  func.func @transform_2(%arg0: i32) -> (i32, i32) {
    %c0_i32 = arith.constant 0 : i32
    %c0_i32_0 = arith.constant 0 : i32
    %c0_i32_1 = arith.constant 0 : i32
    return %c0_i32, %c0_i32_0 : i32, i32
  }
  func.func @transform_3(%arg0: i32) -> (i32, i32) {
    %c0_i32 = arith.constant 0 : i32
    %c0_i32_0 = arith.constant 0 : i32
    %c0_i32_1 = arith.constant 0 : i32
    return %c0_i32, %c0_i32_0 : i32, i32
  }
  func.func @transform_4(%arg0: i32) -> (i32, i32) {
    %c0_i32 = arith.constant 0 : i32
    %c0_i32_0 = arith.constant 0 : i32
    %c0_i32_1 = arith.constant 0 : i32
    return %c0_i32, %c0_i32_0 : i32, i32
  }
}

</mosaic_0001>

<llo_original>
// kernel: init_stage_g_forward.5
$region0: #{init_stage_g_forward.5}
  #allocation0 [shape = 'u32[]', space=smem, size = 0x4, offset = 0x4, fixed_abs, tag = 'smem constant byte address 0x4 - core index']
  #allocation1 [shape = 'u32[144,128]{1,0:T(1,128)}', space=vmem, size = 0x12000, scoped, tag = 'internal scratch']
  %s0 = inlined_call_operand.vmem [shape: f32[2,32], index: 0, kind: input, shape index: {}]
  %s1 = inlined_call_operand.hbm [shape: f32[32,2048], index: 1, kind: input, shape index: {}]
  %s2 = inlined_call_operand.hbm [shape: f32[1,2048], index: 2, kind: input, shape index: {}]
  %s3 = inlined_call_operand.hbm [shape: f32[1,2048], index: 3, kind: input, shape index: {}]
  %s4 = inlined_call_operand.vmem [shape: f32[2,1024], index: 4, kind: output, shape index: {}]
  %s5 = sld [smem:[#allocation0]]
  $region38: #{init_stage_g_forward.5} parent=0
    _
  %s7 = ssub.s32 1, %s5
  %s8 = scalar_select 0, %s7, %s5
  $region1: #{init_stage_g_forward.5} parent=0
    #allocation2 [shape = 'u8[262144]{0}', space=vmem, size = 0x40000, scoped, tag = 'input window, operand 1, single buffered']
    #allocation3 [shape = 's32[1]{0}', space=sflag, size = 0x4, scoped, tag = 'scoped memory for init_stage_g_forward.5']
    #allocation4 [shape = 'u8[8192]{0}', space=vmem, size = 0x2000, scoped, tag = 'input window, operand 2, single buffered']
    #allocation5 [shape = 's32[1]{0}', space=sflag, size = 0x4, scoped, tag = 'scoped memory for init_stage_g_forward.5']
    #allocation6 [shape = 'u8[8192]{0}', space=vmem, size = 0x2000, scoped, tag = 'input window, operand 3, single buffered']
    %9 = vsyncpa [#allocation3], 0
    %10 = vsyncpa [#allocation5], 0
    // Predicated region
    $region2: #{init_stage_g_forward.5} parent=1 // pred_check
      _
    $region3: #{init_stage_g_forward.5} parent=1 // pred_check_branch
      %12 = sbr.rel (0) target = $region5
    $region4: #{init_stage_g_forward.5} parent=1 // pred_region
      _
    $region5: #{init_stage_g_forward.5} parent=1 // pred_fallthru
      _
    // Predicated region
    $region6: #{init_stage_g_forward.5} parent=1 // pred_check
      _
    $region7: #{init_stage_g_forward.5} parent=1 // pred_check_branch
      %14 = sbr.rel (0) target = $region9
    $region8: #{init_stage_g_forward.5} parent=1 // pred_region
      %s16 = ssub.s32 8192, 8192
      %17 = vsyncadd [#allocation3], %s16
      %s18 = sshll.u32 [#allocation2], 4
      %s19 = int_to_ptr.vmem [resolvable:$true] %s18
      %24 = dma.hbm_to_vmem [thread:$0]  %s1, 8192, %s19, [#allocation3], 2048, 2048, 128
    $region9: #{init_stage_g_forward.5} parent=1 // pred_fallthru
      _
    // Predicated region
    $region10: #{init_stage_g_forward.5} parent=1 // pred_check
      _
    $region11: #{init_stage_g_forward.5} parent=1 // pred_check_branch
      %26 = sbr.rel (0) target = $region13
    $region12: #{init_stage_g_forward.5} parent=1 // pred_region
      %s28 = ssub.s32 256, 256
      %29 = vsyncadd [#allocation5], %s28
      %s31 = sshll.u32 [#allocation4], 4
      %s32 = int_to_ptr.vmem [resolvable:$true] %s31
      %34 = dma.hbm_to_vmem [thread:$0]  %s2, 256, %s32, [#allocation5]
    $region13: #{init_stage_g_forward.5} parent=1 // pred_fallthru
      _
    // Predicated region
    $region14: #{init_stage_g_forward.5} parent=1 // pred_check
      _
    $region15: #{init_stage_g_forward.5} parent=1 // pred_check_branch
      %36 = sbr.rel (0) target = $region17
    $region16: #{init_stage_g_forward.5} parent=1 // pred_region
      %s38 = ssub.s32 256, 256
      %39 = vsyncadd [#allocation5], %s38
      %s41 = sshll.u32 [#allocation6], 4
      %s42 = int_to_ptr.vmem [resolvable:$true] %s41
      %44 = dma.hbm_to_vmem [thread:$0]  %s3, 256, %s42, [#allocation5]
    $region17: #{init_stage_g_forward.5} parent=1 // pred_fallthru
      _
    // Predicated region
    $region18: #{init_stage_g_forward.5} parent=1 // pred_check
      _
    $region19: #{init_stage_g_forward.5} parent=1 // pred_check_branch
      %46 = sbr.rel (0) target = $region21
    $region20: #{init_stage_g_forward.5} parent=1 // pred_region
      %47 = dma.done [#allocation3], 8192
    $region21: #{init_stage_g_forward.5} parent=1 // pred_fallthru
      _
    // Predicated region
    $region22: #{init_stage_g_forward.5} parent=1 // pred_check
      _
    $region23: #{init_stage_g_forward.5} parent=1 // pred_check_branch
      %49 = sbr.rel (0) target = $region25
    $region24: #{init_stage_g_forward.5} parent=1 // pred_region
      %50 = dma.done [#allocation5], 256
    $region25: #{init_stage_g_forward.5} parent=1 // pred_fallthru
      _
    // Predicated region
    $region26: #{init_stage_g_forward.5} parent=1 // pred_check
      _
    $region27: #{init_stage_g_forward.5} parent=1 // pred_check_branch
      %52 = sbr.rel (0) target = $region29
    $region28: #{init_stage_g_forward.5} parent=1 // pred_region
      %53 = dma.done [#allocation5], 256
    $region29: #{init_stage_g_forward.5} parent=1 // pred_fallthru
      _
    %v54 = vld [vmem:[%s0] sm:$0x3]
    %v55 = vld [vmem:[#allocation2] sm:$0xff]
    %v56 = vld [vmem:[#allocation2 + $0x8] sm:$0xff]
    %v57 = vld [vmem:[#allocation2 + $0x10] sm:$0xff]
    %v58 = vld [vmem:[#allocation2 + $0x18] sm:$0xff]
    %v59 = vld [vmem:[#allocation2 + $0x20] sm:$0xff]
    %v60 = vld [vmem:[#allocation2 + $0x28] sm:$0xff]
    %v61 = vld [vmem:[#allocation2 + $0x30] sm:$0xff]
    %v62 = vld [vmem:[#allocation2 + $0x38] sm:$0xff]
    %v63 = vld [vmem:[#allocation2 + $0x40] sm:$0xff]
    %v64 = vld [vmem:[#allocation2 + $0x48] sm:$0xff]
    %v65 = vld [vmem:[#allocation2 + $0x50] sm:$0xff]
    %v66 = vld [vmem:[#allocation2 + $0x58] sm:$0xff]
    %v67 = vld [vmem:[#allocation2 + $0x60] sm:$0xff]
    %v68 = vld [vmem:[#allocation2 + $0x68] sm:$0xff]
    %v69 = vld [vmem:[#allocation2 + $0x70] sm:$0xff]
    %v70 = vld [vmem:[#allocation2 + $0x78] sm:$0xff]
    %v71 = vld [vmem:[#allocation2 + $0x80] sm:$0xff]
    %v72 = vld [vmem:[#allocation2 + $0x88] sm:$0xff]
    %v73 = vld [vmem:[#allocation2 + $0x90] sm:$0xff]
    %v74 = vld [vmem:[#allocation2 + $0x98] sm:$0xff]
    %v75 = vld [vmem:[#allocation2 + $0xa0] sm:$0xff]
    %v76 = vld [vmem:[#allocation2 + $0xa8] sm:$0xff]
    %v77 = vld [vmem:[#allocation2 + $0xb0] sm:$0xff]
    %v78 = vld [vmem:[#allocation2 + $0xb8] sm:$0xff]
    %v79 = vld [vmem:[#allocation2 + $0xc0] sm:$0xff]
    %v80 = vld [vmem:[#allocation2 + $0xc8] sm:$0xff]
    %v81 = vld [vmem:[#allocation2 + $0xd0] sm:$0xff]
    %v82 = vld [vmem:[#allocation2 + $0xd8] sm:$0xff]
    %v83 = vld [vmem:[#allocation2 + $0xe0] sm:$0xff]
    %v84 = vld [vmem:[#allocation2 + $0xe8] sm:$0xff]
    %v85 = vld [vmem:[#allocation2 + $0xf0] sm:$0xff]
    %v86 = vld [vmem:[#allocation2 + $0xf8] sm:$0xff]
    %v87 = vld [vmem:[#allocation2 + $0x100] sm:$0xff]
    %v88 = vld [vmem:[#allocation2 + $0x108] sm:$0xff]
    %v89 = vld [vmem:[#allocation2 + $0x110] sm:$0xff]
    %v90 = vld [vmem:[#allocation2 + $0x118] sm:$0xff]
    %v91 = vld [vmem:[#allocation2 + $0x120] sm:$0xff]
    %v92 = vld [vmem:[#allocation2 + $0x128] sm:$0xff]
    %v93 = vld [vmem:[#allocation2 + $0x130] sm:$0xff]
    %v94 = vld [vmem:[#allocation2 + $0x138] sm:$0xff]
    %v95 = vld [vmem:[#allocation2 + $0x140] sm:$0xff]
    %v96 = vld [vmem:[#allocation2 + $0x148] sm:$0xff]
    %v97 = vld [vmem:[#allocation2 + $0x150] sm:$0xff]
    %v98 = vld [vmem:[#allocation2 + $0x158] sm:$0xff]
    %v99 = vld [vmem:[#allocation2 + $0x160] sm:$0xff]
    %v100 = vld [vmem:[#allocation2 + $0x168] sm:$0xff]
    %v101 = vld [vmem:[#allocation2 + $0x170] sm:$0xff]
    %v102 = vld [vmem:[#allocation2 + $0x178] sm:$0xff]
    %v103 = vld [vmem:[#allocation2 + $0x180] sm:$0xff]
    %v104 = vld [vmem:[#allocation2 + $0x188] sm:$0xff]
    %v105 = vld [vmem:[#allocation2 + $0x190] sm:$0xff]
    %v106 = vld [vmem:[#allocation2 + $0x198] sm:$0xff]
    %v107 = vld [vmem:[#allocation2 + $0x1a0] sm:$0xff]
    %v108 = vld [vmem:[#allocation2 + $0x1a8] sm:$0xff]
    %v109 = vld [vmem:[#allocation2 + $0x1b0] sm:$0xff]
    %v110 = vld [vmem:[#allocation2 + $0x1b8] sm:$0xff]
    %v111 = vld [vmem:[#allocation2 + $0x1c0] sm:$0xff]
    %v112 = vld [vmem:[#allocation2 + $0x1c8] sm:$0xff]
    %v113 = vld [vmem:[#allocation2 + $0x1d0] sm:$0xff]
    %v114 = vld [vmem:[#allocation2 + $0x1d8] sm:$0xff]
    %v115 = vld [vmem:[#allocation2 + $0x1e0] sm:$0xff]
    %v116 = vld [vmem:[#allocation2 + $0x1e8] sm:$0xff]
    %v117 = vld [vmem:[#allocation2 + $0x1f0] sm:$0xff]
    %v118 = vld [vmem:[#allocation2 + $0x1f8] sm:$0xff]
    %vm119 = vcmask 261120
    %v121 = vsel %vm119, %v54, 0
    %123 = vmatprep.subr.mxu0 0.0
    %124 = vmatpush1.msra.mxu0 0.0
    %125 = vmatprep.subr.mxu0 0.0
    %126 = vmatpush1.msra.mxu0 0.0
    %127 = vmatprep.subr.mxu0 0.0
    %128 = vmatpush1.msra.mxu0 0.0
    %129 = vmatprep.subr.mxu0 0.0
    %130 = vmatpush1.msra.mxu0 0.0
    %131 = vmatprep.subr.mxu0 0.0
    %132 = vmatpush1.msra.mxu0 0.0
    %133 = vmatprep.subr.mxu0 0.0
    %134 = vmatpush1.msra.mxu0 0.0
    %135 = vmatprep.subr.mxu0 0.0
    %136 = vmatpush1.msra.mxu0 0.0
    %137 = vmatprep.subr.mxu0 0.0
    %138 = vmatpush1.msra.mxu0 0.0
    %139 = vmatprep.subr.mxu0 0.0
    %140 = vmatpush1.msra.mxu0 0.0
    %141 = vmatprep.subr.mxu0 0.0
    %142 = vmatpush1.msra.mxu0 0.0
    %143 = vmatprep.subr.mxu0 0.0
    %144 = vmatpush1.msra.mxu0 0.0
    %145 = vmatprep.subr.mxu0 0.0
    %146 = vmatpush1.msra.mxu0 0.0
    %147 = vmatprep.subr.mxu0 %v104
    %148 = vmatpush1.msra.mxu0 %v103
    %149 = vmatprep.subr.mxu0 %v88
    %150 = vmatpush1.msra.mxu0 %v87
    %151 = vmatprep.subr.mxu0 %v72
    %152 = vmatpush1.msra.mxu0 %v71
    %153 = vmatprep.subr.mxu0 %v56
    %154 = vmatpush1.msra.mxu0 %v55
    %155 = vmatprep.subr.mxu0 0.0
    %156 = vmatpush2.msra.mxu0 0.0
    %157 = vmatprep.subr.mxu0 0.0
    %158 = vmatpush2.msra.mxu0 0.0
    %159 = vmatprep.subr.mxu0 0.0
    %160 = vmatpush2.msra.mxu0 0.0
    %161 = vmatprep.subr.mxu0 0.0
    %162 = vmatpush2.msra.mxu0 0.0
    %163 = vmatprep.subr.mxu0 0.0
    %164 = vmatpush2.msra.mxu0 0.0
    %165 = vmatprep.subr.mxu0 0.0
    %166 = vmatpush2.msra.mxu0 0.0
    %167 = vmatprep.subr.mxu0 0.0
    %168 = vmatpush2.msra.mxu0 0.0
    %169 = vmatprep.subr.mxu0 0.0
    %170 = vmatpush2.msra.mxu0 0.0
    %171 = vmatprep.subr.mxu0 0.0
    %172 = vmatpush2.msra.mxu0 0.0
    %173 = vmatprep.subr.mxu0 0.0
    %174 = vmatpush2.msra.mxu0 0.0
    %175 = vmatprep.subr.mxu0 0.0
    %176 = vmatpush2.msra.mxu0 0.0
    %177 = vmatprep.subr.mxu0 0.0
    %178 = vmatpush2.msra.mxu0 0.0
    %179 = vmatprep.subr.mxu0 0.0
    %180 = vmatpush2.msra.mxu0 0.0
    %181 = vmatprep.subr.mxu0 0.0
    %182 = vmatpush2.msra.mxu0 0.0
    %183 = vmatprep.subr.mxu0 0.0
    %184 = vmatpush2.msra.mxu0 0.0
    %185 = vmatprep.subr.mxu0 0.0
    %186 = vmatpush2.msra.mxu0 0.0
    %187 = vmatprep.mubr.f32.mxu0 0.0
    %188 = vmatmul.mubr.f32.gmra.mxu0 %v121
    %v189 = vpop.f32.mrf.mxu0
    %v190 = vadd.f32 0.0, %v189
    %v191 = vpop.f32.mrf.mxu0
    %v192 = vadd.f32 0.0, %v191
    %193 = vdwg.mxu0
    %194 = vmatprep.subr.mxu0 0.0
    %195 = vmatpush1.msra.mxu0 0.0
    %196 = vmatprep.subr.mxu0 0.0
    %197 = vmatpush1.msra.mxu0 0.0
    %198 = vmatprep.subr.mxu0 0.0
    %199 = vmatpush1.msra.mxu0 0.0
    %200 = vmatprep.subr.mxu0 0.0
    %201 = vmatpush1.msra.mxu0 0.0
    %202 = vmatprep.subr.mxu0 0.0
    %203 = vmatpush1.msra.mxu0 0.0
    %204 = vmatprep.subr.mxu0 0.0
    %205 = vmatpush1.msra.mxu0 0.0
    %206 = vmatprep.subr.mxu0 0.0
    %207 = vmatpush1.msra.mxu0 0.0
    %208 = vmatprep.subr.mxu0 0.0
    %209 = vmatpush1.msra.mxu0 0.0
    %210 = vmatprep.subr.mxu0 0.0
    %211 = vmatpush1.msra.mxu0 0.0
    %212 = vmatprep.subr.mxu0 0.0
    %213 = vmatpush1.msra.mxu0 0.0
    %214 = vmatprep.subr.mxu0 0.0
    %215 = vmatpush1.msra.mxu0 0.0
    %216 = vmatprep.subr.mxu0 0.0
    %217 = vmatpush1.msra.mxu0 0.0
    %218 = vmatprep.subr.mxu0 %v106
    %219 = vmatpush1.msra.mxu0 %v105
    %220 = vmatprep.subr.mxu0 %v90
    %221 = vmatpush1.msra.mxu0 %v89
    %222 = vmatprep.subr.mxu0 %v74
    %223 = vmatpush1.msra.mxu0 %v73
    %224 = vmatprep.subr.mxu0 %v58
    %225 = vmatpush1.msra.mxu0 %v57
    %226 = vmatprep.subr.mxu0 0.0
    %227 = vmatpush2.msra.mxu0 0.0
    %228 = vmatprep.subr.mxu0 0.0
    %229 = vmatpush2.msra.mxu0 0.0
    %230 = vmatprep.subr.mxu0 0.0
    %231 = vmatpush2.msra.mxu0 0.0
    %232 = vmatprep.subr.mxu0 0.0
    %233 = vmatpush2.msra.mxu0 0.0
    %234 = vmatprep.subr.mxu0 0.0
    %235 = vmatpush2.msra.mxu0 0.0
    %236 = vmatprep.subr.mxu0 0.0
    %237 = vmatpush2.msra.mxu0 0.0
    %238 = vmatprep.subr.mxu0 0.0
    %239 = vmatpush2.msra.mxu0 0.0
    %240 = vmatprep.subr.mxu0 0.0
    %241 = vmatpush2.msra.mxu0 0.0
    %242 = vmatprep.subr.mxu0 0.0
    %243 = vmatpush2.msra.mxu0 0.0
    %244 = vmatprep.subr.mxu0 0.0
    %245 = vmatpush2.msra.mxu0 0.0
    %246 = vmatprep.subr.mxu0 0.0
    %247 = vmatpush2.msra.mxu0 0.0
    %248 = vmatprep.subr.mxu0 0.0
    %249 = vmatpush2.msra.mxu0 0.0
    %250 = vmatprep.subr.mxu0 0.0
    %251 = vmatpush2.msra.mxu0 0.0
    %252 = vmatprep.subr.mxu0 0.0
    %253 = vmatpush2.msra.mxu0 0.0
    %254 = vmatprep.subr.mxu0 0.0
    %255 = vmatpush2.msra.mxu0 0.0
    %256 = vmatprep.subr.mxu0 0.0
    %257 = vmatpush2.msra.mxu0 0.0
    %258 = vmatprep.mubr.f32.mxu0 0.0
    %259 = vmatmul.mubr.f32.gmra.mxu0 %v121
    %v260 = vpop.f32.mrf.mxu0
    %v261 = vadd.f32 0.0, %v260
    %v262 = vpop.f32.mrf.mxu0
    %v263 = vadd.f32 0.0, %v262
    %264 = vdwg.mxu0
    %265 = vmatprep.subr.mxu0 0.0
    %266 = vmatpush1.msra.mxu0 0.0
    %267 = vmatprep.subr.mxu0 0.0
    %268 = vmatpush1.msra.mxu0 0.0
    %269 = vmatprep.subr.mxu0 0.0
    %270 = vmatpush1.msra.mxu0 0.0
    %271 = vmatprep.subr.mxu0 0.0
    %272 = vmatpush1.msra.mxu0 0.0
    %273 = vmatprep.subr.mxu0 0.0
    %274 = vmatpush1.msra.mxu0 0.0
    %275 = vmatprep.subr.mxu0 0.0
    %276 = vmatpush1.msra.mxu0 0.0
    %277 = vmatprep.subr.mxu0 0.0
    %278 = vmatpush1.msra.mxu0 0.0
    %279 = vmatprep.subr.mxu0 0.0
    %280 = vmatpush1.msra.mxu0 0.0
    %281 = vmatprep.subr.mxu0 0.0
    %282 = vmatpush1.msra.mxu0 0.0
    %283 = vmatprep.subr.mxu0 0.0
    %284 = vmatpush1.msra.mxu0 0.0
    %285 = vmatprep.subr.mxu0 0.0
    %286 = vmatpush1.msra.mxu0 0.0
    %287 = vmatprep.subr.mxu0 0.0
    %288 = vmatpush1.msra.mxu0 0.0
    %289 = vmatprep.subr.mxu0 %v108
    %290 = vmatpush1.msra.mxu0 %v107
    %291 = vmatprep.subr.mxu0 %v92
    %292 = vmatpush1.msra.mxu0 %v91
    %293 = vmatprep.subr.mxu0 %v76
    %294 = vmatpush1.msra.mxu0 %v75
    %295 = vmatprep.subr.mxu0 %v60
    %296 = vmatpush1.msra.mxu0 %v59
    %297 = vmatprep.subr.mxu0 0.0
    %298 = vmatpush2.msra.mxu0 0.0
    %299 = vmatprep.subr.mxu0 0.0
    %300 = vmatpush2.msra.mxu0 0.0
    %301 = vmatprep.subr.mxu0 0.0
    %302 = vmatpush2.msra.mxu0 0.0
    %303 = vmatprep.subr.mxu0 0.0
    %304 = vmatpush2.msra.mxu0 0.0
    %305 = vmatprep.subr.mxu0 0.0
    %306 = vmatpush2.msra.mxu0 0.0
    %307 = vmatprep.subr.mxu0 0.0
    %308 = vmatpush2.msra.mxu0 0.0
    %309 = vmatprep.subr.mxu0 0.0
    %310 = vmatpush2.msra.mxu0 0.0
    %311 = vmatprep.subr.mxu0 0.0
    %312 = vmatpush2.msra.mxu0 0.0
    %313 = vmatprep.subr.mxu0 0.0
    %314 = vmatpush2.msra.mxu0 0.0
    %315 = vmatprep.subr.mxu0 0.0
    %316 = vmatpush2.msra.mxu0 0.0
    %317 = vmatprep.subr.mxu0 0.0
    %318 = vmatpush2.msra.mxu0 0.0
    %319 = vmatprep.subr.mxu0 0.0
    %320 = vmatpush2.msra.mxu0 0.0
    %321 = vmatprep.subr.mxu0 0.0
    %322 = vmatpush2.msra.mxu0 0.0
    %323 = vmatprep.subr.mxu0 0.0
    %324 = vmatpush2.msra.mxu0 0.0
    %325 = vmatprep.subr.mxu0 0.0
    %326 = vmatpush2.msra.mxu0 0.0
    %327 = vmatprep.subr.mxu0 0.0
    %328 = vmatpush2.msra.mxu0 0.0
    %329 = vmatprep.mubr.f32.mxu0 0.0
    %330 = vmatmul.mubr.f32.gmra.mxu0 %v121
    %v331 = vpop.f32.mrf.mxu0
    %v332 = vadd.f32 0.0, %v331
    %v333 = vpop.f32.mrf.mxu0
    %v334 = vadd.f32 0.0, %v333
    %335 = vdwg.mxu0
    %336 = vmatprep.subr.mxu0 0.0
    %337 = vmatpush1.msra.mxu0 0.0
    %338 = vmatprep.subr.mxu0 0.0
    %339 = vmatpush1.msra.mxu0 0.0
    %340 = vmatprep.subr.mxu0 0.0
    %341 = vmatpush1.msra.mxu0 0.0
    %342 = vmatprep.subr.mxu0 0.0
    %343 = vmatpush1.msra.mxu0 0.0
    %344 = vmatprep.subr.mxu0 0.0
    %345 = vmatpush1.msra.mxu0 0.0
    %346 = vmatprep.subr.mxu0 0.0
    %347 = vmatpush1.msra.mxu0 0.0
    %348 = vmatprep.subr.mxu0 0.0
    %349 = vmatpush1.msra.mxu0 0.0
    %350 = vmatprep.subr.mxu0 0.0
    %351 = vmatpush1.msra.mxu0 0.0
    %352 = vmatprep.subr.mxu0 0.0
    %353 = vmatpush1.msra.mxu0 0.0
    %354 = vmatprep.subr.mxu0 0.0
    %355 = vmatpush1.msra.mxu0 0.0
    %356 = vmatprep.subr.mxu0 0.0
    %357 = vmatpush1.msra.mxu0 0.0
    %358 = vmatprep.subr.mxu0 0.0
    %359 = vmatpush1.msra.mxu0 0.0
    %360 = vmatprep.subr.mxu0 %v110
    %361 = vmatpush1.msra.mxu0 %v109
    %362 = vmatprep.subr.mxu0 %v94
    %363 = vmatpush1.msra.mxu0 %v93
    %364 = vmatprep.subr.mxu0 %v78
    %365 = vmatpush1.msra.mxu0 %v77
    %366 = vmatprep.subr.mxu0 %v62
    %367 = vmatpush1.msra.mxu0 %v61
    %368 = vmatprep.subr.mxu0 0.0
    %369 = vmatpush2.msra.mxu0 0.0
    %370 = vmatprep.subr.mxu0 0.0
    %371 = vmatpush2.msra.mxu0 0.0
    %372 = vmatprep.subr.mxu0 0.0
    %373 = vmatpush2.msra.mxu0 0.0
    %374 = vmatprep.subr.mxu0 0.0
    %375 = vmatpush2.msra.mxu0 0.0
    %376 = vmatprep.subr.mxu0 0.0
    %377 = vmatpush2.msra.mxu0 0.0
    %378 = vmatprep.subr.mxu0 0.0
    %379 = vmatpush2.msra.mxu0 0.0
    %380 = vmatprep.subr.mxu0 0.0
    %381 = vmatpush2.msra.mxu0 0.0
    %382 = vmatprep.subr.mxu0 0.0
    %383 = vmatpush2.msra.mxu0 0.0
    %384 = vmatprep.subr.mxu0 0.0
    %385 = vmatpush2.msra.mxu0 0.0
    %386 = vmatprep.subr.mxu0 0.0
    %387 = vmatpush2.msra.mxu0 0.0
    %388 = vmatprep.subr.mxu0 0.0
    %389 = vmatpush2.msra.mxu0 0.0
    %390 = vmatprep.subr.mxu0 0.0
    %391 = vmatpush2.msra.mxu0 0.0
    %392 = vmatprep.subr.mxu0 0.0
    %393 = vmatpush2.msra.mxu0 0.0
    %394 = vmatprep.subr.mxu0 0.0
    %395 = vmatpush2.msra.mxu0 0.0
    %396 = vmatprep.subr.mxu0 0.0
    %397 = vmatpush2.msra.mxu0 0.0
    %398 = vmatprep.subr.mxu0 0.0
    %399 = vmatpush2.msra.mxu0 0.0
    %400 = vmatprep.mubr.f32.mxu0 0.0
    %401 = vmatmul.mubr.f32.gmra.mxu0 %v121
    %v402 = vpop.f32.mrf.mxu0
    %v403 = vadd.f32 0.0, %v402
    %v404 = vpop.f32.mrf.mxu0
    %v405 = vadd.f32 0.0, %v404
    %406 = vdwg.mxu0
    %407 = vmatprep.subr.mxu0 0.0
    %408 = vmatpush1.msra.mxu0 0.0
    %409 = vmatprep.subr.mxu0 0.0
    %410 = vmatpush1.msra.mxu0 0.0
    %411 = vmatprep.subr.mxu0 0.0
    %412 = vmatpush1.msra.mxu0 0.0
    %413 = vmatprep.subr.mxu0 0.0
    %414 = vmatpush1.msra.mxu0 0.0
    %415 = vmatprep.subr.mxu0 0.0
    %416 = vmatpush1.msra.mxu0 0.0
    %417 = vmatprep.subr.mxu0 0.0
    %418 = vmatpush1.msra.mxu0 0.0
    %419 = vmatprep.subr.mxu0 0.0
    %420 = vmatpush1.msra.mxu0 0.0
    %421 = vmatprep.subr.mxu0 0.0
    %422 = vmatpush1.msra.mxu0 0.0
    %423 = vmatprep.subr.mxu0 0.0
    %424 = vmatpush1.msra.mxu0 0.0
    %425 = vmatprep.subr.mxu0 0.0
    %426 = vmatpush1.msra.mxu0 0.0
    %427 = vmatprep.subr.mxu0 0.0
    %428 = vmatpush1.msra.mxu0 0.0
    %429 = vmatprep.subr.mxu0 0.0
    %430 = vmatpush1.msra.mxu0 0.0
    %431 = vmatprep.subr.mxu0 %v112
    %432 = vmatpush1.msra.mxu0 %v111
    %433 = vmatprep.subr.mxu0 %v96
    %434 = vmatpush1.msra.mxu0 %v95
    %435 = vmatprep.subr.mxu0 %v80
    %436 = vmatpush1.msra.mxu0 %v79
    %437 = vmatprep.subr.mxu0 %v64
    %438 = vmatpush1.msra.mxu0 %v63
    %439 = vmatprep.subr.mxu0 0.0
    %440 = vmatpush2.msra.mxu0 0.0
    %441 = vmatprep.subr.mxu0 0.0
    %442 = vmatpush2.msra.mxu0 0.0
    %443 = vmatprep.subr.mxu0 0.0
    %444 = vmatpush2.msra.mxu0 0.0
    %445 = vmatprep.subr.mxu0 0.0
    %446 = vmatpush2.msra.mxu0 0.0
    %447 = vmatprep.subr.mxu0 0.0
    %448 = vmatpush2.msra.mxu0 0.0
    %449 = vmatprep.subr.mxu0 0.0
    %450 = vmatpush2.msra.mxu0 0.0
    %451 = vmatprep.subr.mxu0 0.0
    %452 = vmatpush2.msra.mxu0 0.0
    %453 = vmatprep.subr.mxu0 0.0
    %454 = vmatpush2.msra.mxu0 0.0
    %455 = vmatprep.subr.mxu0 0.0
    %456 = vmatpush2.msra.mxu0 0.0
    %457 = vmatprep.subr.mxu0 0.0
    %458 = vmatpush2.msra.mxu0 0.0
    %459 = vmatprep.subr.mxu0 0.0
    %460 = vmatpush2.msra.mxu0 0.0
    %461 = vmatprep.subr.mxu0 0.0
    %462 = vmatpush2.msra.mxu0 0.0
    %463 = vmatprep.subr.mxu0 0.0
    %464 = vmatpush2.msra.mxu0 0.0
    %465 = vmatprep.subr.mxu0 0.0
    %466 = vmatpush2.msra.mxu0 0.0
    %467 = vmatprep.subr.mxu0 0.0
    %468 = vmatpush2.msra.mxu0 0.0
    %469 = vmatprep.subr.mxu0 0.0
    %470 = vmatpush2.msra.mxu0 0.0
    %471 = vmatprep.mubr.f32.mxu0 0.0
    %472 = vmatmul.mubr.f32.gmra.mxu0 %v121
    %v473 = vpop.f32.mrf.mxu0
    %v474 = vadd.f32 0.0, %v473
    %v475 = vpop.f32.mrf.mxu0
    %v476 = vadd.f32 0.0, %v475
    %477 = vdwg.mxu0
    %478 = vmatprep.subr.mxu0 0.0
    %479 = vmatpush1.msra.mxu0 0.0
    %480 = vmatprep.subr.mxu0 0.0
    %481 = vmatpush1.msra.mxu0 0.0
    %482 = vmatprep.subr.mxu0 0.0
    %483 = vmatpush1.msra.mxu0 0.0
    %484 = vmatprep.subr.mxu0 0.0
    %485 = vmatpush1.msra.mxu0 0.0
    %486 = vmatprep.subr.mxu0 0.0
    %487 = vmatpush1.msra.mxu0 0.0
    %488 = vmatprep.subr.mxu0 0.0
    %489 = vmatpush1.msra.mxu0 0.0
    %490 = vmatprep.subr.mxu0 0.0
    %491 = vmatpush1.msra.mxu0 0.0
    %492 = vmatprep.subr.mxu0 0.0
    %493 = vmatpush1.msra.mxu0 0.0
    %494 = vmatprep.subr.mxu0 0.0
    %495 = vmatpush1.msra.mxu0 0.0
    %496 = vmatprep.subr.mxu0 0.0
    %497 = vmatpush1.msra.mxu0 0.0
    %498 = vmatprep.subr.mxu0 0.0
    %499 = vmatpush1.msra.mxu0 0.0
    %500 = vmatprep.subr.mxu0 0.0
    %501 = vmatpush1.msra.mxu0 0.0
    %502 = vmatprep.subr.mxu0 %v114
    %503 = vmatpush1.msra.mxu0 %v113
    %504 = vmatprep.subr.mxu0 %v98
    %505 = vmatpush1.msra.mxu0 %v97
    %506 = vmatprep.subr.mxu0 %v82
    %507 = vmatpush1.msra.mxu0 %v81
    %508 = vmatprep.subr.mxu0 %v66
    %509 = vmatpush1.msra.mxu0 %v65
    %510 = vmatprep.subr.mxu0 0.0
    %511 = vmatpush2.msra.mxu0 0.0
    %512 = vmatprep.subr.mxu0 0.0
    %513 = vmatpush2.msra.mxu0 0.0
    %514 = vmatprep.subr.mxu0 0.0
    %515 = vmatpush2.msra.mxu0 0.0
    %516 = vmatprep.subr.mxu0 0.0
    %517 = vmatpush2.msra.mxu0 0.0
    %518 = vmatprep.subr.mxu0 0.0
    %519 = vmatpush2.msra.mxu0 0.0
    %520 = vmatprep.subr.mxu0 0.0
    %521 = vmatpush2.msra.mxu0 0.0
    %522 = vmatprep.subr.mxu0 0.0
    %523 = vmatpush2.msra.mxu0 0.0
    %524 = vmatprep.subr.mxu0 0.0
    %525 = vmatpush2.msra.mxu0 0.0
    %526 = vmatprep.subr.mxu0 0.0
    %527 = vmatpush2.msra.mxu0 0.0
    %528 = vmatprep.subr.mxu0 0.0
    %529 = vmatpush2.msra.mxu0 0.0
    %530 = vmatprep.subr.mxu0 0.0
    %531 = vmatpush2.msra.mxu0 0.0
    %532 = vmatprep.subr.mxu0 0.0
    %533 = vmatpush2.msra.mxu0 0.0
    %534 = vmatprep.subr.mxu0 0.0
    %535 = vmatpush2.msra.mxu0 0.0
    %536 = vmatprep.subr.mxu0 0.0
    %537 = vmatpush2.msra.mxu0 0.0
    %538 = vmatprep.subr.mxu0 0.0
    %539 = vmatpush2.msra.mxu0 0.0
    %540 = vmatprep.subr.mxu0 0.0
    %541 = vmatpush2.msra.mxu0 0.0
    %542 = vmatprep.mubr.f32.mxu0 0.0
    %543 = vmatmul.mubr.f32.gmra.mxu0 %v121
    %v544 = vpop.f32.mrf.mxu0
    %v545 = vadd.f32 0.0, %v544
    %v546 = vpop.f32.mrf.mxu0
    %v547 = vadd.f32 0.0, %v546
    %548 = vdwg.mxu0
    %549 = vmatprep.subr.mxu0 0.0
    %550 = vmatpush1.msra.mxu0 0.0
    %551 = vmatprep.subr.mxu0 0.0
    %552 = vmatpush1.msra.mxu0 0.0
    %553 = vmatprep.subr.mxu0 0.0
    %554 = vmatpush1.msra.mxu0 0.0
    %555 = vmatprep.subr.mxu0 0.0
    %556 = vmatpush1.msra.mxu0 0.0
    %557 = vmatprep.subr.mxu0 0.0
    %558 = vmatpush1.msra.mxu0 0.0
    %559 = vmatprep.subr.mxu0 0.0
    %560 = vmatpush1.msra.mxu0 0.0
    %561 = vmatprep.subr.mxu0 0.0
    %562 = vmatpush1.msra.mxu0 0.0
    %563 = vmatprep.subr.mxu0 0.0
    %564 = vmatpush1.msra.mxu0 0.0
    %565 = vmatprep.subr.mxu0 0.0
    %566 = vmatpush1.msra.mxu0 0.0
    %567 = vmatprep.subr.mxu0 0.0
    %568 = vmatpush1.msra.mxu0 0.0
    %569 = vmatprep.subr.mxu0 0.0
    %570 = vmatpush1.msra.mxu0 0.0
    %571 = vmatprep.subr.mxu0 0.0
    %572 = vmatpush1.msra.mxu0 0.0
    %573 = vmatprep.subr.mxu0 %v116
    %574 = vmatpush1.msra.mxu0 %v115
    %575 = vmatprep.subr.mxu0 %v100
    %576 = vmatpush1.msra.mxu0 %v99
    %577 = vmatprep.subr.mxu0 %v84
    %578 = vmatpush1.msra.mxu0 %v83
    %579 = vmatprep.subr.mxu0 %v68
    %580 = vmatpush1.msra.mxu0 %v67
    %581 = vmatprep.subr.mxu0 0.0
    %582 = vmatpush2.msra.mxu0 0.0
    %583 = vmatprep.subr.mxu0 0.0
    %584 = vmatpush2.msra.mxu0 0.0
    %585 = vmatprep.subr.mxu0 0.0
    %586 = vmatpush2.msra.mxu0 0.0
    %587 = vmatprep.subr.mxu0 0.0
    %588 = vmatpush2.msra.mxu0 0.0
    %589 = vmatprep.subr.mxu0 0.0
    %590 = vmatpush2.msra.mxu0 0.0
    %591 = vmatprep.subr.mxu0 0.0
    %592 = vmatpush2.msra.mxu0 0.0
    %593 = vmatprep.subr.mxu0 0.0
    %594 = vmatpush2.msra.mxu0 0.0
    %595 = vmatprep.subr.mxu0 0.0
    %596 = vmatpush2.msra.mxu0 0.0
    %597 = vmatprep.subr.mxu0 0.0
    %598 = vmatpush2.msra.mxu0 0.0
    %599 = vmatprep.subr.mxu0 0.0
    %600 = vmatpush2.msra.mxu0 0.0
    %601 = vmatprep.subr.mxu0 0.0
    %602 = vmatpush2.msra.mxu0 0.0
    %603 = vmatprep.subr.mxu0 0.0
    %604 = vmatpush2.msra.mxu0 0.0
    %605 = vmatprep.subr.mxu0 0.0
    %606 = vmatpush2.msra.mxu0 0.0
    %607 = vmatprep.subr.mxu0 0.0
    %608 = vmatpush2.msra.mxu0 0.0
    %609 = vmatprep.subr.mxu0 0.0
    %610 = vmatpush2.msra.mxu0 0.0
    %611 = vmatprep.subr.mxu0 0.0
    %612 = vmatpush2.msra.mxu0 0.0
    %613 = vmatprep.mubr.f32.mxu0 0.0
    %614 = vmatmul.mubr.f32.gmra.mxu0 %v121
    %v615 = vpop.f32.mrf.mxu0
    %v616 = vadd.f32 0.0, %v615
    %v617 = vpop.f32.mrf.mxu0
    %v618 = vadd.f32 0.0, %v617
    %619 = vdwg.mxu0
    %620 = vmatprep.subr.mxu0 0.0
    %621 = vmatpush1.msra.mxu0 0.0
    %622 = vmatprep.subr.mxu0 0.0
    %623 = vmatpush1.msra.mxu0 0.0
    %624 = vmatprep.subr.mxu0 0.0
    %625 = vmatpush1.msra.mxu0 0.0
    %626 = vmatprep.subr.mxu0 0.0
    %627 = vmatpush1.msra.mxu0 0.0
    %628 = vmatprep.subr.mxu0 0.0
    %629 = vmatpush1.msra.mxu0 0.0
    %630 = vmatprep.subr.mxu0 0.0
    %631 = vmatpush1.msra.mxu0 0.0
    %632 = vmatprep.subr.mxu0 0.0
    %633 = vmatpush1.msra.mxu0 0.0
    %634 = vmatprep.subr.mxu0 0.0
    %635 = vmatpush1.msra.mxu0 0.0
    %636 = vmatprep.subr.mxu0 0.0
    %637 = vmatpush1.msra.mxu0 0.0
    %638 = vmatprep.subr.mxu0 0.0
    %639 = vmatpush1.msra.mxu0 0.0
    %640 = vmatprep.subr.mxu0 0.0
    %641 = vmatpush1.msra.mxu0 0.0
    %642 = vmatprep.subr.mxu0 0.0
    %643 = vmatpush1.msra.mxu0 0.0
    %644 = vmatprep.subr.mxu0 %v118
    %645 = vmatpush1.msra.mxu0 %v117
    %646 = vmatprep.subr.mxu0 %v102
    %647 = vmatpush1.msra.mxu0 %v101
    %648 = vmatprep.subr.mxu0 %v86
    %649 = vmatpush1.msra.mxu0 %v85
    %650 = vmatprep.subr.mxu0 %v70
    %651 = vmatpush1.msra.mxu0 %v69
    %652 = vmatprep.subr.mxu0 0.0
    %653 = vmatpush2.msra.mxu0 0.0
    %654 = vmatprep.subr.mxu0 0.0
    %655 = vmatpush2.msra.mxu0 0.0
    %656 = vmatprep.subr.mxu0 0.0
    %657 = vmatpush2.msra.mxu0 0.0
    %658 = vmatprep.subr.mxu0 0.0
    %659 = vmatpush2.msra.mxu0 0.0
    %660 = vmatprep.subr.mxu0 0.0
    %661 = vmatpush2.msra.mxu0 0.0
    %662 = vmatprep.subr.mxu0 0.0
    %663 = vmatpush2.msra.mxu0 0.0
    %664 = vmatprep.subr.mxu0 0.0
    %665 = vmatpush2.msra.mxu0 0.0
    %666 = vmatprep.subr.mxu0 0.0
    %667 = vmatpush2.msra.mxu0 0.0
    %668 = vmatprep.subr.mxu0 0.0
    %669 = vmatpush2.msra.mxu0 0.0
    %670 = vmatprep.subr.mxu0 0.0
    %671 = vmatpush2.msra.mxu0 0.0
    %672 = vmatprep.subr.mxu0 0.0
    %673 = vmatpush2.msra.mxu0 0.0
    %674 = vmatprep.subr.mxu0 0.0
    %675 = vmatpush2.msra.mxu0 0.0
    %676 = vmatprep.subr.mxu0 0.0
    %677 = vmatpush2.msra.mxu0 0.0
    %678 = vmatprep.subr.mxu0 0.0
    %679 = vmatpush2.msra.mxu0 0.0
    %680 = vmatprep.subr.mxu0 0.0
    %681 = vmatpush2.msra.mxu0 0.0
    %682 = vmatprep.subr.mxu0 0.0
    %683 = vmatpush2.msra.mxu0 0.0
    %684 = vmatprep.mubr.f32.mxu0 0.0
    %685 = vmatmul.mubr.f32.gmra.mxu0 %v121
    %v686 = vpop.f32.mrf.mxu0
    %v687 = vadd.f32 0.0, %v686
    %v688 = vpop.f32.mrf.mxu0
    %v689 = vadd.f32 0.0, %v688
    %690 = vdwg.mxu0
    %vm691 = vcmask 1041408
    %v692 = vsel %vm691, %v190, 0.0
    %v693 = vrot.slane %v692, 4
    %v694 = vadd.f32 %v692, %v693
    %v695 = vrot.slane %v694, 2
    %v696 = vadd.f32 %v694, %v695
    %v697 = vrot.slane %v696, 1
    %v698 = vadd.f32 %v696, %v697
    %v699 = vsel %vm691, %v192, 0.0
    %v700 = vrot.slane %v699, 4
    %v701 = vadd.f32 %v699, %v700
    %v702 = vrot.slane %v701, 2
    %v703 = vadd.f32 %v701, %v702
    %v704 = vrot.slane %v703, 1
    %v705 = vadd.f32 %v703, %v704
    %v706 = vsel %vm691, %v261, 0.0
    %v707 = vrot.slane %v706, 4
    %v708 = vadd.f32 %v706, %v707
    %v709 = vrot.slane %v708, 2
    %v710 = vadd.f32 %v708, %v709
    %v711 = vrot.slane %v710, 1
    %v712 = vadd.f32 %v710, %v711
    %v713 = vsel %vm691, %v263, 0.0
    %v714 = vrot.slane %v713, 4
    %v715 = vadd.f32 %v713, %v714
    %v716 = vrot.slane %v715, 2
    %v717 = vadd.f32 %v715, %v716
    %v718 = vrot.slane %v717, 1
    %v719 = vadd.f32 %v717, %v718
    %v720 = vsel %vm691, %v332, 0.0
    %v721 = vrot.slane %v720, 4
    %v722 = vadd.f32 %v720, %v721
    %v723 = vrot.slane %v722, 2
    %v724 = vadd.f32 %v722, %v723
    %v725 = vrot.slane %v724, 1
    %v726 = vadd.f32 %v724, %v725
    %v727 = vsel %vm691, %v334, 0.0
    %v728 = vrot.slane %v727, 4
    %v729 = vadd.f32 %v727, %v728
    %v730 = vrot.slane %v729, 2
    %v731 = vadd.f32 %v729, %v730
    %v732 = vrot.slane %v731, 1
    %v733 = vadd.f32 %v731, %v732
    %v734 = vsel %vm691, %v403, 0.0
    %v735 = vrot.slane %v734, 4
    %v736 = vadd.f32 %v734, %v735
    %v737 = vrot.slane %v736, 2
    %v738 = vadd.f32 %v736, %v737
    %v739 = vrot.slane %v738, 1
    %v740 = vadd.f32 %v738, %v739
    %v741 = vsel %vm691, %v405, 0.0
    %v742 = vrot.slane %v741, 4
    %v743 = vadd.f32 %v741, %v742
    %v744 = vrot.slane %v743, 2
    %v745 = vadd.f32 %v743, %v744
    %v746 = vrot.slane %v745, 1
    %v747 = vadd.f32 %v745, %v746
    %v748 = vsel %vm691, %v474, 0.0
    %v749 = vrot.slane %v748, 4
    %v750 = vadd.f32 %v748, %v749
    %v751 = vrot.slane %v750, 2
    %v752 = vadd.f32 %v750, %v751
    %v753 = vrot.slane %v752, 1
    %v754 = vadd.f32 %v752, %v753
    %v755 = vsel %vm691, %v476, 0.0
    %v756 = vrot.slane %v755, 4
    %v757 = vadd.f32 %v755, %v756
    %v758 = vrot.slane %v757, 2
    %v759 = vadd.f32 %v757, %v758
    %v760 = vrot.slane %v759, 1
    %v761 = vadd.f32 %v759, %v760
    %v762 = vsel %vm691, %v545, 0.0
    %v763 = vrot.slane %v762, 4
    %v764 = vadd.f32 %v762, %v763
    %v765 = vrot.slane %v764, 2
    %v766 = vadd.f32 %v764, %v765
    %v767 = vrot.slane %v766, 1
    %v768 = vadd.f32 %v766, %v767
    %v769 = vsel %vm691, %v547, 0.0
    %v770 = vrot.slane %v769, 4
    %v771 = vadd.f32 %v769, %v770
    %v772 = vrot.slane %v771, 2
    %v773 = vadd.f32 %v771, %v772
    %v774 = vrot.slane %v773, 1
    %v775 = vadd.f32 %v773, %v774
    %v776 = vsel %vm691, %v616, 0.0
    %v777 = vrot.slane %v776, 4
    %v778 = vadd.f32 %v776, %v777
    %v779 = vrot.slane %v778, 2
    %v780 = vadd.f32 %v778, %v779
    %v781 = vrot.slane %v780, 1
    %v782 = vadd.f32 %v780, %v781
    %v783 = vsel %vm691, %v618, 0.0
    %v784 = vrot.slane %v783, 4
    %v785 = vadd.f32 %v783, %v784
    %v786 = vrot.slane %v785, 2
    %v787 = vadd.f32 %v785, %v786
    %v788 = vrot.slane %v787, 1
    %v789 = vadd.f32 %v787, %v788
    %v790 = vsel %vm691, %v687, 0.0
    %v791 = vrot.slane %v790, 4
    %v792 = vadd.f32 %v790, %v791
    %v793 = vrot.slane %v792, 2
    %v794 = vadd.f32 %v792, %v793
    %v795 = vrot.slane %v794, 1
    %v796 = vadd.f32 %v794, %v795
    %v797 = vsel %vm691, %v689, 0.0
    %v798 = vrot.slane %v797, 4
    %v799 = vadd.f32 %v797, %v798
    %v800 = vrot.slane %v799, 2
    %v801 = vadd.f32 %v799, %v800
    %v802 = vrot.slane %v801, 1
    %v803 = vadd.f32 %v801, %v802
    %v804 = vmul.f32 %v698, 0.5
    %v805 = vmul.f32 %v705, 0.5
    %v806 = vmul.f32 %v712, 0.5
    %v807 = vmul.f32 %v719, 0.5
    %v808 = vmul.f32 %v726, 0.5
    %v809 = vmul.f32 %v733, 0.5
    %v810 = vmul.f32 %v740, 0.5
    %v811 = vmul.f32 %v747, 0.5
    %v812 = vmul.f32 %v754, 0.5
    %v813 = vmul.f32 %v761, 0.5
    %v814 = vmul.f32 %v768, 0.5
    %v815 = vmul.f32 %v775, 0.5
    %v816 = vmul.f32 %v782, 0.5
    %v817 = vmul.f32 %v789, 0.5
    %v818 = vmul.f32 %v796, 0.5
    %v819 = vmul.f32 %v803, 0.5
    %v820 = vsub.f32 %v190, %v804
    %v821 = vsub.f32 %v192, %v805
    %v822 = vsub.f32 %v261, %v806
    %v823 = vsub.f32 %v263, %v807
    %v824 = vsub.f32 %v332, %v808
    %v825 = vsub.f32 %v334, %v809
    %v826 = vsub.f32 %v403, %v810
    %v827 = vsub.f32 %v405, %v811
    %v828 = vsub.f32 %v474, %v812
    %v829 = vsub.f32 %v476, %v813
    %v830 = vsub.f32 %v545, %v814
    %v831 = vsub.f32 %v547, %v815
    %v832 = vsub.f32 %v616, %v816
    %v833 = vsub.f32 %v618, %v817
    %v834 = vsub.f32 %v687, %v818
    %v835 = vsub.f32 %v689, %v819
    %v836 = vmul.f32 %v820, %v820
    %v837 = vmul.f32 %v821, %v821
    %v838 = vmul.f32 %v822, %v822
    %v839 = vmul.f32 %v823, %v823
    %v840 = vmul.f32 %v824, %v824
    %v841 = vmul.f32 %v825, %v825
    %v842 = vmul.f32 %v826, %v826
    %v843 = vmul.f32 %v827, %v827
    %v844 = vmul.f32 %v828, %v828
    %v845 = vmul.f32 %v829, %v829
    %v846 = vmul.f32 %v830, %v830
    %v847 = vmul.f32 %v831, %v831
    %v848 = vmul.f32 %v832, %v832
    %v849 = vmul.f32 %v833, %v833
    %v850 = vmul.f32 %v834, %v834
    %v851 = vmul.f32 %v835, %v835
    %v852 = vsel %vm691, %v836, 0.0
    %v853 = vrot.slane %v852, 4
    %v854 = vadd.f32 %v852, %v853
    %v855 = vrot.slane %v854, 2
    %v856 = vadd.f32 %v854, %v855
    %v857 = vrot.slane %v856, 1
    %v858 = vadd.f32 %v856, %v857
    %v859 = vsel %vm691, %v837, 0.0
    %v860 = vrot.slane %v859, 4
    %v861 = vadd.f32 %v859, %v860
    %v862 = vrot.slane %v861, 2
    %v863 = vadd.f32 %v861, %v862
    %v864 = vrot.slane %v863, 1
    %v865 = vadd.f32 %v863, %v864
    %v866 = vsel %vm691, %v838, 0.0
    %v867 = vrot.slane %v866, 4
    %v868 = vadd.f32 %v866, %v867
    %v869 = vrot.slane %v868, 2
    %v870 = vadd.f32 %v868, %v869
    %v871 = vrot.slane %v870, 1
    %v872 = vadd.f32 %v870, %v871
    %v873 = vsel %vm691, %v839, 0.0
    %v874 = vrot.slane %v873, 4
    %v875 = vadd.f32 %v873, %v874
    %v876 = vrot.slane %v875, 2
    %v877 = vadd.f32 %v875, %v876
    %v878 = vrot.slane %v877, 1
    %v879 = vadd.f32 %v877, %v878
    %v880 = vsel %vm691, %v840, 0.0
    %v881 = vrot.slane %v880, 4
    %v882 = vadd.f32 %v880, %v881
    %v883 = vrot.slane %v882, 2
    %v884 = vadd.f32 %v882, %v883
    %v885 = vrot.slane %v884, 1
    %v886 = vadd.f32 %v884, %v885
    %v887 = vsel %vm691, %v841, 0.0
    %v888 = vrot.slane %v887, 4
    %v889 = vadd.f32 %v887, %v888
    %v890 = vrot.slane %v889, 2
    %v891 = vadd.f32 %v889, %v890
    %v892 = vrot.slane %v891, 1
    %v893 = vadd.f32 %v891, %v892
    %v894 = vsel %vm691, %v842, 0.0
    %v895 = vrot.slane %v894, 4
    %v896 = vadd.f32 %v894, %v895
    %v897 = vrot.slane %v896, 2
    %v898 = vadd.f32 %v896, %v897
    %v899 = vrot.slane %v898, 1
    %v900 = vadd.f32 %v898, %v899
    %v901 = vsel %vm691, %v843, 0.0
    %v902 = vrot.slane %v901, 4
    %v903 = vadd.f32 %v901, %v902
    %v904 = vrot.slane %v903, 2
    %v905 = vadd.f32 %v903, %v904
    %v906 = vrot.slane %v905, 1
    %v907 = vadd.f32 %v905, %v906
    %v908 = vsel %vm691, %v844, 0.0
    %v909 = vrot.slane %v908, 4
    %v910 = vadd.f32 %v908, %v909
    %v911 = vrot.slane %v910, 2
    %v912 = vadd.f32 %v910, %v911
    %v913 = vrot.slane %v912, 1
    %v914 = vadd.f32 %v912, %v913
    %v915 = vsel %vm691, %v845, 0.0
    %v916 = vrot.slane %v915, 4
    %v917 = vadd.f32 %v915, %v916
    %v918 = vrot.slane %v917, 2
    %v919 = vadd.f32 %v917, %v918
    %v920 = vrot.slane %v919, 1
    %v921 = vadd.f32 %v919, %v920
    %v922 = vsel %vm691, %v846, 0.0
    %v923 = vrot.slane %v922, 4
    %v924 = vadd.f32 %v922, %v923
    %v925 = vrot.slane %v924, 2
    %v926 = vadd.f32 %v924, %v925
    %v927 = vrot.slane %v926, 1
    %v928 = vadd.f32 %v926, %v927
    %v929 = vsel %vm691, %v847, 0.0
    %v930 = vrot.slane %v929, 4
    %v931 = vadd.f32 %v929, %v930
    %v932 = vrot.slane %v931, 2
    %v933 = vadd.f32 %v931, %v932
    %v934 = vrot.slane %v933, 1
    %v935 = vadd.f32 %v933, %v934
    %v936 = vsel %vm691, %v848, 0.0
    %v937 = vrot.slane %v936, 4
    %v938 = vadd.f32 %v936, %v937
    %v939 = vrot.slane %v938, 2
    %v940 = vadd.f32 %v938, %v939
    %v941 = vrot.slane %v940, 1
    %v942 = vadd.f32 %v940, %v941
    %v943 = vsel %vm691, %v849, 0.0
    %v944 = vrot.slane %v943, 4
    %v945 = vadd.f32 %v943, %v944
    %v946 = vrot.slane %v945, 2
    %v947 = vadd.f32 %v945, %v946
    %v948 = vrot.slane %v947, 1
    %v949 = vadd.f32 %v947, %v948
    %v950 = vsel %vm691, %v850, 0.0
    %v951 = vrot.slane %v950, 4
    %v952 = vadd.f32 %v950, %v951
    %v953 = vrot.slane %v952, 2
    %v954 = vadd.f32 %v952, %v953
    %v955 = vrot.slane %v954, 1
    %v956 = vadd.f32 %v954, %v955
    %v957 = vsel %vm691, %v851, 0.0
    %v958 = vrot.slane %v957, 4
    %v959 = vadd.f32 %v957, %v958
    %v960 = vrot.slane %v959, 2
    %v961 = vadd.f32 %v959, %v960
    %v962 = vrot.slane %v961, 1
    %v963 = vadd.f32 %v961, %v962
    %v964 = vmul.f32 %v858, 0.5
    %v965 = vmul.f32 %v865, 0.5
    %v966 = vmul.f32 %v872, 0.5
    %v967 = vmul.f32 %v879, 0.5
    %v968 = vmul.f32 %v886, 0.5
    %v969 = vmul.f32 %v893, 0.5
    %v970 = vmul.f32 %v900, 0.5
    %v971 = vmul.f32 %v907, 0.5
    %v972 = vmul.f32 %v914, 0.5
    %v973 = vmul.f32 %v921, 0.5
    %v974 = vmul.f32 %v928, 0.5
    %v975 = vmul.f32 %v935, 0.5
    %v976 = vmul.f32 %v942, 0.5
    %v977 = vmul.f32 %v949, 0.5
    %v978 = vmul.f32 %v956, 0.5
    %v979 = vmul.f32 %v963, 0.5
    %v980 = vadd.f32 %v964, 1e-05
    %v981 = vadd.f32 %v965, 1e-05
    %v982 = vadd.f32 %v966, 1e-05
    %v983 = vadd.f32 %v967, 1e-05
    %v984 = vadd.f32 %v968, 1e-05
    %v985 = vadd.f32 %v969, 1e-05
    %v986 = vadd.f32 %v970, 1e-05
    %v987 = vadd.f32 %v971, 1e-05
    %v988 = vadd.f32 %v972, 1e-05
    %v989 = vadd.f32 %v973, 1e-05
    %v990 = vadd.f32 %v974, 1e-05
    %v991 = vadd.f32 %v975, 1e-05
    %v992 = vadd.f32 %v976, 1e-05
    %v993 = vadd.f32 %v977, 1e-05
    %v994 = vadd.f32 %v978, 1e-05
    %v995 = vadd.f32 %v979, 1e-05
    %v996 = vrsqrt.pop %v980
    %v997 = vrsqrt.pop %v981
    %v998 = vrsqrt.pop %v982
    %v999 = vrsqrt.pop %v983
    %v1000 = vrsqrt.pop %v984
    %v1001 = vrsqrt.pop %v985
    %v1002 = vrsqrt.pop %v986
    %v1003 = vrsqrt.pop %v987
    %v1004 = vrsqrt.pop %v988
    %v1005 = vrsqrt.pop %v989
    %v1006 = vrsqrt.pop %v990
    %v1007 = vrsqrt.pop %v991
    %v1008 = vrsqrt.pop %v992
    %v1009 = vrsqrt.pop %v993
    %v1010 = vrsqrt.pop %v994
    %v1011 = vrsqrt.pop %v995
    %v1012 = vmul.f32 %v820, %v996
    %v1013 = vmul.f32 %v821, %v997
    %v1014 = vmul.f32 %v822, %v998
    %v1015 = vmul.f32 %v823, %v999
    %v1016 = vmul.f32 %v824, %v1000
    %v1017 = vmul.f32 %v825, %v1001
    %v1018 = vmul.f32 %v826, %v1002
    %v1019 = vmul.f32 %v827, %v1003
    %v1020 = vmul.f32 %v828, %v1004
    %v1021 = vmul.f32 %v829, %v1005
    %v1022 = vmul.f32 %v830, %v1006
    %v1023 = vmul.f32 %v831, %v1007
    %v1024 = vmul.f32 %v832, %v1008
    %v1025 = vmul.f32 %v833, %v1009
    %v1026 = vmul.f32 %v834, %v1010
    %v1027 = vmul.f32 %v835, %v1011
    %v1028 = vld [vmem:[#allocation4] sm:$0xff]
    %v1029 = vld [vmem:[#allocation4 + $0x8] sm:$0xff]
    %v1032 = vlaneseq
    %v1033 = vshrl.u32 %v1032, 7
    %v1034 = vsub.s32 0, %v1033
    %v1035 = vrot.slane %v1028, %v1034
    %v1036 = vlaneseq
    %v1037 = vshrl.u32 %v1036, 7
    %v1038 = vsub.s32 1, %v1037
    %v1039 = vrot.slane %v1028, %v1038
    %v1040 = vlaneseq
    %v1041 = vshrl.u32 %v1040, 7
    %v1042 = vsub.s32 2, %v1041
    %v1043 = vrot.slane %v1028, %v1042
    %v1044 = vlaneseq
    %v1045 = vshrl.u32 %v1044, 7
    %v1046 = vsub.s32 3, %v1045
    %v1047 = vrot.slane %v1028, %v1046
    %v1048 = vlaneseq
    %v1049 = vshrl.u32 %v1048, 7
    %v1050 = vsub.s32 4, %v1049
    %v1051 = vrot.slane %v1028, %v1050
    %v1052 = vlaneseq
    %v1053 = vshrl.u32 %v1052, 7
    %v1054 = vsub.s32 5, %v1053
    %v1055 = vrot.slane %v1028, %v1054
    %v1056 = vlaneseq
    %v1057 = vshrl.u32 %v1056, 7
    %v1058 = vsub.s32 6, %v1057
    %v1059 = vrot.slane %v1028, %v1058
    %v1060 = vlaneseq
    %v1061 = vshrl.u32 %v1060, 7
    %v1062 = vsub.s32 7, %v1061
    %v1063 = vrot.slane %v1028, %v1062
    %v1064 = vlaneseq
    %v1065 = vshrl.u32 %v1064, 7
    %v1066 = vsub.s32 0, %v1065
    %v1067 = vrot.slane %v1029, %v1066
    %v1068 = vlaneseq
    %v1069 = vshrl.u32 %v1068, 7
    %v1070 = vsub.s32 1, %v1069
    %v1071 = vrot.slane %v1029, %v1070
    %v1072 = vlaneseq
    %v1073 = vshrl.u32 %v1072, 7
    %v1074 = vsub.s32 2, %v1073
    %v1075 = vrot.slane %v1029, %v1074
    %v1076 = vlaneseq
    %v1077 = vshrl.u32 %v1076, 7
    %v1078 = vsub.s32 3, %v1077
    %v1079 = vrot.slane %v1029, %v1078
    %v1080 = vlaneseq
    %v1081 = vshrl.u32 %v1080, 7
    %v1082 = vsub.s32 4, %v1081
    %v1083 = vrot.slane %v1029, %v1082
    %v1084 = vlaneseq
    %v1085 = vshrl.u32 %v1084, 7
    %v1086 = vsub.s32 5, %v1085
    %v1087 = vrot.slane %v1029, %v1086
    %v1088 = vlaneseq
    %v1089 = vshrl.u32 %v1088, 7
    %v1090 = vsub.s32 6, %v1089
    %v1091 = vrot.slane %v1029, %v1090
    %v1092 = vlaneseq
    %v1093 = vshrl.u32 %v1092, 7
    %v1094 = vsub.s32 7, %v1093
    %v1095 = vrot.slane %v1029, %v1094
    %v1112 = vmul.f32 %v1012, %v1035
    %v1113 = vmul.f32 %v1013, %v1039
    %v1114 = vmul.f32 %v1014, %v1043
    %v1115 = vmul.f32 %v1015, %v1047
    %v1116 = vmul.f32 %v1016, %v1051
    %v1117 = vmul.f32 %v1017, %v1055
    %v1118 = vmul.f32 %v1018, %v1059
    %v1119 = vmul.f32 %v1019, %v1063
    %v1120 = vmul.f32 %v1020, %v1067
    %v1121 = vmul.f32 %v1021, %v1071
    %v1122 = vmul.f32 %v1022, %v1075
    %v1123 = vmul.f32 %v1023, %v1079
    %v1124 = vmul.f32 %v1024, %v1083
    %v1125 = vmul.f32 %v1025, %v1087
    %v1126 = vmul.f32 %v1026, %v1091
    %v1127 = vmul.f32 %v1027, %v1095
    %v1128 = vld [vmem:[#allocation6] sm:$0xff]
    %v1129 = vld [vmem:[#allocation6 + $0x8] sm:$0xff]
    %v1132 = vlaneseq
    %v1133 = vshrl.u32 %v1132, 7
    %v1134 = vsub.s32 0, %v1133
    %v1135 = vrot.slane %v1128, %v1134
    %v1136 = vlaneseq
    %v1137 = vshrl.u32 %v1136, 7
    %v1138 = vsub.s32 1, %v1137
    %v1139 = vrot.slane %v1128, %v1138
    %v1140 = vlaneseq
    %v1141 = vshrl.u32 %v1140, 7
    %v1142 = vsub.s32 2, %v1141
    %v1143 = vrot.slane %v1128, %v1142
    %v1144 = vlaneseq
    %v1145 = vshrl.u32 %v1144, 7
    %v1146 = vsub.s32 3, %v1145
    %v1147 = vrot.slane %v1128, %v1146
    %v1148 = vlaneseq
    %v1149 = vshrl.u32 %v1148, 7
    %v1150 = vsub.s32 4, %v1149
    %v1151 = vrot.slane %v1128, %v1150
    %v1152 = vlaneseq
    %v1153 = vshrl.u32 %v1152, 7
    %v1154 = vsub.s32 5, %v1153
    %v1155 = vrot.slane %v1128, %v1154
    %v1156 = vlaneseq
    %v1157 = vshrl.u32 %v1156, 7
    %v1158 = vsub.s32 6, %v1157
    %v1159 = vrot.slane %v1128, %v1158
    %v1160 = vlaneseq
    %v1161 = vshrl.u32 %v1160, 7
    %v1162 = vsub.s32 7, %v1161
    %v1163 = vrot.slane %v1128, %v1162
    %v1164 = vlaneseq
    %v1165 = vshrl.u32 %v1164, 7
    %v1166 = vsub.s32 0, %v1165
    %v1167 = vrot.slane %v1129, %v1166
    %v1168 = vlaneseq
    %v1169 = vshrl.u32 %v1168, 7
    %v1170 = vsub.s32 1, %v1169
    %v1171 = vrot.slane %v1129, %v1170
    %v1172 = vlaneseq
    %v1173 = vshrl.u32 %v1172, 7
    %v1174 = vsub.s32 2, %v1173
    %v1175 = vrot.slane %v1129, %v1174
    %v1176 = vlaneseq
    %v1177 = vshrl.u32 %v1176, 7
    %v1178 = vsub.s32 3, %v1177
    %v1179 = vrot.slane %v1129, %v1178
    %v1180 = vlaneseq
    %v1181 = vshrl.u32 %v1180, 7
    %v1182 = vsub.s32 4, %v1181
    %v1183 = vrot.slane %v1129, %v1182
    %v1184 = vlaneseq
    %v1185 = vshrl.u32 %v1184, 7
    %v1186 = vsub.s32 5, %v1185
    %v1187 = vrot.slane %v1129, %v1186
    %v1188 = vlaneseq
    %v1189 = vshrl.u32 %v1188, 7
    %v1190 = vsub.s32 6, %v1189
    %v1191 = vrot.slane %v1129, %v1190
    %v1192 = vlaneseq
    %v1193 = vshrl.u32 %v1192, 7
    %v1194 = vsub.s32 7, %v1193
    %v1195 = vrot.slane %v1129, %v1194
    %v1212 = vadd.f32 %v1112, %v1135
    %v1213 = vadd.f32 %v1113, %v1139
    %v1214 = vadd.f32 %v1114, %v1143
    %v1215 = vadd.f32 %v1115, %v1147
    %v1216 = vadd.f32 %v1116, %v1151
    %v1217 = vadd.f32 %v1117, %v1155
    %v1218 = vadd.f32 %v1118, %v1159
    %v1219 = vadd.f32 %v1119, %v1163
    %v1220 = vadd.f32 %v1120, %v1167
    %v1221 = vadd.f32 %v1121, %v1171
    %v1222 = vadd.f32 %v1122, %v1175
    %v1223 = vadd.f32 %v1123, %v1179
    %v1224 = vadd.f32 %v1124, %v1183
    %v1225 = vadd.f32 %v1125, %v1187
    %v1226 = vadd.f32 %v1126, %v1191
    %v1227 = vadd.f32 %v1127, %v1195
    %v1228 = vmul.f32 %v1220, 0.5
    %v1229 = vmul.f32 %v1221, 0.5
    %v1230 = vmul.f32 %v1222, 0.5
    %v1231 = vmul.f32 %v1223, 0.5
    %v1232 = vmul.f32 %v1224, 0.5
    %v1233 = vmul.f32 %v1225, 0.5
    %v1234 = vmul.f32 %v1226, 0.5
    %v1235 = vmul.f32 %v1227, 0.5
    %v1236 = vtanh.pop %v1228
    %v1237 = vtanh.pop %v1229
    %v1238 = vtanh.pop %v1230
    %v1239 = vtanh.pop %v1231
    %v1240 = vtanh.pop %v1232
    %v1241 = vtanh.pop %v1233
    %v1242 = vtanh.pop %v1234
    %v1243 = vtanh.pop %v1235
    %v1244 = vadd.f32 %v1236, 1.0
    %v1245 = vadd.f32 %v1237, 1.0
    %v1246 = vadd.f32 %v1238, 1.0
    %v1247 = vadd.f32 %v1239, 1.0
    %v1248 = vadd.f32 %v1240, 1.0
    %v1249 = vadd.f32 %v1241, 1.0
    %v1250 = vadd.f32 %v1242, 1.0
    %v1251 = vadd.f32 %v1243, 1.0
    %v1252 = vmul.f32 %v1244, 0.5
    %v1253 = vmul.f32 %v1245, 0.5
    %v1254 = vmul.f32 %v1246, 0.5
    %v1255 = vmul.f32 %v1247, 0.5
    %v1256 = vmul.f32 %v1248, 0.5
    %v1257 = vmul.f32 %v1249, 0.5
    %v1258 = vmul.f32 %v1250, 0.5
    %v1259 = vmul.f32 %v1251, 0.5
    %v1260 = vmul.f32 %v1212, %v1252
    %v1261 = vmul.f32 %v1213, %v1253
    %v1262 = vmul.f32 %v1214, %v1254
    %v1263 = vmul.f32 %v1215, %v1255
    %v1264 = vmul.f32 %v1216, %v1256
    %v1265 = vmul.f32 %v1217, %v1257
    %v1266 = vmul.f32 %v1218, %v1258
    %v1267 = vmul.f32 %v1219, %v1259
    %v1276 = vcombine.low %v1260, %v1261
    %v1277 = vcombine.low %v1262, %v1263
    %v1279 = vunpack.c.l.s4 1983009808
    %v1280 = vunpack.c.0.s8 %v1279
    %v1281 = vlaneseq
    %v1282 = vshrl.u32 %v1281, 7
    %v1283 = vsub.s32 %v1280, %v1282
    %v1284 = vrot.slane %v1276, %v1283
    %v1286 = vunpack.c.l.s4 1983009808
    %v1287 = vunpack.c.0.s8 %v1286
    %v1288 = vlaneseq
    %v1289 = vshrl.u32 %v1288, 7
    %v1290 = vsub.s32 %v1287, %v1289
    %v1291 = vrot.slane %v1277, %v1290
    %v1292 = vcombine.low %v1284, %v1291
    %v1293 = vcombine.low %v1264, %v1265
    %v1294 = vcombine.low %v1266, %v1267
    %v1296 = vunpack.c.l.s4 1983009808
    %v1297 = vunpack.c.0.s8 %v1296
    %v1298 = vlaneseq
    %v1299 = vshrl.u32 %v1298, 7
    %v1300 = vsub.s32 %v1297, %v1299
    %v1301 = vrot.slane %v1293, %v1300
    %v1303 = vunpack.c.l.s4 1983009808
    %v1304 = vunpack.c.0.s8 %v1303
    %v1305 = vlaneseq
    %v1306 = vshrl.u32 %v1305, 7
    %v1307 = vsub.s32 %v1304, %v1306
    %v1308 = vrot.slane %v1294, %v1307
    %v1309 = vcombine.low %v1301, %v1308
    %1312 = vst [vmem:[%s4] sm:$0xff] %v1292
    %1313 = vst [vmem:[%s4 + $0x8] sm:$0xff] %v1309
    // Predicated region
    $region30: #{init_stage_g_forward.5} parent=1 // pred_check
      _
    $region31: #{init_stage_g_forward.5} parent=1 // pred_check_branch
      %1315 = sbr.rel (0) target = $region33
    $region32: #{init_stage_g_forward.5} parent=1 // pred_region
      _
    $region33: #{init_stage_g_forward.5} parent=1 // pred_fallthru
      _
    // Predicated region
    $region34: #{init_stage_g_forward.5} parent=1 // pred_check
      _
    $region35: #{init_stage_g_forward.5} parent=1 // pred_check_branch
      %1317 = sbr.rel (0) target = $region37
    $region36: #{init_stage_g_forward.5} parent=1 // pred_region
      _
    $region37: #{init_stage_g_forward.5} parent=1 // pred_fallthru
      _
    %1318 = vsyncpa [#allocation3], 1
    %1319 = vsyncpa [#allocation5], 1

// kernel: init_stage_g_forward.6
$region0: #{init_stage_g_forward.6}
  #allocation0 [shape = 'u32[]', space=smem, size = 0x4, offset = 0x4, fixed_abs, tag = 'smem constant byte address 0x4 - core index']
  #allocation1 [shape = 'u32[144,128]{1,0:T(1,128)}', space=vmem, size = 0x12000, scoped, tag = 'internal scratch']
  %s0 = inlined_call_operand.vmem [shape: f32[576,128], index: 0, kind: input, shape index: {}]
  %s1 = inlined_call_operand.vmem [shape: f32[64,576], index: 1, kind: input, shape index: {}]
  %s2 = inlined_call_operand.vmem [shape: f32[64,1], index: 2, kind: input, shape index: {}]
  %s3 = inlined_call_operand.vmem [shape: f32[64,1], index: 3, kind: input, shape index: {}]
  %s4 = inlined_call_operand.vmem [shape: f32[32,128], index: 4, kind: output, shape index: {}]
  %s5 = sld [smem:[#allocation0]]
  $region26: #{init_stage_g_forward.6} parent=0
    _
  %s7 = ssub.s32 1, %s5
  %s8 = scalar_select 0, %s7, %s5
  // Predicated region
  $region2: #{init_stage_g_forward.6} parent=0 // pred_check
    _
  $region3: #{init_stage_g_forward.6} parent=0 // pred_check_branch
    %10 = sbr.rel (0) target = $region5
  $region4: #{init_stage_g_forward.6} parent=0 // pred_region
    _
  $region5: #{init_stage_g_forward.6} parent=0 // pred_fallthru
    _
  // Predicated region
  $region6: #{init_stage_g_forward.6} parent=0 // pred_check
    _
  $region7: #{init_stage_g_forward.6} parent=0 // pred_check_branch
    %12 = sbr.rel (0) target = $region9
  $region8: #{init_stage_g_forward.6} parent=0 // pred_region
    _
  $region9: #{init_stage_g_forward.6} parent=0 // pred_fallthru
    _
  // Predicated region
  $region10: #{init_stage_g_forward.6} parent=0 // pred_check
    _
  $region11: #{init_stage_g_forward.6} parent=0 // pred_check_branch
    %14 = sbr.rel (0) target = $region13
  $region12: #{init_stage_g_forward.6} parent=0 // pred_region
    _
  $region13: #{init_stage_g_forward.6} parent=0 // pred_fallthru
    _
  // Predicated region
  $region14: #{init_stage_g_forward.6} parent=0 // pred_check
    _
  $region15: #{init_stage_g_forward.6} parent=0 // pred_check_branch
    %16 = sbr.rel (0) target = $region17
  $region16: #{init_stage_g_forward.6} parent=0 // pred_region
    _
  $region17: #{init_stage_g_forward.6} parent=0 // pred_fallthru
    _
  %v17 = vld [vmem:[%s1] sm:$0xff]
  %v18 = vld [vmem:[%s1 + $0x8] sm:$0xff]
  %v19 = vld [vmem:[%s1 + $0x10] sm:$0xff]
  %v20 = vld [vmem:[%s1 + $0x18] sm:$0xff]
  %v21 = vld [vmem:[%s1 + $0x20] sm:$0xff]
  %v22 = vld [vmem:[%s1 + $0x28] sm:$0xff]
  %v23 = vld [vmem:[%s1 + $0x30] sm:$0xff]
  %v24 = vld [vmem:[%s1 + $0x38] sm:$0xff]
  %v25 = vld [vmem:[%s1 + $0x40] sm:$0xff]
  %v26 = vld [vmem:[%s1 + $0x48] sm:$0xff]
  %v27 = vld [vmem:[%s1 + $0x50] sm:$0xff]
  %v28 = vld [vmem:[%s1 + $0x58] sm:$0xff]
  %v29 = vld [vmem:[%s1 + $0x60] sm:$0xff]
  %v30 = vld [vmem:[%s1 + $0x68] sm:$0xff]
  %v31 = vld [vmem:[%s1 + $0x70] sm:$0xff]
  %v32 = vld [vmem:[%s1 + $0x78] sm:$0xff]
  %v33 = vld [vmem:[%s1 + $0x80] sm:$0xff]
  %v34 = vld [vmem:[%s1 + $0x88] sm:$0xff]
  %v35 = vld [vmem:[%s1 + $0x90] sm:$0xff]
  %v36 = vld [vmem:[%s1 + $0x98] sm:$0xff]
  %v37 = vld [vmem:[%s1 + $0xa0] sm:$0xff]
  %v38 = vld [vmem:[%s1 + $0xa8] sm:$0xff]
  %v39 = vld [vmem:[%s1 + $0xb0] sm:$0xff]
  %v40 = vld [vmem:[%s1 + $0xb8] sm:$0xff]
  %v41 = vld [vmem:[%s1 + $0xc0] sm:$0xff]
  %v42 = vld [vmem:[%s1 + $0xc8] sm:$0xff]
  %v43 = vld [vmem:[%s1 + $0xd0] sm:$0xff]
  %v44 = vld [vmem:[%s1 + $0xd8] sm:$0xff]
  %v45 = vld [vmem:[%s1 + $0xe0] sm:$0xff]
  %v46 = vld [vmem:[%s1 + $0xe8] sm:$0xff]
  %v47 = vld [vmem:[%s1 + $0xf0] sm:$0xff]
  %v48 = vld [vmem:[%s1 + $0xf8] sm:$0xff]
  %v49 = vld [vmem:[%s1 + $0x100] sm:$0xff]
  %v50 = vld [vmem:[%s1 + $0x108] sm:$0xff]
  %v51 = vld [vmem:[%s1 + $0x110] sm:$0xff]
  %v52 = vld [vmem:[%s1 + $0x118] sm:$0xff]
  %v53 = vld [vmem:[%s1 + $0x120] sm:$0xff]
  %v54 = vld [vmem:[%s1 + $0x128] sm:$0xff]
  %v55 = vld [vmem:[%s1 + $0x130] sm:$0xff]
  %v56 = vld [vmem:[%s1 + $0x138] sm:$0xff]
  %v57 = vld [vmem:[%s0] sm:$0xff]
  %v58 = vld [vmem:[%s0 + $0x8] sm:$0xff]
  %v59 = vld [vmem:[%s0 + $0x10] sm:$0xff]
  %v60 = vld [vmem:[%s0 + $0x18] sm:$0xff]
  %v61 = vld [vmem:[%s0 + $0x20] sm:$0xff]
  %v62 = vld [vmem:[%s0 + $0x28] sm:$0xff]
  %v63 = vld [vmem:[%s0 + $0x30] sm:$0xff]
  %v64 = vld [vmem:[%s0 + $0x38] sm:$0xff]
  %v65 = vld [vmem:[%s0 + $0x40] sm:$0xff]
  %v66 = vld [vmem:[%s0 + $0x48] sm:$0xff]
  %v67 = vld [vmem:[%s0 + $0x50] sm:$0xff]
  %v68 = vld [vmem:[%s0 + $0x58] sm:$0xff]
  %v69 = vld [vmem:[%s0 + $0x60] sm:$0xff]
  %v70 = vld [vmem:[%s0 + $0x68] sm:$0xff]
  %v71 = vld [vmem:[%s0 + $0x70] sm:$0xff]
  %v72 = vld [vmem:[%s0 + $0x78] sm:$0xff]
  %v73 = vld [vmem:[%s0 + $0x80] sm:$0xff]
  %v74 = vld [vmem:[%s0 + $0x88] sm:$0xff]
  %v75 = vld [vmem:[%s0 + $0x90] sm:$0xff]
  %v76 = vld [vmem:[%s0 + $0x98] sm:$0xff]
  %v77 = vld [vmem:[%s0 + $0xa0] sm:$0xff]
  %v78 = vld [vmem:[%s0 + $0xa8] sm:$0xff]
  %v79 = vld [vmem:[%s0 + $0xb0] sm:$0xff]
  %v80 = vld [vmem:[%s0 + $0xb8] sm:$0xff]
  %v81 = vld [vmem:[%s0 + $0xc0] sm:$0xff]
  %v82 = vld [vmem:[%s0 + $0xc8] sm:$0xff]
  %v83 = vld [vmem:[%s0 + $0xd0] sm:$0xff]
  %v84 = vld [vmem:[%s0 + $0xd8] sm:$0xff]
  %v85 = vld [vmem:[%s0 + $0xe0] sm:$0xff]
  %v86 = vld [vmem:[%s0 + $0xe8] sm:$0xff]
  %v87 = vld [vmem:[%s0 + $0xf0] sm:$0xff]
  %v88 = vld [vmem:[%s0 + $0xf8] sm:$0xff]
  %v89 = vld [vmem:[%s0 + $0x100] sm:$0xff]
  %v90 = vld [vmem:[%s0 + $0x108] sm:$0xff]
  %v91 = vld [vmem:[%s0 + $0x110] sm:$0xff]
  %v92 = vld [vmem:[%s0 + $0x118] sm:$0xff]
  %v93 = vld [vmem:[%s0 + $0x120] sm:$0xff]
  %v94 = vld [vmem:[%s0 + $0x128] sm:$0xff]
  %v95 = vld [vmem:[%s0 + $0x130] sm:$0xff]
  %v96 = vld [vmem:[%s0 + $0x138] sm:$0xff]
  %v97 = vld [vmem:[%s0 + $0x140] sm:$0xff]
  %v98 = vld [vmem:[%s0 + $0x148] sm:$0xff]
  %v99 = vld [vmem:[%s0 + $0x150] sm:$0xff]
  %v100 = vld [vmem:[%s0 + $0x158] sm:$0xff]
  %v101 = vld [vmem:[%s0 + $0x160] sm:$0xff]
  %v102 = vld [vmem:[%s0 + $0x168] sm:$0xff]
  %v103 = vld [vmem:[%s0 + $0x170] sm:$0xff]
  %v104 = vld [vmem:[%s0 + $0x178] sm:$0xff]
  %v105 = vld [vmem:[%s0 + $0x180] sm:$0xff]
  %v106 = vld [vmem:[%s0 + $0x188] sm:$0xff]
  %v107 = vld [vmem:[%s0 + $0x190] sm:$0xff]
  %v108 = vld [vmem:[%s0 + $0x198] sm:$0xff]
  %v109 = vld [vmem:[%s0 + $0x1a0] sm:$0xff]
  %v110 = vld [vmem:[%s0 + $0x1a8] sm:$0xff]
  %v111 = vld [vmem:[%s0 + $0x1b0] sm:$0xff]
  %v112 = vld [vmem:[%s0 + $0x1b8] sm:$0xff]
  %v113 = vld [vmem:[%s0 + $0x1c0] sm:$0xff]
  %v114 = vld [vmem:[%s0 + $0x1c8] sm:$0xff]
  %v115 = vld [vmem:[%s0 + $0x1d0] sm:$0xff]
  %v116 = vld [vmem:[%s0 + $0x1d8] sm:$0xff]
  %v117 = vld [vmem:[%s0 + $0x1e0] sm:$0xff]
  %v118 = vld [vmem:[%s0 + $0x1e8] sm:$0xff]
  %v119 = vld [vmem:[%s0 + $0x1f0] sm:$0xff]
  %v120 = vld [vmem:[%s0 + $0x1f8] sm:$0xff]
  %v121 = vld [vmem:[%s0 + $0x200] sm:$0xff]
  %v122 = vld [vmem:[%s0 + $0x208] sm:$0xff]
  %v123 = vld [vmem:[%s0 + $0x210] sm:$0xff]
  %v124 = vld [vmem:[%s0 + $0x218] sm:$0xff]
  %v125 = vld [vmem:[%s0 + $0x220] sm:$0xff]
  %v126 = vld [vmem:[%s0 + $0x228] sm:$0xff]
  %v127 = vld [vmem:[%s0 + $0x230] sm:$0xff]
  %v128 = vld [vmem:[%s0 + $0x238] sm:$0xff]
  %vm129 = vcmask 523264
  %v131 = vsel %vm129, %v21, 0
  %v134 = vsel %vm129, %v26, 0
  %v137 = vsel %vm129, %v31, 0
  %v140 = vsel %vm129, %v36, 0
  %v143 = vsel %vm129, %v41, 0
  %v146 = vsel %vm129, %v46, 0
  %v149 = vsel %vm129, %v51, 0
  %v152 = vsel %vm129, %v56, 0
  %154 = vmatprep.subr.mxu0 0.0
  %155 = vmatpush1.msra.mxu0 %v72
  %156 = vmatprep.subr.mxu0 0.0
  %157 = vmatpush1.msra.mxu0 %v71
  %158 = vmatprep.subr.mxu0 0.0
  %159 = vmatpush1.msra.mxu0 %v70
  %160 = vmatprep.subr.mxu0 0.0
  %161 = vmatpush1.msra.mxu0 %v69
  %162 = vmatprep.subr.mxu0 0.0
  %163 = vmatpush1.msra.mxu0 %v68
  %164 = vmatprep.subr.mxu0 0.0
  %165 = vmatpush1.msra.mxu0 %v67
  %166 = vmatprep.subr.mxu0 0.0
  %167 = vmatpush1.msra.mxu0 %v66
  %168 = vmatprep.subr.mxu0 0.0
  %169 = vmatpush1.msra.mxu0 %v65
  %170 = vmatprep.subr.mxu0 0.0
  %171 = vmatpush1.msra.mxu0 %v64
  %172 = vmatprep.subr.mxu0 0.0
  %173 = vmatpush1.msra.mxu0 %v63
  %174 = vmatprep.subr.mxu0 0.0
  %175 = vmatpush1.msra.mxu0 %v62
  %176 = vmatprep.subr.mxu0 0.0
  %177 = vmatpush1.msra.mxu0 %v61
  %178 = vmatprep.subr.mxu0 0.0
  %179 = vmatpush1.msra.mxu0 %v60
  %180 = vmatprep.subr.mxu0 0.0
  %181 = vmatpush1.msra.mxu0 %v59
  %182 = vmatprep.subr.mxu0 0.0
  %183 = vmatpush1.msra.mxu0 %v58
  %184 = vmatprep.subr.mxu0 0.0
  %185 = vmatpush1.msra.mxu0 %v57
  %186 = vmatprep.subr.mxu0 0.0
  %187 = vmatpush2.msra.mxu0 %v88
  %188 = vmatprep.subr.mxu0 0.0
  %189 = vmatpush2.msra.mxu0 %v87
  %190 = vmatprep.subr.mxu0 0.0
  %191 = vmatpush2.msra.mxu0 %v86
  %192 = vmatprep.subr.mxu0 0.0
  %193 = vmatpush2.msra.mxu0 %v85
  %194 = vmatprep.subr.mxu0 0.0
  %195 = vmatpush2.msra.mxu0 %v84
  %196 = vmatprep.subr.mxu0 0.0
  %197 = vmatpush2.msra.mxu0 %v83
  %198 = vmatprep.subr.mxu0 0.0
  %199 = vmatpush2.msra.mxu0 %v82
  %200 = vmatprep.subr.mxu0 0.0
  %201 = vmatpush2.msra.mxu0 %v81
  %202 = vmatprep.subr.mxu0 0.0
  %203 = vmatpush2.msra.mxu0 %v80
  %204 = vmatprep.subr.mxu0 0.0
  %205 = vmatpush2.msra.mxu0 %v79
  %206 = vmatprep.subr.mxu0 0.0
  %207 = vmatpush2.msra.mxu0 %v78
  %208 = vmatprep.subr.mxu0 0.0
  %209 = vmatpush2.msra.mxu0 %v77
  %210 = vmatprep.subr.mxu0 0.0
  %211 = vmatpush2.msra.mxu0 %v76
  %212 = vmatprep.subr.mxu0 0.0
  %213 = vmatpush2.msra.mxu0 %v75
  %214 = vmatprep.subr.mxu0 0.0
  %215 = vmatpush2.msra.mxu0 %v74
  %216 = vmatprep.subr.mxu0 0.0
  %217 = vmatpush2.msra.mxu0 %v73
  %218 = vmatprep.mubr.f32.mxu0 %v18
  %219 = vmatmul.mubr.f32.gmra.mxu0 %v17
  %v220 = vpop.f32.mrf.mxu0
  %v221 = vadd.f32 0.0, %v220
  %v222 = vpop.f32.mrf.mxu0
  %223 = vmatprep.mubr.f32.mxu0 %v23
  %224 = vmatmul.mubr.f32.gmra.mxu0 %v22
  %v225 = vpop.f32.mrf.mxu0
  %v226 = vadd.f32 0.0, %v225
  %v227 = vpop.f32.mrf.mxu0
  %228 = vmatprep.mubr.f32.mxu0 %v28
  %229 = vmatmul.mubr.f32.gmra.mxu0 %v27
  %v230 = vpop.f32.mrf.mxu0
  %v231 = vadd.f32 0.0, %v230
  %v232 = vpop.f32.mrf.mxu0
  %233 = vmatprep.mubr.f32.mxu0 %v33
  %234 = vmatmul.mubr.f32.gmra.mxu0 %v32
  %v235 = vpop.f32.mrf.mxu0
  %v236 = vadd.f32 0.0, %v235
  %v237 = vpop.f32.mrf.mxu0
  %238 = vmatprep.mubr.f32.mxu0 %v38
  %239 = vmatmul.mubr.f32.gmra.mxu0 %v37
  %v240 = vpop.f32.mrf.mxu0
  %v241 = vadd.f32 0.0, %v240
  %v242 = vpop.f32.mrf.mxu0
  %243 = vmatprep.mubr.f32.mxu0 %v43
  %244 = vmatmul.mubr.f32.gmra.mxu0 %v42
  %v245 = vpop.f32.mrf.mxu0
  %v246 = vadd.f32 0.0, %v245
  %v247 = vpop.f32.mrf.mxu0
  %248 = vmatprep.mubr.f32.mxu0 %v48
  %249 = vmatmul.mubr.f32.gmra.mxu0 %v47
  %v250 = vpop.f32.mrf.mxu0
  %v251 = vadd.f32 0.0, %v250
  %v252 = vpop.f32.mrf.mxu0
  %253 = vmatprep.mubr.f32.mxu0 %v53
  %254 = vmatmul.mubr.f32.gmra.mxu0 %v52
  %v255 = vpop.f32.mrf.mxu0
  %v256 = vadd.f32 0.0, %v255
  %v257 = vpop.f32.mrf.mxu0
  %258 = vdwg.mxu0
  %259 = vmatprep.subr.mxu0 0.0
  %260 = vmatpush1.msra.mxu0 %v104
  %261 = vmatprep.subr.mxu0 0.0
  %262 = vmatpush1.msra.mxu0 %v103
  %263 = vmatprep.subr.mxu0 0.0
  %264 = vmatpush1.msra.mxu0 %v102
  %265 = vmatprep.subr.mxu0 0.0
  %266 = vmatpush1.msra.mxu0 %v101
  %267 = vmatprep.subr.mxu0 0.0
  %268 = vmatpush1.msra.mxu0 %v100
  %269 = vmatprep.subr.mxu0 0.0
  %270 = vmatpush1.msra.mxu0 %v99
  %271 = vmatprep.subr.mxu0 0.0
  %272 = vmatpush1.msra.mxu0 %v98
  %273 = vmatprep.subr.mxu0 0.0
  %274 = vmatpush1.msra.mxu0 %v97
  %275 = vmatprep.subr.mxu0 0.0
  %276 = vmatpush1.msra.mxu0 %v96
  %277 = vmatprep.subr.mxu0 0.0
  %278 = vmatpush1.msra.mxu0 %v95
  %279 = vmatprep.subr.mxu0 0.0
  %280 = vmatpush1.msra.mxu0 %v94
  %281 = vmatprep.subr.mxu0 0.0
  %282 = vmatpush1.msra.mxu0 %v93
  %283 = vmatprep.subr.mxu0 0.0
  %284 = vmatpush1.msra.mxu0 %v92
  %285 = vmatprep.subr.mxu0 0.0
  %286 = vmatpush1.msra.mxu0 %v91
  %287 = vmatprep.subr.mxu0 0.0
  %288 = vmatpush1.msra.mxu0 %v90
  %289 = vmatprep.subr.mxu0 0.0
  %290 = vmatpush1.msra.mxu0 %v89
  %291 = vmatprep.subr.mxu0 0.0
  %292 = vmatpush2.msra.mxu0 %v120
  %293 = vmatprep.subr.mxu0 0.0
  %294 = vmatpush2.msra.mxu0 %v119
  %295 = vmatprep.subr.mxu0 0.0
  %296 = vmatpush2.msra.mxu0 %v118
  %297 = vmatprep.subr.mxu0 0.0
  %298 = vmatpush2.msra.mxu0 %v117
  %299 = vmatprep.subr.mxu0 0.0
  %300 = vmatpush2.msra.mxu0 %v116
  %301 = vmatprep.subr.mxu0 0.0
  %302 = vmatpush2.msra.mxu0 %v115
  %303 = vmatprep.subr.mxu0 0.0
  %304 = vmatpush2.msra.mxu0 %v114
  %305 = vmatprep.subr.mxu0 0.0
  %306 = vmatpush2.msra.mxu0 %v113
  %307 = vmatprep.subr.mxu0 0.0
  %308 = vmatpush2.msra.mxu0 %v112
  %309 = vmatprep.subr.mxu0 0.0
  %310 = vmatpush2.msra.mxu0 %v111
  %311 = vmatprep.subr.mxu0 0.0
  %312 = vmatpush2.msra.mxu0 %v110
  %313 = vmatprep.subr.mxu0 0.0
  %314 = vmatpush2.msra.mxu0 %v109
  %315 = vmatprep.subr.mxu0 0.0
  %316 = vmatpush2.msra.mxu0 %v108
  %317 = vmatprep.subr.mxu0 0.0
  %318 = vmatpush2.msra.mxu0 %v107
  %319 = vmatprep.subr.mxu0 0.0
  %320 = vmatpush2.msra.mxu0 %v106
  %321 = vmatprep.subr.mxu0 0.0
  %322 = vmatpush2.msra.mxu0 %v105
  %323 = vmatprep.mubr.f32.mxu0 %v20
  %324 = vmatmul.mubr.f32.gmra.mxu0 %v19
  %v325 = vpop.f32.mrf.mxu0
  %v326 = vadd.f32 %v221, %v325
  %v327 = vpop.f32.mrf.mxu0
  %328 = vmatprep.mubr.f32.mxu0 %v25
  %329 = vmatmul.mubr.f32.gmra.mxu0 %v24
  %v330 = vpop.f32.mrf.mxu0
  %v331 = vadd.f32 %v226, %v330
  %v332 = vpop.f32.mrf.mxu0
  %333 = vmatprep.mubr.f32.mxu0 %v30
  %334 = vmatmul.mubr.f32.gmra.mxu0 %v29
  %v335 = vpop.f32.mrf.mxu0
  %v336 = vadd.f32 %v231, %v335
  %v337 = vpop.f32.mrf.mxu0
  %338 = vmatprep.mubr.f32.mxu0 %v35
  %339 = vmatmul.mubr.f32.gmra.mxu0 %v34
  %v340 = vpop.f32.mrf.mxu0
  %v341 = vadd.f32 %v236, %v340
  %v342 = vpop.f32.mrf.mxu0
  %343 = vmatprep.mubr.f32.mxu0 %v40
  %344 = vmatmul.mubr.f32.gmra.mxu0 %v39
  %v345 = vpop.f32.mrf.mxu0
  %v346 = vadd.f32 %v241, %v345
  %v347 = vpop.f32.mrf.mxu0
  %348 = vmatprep.mubr.f32.mxu0 %v45
  %349 = vmatmul.mubr.f32.gmra.mxu0 %v44
  %v350 = vpop.f32.mrf.mxu0
  %v351 = vadd.f32 %v246, %v350
  %v352 = vpop.f32.mrf.mxu0
  %353 = vmatprep.mubr.f32.mxu0 %v50
  %354 = vmatmul.mubr.f32.gmra.mxu0 %v49
  %v355 = vpop.f32.mrf.mxu0
  %v356 = vadd.f32 %v251, %v355
  %v357 = vpop.f32.mrf.mxu0
  %358 = vmatprep.mubr.f32.mxu0 %v55
  %359 = vmatmul.mubr.f32.gmra.mxu0 %v54
  %v360 = vpop.f32.mrf.mxu0
  %v361 = vadd.f32 %v256, %v360
  %v362 = vpop.f32.mrf.mxu0
  %363 = vdwg.mxu0
  %364 = vmatprep.subr.mxu0 0.0
  %365 = vmatpush1.msra.mxu0 0.0
  %366 = vmatprep.subr.mxu0 0.0
  %367 = vmatpush1.msra.mxu0 0.0
  %368 = vmatprep.subr.mxu0 0.0
  %369 = vmatpush1.msra.mxu0 0.0
  %370 = vmatprep.subr.mxu0 0.0
  %371 = vmatpush1.msra.mxu0 0.0
  %372 = vmatprep.subr.mxu0 0.0
  %373 = vmatpush1.msra.mxu0 0.0
  %374 = vmatprep.subr.mxu0 0.0
  %375 = vmatpush1.msra.mxu0 0.0
  %376 = vmatprep.subr.mxu0 0.0
  %377 = vmatpush1.msra.mxu0 0.0
  %378 = vmatprep.subr.mxu0 0.0
  %379 = vmatpush1.msra.mxu0 0.0
  %380 = vmatprep.subr.mxu0 0.0
  %381 = vmatpush1.msra.mxu0 %v128
  %382 = vmatprep.subr.mxu0 0.0
  %383 = vmatpush1.msra.mxu0 %v127
  %384 = vmatprep.subr.mxu0 0.0
  %385 = vmatpush1.msra.mxu0 %v126
  %386 = vmatprep.subr.mxu0 0.0
  %387 = vmatpush1.msra.mxu0 %v125
  %388 = vmatprep.subr.mxu0 0.0
  %389 = vmatpush1.msra.mxu0 %v124
  %390 = vmatprep.subr.mxu0 0.0
  %391 = vmatpush1.msra.mxu0 %v123
  %392 = vmatprep.subr.mxu0 0.0
  %393 = vmatpush1.msra.mxu0 %v122
  %394 = vmatprep.subr.mxu0 0.0
  %395 = vmatpush1.msra.mxu0 %v121
  %396 = vmatprep.subr.mxu0 0.0
  %397 = vmatpush2.msra.mxu0 0.0
  %398 = vmatprep.subr.mxu0 0.0
  %399 = vmatpush2.msra.mxu0 0.0
  %400 = vmatprep.subr.mxu0 0.0
  %401 = vmatpush2.msra.mxu0 0.0
  %402 = vmatprep.subr.mxu0 0.0
  %403 = vmatpush2.msra.mxu0 0.0
  %404 = vmatprep.subr.mxu0 0.0
  %405 = vmatpush2.msra.mxu0 0.0
  %406 = vmatprep.subr.mxu0 0.0
  %407 = vmatpush2.msra.mxu0 0.0
  %408 = vmatprep.subr.mxu0 0.0
  %409 = vmatpush2.msra.mxu0 0.0
  %410 = vmatprep.subr.mxu0 0.0
  %411 = vmatpush2.msra.mxu0 0.0
  %412 = vmatprep.subr.mxu0 0.0
  %413 = vmatpush2.msra.mxu0 0.0
  %414 = vmatprep.subr.mxu0 0.0
  %415 = vmatpush2.msra.mxu0 0.0
  %416 = vmatprep.subr.mxu0 0.0
  %417 = vmatpush2.msra.mxu0 0.0
  %418 = vmatprep.subr.mxu0 0.0
  %419 = vmatpush2.msra.mxu0 0.0
  %420 = vmatprep.subr.mxu0 0.0
  %421 = vmatpush2.msra.mxu0 0.0
  %422 = vmatprep.subr.mxu0 0.0
  %423 = vmatpush2.msra.mxu0 0.0
  %424 = vmatprep.subr.mxu0 0.0
  %425 = vmatpush2.msra.mxu0 0.0
  %426 = vmatprep.subr.mxu0 0.0
  %427 = vmatpush2.msra.mxu0 0.0
  %428 = vmatprep.mubr.f32.mxu0 0.0
  %429 = vmatmul.mubr.f32.gmra.mxu0 %v131
  %v430 = vpop.f32.mrf.mxu0
  %v431 = vadd.f32 %v326, %v430
  %v432 = vpop.f32.mrf.mxu0
  %433 = vmatprep.mubr.f32.mxu0 0.0
  %434 = vmatmul.mubr.f32.gmra.mxu0 %v134
  %v435 = vpop.f32.mrf.mxu0
  %v436 = vadd.f32 %v331, %v435
  %v437 = vpop.f32.mrf.mxu0
  %438 = vmatprep.mubr.f32.mxu0 0.0
  %439 = vmatmul.mubr.f32.gmra.mxu0 %v137
  %v440 = vpop.f32.mrf.mxu0
  %v441 = vadd.f32 %v336, %v440
  %v442 = vpop.f32.mrf.mxu0
  %443 = vmatprep.mubr.f32.mxu0 0.0
  %444 = vmatmul.mubr.f32.gmra.mxu0 %v140
  %v445 = vpop.f32.mrf.mxu0
  %v446 = vadd.f32 %v341, %v445
  %v447 = vpop.f32.mrf.mxu0
  %448 = vmatprep.mubr.f32.mxu0 0.0
  %449 = vmatmul.mubr.f32.gmra.mxu0 %v143
  %v450 = vpop.f32.mrf.mxu0
  %v451 = vadd.f32 %v346, %v450
  %v452 = vpop.f32.mrf.mxu0
  %453 = vmatprep.mubr.f32.mxu0 0.0
  %454 = vmatmul.mubr.f32.gmra.mxu0 %v146
  %v455 = vpop.f32.mrf.mxu0
  %v456 = vadd.f32 %v351, %v455
  %v457 = vpop.f32.mrf.mxu0
  %458 = vmatprep.mubr.f32.mxu0 0.0
  %459 = vmatmul.mubr.f32.gmra.mxu0 %v149
  %v460 = vpop.f32.mrf.mxu0
  %v461 = vadd.f32 %v356, %v460
  %v462 = vpop.f32.mrf.mxu0
  %463 = vmatprep.mubr.f32.mxu0 0.0
  %464 = vmatmul.mubr.f32.gmra.mxu0 %v152
  %v465 = vpop.f32.mrf.mxu0
  %v466 = vadd.f32 %v361, %v465
  %v467 = vpop.f32.mrf.mxu0
  %468 = vdwg.mxu0
  %469 = vadd.xlane.f32.xlu0 %v431
  %v470 = vpop.xlane.xlu0 %469
  %471 = vadd.xlane.f32.xlu0 %v436
  %v472 = vpop.xlane.xlu0 %471
  %473 = vadd.xlane.f32.xlu0 %v441
  %v474 = vpop.xlane.xlu0 %473
  %475 = vadd.xlane.f32.xlu0 %v446
  %v476 = vpop.xlane.xlu0 %475
  %477 = vadd.xlane.f32.xlu0 %v451
  %v478 = vpop.xlane.xlu0 %477
  %479 = vadd.xlane.f32.xlu0 %v456
  %v480 = vpop.xlane.xlu0 %479
  %481 = vadd.xlane.f32.xlu0 %v461
  %v482 = vpop.xlane.xlu0 %481
  %483 = vadd.xlane.f32.xlu0 %v466
  %v484 = vpop.xlane.xlu0 %483
  %v485 = vmul.f32 %v470, 0.0078125
  %v486 = vmul.f32 %v472, 0.0078125
  %v487 = vmul.f32 %v474, 0.0078125
  %v488 = vmul.f32 %v476, 0.0078125
  %v489 = vmul.f32 %v478, 0.0078125
  %v490 = vmul.f32 %v480, 0.0078125
  %v491 = vmul.f32 %v482, 0.0078125
  %v492 = vmul.f32 %v484, 0.0078125
  %v493 = vsub.f32 %v431, %v485
  %v494 = vsub.f32 %v436, %v486
  %v495 = vsub.f32 %v441, %v487
  %v496 = vsub.f32 %v446, %v488
  %v497 = vsub.f32 %v451, %v489
  %v498 = vsub.f32 %v456, %v490
  %v499 = vsub.f32 %v461, %v491
  %v500 = vsub.f32 %v466, %v492
  %v501 = vmul.f32 %v493, %v493
  %v502 = vmul.f32 %v494, %v494
  %v503 = vmul.f32 %v495, %v495
  %v504 = vmul.f32 %v496, %v496
  %v505 = vmul.f32 %v497, %v497
  %v506 = vmul.f32 %v498, %v498
  %v507 = vmul.f32 %v499, %v499
  %v508 = vmul.f32 %v500, %v500
  %509 = vadd.xlane.f32.xlu0 %v501
  %v510 = vpop.xlane.xlu0 %509
  %511 = vadd.xlane.f32.xlu0 %v502
  %v512 = vpop.xlane.xlu0 %511
  %513 = vadd.xlane.f32.xlu0 %v503
  %v514 = vpop.xlane.xlu0 %513
  %515 = vadd.xlane.f32.xlu0 %v504
  %v516 = vpop.xlane.xlu0 %515
  %517 = vadd.xlane.f32.xlu0 %v505
  %v518 = vpop.xlane.xlu0 %517
  %519 = vadd.xlane.f32.xlu0 %v506
  %v520 = vpop.xlane.xlu0 %519
  %521 = vadd.xlane.f32.xlu0 %v507
  %v522 = vpop.xlane.xlu0 %521
  %523 = vadd.xlane.f32.xlu0 %v508
  %v524 = vpop.xlane.xlu0 %523
  %v525 = vmul.f32 %v510, 0.0078125
  %v526 = vmul.f32 %v512, 0.0078125
  %v527 = vmul.f32 %v514, 0.0078125
  %v528 = vmul.f32 %v516, 0.0078125
  %v529 = vmul.f32 %v518, 0.0078125
  %v530 = vmul.f32 %v520, 0.0078125
  %v531 = vmul.f32 %v522, 0.0078125
  %v532 = vmul.f32 %v524, 0.0078125
  %v533 = vadd.f32 %v525, 1e-05
  %v534 = vadd.f32 %v526, 1e-05
  %v535 = vadd.f32 %v527, 1e-05
  %v536 = vadd.f32 %v528, 1e-05
  %v537 = vadd.f32 %v529, 1e-05
  %v538 = vadd.f32 %v530, 1e-05
  %v539 = vadd.f32 %v531, 1e-05
  %v540 = vadd.f32 %v532, 1e-05
  %v541 = vrsqrt.pop %v533
  %v542 = vrsqrt.pop %v534
  %v543 = vrsqrt.pop %v535
  %v544 = vrsqrt.pop %v536
  %v545 = vrsqrt.pop %v537
  %v546 = vrsqrt.pop %v538
  %v547 = vrsqrt.pop %v539
  %v548 = vrsqrt.pop %v540
  %v549 = vmul.f32 %v493, %v541
  %v550 = vmul.f32 %v494, %v542
  %v551 = vmul.f32 %v495, %v543
  %v552 = vmul.f32 %v496, %v544
  %v553 = vmul.f32 %v497, %v545
  %v554 = vmul.f32 %v498, %v546
  %v555 = vmul.f32 %v499, %v547
  %v556 = vmul.f32 %v500, %v548
  %v557 = vld [vmem:[%s2] sm:$0xff]
  %v558 = vld [vmem:[%s2 + $0x8] sm:$0xff]
  %v559 = vld [vmem:[%s2 + $0x10] sm:$0xff]
  %v560 = vld [vmem:[%s2 + $0x18] sm:$0xff]
  %v561 = vld [vmem:[%s2 + $0x20] sm:$0xff]
  %v562 = vld [vmem:[%s2 + $0x28] sm:$0xff]
  %v563 = vld [vmem:[%s2 + $0x30] sm:$0xff]
  %v564 = vld [vmem:[%s2 + $0x38] sm:$0xff]
  %566 = vset.pattern.permute.xlu0 0
  %567 = vperm.xlu0 %566, %v557
  %v568 = vpop.permute.xlu0 %567
  %571 = vset.pattern.permute.xlu0 0
  %572 = vperm.xlu0 %571, %v558
  %v573 = vpop.permute.xlu0 %572
  %576 = vset.pattern.permute.xlu0 0
  %577 = vperm.xlu0 %576, %v559
  %v578 = vpop.permute.xlu0 %577
  %581 = vset.pattern.permute.xlu0 0
  %582 = vperm.xlu0 %581, %v560
  %v583 = vpop.permute.xlu0 %582
  %586 = vset.pattern.permute.xlu0 0
  %587 = vperm.xlu0 %586, %v561
  %v588 = vpop.permute.xlu0 %587
  %591 = vset.pattern.permute.xlu0 0
  %592 = vperm.xlu0 %591, %v562
  %v593 = vpop.permute.xlu0 %592
  %596 = vset.pattern.permute.xlu0 0
  %597 = vperm.xlu0 %596, %v563
  %v598 = vpop.permute.xlu0 %597
  %601 = vset.pattern.permute.xlu0 0
  %602 = vperm.xlu0 %601, %v564
  %v603 = vpop.permute.xlu0 %602
  %v605 = vmul.f32 %v549, %v568
  %v606 = vmul.f32 %v550, %v573
  %v607 = vmul.f32 %v551, %v578
  %v608 = vmul.f32 %v552, %v583
  %v609 = vmul.f32 %v553, %v588
  %v610 = vmul.f32 %v554, %v593
  %v611 = vmul.f32 %v555, %v598
  %v612 = vmul.f32 %v556, %v603
  %v613 = vld [vmem:[%s3] sm:$0xff]
  %v614 = vld [vmem:[%s3 + $0x8] sm:$0xff]
  %v615 = vld [vmem:[%s3 + $0x10] sm:$0xff]
  %v616 = vld [vmem:[%s3 + $0x18] sm:$0xff]
  %v617 = vld [vmem:[%s3 + $0x20] sm:$0xff]
  %v618 = vld [vmem:[%s3 + $0x28] sm:$0xff]
  %v619 = vld [vmem:[%s3 + $0x30] sm:$0xff]
  %v620 = vld [vmem:[%s3 + $0x38] sm:$0xff]
  %622 = vset.pattern.permute.xlu0 0
  %623 = vperm.xlu0 %622, %v613
  %v624 = vpop.permute.xlu0 %623
  %627 = vset.pattern.permute.xlu0 0
  %628 = vperm.xlu0 %627, %v614
  %v629 = vpop.permute.xlu0 %628
  %632 = vset.pattern.permute.xlu0 0
  %633 = vperm.xlu0 %632, %v615
  %v634 = vpop.permute.xlu0 %633
  %637 = vset.pattern.permute.xlu0 0
  %638 = vperm.xlu0 %637, %v616
  %v639 = vpop.permute.xlu0 %638
  %642 = vset.pattern.permute.xlu0 0
  %643 = vperm.xlu0 %642, %v617
  %v644 = vpop.permute.xlu0 %643
  %647 = vset.pattern.permute.xlu0 0
  %648 = vperm.xlu0 %647, %v618
  %v649 = vpop.permute.xlu0 %648
  %652 = vset.pattern.permute.xlu0 0
  %653 = vperm.xlu0 %652, %v619
  %v654 = vpop.permute.xlu0 %653
  %657 = vset.pattern.permute.xlu0 0
  %658 = vperm.xlu0 %657, %v620
  %v659 = vpop.permute.xlu0 %658
  %v661 = vadd.f32 %v605, %v624
  %v662 = vadd.f32 %v606, %v629
  %v663 = vadd.f32 %v607, %v634
  %v664 = vadd.f32 %v608, %v639
  %v665 = vadd.f32 %v609, %v644
  %v666 = vadd.f32 %v610, %v649
  %v667 = vadd.f32 %v611, %v654
  %v668 = vadd.f32 %v612, %v659
  %v669 = vmul.f32 %v665, 0.5
  %v670 = vmul.f32 %v666, 0.5
  %v671 = vmul.f32 %v667, 0.5
  %v672 = vmul.f32 %v668, 0.5
  %v673 = vtanh.pop %v669
  %v674 = vtanh.pop %v670
  %v675 = vtanh.pop %v671
  %v676 = vtanh.pop %v672
  %v677 = vadd.f32 %v673, 1.0
  %v678 = vadd.f32 %v674, 1.0
  %v679 = vadd.f32 %v675, 1.0
  %v680 = vadd.f32 %v676, 1.0
  %v681 = vmul.f32 %v677, 0.5
  %v682 = vmul.f32 %v678, 0.5
  %v683 = vmul.f32 %v679, 0.5
  %v684 = vmul.f32 %v680, 0.5
  %v685 = vmul.f32 %v661, %v681
  %v686 = vmul.f32 %v662, %v682
  %v687 = vmul.f32 %v663, %v683
  %v688 = vmul.f32 %v664, %v684
  %689 = vst [vmem:[%s4] sm:$0xff] %v685
  %690 = vst [vmem:[%s4 + $0x8] sm:$0xff] %v686
  %691 = vst [vmem:[%s4 + $0x10] sm:$0xff] %v687
  %692 = vst [vmem:[%s4 + $0x18] sm:$0xff] %v688
  // Predicated region
  $region18: #{init_stage_g_forward.6} parent=0 // pred_check
    _
  $region19: #{init_stage_g_forward.6} parent=0 // pred_check_branch
    %694 = sbr.rel (0) target = $region21
  $region20: #{init_stage_g_forward.6} parent=0 // pred_region
    _
  $region21: #{init_stage_g_forward.6} parent=0 // pred_fallthru
    _
  // Predicated region
  $region22: #{init_stage_g_forward.6} parent=0 // pred_check
    _
  $region23: #{init_stage_g_forward.6} parent=0 // pred_check_branch
    %696 = sbr.rel (0) target = $region25
  $region24: #{init_stage_g_forward.6} parent=0 // pred_region
    _
  $region25: #{init_stage_g_forward.6} parent=0 // pred_fallthru
    _

// kernel: init_stage_g_forward.7
$region0: #{init_stage_g_forward.7}
  #allocation0 [shape = 'u32[]', space=smem, size = 0x4, offset = 0x4, fixed_abs, tag = 'smem constant byte address 0x4 - core index']
  #allocation1 [shape = 'u32[144,128]{1,0:T(1,128)}', space=vmem, size = 0x12000, scoped, tag = 'internal scratch']
  %s0 = inlined_call_operand.vmem [shape: f32[288,512], index: 0, kind: input, shape index: {}]
  %s1 = inlined_call_operand.vmem [shape: f32[32,288], index: 1, kind: input, shape index: {}]
  %s2 = inlined_call_operand.vmem [shape: f32[32,1], index: 2, kind: input, shape index: {}]
  %s3 = inlined_call_operand.vmem [shape: f32[32,1], index: 3, kind: input, shape index: {}]
  %s4 = inlined_call_operand.vmem [shape: f32[16,512], index: 4, kind: output, shape index: {}]
  %s5 = sld [smem:[#allocation0]]
  $region26: #{init_stage_g_forward.7} parent=0
    _
  %s7 = ssub.s32 1, %s5
  %s8 = scalar_select 0, %s7, %s5
  // Predicated region
  $region2: #{init_stage_g_forward.7} parent=0 // pred_check
    _
  $region3: #{init_stage_g_forward.7} parent=0 // pred_check_branch
    %10 = sbr.rel (0) target = $region5
  $region4: #{init_stage_g_forward.7} parent=0 // pred_region
    _
  $region5: #{init_stage_g_forward.7} parent=0 // pred_fallthru
    _
  // Predicated region
  $region6: #{init_stage_g_forward.7} parent=0 // pred_check
    _
  $region7: #{init_stage_g_forward.7} parent=0 // pred_check_branch
    %12 = sbr.rel (0) target = $region9
  $region8: #{init_stage_g_forward.7} parent=0 // pred_region
    _
  $region9: #{init_stage_g_forward.7} parent=0 // pred_fallthru
    _
  // Predicated region
  $region10: #{init_stage_g_forward.7} parent=0 // pred_check
    _
  $region11: #{init_stage_g_forward.7} parent=0 // pred_check_branch
    %14 = sbr.rel (0) target = $region13
  $region12: #{init_stage_g_forward.7} parent=0 // pred_region
    _
  $region13: #{init_stage_g_forward.7} parent=0 // pred_fallthru
    _
  // Predicated region
  $region14: #{init_stage_g_forward.7} parent=0 // pred_check
    _
  $region15: #{init_stage_g_forward.7} parent=0 // pred_check_branch
    %16 = sbr.rel (0) target = $region17
  $region16: #{init_stage_g_forward.7} parent=0 // pred_region
    _
  $region17: #{init_stage_g_forward.7} parent=0 // pred_fallthru
    _
  %v17 = vld [vmem:[%s1] sm:$0xff]
  %v18 = vld [vmem:[%s1 + $0x8] sm:$0xff]
  %v19 = vld [vmem:[%s1 + $0x10] sm:$0xff]
  %v20 = vld [vmem:[%s1 + $0x18] sm:$0xff]
  %v21 = vld [vmem:[%s1 + $0x20] sm:$0xff]
  %v22 = vld [vmem:[%s1 + $0x28] sm:$0xff]
  %v23 = vld [vmem:[%s1 + $0x30] sm:$0xff]
  %v24 = vld [vmem:[%s1 + $0x38] sm:$0xff]
  %v25 = vld [vmem:[%s1 + $0x40] sm:$0xff]
  %v26 = vld [vmem:[%s1 + $0x48] sm:$0xff]
  %v27 = vld [vmem:[%s1 + $0x50] sm:$0xff]
  %v28 = vld [vmem:[%s1 + $0x58] sm:$0xff]
  %v29 = vld [vmem:[%s0] sm:$0xff]
  %v30 = vld [vmem:[%s0 + $0x8] sm:$0xff]
  %v31 = vld [vmem:[%s0 + $0x10] sm:$0xff]
  %v32 = vld [vmem:[%s0 + $0x18] sm:$0xff]
  %v33 = vld [vmem:[%s0 + $0x20] sm:$0xff]
  %v34 = vld [vmem:[%s0 + $0x28] sm:$0xff]
  %v35 = vld [vmem:[%s0 + $0x30] sm:$0xff]
  %v36 = vld [vmem:[%s0 + $0x38] sm:$0xff]
  %v37 = vld [vmem:[%s0 + $0x40] sm:$0xff]
  %v38 = vld [vmem:[%s0 + $0x48] sm:$0xff]
  %v39 = vld [vmem:[%s0 + $0x50] sm:$0xff]
  %v40 = vld [vmem:[%s0 + $0x58] sm:$0xff]
  %v41 = vld [vmem:[%s0 + $0x60] sm:$0xff]
  %v42 = vld [vmem:[%s0 + $0x68] sm:$0xff]
  %v43 = vld [vmem:[%s0 + $0x70] sm:$0xff]
  %v44 = vld [vmem:[%s0 + $0x78] sm:$0xff]
  %v45 = vld [vmem:[%s0 + $0x80] sm:$0xff]
  %v46 = vld [vmem:[%s0 + $0x88] sm:$0xff]
  %v47 = vld [vmem:[%s0 + $0x90] sm:$0xff]
  %v48 = vld [vmem:[%s0 + $0x98] sm:$0xff]
  %v49 = vld [vmem:[%s0 + $0xa0] sm:$0xff]
  %v50 = vld [vmem:[%s0 + $0xa8] sm:$0xff]
  %v51 = vld [vmem:[%s0 + $0xb0] sm:$0xff]
  %v52 = vld [vmem:[%s0 + $0xb8] sm:$0xff]
  %v53 = vld [vmem:[%s0 + $0xc0] sm:$0xff]
  %v54 = vld [vmem:[%s0 + $0xc8] sm:$0xff]
  %v55 = vld [vmem:[%s0 + $0xd0] sm:$0xff]
  %v56 = vld [vmem:[%s0 + $0xd8] sm:$0xff]
  %v57 = vld [vmem:[%s0 + $0xe0] sm:$0xff]
  %v58 = vld [vmem:[%s0 + $0xe8] sm:$0xff]
  %v59 = vld [vmem:[%s0 + $0xf0] sm:$0xff]
  %v60 = vld [vmem:[%s0 + $0xf8] sm:$0xff]
  %v61 = vld [vmem:[%s0 + $0x100] sm:$0xff]
  %v62 = vld [vmem:[%s0 + $0x108] sm:$0xff]
  %v63 = vld [vmem:[%s0 + $0x110] sm:$0xff]
  %v64 = vld [vmem:[%s0 + $0x118] sm:$0xff]
  %v65 = vld [vmem:[%s0 + $0x120] sm:$0xff]
  %v66 = vld [vmem:[%s0 + $0x128] sm:$0xff]
  %v67 = vld [vmem:[%s0 + $0x130] sm:$0xff]
  %v68 = vld [vmem:[%s0 + $0x138] sm:$0xff]
  %v69 = vld [vmem:[%s0 + $0x140] sm:$0xff]
  %v70 = vld [vmem:[%s0 + $0x148] sm:$0xff]
  %v71 = vld [vmem:[%s0 + $0x150] sm:$0xff]
  %v72 = vld [vmem:[%s0 + $0x158] sm:$0xff]
  %v73 = vld [vmem:[%s0 + $0x160] sm:$0xff]
  %v74 = vld [vmem:[%s0 + $0x168] sm:$0xff]
  %v75 = vld [vmem:[%s0 + $0x170] sm:$0xff]
  %v76 = vld [vmem:[%s0 + $0x178] sm:$0xff]
  %v77 = vld [vmem:[%s0 + $0x180] sm:$0xff]
  %v78 = vld [vmem:[%s0 + $0x188] sm:$0xff]
  %v79 = vld [vmem:[%s0 + $0x190] sm:$0xff]
  %v80 = vld [vmem:[%s0 + $0x198] sm:$0xff]
  %v81 = vld [vmem:[%s0 + $0x1a0] sm:$0xff]
  %v82 = vld [vmem:[%s0 + $0x1a8] sm:$0xff]
  %v83 = vld [vmem:[%s0 + $0x1b0] sm:$0xff]
  %v84 = vld [vmem:[%s0 + $0x1b8] sm:$0xff]
  %v85 = vld [vmem:[%s0 + $0x1c0] sm:$0xff]
  %v86 = vld [vmem:[%s0 + $0x1c8] sm:$0xff]
  %v87 = vld [vmem:[%s0 + $0x1d0] sm:$0xff]
  %v88 = vld [vmem:[%s0 + $0x1d8] sm:$0xff]
  %v89 = vld [vmem:[%s0 + $0x1e0] sm:$0xff]
  %v90 = vld [vmem:[%s0 + $0x1e8] sm:$0xff]
  %v91 = vld [vmem:[%s0 + $0x1f0] sm:$0xff]
  %v92 = vld [vmem:[%s0 + $0x1f8] sm:$0xff]
  %v93 = vld [vmem:[%s0 + $0x200] sm:$0xff]
  %v94 = vld [vmem:[%s0 + $0x208] sm:$0xff]
  %v95 = vld [vmem:[%s0 + $0x210] sm:$0xff]
  %v96 = vld [vmem:[%s0 + $0x218] sm:$0xff]
  %v97 = vld [vmem:[%s0 + $0x220] sm:$0xff]
  %v98 = vld [vmem:[%s0 + $0x228] sm:$0xff]
  %v99 = vld [vmem:[%s0 + $0x230] sm:$0xff]
  %v100 = vld [vmem:[%s0 + $0x238] sm:$0xff]
  %v101 = vld [vmem:[%s0 + $0x240] sm:$0xff]
  %v102 = vld [vmem:[%s0 + $0x248] sm:$0xff]
  %v103 = vld [vmem:[%s0 + $0x250] sm:$0xff]
  %v104 = vld [vmem:[%s0 + $0x258] sm:$0xff]
  %v105 = vld [vmem:[%s0 + $0x260] sm:$0xff]
  %v106 = vld [vmem:[%s0 + $0x268] sm:$0xff]
  %v107 = vld [vmem:[%s0 + $0x270] sm:$0xff]
  %v108 = vld [vmem:[%s0 + $0x278] sm:$0xff]
  %v109 = vld [vmem:[%s0 + $0x280] sm:$0xff]
  %v110 = vld [vmem:[%s0 + $0x288] sm:$0xff]
  %v111 = vld [vmem:[%s0 + $0x290] sm:$0xff]
  %v112 = vld [vmem:[%s0 + $0x298] sm:$0xff]
  %v113 = vld [vmem:[%s0 + $0x2a0] sm:$0xff]
  %v114 = vld [vmem:[%s0 + $0x2a8] sm:$0xff]
  %v115 = vld [vmem:[%s0 + $0x2b0] sm:$0xff]
  %v116 = vld [vmem:[%s0 + $0x2b8] sm:$0xff]
  %v117 = vld [vmem:[%s0 + $0x2c0] sm:$0xff]
  %v118 = vld [vmem:[%s0 + $0x2c8] sm:$0xff]
  %v119 = vld [vmem:[%s0 + $0x2d0] sm:$0xff]
  %v120 = vld [vmem:[%s0 + $0x2d8] sm:$0xff]
  %v121 = vld [vmem:[%s0 + $0x2e0] sm:$0xff]
  %v122 = vld [vmem:[%s0 + $0x2e8] sm:$0xff]
  %v123 = vld [vmem:[%s0 + $0x2f0] sm:$0xff]
  %v124 = vld [vmem:[%s0 + $0x2f8] sm:$0xff]
  %v125 = vld [vmem:[%s0 + $0x300] sm:$0xff]
  %v126 = vld [vmem:[%s0 + $0x308] sm:$0xff]
  %v127 = vld [vmem:[%s0 + $0x310] sm:$0xff]
  %v128 = vld [vmem:[%s0 + $0x318] sm:$0xff]
  %v129 = vld [vmem:[%s0 + $0x320] sm:$0xff]
  %v130 = vld [vmem:[%s0 + $0x328] sm:$0xff]
  %v131 = vld [vmem:[%s0 + $0x330] sm:$0xff]
  %v132 = vld [vmem:[%s0 + $0x338] sm:$0xff]
  %v133 = vld [vmem:[%s0 + $0x340] sm:$0xff]
  %v134 = vld [vmem:[%s0 + $0x348] sm:$0xff]
  %v135 = vld [vmem:[%s0 + $0x350] sm:$0xff]
  %v136 = vld [vmem:[%s0 + $0x358] sm:$0xff]
  %v137 = vld [vmem:[%s0 + $0x360] sm:$0xff]
  %v138 = vld [vmem:[%s0 + $0x368] sm:$0xff]
  %v139 = vld [vmem:[%s0 + $0x370] sm:$0xff]
  %v140 = vld [vmem:[%s0 + $0x378] sm:$0xff]
  %v141 = vld [vmem:[%s0 + $0x380] sm:$0xff]
  %v142 = vld [vmem:[%s0 + $0x388] sm:$0xff]
  %v143 = vld [vmem:[%s0 + $0x390] sm:$0xff]
  %v144 = vld [vmem:[%s0 + $0x398] sm:$0xff]
  %v145 = vld [vmem:[%s0 + $0x3a0] sm:$0xff]
  %v146 = vld [vmem:[%s0 + $0x3a8] sm:$0xff]
  %v147 = vld [vmem:[%s0 + $0x3b0] sm:$0xff]
  %v148 = vld [vmem:[%s0 + $0x3b8] sm:$0xff]
  %v149 = vld [vmem:[%s0 + $0x3c0] sm:$0xff]
  %v150 = vld [vmem:[%s0 + $0x3c8] sm:$0xff]
  %v151 = vld [vmem:[%s0 + $0x3d0] sm:$0xff]
  %v152 = vld [vmem:[%s0 + $0x3d8] sm:$0xff]
  %v153 = vld [vmem:[%s0 + $0x3e0] sm:$0xff]
  %v154 = vld [vmem:[%s0 + $0x3e8] sm:$0xff]
  %v155 = vld [vmem:[%s0 + $0x3f0] sm:$0xff]
  %v156 = vld [vmem:[%s0 + $0x3f8] sm:$0xff]
  %v157 = vld [vmem:[%s0 + $0x400] sm:$0xff]
  %v158 = vld [vmem:[%s0 + $0x408] sm:$0xff]
  %v159 = vld [vmem:[%s0 + $0x410] sm:$0xff]
  %v160 = vld [vmem:[%s0 + $0x418] sm:$0xff]
  %v161 = vld [vmem:[%s0 + $0x420] sm:$0xff]
  %v162 = vld [vmem:[%s0 + $0x428] sm:$0xff]
  %v163 = vld [vmem:[%s0 + $0x430] sm:$0xff]
  %v164 = vld [vmem:[%s0 + $0x438] sm:$0xff]
  %v165 = vld [vmem:[%s0 + $0x440] sm:$0xff]
  %v166 = vld [vmem:[%s0 + $0x448] sm:$0xff]
  %v167 = vld [vmem:[%s0 + $0x450] sm:$0xff]
  %v168 = vld [vmem:[%s0 + $0x458] sm:$0xff]
  %v169 = vld [vmem:[%s0 + $0x460] sm:$0xff]
  %v170 = vld [vmem:[%s0 + $0x468] sm:$0xff]
  %v171 = vld [vmem:[%s0 + $0x470] sm:$0xff]
  %v172 = vld [vmem:[%s0 + $0x478] sm:$0xff]
  %vm173 = vcmask 261120
  %v175 = vsel %vm173, %v19, 0
  %v178 = vsel %vm173, %v22, 0
  %v181 = vsel %vm173, %v25, 0
  %v184 = vsel %vm173, %v28, 0
  %186 = vmatprep.subr.mxu0 %v90
  %187 = vmatpush1.msra.mxu0 %v89
  %188 = vmatprep.subr.mxu0 %v86
  %189 = vmatpush1.msra.mxu0 %v85
  %190 = vmatprep.subr.mxu0 %v82
  %191 = vmatpush1.msra.mxu0 %v81
  %192 = vmatprep.subr.mxu0 %v78
  %193 = vmatpush1.msra.mxu0 %v77
  %194 = vmatprep.subr.mxu0 %v74
  %195 = vmatpush1.msra.mxu0 %v73
  %196 = vmatprep.subr.mxu0 %v70
  %197 = vmatpush1.msra.mxu0 %v69
  %198 = vmatprep.subr.mxu0 %v66
  %199 = vmatpush1.msra.mxu0 %v65
  %200 = vmatprep.subr.mxu0 %v62
  %201 = vmatpush1.msra.mxu0 %v61
  %202 = vmatprep.subr.mxu0 %v58
  %203 = vmatpush1.msra.mxu0 %v57
  %204 = vmatprep.subr.mxu0 %v54
  %205 = vmatpush1.msra.mxu0 %v53
  %206 = vmatprep.subr.mxu0 %v50
  %207 = vmatpush1.msra.mxu0 %v49
  %208 = vmatprep.subr.mxu0 %v46
  %209 = vmatpush1.msra.mxu0 %v45
  %210 = vmatprep.subr.mxu0 %v42
  %211 = vmatpush1.msra.mxu0 %v41
  %212 = vmatprep.subr.mxu0 %v38
  %213 = vmatpush1.msra.mxu0 %v37
  %214 = vmatprep.subr.mxu0 %v34
  %215 = vmatpush1.msra.mxu0 %v33
  %216 = vmatprep.subr.mxu0 %v30
  %217 = vmatpush1.msra.mxu0 %v29
  %218 = vmatprep.subr.mxu0 %v154
  %219 = vmatpush2.msra.mxu0 %v153
  %220 = vmatprep.subr.mxu0 %v150
  %221 = vmatpush2.msra.mxu0 %v149
  %222 = vmatprep.subr.mxu0 %v146
  %223 = vmatpush2.msra.mxu0 %v145
  %224 = vmatprep.subr.mxu0 %v142
  %225 = vmatpush2.msra.mxu0 %v141
  %226 = vmatprep.subr.mxu0 %v138
  %227 = vmatpush2.msra.mxu0 %v137
  %228 = vmatprep.subr.mxu0 %v134
  %229 = vmatpush2.msra.mxu0 %v133
  %230 = vmatprep.subr.mxu0 %v130
  %231 = vmatpush2.msra.mxu0 %v129
  %232 = vmatprep.subr.mxu0 %v126
  %233 = vmatpush2.msra.mxu0 %v125
  %234 = vmatprep.subr.mxu0 %v122
  %235 = vmatpush2.msra.mxu0 %v121
  %236 = vmatprep.subr.mxu0 %v118
  %237 = vmatpush2.msra.mxu0 %v117
  %238 = vmatprep.subr.mxu0 %v114
  %239 = vmatpush2.msra.mxu0 %v113
  %240 = vmatprep.subr.mxu0 %v110
  %241 = vmatpush2.msra.mxu0 %v109
  %242 = vmatprep.subr.mxu0 %v106
  %243 = vmatpush2.msra.mxu0 %v105
  %244 = vmatprep.subr.mxu0 %v102
  %245 = vmatpush2.msra.mxu0 %v101
  %246 = vmatprep.subr.mxu0 %v98
  %247 = vmatpush2.msra.mxu0 %v97
  %248 = vmatprep.subr.mxu0 %v94
  %249 = vmatpush2.msra.mxu0 %v93
  %250 = vmatprep.mubr.f32.mxu0 %v18
  %251 = vmatmul.mubr.f32.gmra.mxu0 %v17
  %v252 = vpop.f32.mrf.mxu0
  %v253 = vadd.f32 0.0, %v252
  %v254 = vpop.f32.mrf.mxu0
  %v255 = vadd.f32 0.0, %v254
  %256 = vmatprep.mubr.f32.mxu0 %v21
  %257 = vmatmul.mubr.f32.gmra.mxu0 %v20
  %v258 = vpop.f32.mrf.mxu0
  %v259 = vadd.f32 0.0, %v258
  %v260 = vpop.f32.mrf.mxu0
  %v261 = vadd.f32 0.0, %v260
  %262 = vmatprep.mubr.f32.mxu0 %v24
  %263 = vmatmul.mubr.f32.gmra.mxu0 %v23
  %v264 = vpop.f32.mrf.mxu0
  %v265 = vadd.f32 0.0, %v264
  %v266 = vpop.f32.mrf.mxu0
  %v267 = vadd.f32 0.0, %v266
  %268 = vmatprep.mubr.f32.mxu0 %v27
  %269 = vmatmul.mubr.f32.gmra.mxu0 %v26
  %v270 = vpop.f32.mrf.mxu0
  %v271 = vadd.f32 0.0, %v270
  %v272 = vpop.f32.mrf.mxu0
  %v273 = vadd.f32 0.0, %v272
  %274 = vdwg.mxu0
  %275 = vmatprep.subr.mxu0 0.0
  %276 = vmatpush1.msra.mxu0 0.0
  %277 = vmatprep.subr.mxu0 0.0
  %278 = vmatpush1.msra.mxu0 0.0
  %279 = vmatprep.subr.mxu0 0.0
  %280 = vmatpush1.msra.mxu0 0.0
  %281 = vmatprep.subr.mxu0 0.0
  %282 = vmatpush1.msra.mxu0 0.0
  %283 = vmatprep.subr.mxu0 0.0
  %284 = vmatpush1.msra.mxu0 0.0
  %285 = vmatprep.subr.mxu0 0.0
  %286 = vmatpush1.msra.mxu0 0.0
  %287 = vmatprep.subr.mxu0 0.0
  %288 = vmatpush1.msra.mxu0 0.0
  %289 = vmatprep.subr.mxu0 0.0
  %290 = vmatpush1.msra.mxu0 0.0
  %291 = vmatprep.subr.mxu0 0.0
  %292 = vmatpush1.msra.mxu0 0.0
  %293 = vmatprep.subr.mxu0 0.0
  %294 = vmatpush1.msra.mxu0 0.0
  %295 = vmatprep.subr.mxu0 0.0
  %296 = vmatpush1.msra.mxu0 0.0
  %297 = vmatprep.subr.mxu0 0.0
  %298 = vmatpush1.msra.mxu0 0.0
  %299 = vmatprep.subr.mxu0 %v170
  %300 = vmatpush1.msra.mxu0 %v169
  %301 = vmatprep.subr.mxu0 %v166
  %302 = vmatpush1.msra.mxu0 %v165
  %303 = vmatprep.subr.mxu0 %v162
  %304 = vmatpush1.msra.mxu0 %v161
  %305 = vmatprep.subr.mxu0 %v158
  %306 = vmatpush1.msra.mxu0 %v157
  %307 = vmatprep.subr.mxu0 0.0
  %308 = vmatpush2.msra.mxu0 0.0
  %309 = vmatprep.subr.mxu0 0.0
  %310 = vmatpush2.msra.mxu0 0.0
  %311 = vmatprep.subr.mxu0 0.0
  %312 = vmatpush2.msra.mxu0 0.0
  %313 = vmatprep.subr.mxu0 0.0
  %314 = vmatpush2.msra.mxu0 0.0
  %315 = vmatprep.subr.mxu0 0.0
  %316 = vmatpush2.msra.mxu0 0.0
  %317 = vmatprep.subr.mxu0 0.0
  %318 = vmatpush2.msra.mxu0 0.0
  %319 = vmatprep.subr.mxu0 0.0
  %320 = vmatpush2.msra.mxu0 0.0
  %321 = vmatprep.subr.mxu0 0.0
  %322 = vmatpush2.msra.mxu0 0.0
  %323 = vmatprep.subr.mxu0 0.0
  %324 = vmatpush2.msra.mxu0 0.0
  %325 = vmatprep.subr.mxu0 0.0
  %326 = vmatpush2.msra.mxu0 0.0
  %327 = vmatprep.subr.mxu0 0.0
  %328 = vmatpush2.msra.mxu0 0.0
  %329 = vmatprep.subr.mxu0 0.0
  %330 = vmatpush2.msra.mxu0 0.0
  %331 = vmatprep.subr.mxu0 0.0
  %332 = vmatpush2.msra.mxu0 0.0
  %333 = vmatprep.subr.mxu0 0.0
  %334 = vmatpush2.msra.mxu0 0.0
  %335 = vmatprep.subr.mxu0 0.0
  %336 = vmatpush2.msra.mxu0 0.0
  %337 = vmatprep.subr.mxu0 0.0
  %338 = vmatpush2.msra.mxu0 0.0
  %339 = vmatprep.mubr.f32.mxu0 0.0
  %340 = vmatmul.mubr.f32.gmra.mxu0 %v175
  %v341 = vpop.f32.mrf.mxu0
  %v342 = vadd.f32 %v253, %v341
  %v343 = vpop.f32.mrf.mxu0
  %v344 = vadd.f32 %v255, %v343
  %345 = vmatprep.mubr.f32.mxu0 0.0
  %346 = vmatmul.mubr.f32.gmra.mxu0 %v178
  %v347 = vpop.f32.mrf.mxu0
  %v348 = vadd.f32 %v259, %v347
  %v349 = vpop.f32.mrf.mxu0
  %v350 = vadd.f32 %v261, %v349
  %351 = vmatprep.mubr.f32.mxu0 0.0
  %352 = vmatmul.mubr.f32.gmra.mxu0 %v181
  %v353 = vpop.f32.mrf.mxu0
  %v354 = vadd.f32 %v265, %v353
  %v355 = vpop.f32.mrf.mxu0
  %v356 = vadd.f32 %v267, %v355
  %357 = vmatprep.mubr.f32.mxu0 0.0
  %358 = vmatmul.mubr.f32.gmra.mxu0 %v184
  %v359 = vpop.f32.mrf.mxu0
  %v360 = vadd.f32 %v271, %v359
  %v361 = vpop.f32.mrf.mxu0
  %v362 = vadd.f32 %v273, %v361
  %363 = vdwg.mxu0
  %364 = vmatprep.subr.mxu0 %v92
  %365 = vmatpush1.msra.mxu0 %v91
  %366 = vmatprep.subr.mxu0 %v88
  %367 = vmatpush1.msra.mxu0 %v87
  %368 = vmatprep.subr.mxu0 %v84
  %369 = vmatpush1.msra.mxu0 %v83
  %370 = vmatprep.subr.mxu0 %v80
  %371 = vmatpush1.msra.mxu0 %v79
  %372 = vmatprep.subr.mxu0 %v76
  %373 = vmatpush1.msra.mxu0 %v75
  %374 = vmatprep.subr.mxu0 %v72
  %375 = vmatpush1.msra.mxu0 %v71
  %376 = vmatprep.subr.mxu0 %v68
  %377 = vmatpush1.msra.mxu0 %v67
  %378 = vmatprep.subr.mxu0 %v64
  %379 = vmatpush1.msra.mxu0 %v63
  %380 = vmatprep.subr.mxu0 %v60
  %381 = vmatpush1.msra.mxu0 %v59
  %382 = vmatprep.subr.mxu0 %v56
  %383 = vmatpush1.msra.mxu0 %v55
  %384 = vmatprep.subr.mxu0 %v52
  %385 = vmatpush1.msra.mxu0 %v51
  %386 = vmatprep.subr.mxu0 %v48
  %387 = vmatpush1.msra.mxu0 %v47
  %388 = vmatprep.subr.mxu0 %v44
  %389 = vmatpush1.msra.mxu0 %v43
  %390 = vmatprep.subr.mxu0 %v40
  %391 = vmatpush1.msra.mxu0 %v39
  %392 = vmatprep.subr.mxu0 %v36
  %393 = vmatpush1.msra.mxu0 %v35
  %394 = vmatprep.subr.mxu0 %v32
  %395 = vmatpush1.msra.mxu0 %v31
  %396 = vmatprep.subr.mxu0 %v156
  %397 = vmatpush2.msra.mxu0 %v155
  %398 = vmatprep.subr.mxu0 %v152
  %399 = vmatpush2.msra.mxu0 %v151
  %400 = vmatprep.subr.mxu0 %v148
  %401 = vmatpush2.msra.mxu0 %v147
  %402 = vmatprep.subr.mxu0 %v144
  %403 = vmatpush2.msra.mxu0 %v143
  %404 = vmatprep.subr.mxu0 %v140
  %405 = vmatpush2.msra.mxu0 %v139
  %406 = vmatprep.subr.mxu0 %v136
  %407 = vmatpush2.msra.mxu0 %v135
  %408 = vmatprep.subr.mxu0 %v132
  %409 = vmatpush2.msra.mxu0 %v131
  %410 = vmatprep.subr.mxu0 %v128
  %411 = vmatpush2.msra.mxu0 %v127
  %412 = vmatprep.subr.mxu0 %v124
  %413 = vmatpush2.msra.mxu0 %v123
  %414 = vmatprep.subr.mxu0 %v120
  %415 = vmatpush2.msra.mxu0 %v119
  %416 = vmatprep.subr.mxu0 %v116
  %417 = vmatpush2.msra.mxu0 %v115
  %418 = vmatprep.subr.mxu0 %v112
  %419 = vmatpush2.msra.mxu0 %v111
  %420 = vmatprep.subr.mxu0 %v108
  %421 = vmatpush2.msra.mxu0 %v107
  %422 = vmatprep.subr.mxu0 %v104
  %423 = vmatpush2.msra.mxu0 %v103
  %424 = vmatprep.subr.mxu0 %v100
  %425 = vmatpush2.msra.mxu0 %v99
  %426 = vmatprep.subr.mxu0 %v96
  %427 = vmatpush2.msra.mxu0 %v95
  %428 = vmatprep.mubr.f32.mxu0 %v18
  %429 = vmatmul.mubr.f32.gmra.mxu0 %v17
  %v430 = vpop.f32.mrf.mxu0
  %v431 = vadd.f32 0.0, %v430
  %v432 = vpop.f32.mrf.mxu0
  %v433 = vadd.f32 0.0, %v432
  %434 = vmatprep.mubr.f32.mxu0 %v21
  %435 = vmatmul.mubr.f32.gmra.mxu0 %v20
  %v436 = vpop.f32.mrf.mxu0
  %v437 = vadd.f32 0.0, %v436
  %v438 = vpop.f32.mrf.mxu0
  %v439 = vadd.f32 0.0, %v438
  %440 = vmatprep.mubr.f32.mxu0 %v24
  %441 = vmatmul.mubr.f32.gmra.mxu0 %v23
  %v442 = vpop.f32.mrf.mxu0
  %v443 = vadd.f32 0.0, %v442
  %v444 = vpop.f32.mrf.mxu0
  %v445 = vadd.f32 0.0, %v444
  %446 = vmatprep.mubr.f32.mxu0 %v27
  %447 = vmatmul.mubr.f32.gmra.mxu0 %v26
  %v448 = vpop.f32.mrf.mxu0
  %v449 = vadd.f32 0.0, %v448
  %v450 = vpop.f32.mrf.mxu0
  %v451 = vadd.f32 0.0, %v450
  %452 = vdwg.mxu0
  %453 = vmatprep.subr.mxu0 0.0
  %454 = vmatpush1.msra.mxu0 0.0
  %455 = vmatprep.subr.mxu0 0.0
  %456 = vmatpush1.msra.mxu0 0.0
  %457 = vmatprep.subr.mxu0 0.0
  %458 = vmatpush1.msra.mxu0 0.0
  %459 = vmatprep.subr.mxu0 0.0
  %460 = vmatpush1.msra.mxu0 0.0
  %461 = vmatprep.subr.mxu0 0.0
  %462 = vmatpush1.msra.mxu0 0.0
  %463 = vmatprep.subr.mxu0 0.0
  %464 = vmatpush1.msra.mxu0 0.0
  %465 = vmatprep.subr.mxu0 0.0
  %466 = vmatpush1.msra.mxu0 0.0
  %467 = vmatprep.subr.mxu0 0.0
  %468 = vmatpush1.msra.mxu0 0.0
  %469 = vmatprep.subr.mxu0 0.0
  %470 = vmatpush1.msra.mxu0 0.0
  %471 = vmatprep.subr.mxu0 0.0
  %472 = vmatpush1.msra.mxu0 0.0
  %473 = vmatprep.subr.mxu0 0.0
  %474 = vmatpush1.msra.mxu0 0.0
  %475 = vmatprep.subr.mxu0 0.0
  %476 = vmatpush1.msra.mxu0 0.0
  %477 = vmatprep.subr.mxu0 %v172
  %478 = vmatpush1.msra.mxu0 %v171
  %479 = vmatprep.subr.mxu0 %v168
  %480 = vmatpush1.msra.mxu0 %v167
  %481 = vmatprep.subr.mxu0 %v164
  %482 = vmatpush1.msra.mxu0 %v163
  %483 = vmatprep.subr.mxu0 %v160
  %484 = vmatpush1.msra.mxu0 %v159
  %485 = vmatprep.subr.mxu0 0.0
  %486 = vmatpush2.msra.mxu0 0.0
  %487 = vmatprep.subr.mxu0 0.0
  %488 = vmatpush2.msra.mxu0 0.0
  %489 = vmatprep.subr.mxu0 0.0
  %490 = vmatpush2.msra.mxu0 0.0
  %491 = vmatprep.subr.mxu0 0.0
  %492 = vmatpush2.msra.mxu0 0.0
  %493 = vmatprep.subr.mxu0 0.0
  %494 = vmatpush2.msra.mxu0 0.0
  %495 = vmatprep.subr.mxu0 0.0
  %496 = vmatpush2.msra.mxu0 0.0
  %497 = vmatprep.subr.mxu0 0.0
  %498 = vmatpush2.msra.mxu0 0.0
  %499 = vmatprep.subr.mxu0 0.0
  %500 = vmatpush2.msra.mxu0 0.0
  %501 = vmatprep.subr.mxu0 0.0
  %502 = vmatpush2.msra.mxu0 0.0
  %503 = vmatprep.subr.mxu0 0.0
  %504 = vmatpush2.msra.mxu0 0.0
  %505 = vmatprep.subr.mxu0 0.0
  %506 = vmatpush2.msra.mxu0 0.0
  %507 = vmatprep.subr.mxu0 0.0
  %508 = vmatpush2.msra.mxu0 0.0
  %509 = vmatprep.subr.mxu0 0.0
  %510 = vmatpush2.msra.mxu0 0.0
  %511 = vmatprep.subr.mxu0 0.0
  %512 = vmatpush2.msra.mxu0 0.0
  %513 = vmatprep.subr.mxu0 0.0
  %514 = vmatpush2.msra.mxu0 0.0
  %515 = vmatprep.subr.mxu0 0.0
  %516 = vmatpush2.msra.mxu0 0.0
  %517 = vmatprep.mubr.f32.mxu0 0.0
  %518 = vmatmul.mubr.f32.gmra.mxu0 %v175
  %v519 = vpop.f32.mrf.mxu0
  %v520 = vadd.f32 %v431, %v519
  %v521 = vpop.f32.mrf.mxu0
  %v522 = vadd.f32 %v433, %v521
  %523 = vmatprep.mubr.f32.mxu0 0.0
  %524 = vmatmul.mubr.f32.gmra.mxu0 %v178
  %v525 = vpop.f32.mrf.mxu0
  %v526 = vadd.f32 %v437, %v525
  %v527 = vpop.f32.mrf.mxu0
  %v528 = vadd.f32 %v439, %v527
  %529 = vmatprep.mubr.f32.mxu0 0.0
  %530 = vmatmul.mubr.f32.gmra.mxu0 %v181
  %v531 = vpop.f32.mrf.mxu0
  %v532 = vadd.f32 %v443, %v531
  %v533 = vpop.f32.mrf.mxu0
  %v534 = vadd.f32 %v445, %v533
  %535 = vmatprep.mubr.f32.mxu0 0.0
  %536 = vmatmul.mubr.f32.gmra.mxu0 %v184
  %v537 = vpop.f32.mrf.mxu0
  %v538 = vadd.f32 %v449, %v537
  %v539 = vpop.f32.mrf.mxu0
  %v540 = vadd.f32 %v451, %v539
  %541 = vdwg.mxu0
  %v542 = vadd.f32 %v342, %v344
  %v543 = vadd.f32 %v542, %v520
  %v544 = vadd.f32 %v543, %v522
  %545 = vadd.xlane.f32.xlu0 %v544
  %v546 = vpop.xlane.xlu0 %545
  %v547 = vadd.f32 %v348, %v350
  %v548 = vadd.f32 %v547, %v526
  %v549 = vadd.f32 %v548, %v528
  %550 = vadd.xlane.f32.xlu0 %v549
  %v551 = vpop.xlane.xlu0 %550
  %v552 = vadd.f32 %v354, %v356
  %v553 = vadd.f32 %v552, %v532
  %v554 = vadd.f32 %v553, %v534
  %555 = vadd.xlane.f32.xlu0 %v554
  %v556 = vpop.xlane.xlu0 %555
  %v557 = vadd.f32 %v360, %v362
  %v558 = vadd.f32 %v557, %v538
  %v559 = vadd.f32 %v558, %v540
  %560 = vadd.xlane.f32.xlu0 %v559
  %v561 = vpop.xlane.xlu0 %560
  %v562 = vmul.f32 %v546, 0.001953125
  %v563 = vmul.f32 %v551, 0.001953125
  %v564 = vmul.f32 %v556, 0.001953125
  %v565 = vmul.f32 %v561, 0.001953125
  %v566 = vsub.f32 %v342, %v562
  %v567 = vsub.f32 %v344, %v562
  %v568 = vsub.f32 %v520, %v562
  %v569 = vsub.f32 %v522, %v562
  %v570 = vsub.f32 %v348, %v563
  %v571 = vsub.f32 %v350, %v563
  %v572 = vsub.f32 %v526, %v563
  %v573 = vsub.f32 %v528, %v563
  %v574 = vsub.f32 %v354, %v564
  %v575 = vsub.f32 %v356, %v564
  %v576 = vsub.f32 %v532, %v564
  %v577 = vsub.f32 %v534, %v564
  %v578 = vsub.f32 %v360, %v565
  %v579 = vsub.f32 %v362, %v565
  %v580 = vsub.f32 %v538, %v565
  %v581 = vsub.f32 %v540, %v565
  %v582 = vmul.f32 %v566, %v566
  %v583 = vmul.f32 %v567, %v567
  %v584 = vmul.f32 %v568, %v568
  %v585 = vmul.f32 %v569, %v569
  %v586 = vmul.f32 %v570, %v570
  %v587 = vmul.f32 %v571, %v571
  %v588 = vmul.f32 %v572, %v572
  %v589 = vmul.f32 %v573, %v573
  %v590 = vmul.f32 %v574, %v574
  %v591 = vmul.f32 %v575, %v575
  %v592 = vmul.f32 %v576, %v576
  %v593 = vmul.f32 %v577, %v577
  %v594 = vmul.f32 %v578, %v578
  %v595 = vmul.f32 %v579, %v579
  %v596 = vmul.f32 %v580, %v580
  %v597 = vmul.f32 %v581, %v581
  %v598 = vadd.f32 %v582, %v583
  %v599 = vadd.f32 %v598, %v584
  %v600 = vadd.f32 %v599, %v585
  %601 = vadd.xlane.f32.xlu0 %v600
  %v602 = vpop.xlane.xlu0 %601
  %v603 = vadd.f32 %v586, %v587
  %v604 = vadd.f32 %v603, %v588
  %v605 = vadd.f32 %v604, %v589
  %606 = vadd.xlane.f32.xlu0 %v605
  %v607 = vpop.xlane.xlu0 %606
  %v608 = vadd.f32 %v590, %v591
  %v609 = vadd.f32 %v608, %v592
  %v610 = vadd.f32 %v609, %v593
  %611 = vadd.xlane.f32.xlu0 %v610
  %v612 = vpop.xlane.xlu0 %611
  %v613 = vadd.f32 %v594, %v595
  %v614 = vadd.f32 %v613, %v596
  %v615 = vadd.f32 %v614, %v597
  %616 = vadd.xlane.f32.xlu0 %v615
  %v617 = vpop.xlane.xlu0 %616
  %v618 = vmul.f32 %v602, 0.001953125
  %v619 = vmul.f32 %v607, 0.001953125
  %v620 = vmul.f32 %v612, 0.001953125
  %v621 = vmul.f32 %v617, 0.001953125
  %v622 = vadd.f32 %v618, 1e-05
  %v623 = vadd.f32 %v619, 1e-05
  %v624 = vadd.f32 %v620, 1e-05
  %v625 = vadd.f32 %v621, 1e-05
  %v626 = vrsqrt.pop %v622
  %v627 = vrsqrt.pop %v623
  %v628 = vrsqrt.pop %v624
  %v629 = vrsqrt.pop %v625
  %v630 = vmul.f32 %v566, %v626
  %v631 = vmul.f32 %v567, %v626
  %v632 = vmul.f32 %v568, %v626
  %v633 = vmul.f32 %v569, %v626
  %v634 = vmul.f32 %v570, %v627
  %v635 = vmul.f32 %v571, %v627
  %v636 = vmul.f32 %v572, %v627
  %v637 = vmul.f32 %v573, %v627
  %v638 = vmul.f32 %v574, %v628
  %v639 = vmul.f32 %v575, %v628
  %v640 = vmul.f32 %v576, %v628
  %v641 = vmul.f32 %v577, %v628
  %v642 = vmul.f32 %v578, %v629
  %v643 = vmul.f32 %v579, %v629
  %v644 = vmul.f32 %v580, %v629
  %v645 = vmul.f32 %v581, %v629
  %v646 = vld [vmem:[%s2] sm:$0xff]
  %v647 = vld [vmem:[%s2 + $0x8] sm:$0xff]
  %v648 = vld [vmem:[%s2 + $0x10] sm:$0xff]
  %v649 = vld [vmem:[%s2 + $0x18] sm:$0xff]
  %651 = vset.pattern.permute.xlu0 0
  %652 = vperm.xlu0 %651, %v646
  %v653 = vpop.permute.xlu0 %652
  %656 = vset.pattern.permute.xlu0 0
  %657 = vperm.xlu0 %656, %v647
  %v658 = vpop.permute.xlu0 %657
  %661 = vset.pattern.permute.xlu0 0
  %662 = vperm.xlu0 %661, %v648
  %v663 = vpop.permute.xlu0 %662
  %666 = vset.pattern.permute.xlu0 0
  %667 = vperm.xlu0 %666, %v649
  %v668 = vpop.permute.xlu0 %667
  %v670 = vmul.f32 %v630, %v653
  %v671 = vmul.f32 %v631, %v653
  %v672 = vmul.f32 %v632, %v653
  %v673 = vmul.f32 %v633, %v653
  %v674 = vmul.f32 %v634, %v658
  %v675 = vmul.f32 %v635, %v658
  %v676 = vmul.f32 %v636, %v658
  %v677 = vmul.f32 %v637, %v658
  %v678 = vmul.f32 %v638, %v663
  %v679 = vmul.f32 %v639, %v663
  %v680 = vmul.f32 %v640, %v663
  %v681 = vmul.f32 %v641, %v663
  %v682 = vmul.f32 %v642, %v668
  %v683 = vmul.f32 %v643, %v668
  %v684 = vmul.f32 %v644, %v668
  %v685 = vmul.f32 %v645, %v668
  %v686 = vld [vmem:[%s3] sm:$0xff]
  %v687 = vld [vmem:[%s3 + $0x8] sm:$0xff]
  %v688 = vld [vmem:[%s3 + $0x10] sm:$0xff]
  %v689 = vld [vmem:[%s3 + $0x18] sm:$0xff]
  %691 = vset.pattern.permute.xlu0 0
  %692 = vperm.xlu0 %691, %v686
  %v693 = vpop.permute.xlu0 %692
  %696 = vset.pattern.permute.xlu0 0
  %697 = vperm.xlu0 %696, %v687
  %v698 = vpop.permute.xlu0 %697
  %701 = vset.pattern.permute.xlu0 0
  %702 = vperm.xlu0 %701, %v688
  %v703 = vpop.permute.xlu0 %702
  %706 = vset.pattern.permute.xlu0 0
  %707 = vperm.xlu0 %706, %v689
  %v708 = vpop.permute.xlu0 %707
  %v710 = vadd.f32 %v670, %v693
  %v711 = vadd.f32 %v671, %v693
  %v712 = vadd.f32 %v672, %v693
  %v713 = vadd.f32 %v673, %v693
  %v714 = vadd.f32 %v674, %v698
  %v715 = vadd.f32 %v675, %v698
  %v716 = vadd.f32 %v676, %v698
  %v717 = vadd.f32 %v677, %v698
  %v718 = vadd.f32 %v678, %v703
  %v719 = vadd.f32 %v679, %v703
  %v720 = vadd.f32 %v680, %v703
  %v721 = vadd.f32 %v681, %v703
  %v722 = vadd.f32 %v682, %v708
  %v723 = vadd.f32 %v683, %v708
  %v724 = vadd.f32 %v684, %v708
  %v725 = vadd.f32 %v685, %v708
  %v726 = vmul.f32 %v718, 0.5
  %v727 = vmul.f32 %v719, 0.5
  %v728 = vmul.f32 %v720, 0.5
  %v729 = vmul.f32 %v721, 0.5
  %v730 = vmul.f32 %v722, 0.5
  %v731 = vmul.f32 %v723, 0.5
  %v732 = vmul.f32 %v724, 0.5
  %v733 = vmul.f32 %v725, 0.5
  %v734 = vtanh.pop %v726
  %v735 = vtanh.pop %v727
  %v736 = vtanh.pop %v728
  %v737 = vtanh.pop %v729
  %v738 = vtanh.pop %v730
  %v739 = vtanh.pop %v731
  %v740 = vtanh.pop %v732
  %v741 = vtanh.pop %v733
  %v742 = vadd.f32 %v734, 1.0
  %v743 = vadd.f32 %v735, 1.0
  %v744 = vadd.f32 %v736, 1.0
  %v745 = vadd.f32 %v737, 1.0
  %v746 = vadd.f32 %v738, 1.0
  %v747 = vadd.f32 %v739, 1.0
  %v748 = vadd.f32 %v740, 1.0
  %v749 = vadd.f32 %v741, 1.0
  %v750 = vmul.f32 %v742, 0.5
  %v751 = vmul.f32 %v743, 0.5
  %v752 = vmul.f32 %v744, 0.5
  %v753 = vmul.f32 %v745, 0.5
  %v754 = vmul.f32 %v746, 0.5
  %v755 = vmul.f32 %v747, 0.5
  %v756 = vmul.f32 %v748, 0.5
  %v757 = vmul.f32 %v749, 0.5
  %v758 = vmul.f32 %v710, %v750
  %v759 = vmul.f32 %v711, %v751
  %v760 = vmul.f32 %v712, %v752
  %v761 = vmul.f32 %v713, %v753
  %v762 = vmul.f32 %v714, %v754
  %v763 = vmul.f32 %v715, %v755
  %v764 = vmul.f32 %v716, %v756
  %v765 = vmul.f32 %v717, %v757
  %766 = vst [vmem:[%s4] sm:$0xff] %v758
  %767 = vst [vmem:[%s4 + $0x8] sm:$0xff] %v759
  %768 = vst [vmem:[%s4 + $0x10] sm:$0xff] %v760
  %769 = vst [vmem:[%s4 + $0x18] sm:$0xff] %v761
  %770 = vst [vmem:[%s4 + $0x20] sm:$0xff] %v762
  %771 = vst [vmem:[%s4 + $0x28] sm:$0xff] %v763
  %772 = vst [vmem:[%s4 + $0x30] sm:$0xff] %v764
  %773 = vst [vmem:[%s4 + $0x38] sm:$0xff] %v765
  // Predicated region
  $region18: #{init_stage_g_forward.7} parent=0 // pred_check
    _
  $region19: #{init_stage_g_forward.7} parent=0 // pred_check_branch
    %775 = sbr.rel (0) target = $region21
  $region20: #{init_stage_g_forward.7} parent=0 // pred_region
    _
  $region21: #{init_stage_g_forward.7} parent=0 // pred_fallthru
    _
  // Predicated region
  $region22: #{init_stage_g_forward.7} parent=0 // pred_check
    _
  $region23: #{init_stage_g_forward.7} parent=0 // pred_check_branch
    %777 = sbr.rel (0) target = $region25
  $region24: #{init_stage_g_forward.7} parent=0 // pred_region
    _
  $region25: #{init_stage_g_forward.7} parent=0 // pred_fallthru
    _

// kernel: init_stage_g_forward.8
$region0: #{init_stage_g_forward.8}
  #allocation0 [shape = 'u32[]', space=smem, size = 0x4, offset = 0x4, fixed_abs, tag = 'smem constant byte address 0x4 - core index']
  #allocation1 [shape = 'u32[144,128]{1,0:T(1,128)}', space=vmem, size = 0x12000, scoped, tag = 'internal scratch']
  %s0 = inlined_call_operand.vmem [shape: f32[144,2048], index: 0, kind: input, shape index: {}]
  %s1 = inlined_call_operand.vmem [shape: f32[16,144], index: 1, kind: input, shape index: {}]
  %s2 = inlined_call_operand.vmem [shape: f32[16,1], index: 2, kind: input, shape index: {}]
  %s3 = inlined_call_operand.vmem [shape: f32[16,1], index: 3, kind: input, shape index: {}]
  %s4 = inlined_call_operand.vmem [shape: f32[8,2048], index: 4, kind: output, shape index: {}]
  %s5 = sld [smem:[#allocation0]]
  $region26: #{init_stage_g_forward.8} parent=0
    _
  %s7 = ssub.s32 1, %s5
  %s8 = scalar_select 0, %s7, %s5
  // Predicated region
  $region2: #{init_stage_g_forward.8} parent=0 // pred_check
    _
  $region3: #{init_stage_g_forward.8} parent=0 // pred_check_branch
    %10 = sbr.rel (0) target = $region5
  $region4: #{init_stage_g_forward.8} parent=0 // pred_region
    _
  $region5: #{init_stage_g_forward.8} parent=0 // pred_fallthru
    _
  // Predicated region
  $region6: #{init_stage_g_forward.8} parent=0 // pred_check
    _
  $region7: #{init_stage_g_forward.8} parent=0 // pred_check_branch
    %12 = sbr.rel (0) target = $region9
  $region8: #{init_stage_g_forward.8} parent=0 // pred_region
    _
  $region9: #{init_stage_g_forward.8} parent=0 // pred_fallthru
    _
  // Predicated region
  $region10: #{init_stage_g_forward.8} parent=0 // pred_check
    _
  $region11: #{init_stage_g_forward.8} parent=0 // pred_check_branch
    %14 = sbr.rel (0) target = $region13
  $region12: #{init_stage_g_forward.8} parent=0 // pred_region
    _
  $region13: #{init_stage_g_forward.8} parent=0 // pred_fallthru
    _
  // Predicated region
  $region14: #{init_stage_g_forward.8} parent=0 // pred_check
    _
  $region15: #{init_stage_g_forward.8} parent=0 // pred_check_branch
    %16 = sbr.rel (0) target = $region17
  $region16: #{init_stage_g_forward.8} parent=0 // pred_region
    _
  $region17: #{init_stage_g_forward.8} parent=0 // pred_fallthru
    _
  %v17 = vld [vmem:[%s1] sm:$0xff]
  %v18 = vld [vmem:[%s1 + $0x8] sm:$0xff]
  %v19 = vld [vmem:[%s1 + $0x10] sm:$0xff]
  %v20 = vld [vmem:[%s1 + $0x18] sm:$0xff]
  %v21 = vld [vmem:[%s0] sm:$0xff]
  %v22 = vld [vmem:[%s0 + $0x8] sm:$0xff]
  %v23 = vld [vmem:[%s0 + $0x10] sm:$0xff]
  %v24 = vld [vmem:[%s0 + $0x18] sm:$0xff]
  %v25 = vld [vmem:[%s0 + $0x20] sm:$0xff]
  %v26 = vld [vmem:[%s0 + $0x28] sm:$0xff]
  %v27 = vld [vmem:[%s0 + $0x30] sm:$0xff]
  %v28 = vld [vmem:[%s0 + $0x38] sm:$0xff]
  %v29 = vld [vmem:[%s0 + $0x40] sm:$0xff]
  %v30 = vld [vmem:[%s0 + $0x48] sm:$0xff]
  %v31 = vld [vmem:[%s0 + $0x50] sm:$0xff]
  %v32 = vld [vmem:[%s0 + $0x58] sm:$0xff]
  %v33 = vld [vmem:[%s0 + $0x60] sm:$0xff]
  %v34 = vld [vmem:[%s0 + $0x68] sm:$0xff]
  %v35 = vld [vmem:[%s0 + $0x70] sm:$0xff]
  %v36 = vld [vmem:[%s0 + $0x78] sm:$0xff]
  %v37 = vld [vmem:[%s0 + $0x80] sm:$0xff]
  %v38 = vld [vmem:[%s0 + $0x88] sm:$0xff]
  %v39 = vld [vmem:[%s0 + $0x90] sm:$0xff]
  %v40 = vld [vmem:[%s0 + $0x98] sm:$0xff]
  %v41 = vld [vmem:[%s0 + $0xa0] sm:$0xff]
  %v42 = vld [vmem:[%s0 + $0xa8] sm:$0xff]
  %v43 = vld [vmem:[%s0 + $0xb0] sm:$0xff]
  %v44 = vld [vmem:[%s0 + $0xb8] sm:$0xff]
  %v45 = vld [vmem:[%s0 + $0xc0] sm:$0xff]
  %v46 = vld [vmem:[%s0 + $0xc8] sm:$0xff]
  %v47 = vld [vmem:[%s0 + $0xd0] sm:$0xff]
  %v48 = vld [vmem:[%s0 + $0xd8] sm:$0xff]
  %v49 = vld [vmem:[%s0 + $0xe0] sm:$0xff]
  %v50 = vld [vmem:[%s0 + $0xe8] sm:$0xff]
  %v51 = vld [vmem:[%s0 + $0xf0] sm:$0xff]
  %v52 = vld [vmem:[%s0 + $0xf8] sm:$0xff]
  %v53 = vld [vmem:[%s0 + $0x100] sm:$0xff]
  %v54 = vld [vmem:[%s0 + $0x108] sm:$0xff]
  %v55 = vld [vmem:[%s0 + $0x110] sm:$0xff]
  %v56 = vld [vmem:[%s0 + $0x118] sm:$0xff]
  %v57 = vld [vmem:[%s0 + $0x120] sm:$0xff]
  %v58 = vld [vmem:[%s0 + $0x128] sm:$0xff]
  %v59 = vld [vmem:[%s0 + $0x130] sm:$0xff]
  %v60 = vld [vmem:[%s0 + $0x138] sm:$0xff]
  %v61 = vld [vmem:[%s0 + $0x140] sm:$0xff]
  %v62 = vld [vmem:[%s0 + $0x148] sm:$0xff]
  %v63 = vld [vmem:[%s0 + $0x150] sm:$0xff]
  %v64 = vld [vmem:[%s0 + $0x158] sm:$0xff]
  %v65 = vld [vmem:[%s0 + $0x160] sm:$0xff]
  %v66 = vld [vmem:[%s0 + $0x168] sm:$0xff]
  %v67 = vld [vmem:[%s0 + $0x170] sm:$0xff]
  %v68 = vld [vmem:[%s0 + $0x178] sm:$0xff]
  %v69 = vld [vmem:[%s0 + $0x180] sm:$0xff]
  %v70 = vld [vmem:[%s0 + $0x188] sm:$0xff]
  %v71 = vld [vmem:[%s0 + $0x190] sm:$0xff]
  %v72 = vld [vmem:[%s0 + $0x198] sm:$0xff]
  %v73 = vld [vmem:[%s0 + $0x1a0] sm:$0xff]
  %v74 = vld [vmem:[%s0 + $0x1a8] sm:$0xff]
  %v75 = vld [vmem:[%s0 + $0x1b0] sm:$0xff]
  %v76 = vld [vmem:[%s0 + $0x1b8] sm:$0xff]
  %v77 = vld [vmem:[%s0 + $0x1c0] sm:$0xff]
  %v78 = vld [vmem:[%s0 + $0x1c8] sm:$0xff]
  %v79 = vld [vmem:[%s0 + $0x1d0] sm:$0xff]
  %v80 = vld [vmem:[%s0 + $0x1d8] sm:$0xff]
  %v81 = vld [vmem:[%s0 + $0x1e0] sm:$0xff]
  %v82 = vld [vmem:[%s0 + $0x1e8] sm:$0xff]
  %v83 = vld [vmem:[%s0 + $0x1f0] sm:$0xff]
  %v84 = vld [vmem:[%s0 + $0x1f8] sm:$0xff]
  %v85 = vld [vmem:[%s0 + $0x200] sm:$0xff]
  %v86 = vld [vmem:[%s0 + $0x208] sm:$0xff]
  %v87 = vld [vmem:[%s0 + $0x210] sm:$0xff]
  %v88 = vld [vmem:[%s0 + $0x218] sm:$0xff]
  %v89 = vld [vmem:[%s0 + $0x220] sm:$0xff]
  %v90 = vld [vmem:[%s0 + $0x228] sm:$0xff]
  %v91 = vld [vmem:[%s0 + $0x230] sm:$0xff]
  %v92 = vld [vmem:[%s0 + $0x238] sm:$0xff]
  %v93 = vld [vmem:[%s0 + $0x240] sm:$0xff]
  %v94 = vld [vmem:[%s0 + $0x248] sm:$0xff]
  %v95 = vld [vmem:[%s0 + $0x250] sm:$0xff]
  %v96 = vld [vmem:[%s0 + $0x258] sm:$0xff]
  %v97 = vld [vmem:[%s0 + $0x260] sm:$0xff]
  %v98 = vld [vmem:[%s0 + $0x268] sm:$0xff]
  %v99 = vld [vmem:[%s0 + $0x270] sm:$0xff]
  %v100 = vld [vmem:[%s0 + $0x278] sm:$0xff]
  %v101 = vld [vmem:[%s0 + $0x280] sm:$0xff]
  %v102 = vld [vmem:[%s0 + $0x288] sm:$0xff]
  %v103 = vld [vmem:[%s0 + $0x290] sm:$0xff]
  %v104 = vld [vmem:[%s0 + $0x298] sm:$0xff]
  %v105 = vld [vmem:[%s0 + $0x2a0] sm:$0xff]
  %v106 = vld [vmem:[%s0 + $0x2a8] sm:$0xff]
  %v107 = vld [vmem:[%s0 + $0x2b0] sm:$0xff]
  %v108 = vld [vmem:[%s0 + $0x2b8] sm:$0xff]
  %v109 = vld [vmem:[%s0 + $0x2c0] sm:$0xff]
  %v110 = vld [vmem:[%s0 + $0x2c8] sm:$0xff]
  %v111 = vld [vmem:[%s0 + $0x2d0] sm:$0xff]
  %v112 = vld [vmem:[%s0 + $0x2d8] sm:$0xff]
  %v113 = vld [vmem:[%s0 + $0x2e0] sm:$0xff]
  %v114 = vld [vmem:[%s0 + $0x2e8] sm:$0xff]
  %v115 = vld [vmem:[%s0 + $0x2f0] sm:$0xff]
  %v116 = vld [vmem:[%s0 + $0x2f8] sm:$0xff]
  %v117 = vld [vmem:[%s0 + $0x300] sm:$0xff]
  %v118 = vld [vmem:[%s0 + $0x308] sm:$0xff]
  %v119 = vld [vmem:[%s0 + $0x310] sm:$0xff]
  %v120 = vld [vmem:[%s0 + $0x318] sm:$0xff]
  %v121 = vld [vmem:[%s0 + $0x320] sm:$0xff]
  %v122 = vld [vmem:[%s0 + $0x328] sm:$0xff]
  %v123 = vld [vmem:[%s0 + $0x330] sm:$0xff]
  %v124 = vld [vmem:[%s0 + $0x338] sm:$0xff]
  %v125 = vld [vmem:[%s0 + $0x340] sm:$0xff]
  %v126 = vld [vmem:[%s0 + $0x348] sm:$0xff]
  %v127 = vld [vmem:[%s0 + $0x350] sm:$0xff]
  %v128 = vld [vmem:[%s0 + $0x358] sm:$0xff]
  %v129 = vld [vmem:[%s0 + $0x360] sm:$0xff]
  %v130 = vld [vmem:[%s0 + $0x368] sm:$0xff]
  %v131 = vld [vmem:[%s0 + $0x370] sm:$0xff]
  %v132 = vld [vmem:[%s0 + $0x378] sm:$0xff]
  %v133 = vld [vmem:[%s0 + $0x380] sm:$0xff]
  %v134 = vld [vmem:[%s0 + $0x388] sm:$0xff]
  %v135 = vld [vmem:[%s0 + $0x390] sm:$0xff]
  %v136 = vld [vmem:[%s0 + $0x398] sm:$0xff]
  %v137 = vld [vmem:[%s0 + $0x3a0] sm:$0xff]
  %v138 = vld [vmem:[%s0 + $0x3a8] sm:$0xff]
  %v139 = vld [vmem:[%s0 + $0x3b0] sm:$0xff]
  %v140 = vld [vmem:[%s0 + $0x3b8] sm:$0xff]
  %v141 = vld [vmem:[%s0 + $0x3c0] sm:$0xff]
  %v142 = vld [vmem:[%s0 + $0x3c8] sm:$0xff]
  %v143 = vld [vmem:[%s0 + $0x3d0] sm:$0xff]
  %v144 = vld [vmem:[%s0 + $0x3d8] sm:$0xff]
  %v145 = vld [vmem:[%s0 + $0x3e0] sm:$0xff]
  %v146 = vld [vmem:[%s0 + $0x3e8] sm:$0xff]
  %v147 = vld [vmem:[%s0 + $0x3f0] sm:$0xff]
  %v148 = vld [vmem:[%s0 + $0x3f8] sm:$0xff]
  %v149 = vld [vmem:[%s0 + $0x400] sm:$0xff]
  %v150 = vld [vmem:[%s0 + $0x408] sm:$0xff]
  %v151 = vld [vmem:[%s0 + $0x410] sm:$0xff]
  %v152 = vld [vmem:[%s0 + $0x418] sm:$0xff]
  %v153 = vld [vmem:[%s0 + $0x420] sm:$0xff]
  %v154 = vld [vmem:[%s0 + $0x428] sm:$0xff]
  %v155 = vld [vmem:[%s0 + $0x430] sm:$0xff]
  %v156 = vld [vmem:[%s0 + $0x438] sm:$0xff]
  %v157 = vld [vmem:[%s0 + $0x440] sm:$0xff]
  %v158 = vld [vmem:[%s0 + $0x448] sm:$0xff]
  %v159 = vld [vmem:[%s0 + $0x450] sm:$0xff]
  %v160 = vld [vmem:[%s0 + $0x458] sm:$0xff]
  %v161 = vld [vmem:[%s0 + $0x460] sm:$0xff]
  %v162 = vld [vmem:[%s0 + $0x468] sm:$0xff]
  %v163 = vld [vmem:[%s0 + $0x470] sm:$0xff]
  %v164 = vld [vmem:[%s0 + $0x478] sm:$0xff]
  %v165 = vld [vmem:[%s0 + $0x480] sm:$0xff]
  %v166 = vld [vmem:[%s0 + $0x488] sm:$0xff]
  %v167 = vld [vmem:[%s0 + $0x490] sm:$0xff]
  %v168 = vld [vmem:[%s0 + $0x498] sm:$0xff]
  %v169 = vld [vmem:[%s0 + $0x4a0] sm:$0xff]
  %v170 = vld [vmem:[%s0 + $0x4a8] sm:$0xff]
  %v171 = vld [vmem:[%s0 + $0x4b0] sm:$0xff]
  %v172 = vld [vmem:[%s0 + $0x4b8] sm:$0xff]
  %v173 = vld [vmem:[%s0 + $0x4c0] sm:$0xff]
  %v174 = vld [vmem:[%s0 + $0x4c8] sm:$0xff]
  %v175 = vld [vmem:[%s0 + $0x4d0] sm:$0xff]
  %v176 = vld [vmem:[%s0 + $0x4d8] sm:$0xff]
  %v177 = vld [vmem:[%s0 + $0x4e0] sm:$0xff]
  %v178 = vld [vmem:[%s0 + $0x4e8] sm:$0xff]
  %v179 = vld [vmem:[%s0 + $0x4f0] sm:$0xff]
  %v180 = vld [vmem:[%s0 + $0x4f8] sm:$0xff]
  %v181 = vld [vmem:[%s0 + $0x500] sm:$0xff]
  %v182 = vld [vmem:[%s0 + $0x508] sm:$0xff]
  %v183 = vld [vmem:[%s0 + $0x510] sm:$0xff]
  %v184 = vld [vmem:[%s0 + $0x518] sm:$0xff]
  %v185 = vld [vmem:[%s0 + $0x520] sm:$0xff]
  %v186 = vld [vmem:[%s0 + $0x528] sm:$0xff]
  %v187 = vld [vmem:[%s0 + $0x530] sm:$0xff]
  %v188 = vld [vmem:[%s0 + $0x538] sm:$0xff]
  %v189 = vld [vmem:[%s0 + $0x540] sm:$0xff]
  %v190 = vld [vmem:[%s0 + $0x548] sm:$0xff]
  %v191 = vld [vmem:[%s0 + $0x550] sm:$0xff]
  %v192 = vld [vmem:[%s0 + $0x558] sm:$0xff]
  %v193 = vld [vmem:[%s0 + $0x560] sm:$0xff]
  %v194 = vld [vmem:[%s0 + $0x568] sm:$0xff]
  %v195 = vld [vmem:[%s0 + $0x570] sm:$0xff]
  %v196 = vld [vmem:[%s0 + $0x578] sm:$0xff]
  %v197 = vld [vmem:[%s0 + $0x580] sm:$0xff]
  %v198 = vld [vmem:[%s0 + $0x588] sm:$0xff]
  %v199 = vld [vmem:[%s0 + $0x590] sm:$0xff]
  %v200 = vld [vmem:[%s0 + $0x598] sm:$0xff]
  %v201 = vld [vmem:[%s0 + $0x5a0] sm:$0xff]
  %v202 = vld [vmem:[%s0 + $0x5a8] sm:$0xff]
  %v203 = vld [vmem:[%s0 + $0x5b0] sm:$0xff]
  %v204 = vld [vmem:[%s0 + $0x5b8] sm:$0xff]
  %v205 = vld [vmem:[%s0 + $0x5c0] sm:$0xff]
  %v206 = vld [vmem:[%s0 + $0x5c8] sm:$0xff]
  %v207 = vld [vmem:[%s0 + $0x5d0] sm:$0xff]
  %v208 = vld [vmem:[%s0 + $0x5d8] sm:$0xff]
  %v209 = vld [vmem:[%s0 + $0x5e0] sm:$0xff]
  %v210 = vld [vmem:[%s0 + $0x5e8] sm:$0xff]
  %v211 = vld [vmem:[%s0 + $0x5f0] sm:$0xff]
  %v212 = vld [vmem:[%s0 + $0x5f8] sm:$0xff]
  %v213 = vld [vmem:[%s0 + $0x600] sm:$0xff]
  %v214 = vld [vmem:[%s0 + $0x608] sm:$0xff]
  %v215 = vld [vmem:[%s0 + $0x610] sm:$0xff]
  %v216 = vld [vmem:[%s0 + $0x618] sm:$0xff]
  %v217 = vld [vmem:[%s0 + $0x620] sm:$0xff]
  %v218 = vld [vmem:[%s0 + $0x628] sm:$0xff]
  %v219 = vld [vmem:[%s0 + $0x630] sm:$0xff]
  %v220 = vld [vmem:[%s0 + $0x638] sm:$0xff]
  %v221 = vld [vmem:[%s0 + $0x640] sm:$0xff]
  %v222 = vld [vmem:[%s0 + $0x648] sm:$0xff]
  %v223 = vld [vmem:[%s0 + $0x650] sm:$0xff]
  %v224 = vld [vmem:[%s0 + $0x658] sm:$0xff]
  %v225 = vld [vmem:[%s0 + $0x660] sm:$0xff]
  %v226 = vld [vmem:[%s0 + $0x668] sm:$0xff]
  %v227 = vld [vmem:[%s0 + $0x670] sm:$0xff]
  %v228 = vld [vmem:[%s0 + $0x678] sm:$0xff]
  %v229 = vld [vmem:[%s0 + $0x680] sm:$0xff]
  %v230 = vld [vmem:[%s0 + $0x688] sm:$0xff]
  %v231 = vld [vmem:[%s0 + $0x690] sm:$0xff]
  %v232 = vld [vmem:[%s0 + $0x698] sm:$0xff]
  %v233 = vld [vmem:[%s0 + $0x6a0] sm:$0xff]
  %v234 = vld [vmem:[%s0 + $0x6a8] sm:$0xff]
  %v235 = vld [vmem:[%s0 + $0x6b0] sm:$0xff]
  %v236 = vld [vmem:[%s0 + $0x6b8] sm:$0xff]
  %v237 = vld [vmem:[%s0 + $0x6c0] sm:$0xff]
  %v238 = vld [vmem:[%s0 + $0x6c8] sm:$0xff]
  %v239 = vld [vmem:[%s0 + $0x6d0] sm:$0xff]
  %v240 = vld [vmem:[%s0 + $0x6d8] sm:$0xff]
  %v241 = vld [vmem:[%s0 + $0x6e0] sm:$0xff]
  %v242 = vld [vmem:[%s0 + $0x6e8] sm:$0xff]
  %v243 = vld [vmem:[%s0 + $0x6f0] sm:$0xff]
  %v244 = vld [vmem:[%s0 + $0x6f8] sm:$0xff]
  %v245 = vld [vmem:[%s0 + $0x700] sm:$0xff]
  %v246 = vld [vmem:[%s0 + $0x708] sm:$0xff]
  %v247 = vld [vmem:[%s0 + $0x710] sm:$0xff]
  %v248 = vld [vmem:[%s0 + $0x718] sm:$0xff]
  %v249 = vld [vmem:[%s0 + $0x720] sm:$0xff]
  %v250 = vld [vmem:[%s0 + $0x728] sm:$0xff]
  %v251 = vld [vmem:[%s0 + $0x730] sm:$0xff]
  %v252 = vld [vmem:[%s0 + $0x738] sm:$0xff]
  %v253 = vld [vmem:[%s0 + $0x740] sm:$0xff]
  %v254 = vld [vmem:[%s0 + $0x748] sm:$0xff]
  %v255 = vld [vmem:[%s0 + $0x750] sm:$0xff]
  %v256 = vld [vmem:[%s0 + $0x758] sm:$0xff]
  %v257 = vld [vmem:[%s0 + $0x760] sm:$0xff]
  %v258 = vld [vmem:[%s0 + $0x768] sm:$0xff]
  %v259 = vld [vmem:[%s0 + $0x770] sm:$0xff]
  %v260 = vld [vmem:[%s0 + $0x778] sm:$0xff]
  %v261 = vld [vmem:[%s0 + $0x780] sm:$0xff]
  %v262 = vld [vmem:[%s0 + $0x788] sm:$0xff]
  %v263 = vld [vmem:[%s0 + $0x790] sm:$0xff]
  %v264 = vld [vmem:[%s0 + $0x798] sm:$0xff]
  %v265 = vld [vmem:[%s0 + $0x7a0] sm:$0xff]
  %v266 = vld [vmem:[%s0 + $0x7a8] sm:$0xff]
  %v267 = vld [vmem:[%s0 + $0x7b0] sm:$0xff]
  %v268 = vld [vmem:[%s0 + $0x7b8] sm:$0xff]
  %v269 = vld [vmem:[%s0 + $0x7c0] sm:$0xff]
  %v270 = vld [vmem:[%s0 + $0x7c8] sm:$0xff]
  %v271 = vld [vmem:[%s0 + $0x7d0] sm:$0xff]
  %v272 = vld [vmem:[%s0 + $0x7d8] sm:$0xff]
  %v273 = vld [vmem:[%s0 + $0x7e0] sm:$0xff]
  %v274 = vld [vmem:[%s0 + $0x7e8] sm:$0xff]
  %v275 = vld [vmem:[%s0 + $0x7f0] sm:$0xff]
  %v276 = vld [vmem:[%s0 + $0x7f8] sm:$0xff]
  %v277 = vld [vmem:[%s0 + $0x800] sm:$0xff]
  %v278 = vld [vmem:[%s0 + $0x808] sm:$0xff]
  %v279 = vld [vmem:[%s0 + $0x810] sm:$0xff]
  %v280 = vld [vmem:[%s0 + $0x818] sm:$0xff]
  %v281 = vld [vmem:[%s0 + $0x820] sm:$0xff]
  %v282 = vld [vmem:[%s0 + $0x828] sm:$0xff]
  %v283 = vld [vmem:[%s0 + $0x830] sm:$0xff]
  %v284 = vld [vmem:[%s0 + $0x838] sm:$0xff]
  %v285 = vld [vmem:[%s0 + $0x840] sm:$0xff]
  %v286 = vld [vmem:[%s0 + $0x848] sm:$0xff]
  %v287 = vld [vmem:[%s0 + $0x850] sm:$0xff]
  %v288 = vld [vmem:[%s0 + $0x858] sm:$0xff]
  %v289 = vld [vmem:[%s0 + $0x860] sm:$0xff]
  %v290 = vld [vmem:[%s0 + $0x868] sm:$0xff]
  %v291 = vld [vmem:[%s0 + $0x870] sm:$0xff]
  %v292 = vld [vmem:[%s0 + $0x878] sm:$0xff]
  %v293 = vld [vmem:[%s0 + $0x880] sm:$0xff]
  %v294 = vld [vmem:[%s0 + $0x888] sm:$0xff]
  %v295 = vld [vmem:[%s0 + $0x890] sm:$0xff]
  %v296 = vld [vmem:[%s0 + $0x898] sm:$0xff]
  %v297 = vld [vmem:[%s0 + $0x8a0] sm:$0xff]
  %v298 = vld [vmem:[%s0 + $0x8a8] sm:$0xff]
  %v299 = vld [vmem:[%s0 + $0x8b0] sm:$0xff]
  %v300 = vld [vmem:[%s0 + $0x8b8] sm:$0xff]
  %v301 = vld [vmem:[%s0 + $0x8c0] sm:$0xff]
  %v302 = vld [vmem:[%s0 + $0x8c8] sm:$0xff]
  %v303 = vld [vmem:[%s0 + $0x8d0] sm:$0xff]
  %v304 = vld [vmem:[%s0 + $0x8d8] sm:$0xff]
  %v305 = vld [vmem:[%s0 + $0x8e0] sm:$0xff]
  %v306 = vld [vmem:[%s0 + $0x8e8] sm:$0xff]
  %v307 = vld [vmem:[%s0 + $0x8f0] sm:$0xff]
  %v308 = vld [vmem:[%s0 + $0x8f8] sm:$0xff]
  %vm309 = vcmask 130048
  %v311 = vsel %vm309, %v18, 0
  %v314 = vsel %vm309, %v20, 0
  %316 = vmatprep.subr.mxu0 %v262
  %317 = vmatpush1.msra.mxu0 %v261
  %318 = vmatprep.subr.mxu0 %v246
  %319 = vmatpush1.msra.mxu0 %v245
  %320 = vmatprep.subr.mxu0 %v230
  %321 = vmatpush1.msra.mxu0 %v229
  %322 = vmatprep.subr.mxu0 %v214
  %323 = vmatpush1.msra.mxu0 %v213
  %324 = vmatprep.subr.mxu0 %v198
  %325 = vmatpush1.msra.mxu0 %v197
  %326 = vmatprep.subr.mxu0 %v182
  %327 = vmatpush1.msra.mxu0 %v181
  %328 = vmatprep.subr.mxu0 %v166
  %329 = vmatpush1.msra.mxu0 %v165
  %330 = vmatprep.subr.mxu0 %v150
  %331 = vmatpush1.msra.mxu0 %v149
  %332 = vmatprep.subr.mxu0 %v134
  %333 = vmatpush1.msra.mxu0 %v133
  %334 = vmatprep.subr.mxu0 %v118
  %335 = vmatpush1.msra.mxu0 %v117
  %336 = vmatprep.subr.mxu0 %v102
  %337 = vmatpush1.msra.mxu0 %v101
  %338 = vmatprep.subr.mxu0 %v86
  %339 = vmatpush1.msra.mxu0 %v85
  %340 = vmatprep.subr.mxu0 %v70
  %341 = vmatpush1.msra.mxu0 %v69
  %342 = vmatprep.subr.mxu0 %v54
  %343 = vmatpush1.msra.mxu0 %v53
  %344 = vmatprep.subr.mxu0 %v38
  %345 = vmatpush1.msra.mxu0 %v37
  %346 = vmatprep.subr.mxu0 %v22
  %347 = vmatpush1.msra.mxu0 %v21
  %348 = vmatprep.subr.mxu0 0.0
  %349 = vmatpush2.msra.mxu0 0.0
  %350 = vmatprep.subr.mxu0 0.0
  %351 = vmatpush2.msra.mxu0 0.0
  %352 = vmatprep.subr.mxu0 0.0
  %353 = vmatpush2.msra.mxu0 0.0
  %354 = vmatprep.subr.mxu0 0.0
  %355 = vmatpush2.msra.mxu0 0.0
  %356 = vmatprep.subr.mxu0 0.0
  %357 = vmatpush2.msra.mxu0 0.0
  %358 = vmatprep.subr.mxu0 0.0
  %359 = vmatpush2.msra.mxu0 0.0
  %360 = vmatprep.subr.mxu0 0.0
  %361 = vmatpush2.msra.mxu0 0.0
  %362 = vmatprep.subr.mxu0 0.0
  %363 = vmatpush2.msra.mxu0 0.0
  %364 = vmatprep.subr.mxu0 0.0
  %365 = vmatpush2.msra.mxu0 0.0
  %366 = vmatprep.subr.mxu0 0.0
  %367 = vmatpush2.msra.mxu0 0.0
  %368 = vmatprep.subr.mxu0 0.0
  %369 = vmatpush2.msra.mxu0 0.0
  %370 = vmatprep.subr.mxu0 0.0
  %371 = vmatpush2.msra.mxu0 0.0
  %372 = vmatprep.subr.mxu0 0.0
  %373 = vmatpush2.msra.mxu0 0.0
  %374 = vmatprep.subr.mxu0 0.0
  %375 = vmatpush2.msra.mxu0 0.0
  %376 = vmatprep.subr.mxu0 %v294
  %377 = vmatpush2.msra.mxu0 %v293
  %378 = vmatprep.subr.mxu0 %v278
  %379 = vmatpush2.msra.mxu0 %v277
  %380 = vmatprep.mubr.f32.mxu0 %v311
  %381 = vmatmul.mubr.f32.gmra.mxu0 %v17
  %v382 = vpop.f32.mrf.mxu0
  %v383 = vadd.f32 0.0, %v382
  %v384 = vpop.f32.mrf.mxu0
  %v385 = vadd.f32 0.0, %v384
  %386 = vmatprep.mubr.f32.mxu0 %v314
  %387 = vmatmul.mubr.f32.gmra.mxu0 %v19
  %v388 = vpop.f32.mrf.mxu0
  %v389 = vadd.f32 0.0, %v388
  %v390 = vpop.f32.mrf.mxu0
  %v391 = vadd.f32 0.0, %v390
  %392 = vdwg.mxu0
  %393 = vmatprep.subr.mxu0 %v264
  %394 = vmatpush1.msra.mxu0 %v263
  %395 = vmatprep.subr.mxu0 %v248
  %396 = vmatpush1.msra.mxu0 %v247
  %397 = vmatprep.subr.mxu0 %v232
  %398 = vmatpush1.msra.mxu0 %v231
  %399 = vmatprep.subr.mxu0 %v216
  %400 = vmatpush1.msra.mxu0 %v215
  %401 = vmatprep.subr.mxu0 %v200
  %402 = vmatpush1.msra.mxu0 %v199
  %403 = vmatprep.subr.mxu0 %v184
  %404 = vmatpush1.msra.mxu0 %v183
  %405 = vmatprep.subr.mxu0 %v168
  %406 = vmatpush1.msra.mxu0 %v167
  %407 = vmatprep.subr.mxu0 %v152
  %408 = vmatpush1.msra.mxu0 %v151
  %409 = vmatprep.subr.mxu0 %v136
  %410 = vmatpush1.msra.mxu0 %v135
  %411 = vmatprep.subr.mxu0 %v120
  %412 = vmatpush1.msra.mxu0 %v119
  %413 = vmatprep.subr.mxu0 %v104
  %414 = vmatpush1.msra.mxu0 %v103
  %415 = vmatprep.subr.mxu0 %v88
  %416 = vmatpush1.msra.mxu0 %v87
  %417 = vmatprep.subr.mxu0 %v72
  %418 = vmatpush1.msra.mxu0 %v71
  %419 = vmatprep.subr.mxu0 %v56
  %420 = vmatpush1.msra.mxu0 %v55
  %421 = vmatprep.subr.mxu0 %v40
  %422 = vmatpush1.msra.mxu0 %v39
  %423 = vmatprep.subr.mxu0 %v24
  %424 = vmatpush1.msra.mxu0 %v23
  %425 = vmatprep.subr.mxu0 0.0
  %426 = vmatpush2.msra.mxu0 0.0
  %427 = vmatprep.subr.mxu0 0.0
  %428 = vmatpush2.msra.mxu0 0.0
  %429 = vmatprep.subr.mxu0 0.0
  %430 = vmatpush2.msra.mxu0 0.0
  %431 = vmatprep.subr.mxu0 0.0
  %432 = vmatpush2.msra.mxu0 0.0
  %433 = vmatprep.subr.mxu0 0.0
  %434 = vmatpush2.msra.mxu0 0.0
  %435 = vmatprep.subr.mxu0 0.0
  %436 = vmatpush2.msra.mxu0 0.0
  %437 = vmatprep.subr.mxu0 0.0
  %438 = vmatpush2.msra.mxu0 0.0
  %439 = vmatprep.subr.mxu0 0.0
  %440 = vmatpush2.msra.mxu0 0.0
  %441 = vmatprep.subr.mxu0 0.0
  %442 = vmatpush2.msra.mxu0 0.0
  %443 = vmatprep.subr.mxu0 0.0
  %444 = vmatpush2.msra.mxu0 0.0
  %445 = vmatprep.subr.mxu0 0.0
  %446 = vmatpush2.msra.mxu0 0.0
  %447 = vmatprep.subr.mxu0 0.0
  %448 = vmatpush2.msra.mxu0 0.0
  %449 = vmatprep.subr.mxu0 0.0
  %450 = vmatpush2.msra.mxu0 0.0
  %451 = vmatprep.subr.mxu0 0.0
  %452 = vmatpush2.msra.mxu0 0.0
  %453 = vmatprep.subr.mxu0 %v296
  %454 = vmatpush2.msra.mxu0 %v295
  %455 = vmatprep.subr.mxu0 %v280
  %456 = vmatpush2.msra.mxu0 %v279
  %457 = vmatprep.mubr.f32.mxu0 %v311
  %458 = vmatmul.mubr.f32.gmra.mxu0 %v17
  %v459 = vpop.f32.mrf.mxu0
  %v460 = vadd.f32 0.0, %v459
  %v461 = vpop.f32.mrf.mxu0
  %v462 = vadd.f32 0.0, %v461
  %463 = vmatprep.mubr.f32.mxu0 %v314
  %464 = vmatmul.mubr.f32.gmra.mxu0 %v19
  %v465 = vpop.f32.mrf.mxu0
  %v466 = vadd.f32 0.0, %v465
  %v467 = vpop.f32.mrf.mxu0
  %v468 = vadd.f32 0.0, %v467
  %469 = vdwg.mxu0
  %470 = vmatprep.subr.mxu0 %v266
  %471 = vmatpush1.msra.mxu0 %v265
  %472 = vmatprep.subr.mxu0 %v250
  %473 = vmatpush1.msra.mxu0 %v249
  %474 = vmatprep.subr.mxu0 %v234
  %475 = vmatpush1.msra.mxu0 %v233
  %476 = vmatprep.subr.mxu0 %v218
  %477 = vmatpush1.msra.mxu0 %v217
  %478 = vmatprep.subr.mxu0 %v202
  %479 = vmatpush1.msra.mxu0 %v201
  %480 = vmatprep.subr.mxu0 %v186
  %481 = vmatpush1.msra.mxu0 %v185
  %482 = vmatprep.subr.mxu0 %v170
  %483 = vmatpush1.msra.mxu0 %v169
  %484 = vmatprep.subr.mxu0 %v154
  %485 = vmatpush1.msra.mxu0 %v153
  %486 = vmatprep.subr.mxu0 %v138
  %487 = vmatpush1.msra.mxu0 %v137
  %488 = vmatprep.subr.mxu0 %v122
  %489 = vmatpush1.msra.mxu0 %v121
  %490 = vmatprep.subr.mxu0 %v106
  %491 = vmatpush1.msra.mxu0 %v105
  %492 = vmatprep.subr.mxu0 %v90
  %493 = vmatpush1.msra.mxu0 %v89
  %494 = vmatprep.subr.mxu0 %v74
  %495 = vmatpush1.msra.mxu0 %v73
  %496 = vmatprep.subr.mxu0 %v58
  %497 = vmatpush1.msra.mxu0 %v57
  %498 = vmatprep.subr.mxu0 %v42
  %499 = vmatpush1.msra.mxu0 %v41
  %500 = vmatprep.subr.mxu0 %v26
  %501 = vmatpush1.msra.mxu0 %v25
  %502 = vmatprep.subr.mxu0 0.0
  %503 = vmatpush2.msra.mxu0 0.0
  %504 = vmatprep.subr.mxu0 0.0
  %505 = vmatpush2.msra.mxu0 0.0
  %506 = vmatprep.subr.mxu0 0.0
  %507 = vmatpush2.msra.mxu0 0.0
  %508 = vmatprep.subr.mxu0 0.0
  %509 = vmatpush2.msra.mxu0 0.0
  %510 = vmatprep.subr.mxu0 0.0
  %511 = vmatpush2.msra.mxu0 0.0
  %512 = vmatprep.subr.mxu0 0.0
  %513 = vmatpush2.msra.mxu0 0.0
  %514 = vmatprep.subr.mxu0 0.0
  %515 = vmatpush2.msra.mxu0 0.0
  %516 = vmatprep.subr.mxu0 0.0
  %517 = vmatpush2.msra.mxu0 0.0
  %518 = vmatprep.subr.mxu0 0.0
  %519 = vmatpush2.msra.mxu0 0.0
  %520 = vmatprep.subr.mxu0 0.0
  %521 = vmatpush2.msra.mxu0 0.0
  %522 = vmatprep.subr.mxu0 0.0
  %523 = vmatpush2.msra.mxu0 0.0
  %524 = vmatprep.subr.mxu0 0.0
  %525 = vmatpush2.msra.mxu0 0.0
  %526 = vmatprep.subr.mxu0 0.0
  %527 = vmatpush2.msra.mxu0 0.0
  %528 = vmatprep.subr.mxu0 0.0
  %529 = vmatpush2.msra.mxu0 0.0
  %530 = vmatprep.subr.mxu0 %v298
  %531 = vmatpush2.msra.mxu0 %v297
  %532 = vmatprep.subr.mxu0 %v282
  %533 = vmatpush2.msra.mxu0 %v281
  %534 = vmatprep.mubr.f32.mxu0 %v311
  %535 = vmatmul.mubr.f32.gmra.mxu0 %v17
  %v536 = vpop.f32.mrf.mxu0
  %v537 = vadd.f32 0.0, %v536
  %v538 = vpop.f32.mrf.mxu0
  %v539 = vadd.f32 0.0, %v538
  %540 = vmatprep.mubr.f32.mxu0 %v314
  %541 = vmatmul.mubr.f32.gmra.mxu0 %v19
  %v542 = vpop.f32.mrf.mxu0
  %v543 = vadd.f32 0.0, %v542
  %v544 = vpop.f32.mrf.mxu0
  %v545 = vadd.f32 0.0, %v544
  %546 = vdwg.mxu0
  %547 = vmatprep.subr.mxu0 %v268
  %548 = vmatpush1.msra.mxu0 %v267
  %549 = vmatprep.subr.mxu0 %v252
  %550 = vmatpush1.msra.mxu0 %v251
  %551 = vmatprep.subr.mxu0 %v236
  %552 = vmatpush1.msra.mxu0 %v235
  %553 = vmatprep.subr.mxu0 %v220
  %554 = vmatpush1.msra.mxu0 %v219
  %555 = vmatprep.subr.mxu0 %v204
  %556 = vmatpush1.msra.mxu0 %v203
  %557 = vmatprep.subr.mxu0 %v188
  %558 = vmatpush1.msra.mxu0 %v187
  %559 = vmatprep.subr.mxu0 %v172
  %560 = vmatpush1.msra.mxu0 %v171
  %561 = vmatprep.subr.mxu0 %v156
  %562 = vmatpush1.msra.mxu0 %v155
  %563 = vmatprep.subr.mxu0 %v140
  %564 = vmatpush1.msra.mxu0 %v139
  %565 = vmatprep.subr.mxu0 %v124
  %566 = vmatpush1.msra.mxu0 %v123
  %567 = vmatprep.subr.mxu0 %v108
  %568 = vmatpush1.msra.mxu0 %v107
  %569 = vmatprep.subr.mxu0 %v92
  %570 = vmatpush1.msra.mxu0 %v91
  %571 = vmatprep.subr.mxu0 %v76
  %572 = vmatpush1.msra.mxu0 %v75
  %573 = vmatprep.subr.mxu0 %v60
  %574 = vmatpush1.msra.mxu0 %v59
  %575 = vmatprep.subr.mxu0 %v44
  %576 = vmatpush1.msra.mxu0 %v43
  %577 = vmatprep.subr.mxu0 %v28
  %578 = vmatpush1.msra.mxu0 %v27
  %579 = vmatprep.subr.mxu0 0.0
  %580 = vmatpush2.msra.mxu0 0.0
  %581 = vmatprep.subr.mxu0 0.0
  %582 = vmatpush2.msra.mxu0 0.0
  %583 = vmatprep.subr.mxu0 0.0
  %584 = vmatpush2.msra.mxu0 0.0
  %585 = vmatprep.subr.mxu0 0.0
  %586 = vmatpush2.msra.mxu0 0.0
  %587 = vmatprep.subr.mxu0 0.0
  %588 = vmatpush2.msra.mxu0 0.0
  %589 = vmatprep.subr.mxu0 0.0
  %590 = vmatpush2.msra.mxu0 0.0
  %591 = vmatprep.subr.mxu0 0.0
  %592 = vmatpush2.msra.mxu0 0.0
  %593 = vmatprep.subr.mxu0 0.0
  %594 = vmatpush2.msra.mxu0 0.0
  %595 = vmatprep.subr.mxu0 0.0
  %596 = vmatpush2.msra.mxu0 0.0
  %597 = vmatprep.subr.mxu0 0.0
  %598 = vmatpush2.msra.mxu0 0.0
  %599 = vmatprep.subr.mxu0 0.0
  %600 = vmatpush2.msra.mxu0 0.0
  %601 = vmatprep.subr.mxu0 0.0
  %602 = vmatpush2.msra.mxu0 0.0
  %603 = vmatprep.subr.mxu0 0.0
  %604 = vmatpush2.msra.mxu0 0.0
  %605 = vmatprep.subr.mxu0 0.0
  %606 = vmatpush2.msra.mxu0 0.0
  %607 = vmatprep.subr.mxu0 %v300
  %608 = vmatpush2.msra.mxu0 %v299
  %609 = vmatprep.subr.mxu0 %v284
  %610 = vmatpush2.msra.mxu0 %v283
  %611 = vmatprep.mubr.f32.mxu0 %v311
  %612 = vmatmul.mubr.f32.gmra.mxu0 %v17
  %v613 = vpop.f32.mrf.mxu0
  %v614 = vadd.f32 0.0, %v613
  %v615 = vpop.f32.mrf.mxu0
  %v616 = vadd.f32 0.0, %v615
  %617 = vmatprep.mubr.f32.mxu0 %v314
  %618 = vmatmul.mubr.f32.gmra.mxu0 %v19
  %v619 = vpop.f32.mrf.mxu0
  %v620 = vadd.f32 0.0, %v619
  %v621 = vpop.f32.mrf.mxu0
  %v622 = vadd.f32 0.0, %v621
  %623 = vdwg.mxu0
  %624 = vmatprep.subr.mxu0 %v270
  %625 = vmatpush1.msra.mxu0 %v269
  %626 = vmatprep.subr.mxu0 %v254
  %627 = vmatpush1.msra.mxu0 %v253
  %628 = vmatprep.subr.mxu0 %v238
  %629 = vmatpush1.msra.mxu0 %v237
  %630 = vmatprep.subr.mxu0 %v222
  %631 = vmatpush1.msra.mxu0 %v221
  %632 = vmatprep.subr.mxu0 %v206
  %633 = vmatpush1.msra.mxu0 %v205
  %634 = vmatprep.subr.mxu0 %v190
  %635 = vmatpush1.msra.mxu0 %v189
  %636 = vmatprep.subr.mxu0 %v174
  %637 = vmatpush1.msra.mxu0 %v173
  %638 = vmatprep.subr.mxu0 %v158
  %639 = vmatpush1.msra.mxu0 %v157
  %640 = vmatprep.subr.mxu0 %v142
  %641 = vmatpush1.msra.mxu0 %v141
  %642 = vmatprep.subr.mxu0 %v126
  %643 = vmatpush1.msra.mxu0 %v125
  %644 = vmatprep.subr.mxu0 %v110
  %645 = vmatpush1.msra.mxu0 %v109
  %646 = vmatprep.subr.mxu0 %v94
  %647 = vmatpush1.msra.mxu0 %v93
  %648 = vmatprep.subr.mxu0 %v78
  %649 = vmatpush1.msra.mxu0 %v77
  %650 = vmatprep.subr.mxu0 %v62
  %651 = vmatpush1.msra.mxu0 %v61
  %652 = vmatprep.subr.mxu0 %v46
  %653 = vmatpush1.msra.mxu0 %v45
  %654 = vmatprep.subr.mxu0 %v30
  %655 = vmatpush1.msra.mxu0 %v29
  %656 = vmatprep.subr.mxu0 0.0
  %657 = vmatpush2.msra.mxu0 0.0
  %658 = vmatprep.subr.mxu0 0.0
  %659 = vmatpush2.msra.mxu0 0.0
  %660 = vmatprep.subr.mxu0 0.0
  %661 = vmatpush2.msra.mxu0 0.0
  %662 = vmatprep.subr.mxu0 0.0
  %663 = vmatpush2.msra.mxu0 0.0
  %664 = vmatprep.subr.mxu0 0.0
  %665 = vmatpush2.msra.mxu0 0.0
  %666 = vmatprep.subr.mxu0 0.0
  %667 = vmatpush2.msra.mxu0 0.0
  %668 = vmatprep.subr.mxu0 0.0
  %669 = vmatpush2.msra.mxu0 0.0
  %670 = vmatprep.subr.mxu0 0.0
  %671 = vmatpush2.msra.mxu0 0.0
  %672 = vmatprep.subr.mxu0 0.0
  %673 = vmatpush2.msra.mxu0 0.0
  %674 = vmatprep.subr.mxu0 0.0
  %675 = vmatpush2.msra.mxu0 0.0
  %676 = vmatprep.subr.mxu0 0.0
  %677 = vmatpush2.msra.mxu0 0.0
  %678 = vmatprep.subr.mxu0 0.0
  %679 = vmatpush2.msra.mxu0 0.0
  %680 = vmatprep.subr.mxu0 0.0
  %681 = vmatpush2.msra.mxu0 0.0
  %682 = vmatprep.subr.mxu0 0.0
  %683 = vmatpush2.msra.mxu0 0.0
  %684 = vmatprep.subr.mxu0 %v302
  %685 = vmatpush2.msra.mxu0 %v301
  %686 = vmatprep.subr.mxu0 %v286
  %687 = vmatpush2.msra.mxu0 %v285
  %688 = vmatprep.mubr.f32.mxu0 %v311
  %689 = vmatmul.mubr.f32.gmra.mxu0 %v17
  %v690 = vpop.f32.mrf.mxu0
  %v691 = vadd.f32 0.0, %v690
  %v692 = vpop.f32.mrf.mxu0
  %v693 = vadd.f32 0.0, %v692
  %694 = vmatprep.mubr.f32.mxu0 %v314
  %695 = vmatmul.mubr.f32.gmra.mxu0 %v19
  %v696 = vpop.f32.mrf.mxu0
  %v697 = vadd.f32 0.0, %v696
  %v698 = vpop.f32.mrf.mxu0
  %v699 = vadd.f32 0.0, %v698
  %700 = vdwg.mxu0
  %701 = vmatprep.subr.mxu0 %v272
  %702 = vmatpush1.msra.mxu0 %v271
  %703 = vmatprep.subr.mxu0 %v256
  %704 = vmatpush1.msra.mxu0 %v255
  %705 = vmatprep.subr.mxu0 %v240
  %706 = vmatpush1.msra.mxu0 %v239
  %707 = vmatprep.subr.mxu0 %v224
  %708 = vmatpush1.msra.mxu0 %v223
  %709 = vmatprep.subr.mxu0 %v208
  %710 = vmatpush1.msra.mxu0 %v207
  %711 = vmatprep.subr.mxu0 %v192
  %712 = vmatpush1.msra.mxu0 %v191
  %713 = vmatprep.subr.mxu0 %v176
  %714 = vmatpush1.msra.mxu0 %v175
  %715 = vmatprep.subr.mxu0 %v160
  %716 = vmatpush1.msra.mxu0 %v159
  %717 = vmatprep.subr.mxu0 %v144
  %718 = vmatpush1.msra.mxu0 %v143
  %719 = vmatprep.subr.mxu0 %v128
  %720 = vmatpush1.msra.mxu0 %v127
  %721 = vmatprep.subr.mxu0 %v112
  %722 = vmatpush1.msra.mxu0 %v111
  %723 = vmatprep.subr.mxu0 %v96
  %724 = vmatpush1.msra.mxu0 %v95
  %725 = vmatprep.subr.mxu0 %v80
  %726 = vmatpush1.msra.mxu0 %v79
  %727 = vmatprep.subr.mxu0 %v64
  %728 = vmatpush1.msra.mxu0 %v63
  %729 = vmatprep.subr.mxu0 %v48
  %730 = vmatpush1.msra.mxu0 %v47
  %731 = vmatprep.subr.mxu0 %v32
  %732 = vmatpush1.msra.mxu0 %v31
  %733 = vmatprep.subr.mxu0 0.0
  %734 = vmatpush2.msra.mxu0 0.0
  %735 = vmatprep.subr.mxu0 0.0
  %736 = vmatpush2.msra.mxu0 0.0
  %737 = vmatprep.subr.mxu0 0.0
  %738 = vmatpush2.msra.mxu0 0.0
  %739 = vmatprep.subr.mxu0 0.0
  %740 = vmatpush2.msra.mxu0 0.0
  %741 = vmatprep.subr.mxu0 0.0
  %742 = vmatpush2.msra.mxu0 0.0
  %743 = vmatprep.subr.mxu0 0.0
  %744 = vmatpush2.msra.mxu0 0.0
  %745 = vmatprep.subr.mxu0 0.0
  %746 = vmatpush2.msra.mxu0 0.0
  %747 = vmatprep.subr.mxu0 0.0
  %748 = vmatpush2.msra.mxu0 0.0
  %749 = vmatprep.subr.mxu0 0.0
  %750 = vmatpush2.msra.mxu0 0.0
  %751 = vmatprep.subr.mxu0 0.0
  %752 = vmatpush2.msra.mxu0 0.0
  %753 = vmatprep.subr.mxu0 0.0
  %754 = vmatpush2.msra.mxu0 0.0
  %755 = vmatprep.subr.mxu0 0.0
  %756 = vmatpush2.msra.mxu0 0.0
  %757 = vmatprep.subr.mxu0 0.0
  %758 = vmatpush2.msra.mxu0 0.0
  %759 = vmatprep.subr.mxu0 0.0
  %760 = vmatpush2.msra.mxu0 0.0
  %761 = vmatprep.subr.mxu0 %v304
  %762 = vmatpush2.msra.mxu0 %v303
  %763 = vmatprep.subr.mxu0 %v288
  %764 = vmatpush2.msra.mxu0 %v287
  %765 = vmatprep.mubr.f32.mxu0 %v311
  %766 = vmatmul.mubr.f32.gmra.mxu0 %v17
  %v767 = vpop.f32.mrf.mxu0
  %v768 = vadd.f32 0.0, %v767
  %v769 = vpop.f32.mrf.mxu0
  %v770 = vadd.f32 0.0, %v769
  %771 = vmatprep.mubr.f32.mxu0 %v314
  %772 = vmatmul.mubr.f32.gmra.mxu0 %v19
  %v773 = vpop.f32.mrf.mxu0
  %v774 = vadd.f32 0.0, %v773
  %v775 = vpop.f32.mrf.mxu0
  %v776 = vadd.f32 0.0, %v775
  %777 = vdwg.mxu0
  %778 = vmatprep.subr.mxu0 %v274
  %779 = vmatpush1.msra.mxu0 %v273
  %780 = vmatprep.subr.mxu0 %v258
  %781 = vmatpush1.msra.mxu0 %v257
  %782 = vmatprep.subr.mxu0 %v242
  %783 = vmatpush1.msra.mxu0 %v241
  %784 = vmatprep.subr.mxu0 %v226
  %785 = vmatpush1.msra.mxu0 %v225
  %786 = vmatprep.subr.mxu0 %v210
  %787 = vmatpush1.msra.mxu0 %v209
  %788 = vmatprep.subr.mxu0 %v194
  %789 = vmatpush1.msra.mxu0 %v193
  %790 = vmatprep.subr.mxu0 %v178
  %791 = vmatpush1.msra.mxu0 %v177
  %792 = vmatprep.subr.mxu0 %v162
  %793 = vmatpush1.msra.mxu0 %v161
  %794 = vmatprep.subr.mxu0 %v146
  %795 = vmatpush1.msra.mxu0 %v145
  %796 = vmatprep.subr.mxu0 %v130
  %797 = vmatpush1.msra.mxu0 %v129
  %798 = vmatprep.subr.mxu0 %v114
  %799 = vmatpush1.msra.mxu0 %v113
  %800 = vmatprep.subr.mxu0 %v98
  %801 = vmatpush1.msra.mxu0 %v97
  %802 = vmatprep.subr.mxu0 %v82
  %803 = vmatpush1.msra.mxu0 %v81
  %804 = vmatprep.subr.mxu0 %v66
  %805 = vmatpush1.msra.mxu0 %v65
  %806 = vmatprep.subr.mxu0 %v50
  %807 = vmatpush1.msra.mxu0 %v49
  %808 = vmatprep.subr.mxu0 %v34
  %809 = vmatpush1.msra.mxu0 %v33
  %810 = vmatprep.subr.mxu0 0.0
  %811 = vmatpush2.msra.mxu0 0.0
  %812 = vmatprep.subr.mxu0 0.0
  %813 = vmatpush2.msra.mxu0 0.0
  %814 = vmatprep.subr.mxu0 0.0
  %815 = vmatpush2.msra.mxu0 0.0
  %816 = vmatprep.subr.mxu0 0.0
  %817 = vmatpush2.msra.mxu0 0.0
  %818 = vmatprep.subr.mxu0 0.0
  %819 = vmatpush2.msra.mxu0 0.0
  %820 = vmatprep.subr.mxu0 0.0
  %821 = vmatpush2.msra.mxu0 0.0
  %822 = vmatprep.subr.mxu0 0.0
  %823 = vmatpush2.msra.mxu0 0.0
  %824 = vmatprep.subr.mxu0 0.0
  %825 = vmatpush2.msra.mxu0 0.0
  %826 = vmatprep.subr.mxu0 0.0
  %827 = vmatpush2.msra.mxu0 0.0
  %828 = vmatprep.subr.mxu0 0.0
  %829 = vmatpush2.msra.mxu0 0.0
  %830 = vmatprep.subr.mxu0 0.0
  %831 = vmatpush2.msra.mxu0 0.0
  %832 = vmatprep.subr.mxu0 0.0
  %833 = vmatpush2.msra.mxu0 0.0
  %834 = vmatprep.subr.mxu0 0.0
  %835 = vmatpush2.msra.mxu0 0.0
  %836 = vmatprep.subr.mxu0 0.0
  %837 = vmatpush2.msra.mxu0 0.0
  %838 = vmatprep.subr.mxu0 %v306
  %839 = vmatpush2.msra.mxu0 %v305
  %840 = vmatprep.subr.mxu0 %v290
  %841 = vmatpush2.msra.mxu0 %v289
  %842 = vmatprep.mubr.f32.mxu0 %v311
  %843 = vmatmul.mubr.f32.gmra.mxu0 %v17
  %v844 = vpop.f32.mrf.mxu0
  %v845 = vadd.f32 0.0, %v844
  %v846 = vpop.f32.mrf.mxu0
  %v847 = vadd.f32 0.0, %v846
  %848 = vmatprep.mubr.f32.mxu0 %v314
  %849 = vmatmul.mubr.f32.gmra.mxu0 %v19
  %v850 = vpop.f32.mrf.mxu0
  %v851 = vadd.f32 0.0, %v850
  %v852 = vpop.f32.mrf.mxu0
  %v853 = vadd.f32 0.0, %v852
  %854 = vdwg.mxu0
  %855 = vmatprep.subr.mxu0 %v276
  %856 = vmatpush1.msra.mxu0 %v275
  %857 = vmatprep.subr.mxu0 %v260
  %858 = vmatpush1.msra.mxu0 %v259
  %859 = vmatprep.subr.mxu0 %v244
  %860 = vmatpush1.msra.mxu0 %v243
  %861 = vmatprep.subr.mxu0 %v228
  %862 = vmatpush1.msra.mxu0 %v227
  %863 = vmatprep.subr.mxu0 %v212
  %864 = vmatpush1.msra.mxu0 %v211
  %865 = vmatprep.subr.mxu0 %v196
  %866 = vmatpush1.msra.mxu0 %v195
  %867 = vmatprep.subr.mxu0 %v180
  %868 = vmatpush1.msra.mxu0 %v179
  %869 = vmatprep.subr.mxu0 %v164
  %870 = vmatpush1.msra.mxu0 %v163
  %871 = vmatprep.subr.mxu0 %v148
  %872 = vmatpush1.msra.mxu0 %v147
  %873 = vmatprep.subr.mxu0 %v132
  %874 = vmatpush1.msra.mxu0 %v131
  %875 = vmatprep.subr.mxu0 %v116
  %876 = vmatpush1.msra.mxu0 %v115
  %877 = vmatprep.subr.mxu0 %v100
  %878 = vmatpush1.msra.mxu0 %v99
  %879 = vmatprep.subr.mxu0 %v84
  %880 = vmatpush1.msra.mxu0 %v83
  %881 = vmatprep.subr.mxu0 %v68
  %882 = vmatpush1.msra.mxu0 %v67
  %883 = vmatprep.subr.mxu0 %v52
  %884 = vmatpush1.msra.mxu0 %v51
  %885 = vmatprep.subr.mxu0 %v36
  %886 = vmatpush1.msra.mxu0 %v35
  %887 = vmatprep.subr.mxu0 0.0
  %888 = vmatpush2.msra.mxu0 0.0
  %889 = vmatprep.subr.mxu0 0.0
  %890 = vmatpush2.msra.mxu0 0.0
  %891 = vmatprep.subr.mxu0 0.0
  %892 = vmatpush2.msra.mxu0 0.0
  %893 = vmatprep.subr.mxu0 0.0
  %894 = vmatpush2.msra.mxu0 0.0
  %895 = vmatprep.subr.mxu0 0.0
  %896 = vmatpush2.msra.mxu0 0.0
  %897 = vmatprep.subr.mxu0 0.0
  %898 = vmatpush2.msra.mxu0 0.0
  %899 = vmatprep.subr.mxu0 0.0
  %900 = vmatpush2.msra.mxu0 0.0
  %901 = vmatprep.subr.mxu0 0.0
  %902 = vmatpush2.msra.mxu0 0.0
  %903 = vmatprep.subr.mxu0 0.0
  %904 = vmatpush2.msra.mxu0 0.0
  %905 = vmatprep.subr.mxu0 0.0
  %906 = vmatpush2.msra.mxu0 0.0
  %907 = vmatprep.subr.mxu0 0.0
  %908 = vmatpush2.msra.mxu0 0.0
  %909 = vmatprep.subr.mxu0 0.0
  %910 = vmatpush2.msra.mxu0 0.0
  %911 = vmatprep.subr.mxu0 0.0
  %912 = vmatpush2.msra.mxu0 0.0
  %913 = vmatprep.subr.mxu0 0.0
  %914 = vmatpush2.msra.mxu0 0.0
  %915 = vmatprep.subr.mxu0 %v308
  %916 = vmatpush2.msra.mxu0 %v307
  %917 = vmatprep.subr.mxu0 %v292
  %918 = vmatpush2.msra.mxu0 %v291
  %919 = vmatprep.mubr.f32.mxu0 %v311
  %920 = vmatmul.mubr.f32.gmra.mxu0 %v17
  %v921 = vpop.f32.mrf.mxu0
  %v922 = vadd.f32 0.0, %v921
  %v923 = vpop.f32.mrf.mxu0
  %v924 = vadd.f32 0.0, %v923
  %925 = vmatprep.mubr.f32.mxu0 %v314
  %926 = vmatmul.mubr.f32.gmra.mxu0 %v19
  %v927 = vpop.f32.mrf.mxu0
  %v928 = vadd.f32 0.0, %v927
  %v929 = vpop.f32.mrf.mxu0
  %v930 = vadd.f32 0.0, %v929
  %931 = vdwg.mxu0
  %v932 = vadd.f32 %v383, %v385
  %v933 = vadd.f32 %v932, %v460
  %v934 = vadd.f32 %v933, %v462
  %v935 = vadd.f32 %v934, %v537
  %v936 = vadd.f32 %v935, %v539
  %v937 = vadd.f32 %v936, %v614
  %v938 = vadd.f32 %v937, %v616
  %v939 = vadd.f32 %v938, %v691
  %v940 = vadd.f32 %v939, %v693
  %v941 = vadd.f32 %v940, %v768
  %v942 = vadd.f32 %v941, %v770
  %v943 = vadd.f32 %v942, %v845
  %v944 = vadd.f32 %v943, %v847
  %v945 = vadd.f32 %v944, %v922
  %v946 = vadd.f32 %v945, %v924
  %947 = vadd.xlane.f32.xlu0 %v946
  %v948 = vpop.xlane.xlu0 %947
  %v949 = vadd.f32 %v389, %v391
  %v950 = vadd.f32 %v949, %v466
  %v951 = vadd.f32 %v950, %v468
  %v952 = vadd.f32 %v951, %v543
  %v953 = vadd.f32 %v952, %v545
  %v954 = vadd.f32 %v953, %v620
  %v955 = vadd.f32 %v954, %v622
  %v956 = vadd.f32 %v955, %v697
  %v957 = vadd.f32 %v956, %v699
  %v958 = vadd.f32 %v957, %v774
  %v959 = vadd.f32 %v958, %v776
  %v960 = vadd.f32 %v959, %v851
  %v961 = vadd.f32 %v960, %v853
  %v962 = vadd.f32 %v961, %v928
  %v963 = vadd.f32 %v962, %v930
  %964 = vadd.xlane.f32.xlu0 %v963
  %v965 = vpop.xlane.xlu0 %964
  %v966 = vmul.f32 %v948, 0.00048828125
  %v967 = vmul.f32 %v965, 0.00048828125
  %v968 = vsub.f32 %v383, %v966
  %v969 = vsub.f32 %v385, %v966
  %v970 = vsub.f32 %v460, %v966
  %v971 = vsub.f32 %v462, %v966
  %v972 = vsub.f32 %v537, %v966
  %v973 = vsub.f32 %v539, %v966
  %v974 = vsub.f32 %v614, %v966
  %v975 = vsub.f32 %v616, %v966
  %v976 = vsub.f32 %v691, %v966
  %v977 = vsub.f32 %v693, %v966
  %v978 = vsub.f32 %v768, %v966
  %v979 = vsub.f32 %v770, %v966
  %v980 = vsub.f32 %v845, %v966
  %v981 = vsub.f32 %v847, %v966
  %v982 = vsub.f32 %v922, %v966
  %v983 = vsub.f32 %v924, %v966
  %v984 = vsub.f32 %v389, %v967
  %v985 = vsub.f32 %v391, %v967
  %v986 = vsub.f32 %v466, %v967
  %v987 = vsub.f32 %v468, %v967
  %v988 = vsub.f32 %v543, %v967
  %v989 = vsub.f32 %v545, %v967
  %v990 = vsub.f32 %v620, %v967
  %v991 = vsub.f32 %v622, %v967
  %v992 = vsub.f32 %v697, %v967
  %v993 = vsub.f32 %v699, %v967
  %v994 = vsub.f32 %v774, %v967
  %v995 = vsub.f32 %v776, %v967
  %v996 = vsub.f32 %v851, %v967
  %v997 = vsub.f32 %v853, %v967
  %v998 = vsub.f32 %v928, %v967
  %v999 = vsub.f32 %v930, %v967
  %v1000 = vmul.f32 %v968, %v968
  %v1001 = vmul.f32 %v969, %v969
  %v1002 = vmul.f32 %v970, %v970
  %v1003 = vmul.f32 %v971, %v971
  %v1004 = vmul.f32 %v972, %v972
  %v1005 = vmul.f32 %v973, %v973
  %v1006 = vmul.f32 %v974, %v974
  %v1007 = vmul.f32 %v975, %v975
  %v1008 = vmul.f32 %v976, %v976
  %v1009 = vmul.f32 %v977, %v977
  %v1010 = vmul.f32 %v978, %v978
  %v1011 = vmul.f32 %v979, %v979
  %v1012 = vmul.f32 %v980, %v980
  %v1013 = vmul.f32 %v981, %v981
  %v1014 = vmul.f32 %v982, %v982
  %v1015 = vmul.f32 %v983, %v983
  %v1016 = vmul.f32 %v984, %v984
  %v1017 = vmul.f32 %v985, %v985
  %v1018 = vmul.f32 %v986, %v986
  %v1019 = vmul.f32 %v987, %v987
  %v1020 = vmul.f32 %v988, %v988
  %v1021 = vmul.f32 %v989, %v989
  %v1022 = vmul.f32 %v990, %v990
  %v1023 = vmul.f32 %v991, %v991
  %v1024 = vmul.f32 %v992, %v992
  %v1025 = vmul.f32 %v993, %v993
  %v1026 = vmul.f32 %v994, %v994
  %v1027 = vmul.f32 %v995, %v995
  %v1028 = vmul.f32 %v996, %v996
  %v1029 = vmul.f32 %v997, %v997
  %v1030 = vmul.f32 %v998, %v998
  %v1031 = vmul.f32 %v999, %v999
  %v1032 = vadd.f32 %v1000, %v1001
  %v1033 = vadd.f32 %v1032, %v1002
  %v1034 = vadd.f32 %v1033, %v1003
  %v1035 = vadd.f32 %v1034, %v1004
  %v1036 = vadd.f32 %v1035, %v1005
  %v1037 = vadd.f32 %v1036, %v1006
  %v1038 = vadd.f32 %v1037, %v1007
  %v1039 = vadd.f32 %v1038, %v1008
  %v1040 = vadd.f32 %v1039, %v1009
  %v1041 = vadd.f32 %v1040, %v1010
  %v1042 = vadd.f32 %v1041, %v1011
  %v1043 = vadd.f32 %v1042, %v1012
  %v1044 = vadd.f32 %v1043, %v1013
  %v1045 = vadd.f32 %v1044, %v1014
  %v1046 = vadd.f32 %v1045, %v1015
  %1047 = vadd.xlane.f32.xlu0 %v1046
  %v1048 = vpop.xlane.xlu0 %1047
  %v1049 = vadd.f32 %v1016, %v1017
  %v1050 = vadd.f32 %v1049, %v1018
  %v1051 = vadd.f32 %v1050, %v1019
  %v1052 = vadd.f32 %v1051, %v1020
  %v1053 = vadd.f32 %v1052, %v1021
  %v1054 = vadd.f32 %v1053, %v1022
  %v1055 = vadd.f32 %v1054, %v1023
  %v1056 = vadd.f32 %v1055, %v1024
  %v1057 = vadd.f32 %v1056, %v1025
  %v1058 = vadd.f32 %v1057, %v1026
  %v1059 = vadd.f32 %v1058, %v1027
  %v1060 = vadd.f32 %v1059, %v1028
  %v1061 = vadd.f32 %v1060, %v1029
  %v1062 = vadd.f32 %v1061, %v1030
  %v1063 = vadd.f32 %v1062, %v1031
  %1064 = vadd.xlane.f32.xlu0 %v1063
  %v1065 = vpop.xlane.xlu0 %1064
  %v1066 = vmul.f32 %v1048, 0.00048828125
  %v1067 = vmul.f32 %v1065, 0.00048828125
  %v1068 = vadd.f32 %v1066, 1e-05
  %v1069 = vadd.f32 %v1067, 1e-05
  %v1070 = vrsqrt.pop %v1068
  %v1071 = vrsqrt.pop %v1069
  %v1072 = vmul.f32 %v968, %v1070
  %v1073 = vmul.f32 %v969, %v1070
  %v1074 = vmul.f32 %v970, %v1070
  %v1075 = vmul.f32 %v971, %v1070
  %v1076 = vmul.f32 %v972, %v1070
  %v1077 = vmul.f32 %v973, %v1070
  %v1078 = vmul.f32 %v974, %v1070
  %v1079 = vmul.f32 %v975, %v1070
  %v1080 = vmul.f32 %v976, %v1070
  %v1081 = vmul.f32 %v977, %v1070
  %v1082 = vmul.f32 %v978, %v1070
  %v1083 = vmul.f32 %v979, %v1070
  %v1084 = vmul.f32 %v980, %v1070
  %v1085 = vmul.f32 %v981, %v1070
  %v1086 = vmul.f32 %v982, %v1070
  %v1087 = vmul.f32 %v983, %v1070
  %v1088 = vmul.f32 %v984, %v1071
  %v1089 = vmul.f32 %v985, %v1071
  %v1090 = vmul.f32 %v986, %v1071
  %v1091 = vmul.f32 %v987, %v1071
  %v1092 = vmul.f32 %v988, %v1071
  %v1093 = vmul.f32 %v989, %v1071
  %v1094 = vmul.f32 %v990, %v1071
  %v1095 = vmul.f32 %v991, %v1071
  %v1096 = vmul.f32 %v992, %v1071
  %v1097 = vmul.f32 %v993, %v1071
  %v1098 = vmul.f32 %v994, %v1071
  %v1099 = vmul.f32 %v995, %v1071
  %v1100 = vmul.f32 %v996, %v1071
  %v1101 = vmul.f32 %v997, %v1071
  %v1102 = vmul.f32 %v998, %v1071
  %v1103 = vmul.f32 %v999, %v1071
  %v1104 = vld [vmem:[%s2] sm:$0xff]
  %v1105 = vld [vmem:[%s2 + $0x8] sm:$0xff]
  %1107 = vset.pattern.permute.xlu0 0
  %1108 = vperm.xlu0 %1107, %v1104
  %v1109 = vpop.permute.xlu0 %1108
  %1112 = vset.pattern.permute.xlu0 0
  %1113 = vperm.xlu0 %1112, %v1105
  %v1114 = vpop.permute.xlu0 %1113
  %v1116 = vmul.f32 %v1072, %v1109
  %v1117 = vmul.f32 %v1073, %v1109
  %v1118 = vmul.f32 %v1074, %v1109
  %v1119 = vmul.f32 %v1075, %v1109
  %v1120 = vmul.f32 %v1076, %v1109
  %v1121 = vmul.f32 %v1077, %v1109
  %v1122 = vmul.f32 %v1078, %v1109
  %v1123 = vmul.f32 %v1079, %v1109
  %v1124 = vmul.f32 %v1080, %v1109
  %v1125 = vmul.f32 %v1081, %v1109
  %v1126 = vmul.f32 %v1082, %v1109
  %v1127 = vmul.f32 %v1083, %v1109
  %v1128 = vmul.f32 %v1084, %v1109
  %v1129 = vmul.f32 %v1085, %v1109
  %v1130 = vmul.f32 %v1086, %v1109
  %v1131 = vmul.f32 %v1087, %v1109
  %v1132 = vmul.f32 %v1088, %v1114
  %v1133 = vmul.f32 %v1089, %v1114
  %v1134 = vmul.f32 %v1090, %v1114
  %v1135 = vmul.f32 %v1091, %v1114
  %v1136 = vmul.f32 %v1092, %v1114
  %v1137 = vmul.f32 %v1093, %v1114
  %v1138 = vmul.f32 %v1094, %v1114
  %v1139 = vmul.f32 %v1095, %v1114
  %v1140 = vmul.f32 %v1096, %v1114
  %v1141 = vmul.f32 %v1097, %v1114
  %v1142 = vmul.f32 %v1098, %v1114
  %v1143 = vmul.f32 %v1099, %v1114
  %v1144 = vmul.f32 %v1100, %v1114
  %v1145 = vmul.f32 %v1101, %v1114
  %v1146 = vmul.f32 %v1102, %v1114
  %v1147 = vmul.f32 %v1103, %v1114
  %v1148 = vld [vmem:[%s3] sm:$0xff]
  %v1149 = vld [vmem:[%s3 + $0x8] sm:$0xff]
  %1151 = vset.pattern.permute.xlu0 0
  %1152 = vperm.xlu0 %1151, %v1148
  %v1153 = vpop.permute.xlu0 %1152
  %1156 = vset.pattern.permute.xlu0 0
  %1157 = vperm.xlu0 %1156, %v1149
  %v1158 = vpop.permute.xlu0 %1157
  %v1160 = vadd.f32 %v1116, %v1153
  %v1161 = vadd.f32 %v1117, %v1153
  %v1162 = vadd.f32 %v1118, %v1153
  %v1163 = vadd.f32 %v1119, %v1153
  %v1164 = vadd.f32 %v1120, %v1153
  %v1165 = vadd.f32 %v1121, %v1153
  %v1166 = vadd.f32 %v1122, %v1153
  %v1167 = vadd.f32 %v1123, %v1153
  %v1168 = vadd.f32 %v1124, %v1153
  %v1169 = vadd.f32 %v1125, %v1153
  %v1170 = vadd.f32 %v1126, %v1153
  %v1171 = vadd.f32 %v1127, %v1153
  %v1172 = vadd.f32 %v1128, %v1153
  %v1173 = vadd.f32 %v1129, %v1153
  %v1174 = vadd.f32 %v1130, %v1153
  %v1175 = vadd.f32 %v1131, %v1153
  %v1176 = vadd.f32 %v1132, %v1158
  %v1177 = vadd.f32 %v1133, %v1158
  %v1178 = vadd.f32 %v1134, %v1158
  %v1179 = vadd.f32 %v1135, %v1158
  %v1180 = vadd.f32 %v1136, %v1158
  %v1181 = vadd.f32 %v1137, %v1158
  %v1182 = vadd.f32 %v1138, %v1158
  %v1183 = vadd.f32 %v1139, %v1158
  %v1184 = vadd.f32 %v1140, %v1158
  %v1185 = vadd.f32 %v1141, %v1158
  %v1186 = vadd.f32 %v1142, %v1158
  %v1187 = vadd.f32 %v1143, %v1158
  %v1188 = vadd.f32 %v1144, %v1158
  %v1189 = vadd.f32 %v1145, %v1158
  %v1190 = vadd.f32 %v1146, %v1158
  %v1191 = vadd.f32 %v1147, %v1158
  %v1192 = vmul.f32 %v1176, 0.5
  %v1193 = vmul.f32 %v1177, 0.5
  %v1194 = vmul.f32 %v1178, 0.5
  %v1195 = vmul.f32 %v1179, 0.5
  %v1196 = vmul.f32 %v1180, 0.5
  %v1197 = vmul.f32 %v1181, 0.5
  %v1198 = vmul.f32 %v1182, 0.5
  %v1199 = vmul.f32 %v1183, 0.5
  %v1200 = vmul.f32 %v1184, 0.5
  %v1201 = vmul.f32 %v1185, 0.5
  %v1202 = vmul.f32 %v1186, 0.5
  %v1203 = vmul.f32 %v1187, 0.5
  %v1204 = vmul.f32 %v1188, 0.5
  %v1205 = vmul.f32 %v1189, 0.5
  %v1206 = vmul.f32 %v1190, 0.5
  %v1207 = vmul.f32 %v1191, 0.5
  %v1208 = vtanh.pop %v1192
  %v1209 = vtanh.pop %v1193
  %v1210 = vtanh.pop %v1194
  %v1211 = vtanh.pop %v1195
  %v1212 = vtanh.pop %v1196
  %v1213 = vtanh.pop %v1197
  %v1214 = vtanh.pop %v1198
  %v1215 = vtanh.pop %v1199
  %v1216 = vtanh.pop %v1200
  %v1217 = vtanh.pop %v1201
  %v1218 = vtanh.pop %v1202
  %v1219 = vtanh.pop %v1203
  %v1220 = vtanh.pop %v1204
  %v1221 = vtanh.pop %v1205
  %v1222 = vtanh.pop %v1206
  %v1223 = vtanh.pop %v1207
  %v1224 = vadd.f32 %v1208, 1.0
  %v1225 = vadd.f32 %v1209, 1.0
  %v1226 = vadd.f32 %v1210, 1.0
  %v1227 = vadd.f32 %v1211, 1.0
  %v1228 = vadd.f32 %v1212, 1.0
  %v1229 = vadd.f32 %v1213, 1.0
  %v1230 = vadd.f32 %v1214, 1.0
  %v1231 = vadd.f32 %v1215, 1.0
  %v1232 = vadd.f32 %v1216, 1.0
  %v1233 = vadd.f32 %v1217, 1.0
  %v1234 = vadd.f32 %v1218, 1.0
  %v1235 = vadd.f32 %v1219, 1.0
  %v1236 = vadd.f32 %v1220, 1.0
  %v1237 = vadd.f32 %v1221, 1.0
  %v1238 = vadd.f32 %v1222, 1.0
  %v1239 = vadd.f32 %v1223, 1.0
  %v1240 = vmul.f32 %v1224, 0.5
  %v1241 = vmul.f32 %v1225, 0.5
  %v1242 = vmul.f32 %v1226, 0.5
  %v1243 = vmul.f32 %v1227, 0.5
  %v1244 = vmul.f32 %v1228, 0.5
  %v1245 = vmul.f32 %v1229, 0.5
  %v1246 = vmul.f32 %v1230, 0.5
  %v1247 = vmul.f32 %v1231, 0.5
  %v1248 = vmul.f32 %v1232, 0.5
  %v1249 = vmul.f32 %v1233, 0.5
  %v1250 = vmul.f32 %v1234, 0.5
  %v1251 = vmul.f32 %v1235, 0.5
  %v1252 = vmul.f32 %v1236, 0.5
  %v1253 = vmul.f32 %v1237, 0.5
  %v1254 = vmul.f32 %v1238, 0.5
  %v1255 = vmul.f32 %v1239, 0.5
  %v1256 = vmul.f32 %v1160, %v1240
  %v1257 = vmul.f32 %v1161, %v1241
  %v1258 = vmul.f32 %v1162, %v1242
  %v1259 = vmul.f32 %v1163, %v1243
  %v1260 = vmul.f32 %v1164, %v1244
  %v1261 = vmul.f32 %v1165, %v1245
  %v1262 = vmul.f32 %v1166, %v1246
  %v1263 = vmul.f32 %v1167, %v1247
  %v1264 = vmul.f32 %v1168, %v1248
  %v1265 = vmul.f32 %v1169, %v1249
  %v1266 = vmul.f32 %v1170, %v1250
  %v1267 = vmul.f32 %v1171, %v1251
  %v1268 = vmul.f32 %v1172, %v1252
  %v1269 = vmul.f32 %v1173, %v1253
  %v1270 = vmul.f32 %v1174, %v1254
  %v1271 = vmul.f32 %v1175, %v1255
  %1272 = vst [vmem:[%s4] sm:$0xff] %v1256
  %1273 = vst [vmem:[%s4 + $0x8] sm:$0xff] %v1257
  %1274 = vst [vmem:[%s4 + $0x10] sm:$0xff] %v1258
  %1275 = vst [vmem:[%s4 + $0x18] sm:$0xff] %v1259
  %1276 = vst [vmem:[%s4 + $0x20] sm:$0xff] %v1260
  %1277 = vst [vmem:[%s4 + $0x28] sm:$0xff] %v1261
  %1278 = vst [vmem:[%s4 + $0x30] sm:$0xff] %v1262
  %1279 = vst [vmem:[%s4 + $0x38] sm:$0xff] %v1263
  %1280 = vst [vmem:[%s4 + $0x40] sm:$0xff] %v1264
  %1281 = vst [vmem:[%s4 + $0x48] sm:$0xff] %v1265
  %1282 = vst [vmem:[%s4 + $0x50] sm:$0xff] %v1266
  %1283 = vst [vmem:[%s4 + $0x58] sm:$0xff] %v1267
  %1284 = vst [vmem:[%s4 + $0x60] sm:$0xff] %v1268
  %1285 = vst [vmem:[%s4 + $0x68] sm:$0xff] %v1269
  %1286 = vst [vmem:[%s4 + $0x70] sm:$0xff] %v1270
  %1287 = vst [vmem:[%s4 + $0x78] sm:$0xff] %v1271
  // Predicated region
  $region18: #{init_stage_g_forward.8} parent=0 // pred_check
    _
  $region19: #{init_stage_g_forward.8} parent=0 // pred_check_branch
    %1289 = sbr.rel (0) target = $region21
  $region20: #{init_stage_g_forward.8} parent=0 // pred_region
    _
  $region21: #{init_stage_g_forward.8} parent=0 // pred_fallthru
    _
  // Predicated region
  $region22: #{init_stage_g_forward.8} parent=0 // pred_check
    _
  $region23: #{init_stage_g_forward.8} parent=0 // pred_check_branch
    %1291 = sbr.rel (0) target = $region25
  $region24: #{init_stage_g_forward.8} parent=0 // pred_region
    _
  $region25: #{init_stage_g_forward.8} parent=0 // pred_fallthru
    _

// kernel: init_stage_g_forward.9
$region0: #{init_stage_g_forward.9}
  #allocation0 [shape = 'u32[]', space=smem, size = 0x4, offset = 0x4, fixed_abs, tag = 'smem constant byte address 0x4 - core index']
  #allocation1 [shape = 'u32[144,128]{1,0:T(1,128)}', space=vmem, size = 0x12000, scoped, tag = 'internal scratch']
  %s0 = inlined_call_operand.vmem [shape: f32[72,8192], index: 0, kind: input, shape index: {}]
  %s1 = inlined_call_operand.vmem [shape: f32[8,72], index: 1, kind: input, shape index: {}]
  %s2 = inlined_call_operand.vmem [shape: f32[8,1], index: 2, kind: input, shape index: {}]
  %s3 = inlined_call_operand.vmem [shape: f32[8,1], index: 3, kind: input, shape index: {}]
  %s4 = inlined_call_operand.vmem [shape: f32[4,8192], index: 4, kind: output, shape index: {}]
  %s5 = sld [smem:[#allocation0]]
  $region26: #{init_stage_g_forward.9} parent=0
    _
  %s7 = ssub.s32 1, %s5
  %s8 = scalar_select 0, %s7, %s5
  // Predicated region
  $region2: #{init_stage_g_forward.9} parent=0 // pred_check
    _
  $region3: #{init_stage_g_forward.9} parent=0 // pred_check_branch
    %10 = sbr.rel (0) target = $region5
  $region4: #{init_stage_g_forward.9} parent=0 // pred_region
    _
  $region5: #{init_stage_g_forward.9} parent=0 // pred_fallthru
    _
  // Predicated region
  $region6: #{init_stage_g_forward.9} parent=0 // pred_check
    _
  $region7: #{init_stage_g_forward.9} parent=0 // pred_check_branch
    %12 = sbr.rel (0) target = $region9
  $region8: #{init_stage_g_forward.9} parent=0 // pred_region
    _
  $region9: #{init_stage_g_forward.9} parent=0 // pred_fallthru
    _
  // Predicated region
  $region10: #{init_stage_g_forward.9} parent=0 // pred_check
    _
  $region11: #{init_stage_g_forward.9} parent=0 // pred_check_branch
    %14 = sbr.rel (0) target = $region13
  $region12: #{init_stage_g_forward.9} parent=0 // pred_region
    _
  $region13: #{init_stage_g_forward.9} parent=0 // pred_fallthru
    _
  // Predicated region
  $region14: #{init_stage_g_forward.9} parent=0 // pred_check
    _
  $region15: #{init_stage_g_forward.9} parent=0 // pred_check_branch
    %16 = sbr.rel (0) target = $region17
  $region16: #{init_stage_g_forward.9} parent=0 // pred_region
    _
  $region17: #{init_stage_g_forward.9} parent=0 // pred_fallthru
    _
  %v17 = vld [vmem:[%s1] sm:$0xff]
  %v18 = vld [vmem:[%s0] sm:$0xff]
  %v19 = vld [vmem:[%s0 + $0x8] sm:$0xff]
  %v20 = vld [vmem:[%s0 + $0x10] sm:$0xff]
  %v21 = vld [vmem:[%s0 + $0x18] sm:$0xff]
  %v22 = vld [vmem:[%s0 + $0x20] sm:$0xff]
  %v23 = vld [vmem:[%s0 + $0x28] sm:$0xff]
  %v24 = vld [vmem:[%s0 + $0x30] sm:$0xff]
  %v25 = vld [vmem:[%s0 + $0x38] sm:$0xff]
  %v26 = vld [vmem:[%s0 + $0x40] sm:$0xff]
  %v27 = vld [vmem:[%s0 + $0x48] sm:$0xff]
  %v28 = vld [vmem:[%s0 + $0x50] sm:$0xff]
  %v29 = vld [vmem:[%s0 + $0x58] sm:$0xff]
  %v30 = vld [vmem:[%s0 + $0x60] sm:$0xff]
  %v31 = vld [vmem:[%s0 + $0x68] sm:$0xff]
  %v32 = vld [vmem:[%s0 + $0x70] sm:$0xff]
  %v33 = vld [vmem:[%s0 + $0x78] sm:$0xff]
  %v34 = vld [vmem:[%s0 + $0x80] sm:$0xff]
  %v35 = vld [vmem:[%s0 + $0x88] sm:$0xff]
  %v36 = vld [vmem:[%s0 + $0x90] sm:$0xff]
  %v37 = vld [vmem:[%s0 + $0x98] sm:$0xff]
  %v38 = vld [vmem:[%s0 + $0xa0] sm:$0xff]
  %v39 = vld [vmem:[%s0 + $0xa8] sm:$0xff]
  %v40 = vld [vmem:[%s0 + $0xb0] sm:$0xff]
  %v41 = vld [vmem:[%s0 + $0xb8] sm:$0xff]
  %v42 = vld [vmem:[%s0 + $0xc0] sm:$0xff]
  %v43 = vld [vmem:[%s0 + $0xc8] sm:$0xff]
  %v44 = vld [vmem:[%s0 + $0xd0] sm:$0xff]
  %v45 = vld [vmem:[%s0 + $0xd8] sm:$0xff]
  %v46 = vld [vmem:[%s0 + $0xe0] sm:$0xff]
  %v47 = vld [vmem:[%s0 + $0xe8] sm:$0xff]
  %v48 = vld [vmem:[%s0 + $0xf0] sm:$0xff]
  %v49 = vld [vmem:[%s0 + $0xf8] sm:$0xff]
  %v50 = vld [vmem:[%s0 + $0x100] sm:$0xff]
  %v51 = vld [vmem:[%s0 + $0x108] sm:$0xff]
  %v52 = vld [vmem:[%s0 + $0x110] sm:$0xff]
  %v53 = vld [vmem:[%s0 + $0x118] sm:$0xff]
  %v54 = vld [vmem:[%s0 + $0x120] sm:$0xff]
  %v55 = vld [vmem:[%s0 + $0x128] sm:$0xff]
  %v56 = vld [vmem:[%s0 + $0x130] sm:$0xff]
  %v57 = vld [vmem:[%s0 + $0x138] sm:$0xff]
  %v58 = vld [vmem:[%s0 + $0x140] sm:$0xff]
  %v59 = vld [vmem:[%s0 + $0x148] sm:$0xff]
  %v60 = vld [vmem:[%s0 + $0x150] sm:$0xff]
  %v61 = vld [vmem:[%s0 + $0x158] sm:$0xff]
  %v62 = vld [vmem:[%s0 + $0x160] sm:$0xff]
  %v63 = vld [vmem:[%s0 + $0x168] sm:$0xff]
  %v64 = vld [vmem:[%s0 + $0x170] sm:$0xff]
  %v65 = vld [vmem:[%s0 + $0x178] sm:$0xff]
  %v66 = vld [vmem:[%s0 + $0x180] sm:$0xff]
  %v67 = vld [vmem:[%s0 + $0x188] sm:$0xff]
  %v68 = vld [vmem:[%s0 + $0x190] sm:$0xff]
  %v69 = vld [vmem:[%s0 + $0x198] sm:$0xff]
  %v70 = vld [vmem:[%s0 + $0x1a0] sm:$0xff]
  %v71 = vld [vmem:[%s0 + $0x1a8] sm:$0xff]
  %v72 = vld [vmem:[%s0 + $0x1b0] sm:$0xff]
  %v73 = vld [vmem:[%s0 + $0x1b8] sm:$0xff]
  %v74 = vld [vmem:[%s0 + $0x1c0] sm:$0xff]
  %v75 = vld [vmem:[%s0 + $0x1c8] sm:$0xff]
  %v76 = vld [vmem:[%s0 + $0x1d0] sm:$0xff]
  %v77 = vld [vmem:[%s0 + $0x1d8] sm:$0xff]
  %v78 = vld [vmem:[%s0 + $0x1e0] sm:$0xff]
  %v79 = vld [vmem:[%s0 + $0x1e8] sm:$0xff]
  %v80 = vld [vmem:[%s0 + $0x1f0] sm:$0xff]
  %v81 = vld [vmem:[%s0 + $0x1f8] sm:$0xff]
  %v82 = vld [vmem:[%s0 + $0x200] sm:$0xff]
  %v83 = vld [vmem:[%s0 + $0x208] sm:$0xff]
  %v84 = vld [vmem:[%s0 + $0x210] sm:$0xff]
  %v85 = vld [vmem:[%s0 + $0x218] sm:$0xff]
  %v86 = vld [vmem:[%s0 + $0x220] sm:$0xff]
  %v87 = vld [vmem:[%s0 + $0x228] sm:$0xff]
  %v88 = vld [vmem:[%s0 + $0x230] sm:$0xff]
  %v89 = vld [vmem:[%s0 + $0x238] sm:$0xff]
  %v90 = vld [vmem:[%s0 + $0x240] sm:$0xff]
  %v91 = vld [vmem:[%s0 + $0x248] sm:$0xff]
  %v92 = vld [vmem:[%s0 + $0x250] sm:$0xff]
  %v93 = vld [vmem:[%s0 + $0x258] sm:$0xff]
  %v94 = vld [vmem:[%s0 + $0x260] sm:$0xff]
  %v95 = vld [vmem:[%s0 + $0x268] sm:$0xff]
  %v96 = vld [vmem:[%s0 + $0x270] sm:$0xff]
  %v97 = vld [vmem:[%s0 + $0x278] sm:$0xff]
  %v98 = vld [vmem:[%s0 + $0x280] sm:$0xff]
  %v99 = vld [vmem:[%s0 + $0x288] sm:$0xff]
  %v100 = vld [vmem:[%s0 + $0x290] sm:$0xff]
  %v101 = vld [vmem:[%s0 + $0x298] sm:$0xff]
  %v102 = vld [vmem:[%s0 + $0x2a0] sm:$0xff]
  %v103 = vld [vmem:[%s0 + $0x2a8] sm:$0xff]
  %v104 = vld [vmem:[%s0 + $0x2b0] sm:$0xff]
  %v105 = vld [vmem:[%s0 + $0x2b8] sm:$0xff]
  %v106 = vld [vmem:[%s0 + $0x2c0] sm:$0xff]
  %v107 = vld [vmem:[%s0 + $0x2c8] sm:$0xff]
  %v108 = vld [vmem:[%s0 + $0x2d0] sm:$0xff]
  %v109 = vld [vmem:[%s0 + $0x2d8] sm:$0xff]
  %v110 = vld [vmem:[%s0 + $0x2e0] sm:$0xff]
  %v111 = vld [vmem:[%s0 + $0x2e8] sm:$0xff]
  %v112 = vld [vmem:[%s0 + $0x2f0] sm:$0xff]
  %v113 = vld [vmem:[%s0 + $0x2f8] sm:$0xff]
  %v114 = vld [vmem:[%s0 + $0x300] sm:$0xff]
  %v115 = vld [vmem:[%s0 + $0x308] sm:$0xff]
  %v116 = vld [vmem:[%s0 + $0x310] sm:$0xff]
  %v117 = vld [vmem:[%s0 + $0x318] sm:$0xff]
  %v118 = vld [vmem:[%s0 + $0x320] sm:$0xff]
  %v119 = vld [vmem:[%s0 + $0x328] sm:$0xff]
  %v120 = vld [vmem:[%s0 + $0x330] sm:$0xff]
  %v121 = vld [vmem:[%s0 + $0x338] sm:$0xff]
  %v122 = vld [vmem:[%s0 + $0x340] sm:$0xff]
  %v123 = vld [vmem:[%s0 + $0x348] sm:$0xff]
  %v124 = vld [vmem:[%s0 + $0x350] sm:$0xff]
  %v125 = vld [vmem:[%s0 + $0x358] sm:$0xff]
  %v126 = vld [vmem:[%s0 + $0x360] sm:$0xff]
  %v127 = vld [vmem:[%s0 + $0x368] sm:$0xff]
  %v128 = vld [vmem:[%s0 + $0x370] sm:$0xff]
  %v129 = vld [vmem:[%s0 + $0x378] sm:$0xff]
  %v130 = vld [vmem:[%s0 + $0x380] sm:$0xff]
  %v131 = vld [vmem:[%s0 + $0x388] sm:$0xff]
  %v132 = vld [vmem:[%s0 + $0x390] sm:$0xff]
  %v133 = vld [vmem:[%s0 + $0x398] sm:$0xff]
  %v134 = vld [vmem:[%s0 + $0x3a0] sm:$0xff]
  %v135 = vld [vmem:[%s0 + $0x3a8] sm:$0xff]
  %v136 = vld [vmem:[%s0 + $0x3b0] sm:$0xff]
  %v137 = vld [vmem:[%s0 + $0x3b8] sm:$0xff]
  %v138 = vld [vmem:[%s0 + $0x3c0] sm:$0xff]
  %v139 = vld [vmem:[%s0 + $0x3c8] sm:$0xff]
  %v140 = vld [vmem:[%s0 + $0x3d0] sm:$0xff]
  %v141 = vld [vmem:[%s0 + $0x3d8] sm:$0xff]
  %v142 = vld [vmem:[%s0 + $0x3e0] sm:$0xff]
  %v143 = vld [vmem:[%s0 + $0x3e8] sm:$0xff]
  %v144 = vld [vmem:[%s0 + $0x3f0] sm:$0xff]
  %v145 = vld [vmem:[%s0 + $0x3f8] sm:$0xff]
  %v146 = vld [vmem:[%s0 + $0x400] sm:$0xff]
  %v147 = vld [vmem:[%s0 + $0x408] sm:$0xff]
  %v148 = vld [vmem:[%s0 + $0x410] sm:$0xff]
  %v149 = vld [vmem:[%s0 + $0x418] sm:$0xff]
  %v150 = vld [vmem:[%s0 + $0x420] sm:$0xff]
  %v151 = vld [vmem:[%s0 + $0x428] sm:$0xff]
  %v152 = vld [vmem:[%s0 + $0x430] sm:$0xff]
  %v153 = vld [vmem:[%s0 + $0x438] sm:$0xff]
  %v154 = vld [vmem:[%s0 + $0x440] sm:$0xff]
  %v155 = vld [vmem:[%s0 + $0x448] sm:$0xff]
  %v156 = vld [vmem:[%s0 + $0x450] sm:$0xff]
  %v157 = vld [vmem:[%s0 + $0x458] sm:$0xff]
  %v158 = vld [vmem:[%s0 + $0x460] sm:$0xff]
  %v159 = vld [vmem:[%s0 + $0x468] sm:$0xff]
  %v160 = vld [vmem:[%s0 + $0x470] sm:$0xff]
  %v161 = vld [vmem:[%s0 + $0x478] sm:$0xff]
  %v162 = vld [vmem:[%s0 + $0x480] sm:$0xff]
  %v163 = vld [vmem:[%s0 + $0x488] sm:$0xff]
  %v164 = vld [vmem:[%s0 + $0x490] sm:$0xff]
  %v165 = vld [vmem:[%s0 + $0x498] sm:$0xff]
  %v166 = vld [vmem:[%s0 + $0x4a0] sm:$0xff]
  %v167 = vld [vmem:[%s0 + $0x4a8] sm:$0xff]
  %v168 = vld [vmem:[%s0 + $0x4b0] sm:$0xff]
  %v169 = vld [vmem:[%s0 + $0x4b8] sm:$0xff]
  %v170 = vld [vmem:[%s0 + $0x4c0] sm:$0xff]
  %v171 = vld [vmem:[%s0 + $0x4c8] sm:$0xff]
  %v172 = vld [vmem:[%s0 + $0x4d0] sm:$0xff]
  %v173 = vld [vmem:[%s0 + $0x4d8] sm:$0xff]
  %v174 = vld [vmem:[%s0 + $0x4e0] sm:$0xff]
  %v175 = vld [vmem:[%s0 + $0x4e8] sm:$0xff]
  %v176 = vld [vmem:[%s0 + $0x4f0] sm:$0xff]
  %v177 = vld [vmem:[%s0 + $0x4f8] sm:$0xff]
  %v178 = vld [vmem:[%s0 + $0x500] sm:$0xff]
  %v179 = vld [vmem:[%s0 + $0x508] sm:$0xff]
  %v180 = vld [vmem:[%s0 + $0x510] sm:$0xff]
  %v181 = vld [vmem:[%s0 + $0x518] sm:$0xff]
  %v182 = vld [vmem:[%s0 + $0x520] sm:$0xff]
  %v183 = vld [vmem:[%s0 + $0x528] sm:$0xff]
  %v184 = vld [vmem:[%s0 + $0x530] sm:$0xff]
  %v185 = vld [vmem:[%s0 + $0x538] sm:$0xff]
  %v186 = vld [vmem:[%s0 + $0x540] sm:$0xff]
  %v187 = vld [vmem:[%s0 + $0x548] sm:$0xff]
  %v188 = vld [vmem:[%s0 + $0x550] sm:$0xff]
  %v189 = vld [vmem:[%s0 + $0x558] sm:$0xff]
  %v190 = vld [vmem:[%s0 + $0x560] sm:$0xff]
  %v191 = vld [vmem:[%s0 + $0x568] sm:$0xff]
  %v192 = vld [vmem:[%s0 + $0x570] sm:$0xff]
  %v193 = vld [vmem:[%s0 + $0x578] sm:$0xff]
  %v194 = vld [vmem:[%s0 + $0x580] sm:$0xff]
  %v195 = vld [vmem:[%s0 + $0x588] sm:$0xff]
  %v196 = vld [vmem:[%s0 + $0x590] sm:$0xff]
  %v197 = vld [vmem:[%s0 + $0x598] sm:$0xff]
  %v198 = vld [vmem:[%s0 + $0x5a0] sm:$0xff]
  %v199 = vld [vmem:[%s0 + $0x5a8] sm:$0xff]
  %v200 = vld [vmem:[%s0 + $0x5b0] sm:$0xff]
  %v201 = vld [vmem:[%s0 + $0x5b8] sm:$0xff]
  %v202 = vld [vmem:[%s0 + $0x5c0] sm:$0xff]
  %v203 = vld [vmem:[%s0 + $0x5c8] sm:$0xff]
  %v204 = vld [vmem:[%s0 + $0x5d0] sm:$0xff]
  %v205 = vld [vmem:[%s0 + $0x5d8] sm:$0xff]
  %v206 = vld [vmem:[%s0 + $0x5e0] sm:$0xff]
  %v207 = vld [vmem:[%s0 + $0x5e8] sm:$0xff]
  %v208 = vld [vmem:[%s0 + $0x5f0] sm:$0xff]
  %v209 = vld [vmem:[%s0 + $0x5f8] sm:$0xff]
  %v210 = vld [vmem:[%s0 + $0x600] sm:$0xff]
  %v211 = vld [vmem:[%s0 + $0x608] sm:$0xff]
  %v212 = vld [vmem:[%s0 + $0x610] sm:$0xff]
  %v213 = vld [vmem:[%s0 + $0x618] sm:$0xff]
  %v214 = vld [vmem:[%s0 + $0x620] sm:$0xff]
  %v215 = vld [vmem:[%s0 + $0x628] sm:$0xff]
  %v216 = vld [vmem:[%s0 + $0x630] sm:$0xff]
  %v217 = vld [vmem:[%s0 + $0x638] sm:$0xff]
  %v218 = vld [vmem:[%s0 + $0x640] sm:$0xff]
  %v219 = vld [vmem:[%s0 + $0x648] sm:$0xff]
  %v220 = vld [vmem:[%s0 + $0x650] sm:$0xff]
  %v221 = vld [vmem:[%s0 + $0x658] sm:$0xff]
  %v222 = vld [vmem:[%s0 + $0x660] sm:$0xff]
  %v223 = vld [vmem:[%s0 + $0x668] sm:$0xff]
  %v224 = vld [vmem:[%s0 + $0x670] sm:$0xff]
  %v225 = vld [vmem:[%s0 + $0x678] sm:$0xff]
  %v226 = vld [vmem:[%s0 + $0x680] sm:$0xff]
  %v227 = vld [vmem:[%s0 + $0x688] sm:$0xff]
  %v228 = vld [vmem:[%s0 + $0x690] sm:$0xff]
  %v229 = vld [vmem:[%s0 + $0x698] sm:$0xff]
  %v230 = vld [vmem:[%s0 + $0x6a0] sm:$0xff]
  %v231 = vld [vmem:[%s0 + $0x6a8] sm:$0xff]
  %v232 = vld [vmem:[%s0 + $0x6b0] sm:$0xff]
  %v233 = vld [vmem:[%s0 + $0x6b8] sm:$0xff]
  %v234 = vld [vmem:[%s0 + $0x6c0] sm:$0xff]
  %v235 = vld [vmem:[%s0 + $0x6c8] sm:$0xff]
  %v236 = vld [vmem:[%s0 + $0x6d0] sm:$0xff]
  %v237 = vld [vmem:[%s0 + $0x6d8] sm:$0xff]
  %v238 = vld [vmem:[%s0 + $0x6e0] sm:$0xff]
  %v239 = vld [vmem:[%s0 + $0x6e8] sm:$0xff]
  %v240 = vld [vmem:[%s0 + $0x6f0] sm:$0xff]
  %v241 = vld [vmem:[%s0 + $0x6f8] sm:$0xff]
  %v242 = vld [vmem:[%s0 + $0x700] sm:$0xff]
  %v243 = vld [vmem:[%s0 + $0x708] sm:$0xff]
  %v244 = vld [vmem:[%s0 + $0x710] sm:$0xff]
  %v245 = vld [vmem:[%s0 + $0x718] sm:$0xff]
  %v246 = vld [vmem:[%s0 + $0x720] sm:$0xff]
  %v247 = vld [vmem:[%s0 + $0x728] sm:$0xff]
  %v248 = vld [vmem:[%s0 + $0x730] sm:$0xff]
  %v249 = vld [vmem:[%s0 + $0x738] sm:$0xff]
  %v250 = vld [vmem:[%s0 + $0x740] sm:$0xff]
  %v251 = vld [vmem:[%s0 + $0x748] sm:$0xff]
  %v252 = vld [vmem:[%s0 + $0x750] sm:$0xff]
  %v253 = vld [vmem:[%s0 + $0x758] sm:$0xff]
  %v254 = vld [vmem:[%s0 + $0x760] sm:$0xff]
  %v255 = vld [vmem:[%s0 + $0x768] sm:$0xff]
  %v256 = vld [vmem:[%s0 + $0x770] sm:$0xff]
  %v257 = vld [vmem:[%s0 + $0x778] sm:$0xff]
  %v258 = vld [vmem:[%s0 + $0x780] sm:$0xff]
  %v259 = vld [vmem:[%s0 + $0x788] sm:$0xff]
  %v260 = vld [vmem:[%s0 + $0x790] sm:$0xff]
  %v261 = vld [vmem:[%s0 + $0x798] sm:$0xff]
  %v262 = vld [vmem:[%s0 + $0x7a0] sm:$0xff]
  %v263 = vld [vmem:[%s0 + $0x7a8] sm:$0xff]
  %v264 = vld [vmem:[%s0 + $0x7b0] sm:$0xff]
  %v265 = vld [vmem:[%s0 + $0x7b8] sm:$0xff]
  %v266 = vld [vmem:[%s0 + $0x7c0] sm:$0xff]
  %v267 = vld [vmem:[%s0 + $0x7c8] sm:$0xff]
  %v268 = vld [vmem:[%s0 + $0x7d0] sm:$0xff]
  %v269 = vld [vmem:[%s0 + $0x7d8] sm:$0xff]
  %v270 = vld [vmem:[%s0 + $0x7e0] sm:$0xff]
  %v271 = vld [vmem:[%s0 + $0x7e8] sm:$0xff]
  %v272 = vld [vmem:[%s0 + $0x7f0] sm:$0xff]
  %v273 = vld [vmem:[%s0 + $0x7f8] sm:$0xff]
  %v274 = vld [vmem:[%s0 + $0x800] sm:$0xff]
  %v275 = vld [vmem:[%s0 + $0x808] sm:$0xff]
  %v276 = vld [vmem:[%s0 + $0x810] sm:$0xff]
  %v277 = vld [vmem:[%s0 + $0x818] sm:$0xff]
  %v278 = vld [vmem:[%s0 + $0x820] sm:$0xff]
  %v279 = vld [vmem:[%s0 + $0x828] sm:$0xff]
  %v280 = vld [vmem:[%s0 + $0x830] sm:$0xff]
  %v281 = vld [vmem:[%s0 + $0x838] sm:$0xff]
  %v282 = vld [vmem:[%s0 + $0x840] sm:$0xff]
  %v283 = vld [vmem:[%s0 + $0x848] sm:$0xff]
  %v284 = vld [vmem:[%s0 + $0x850] sm:$0xff]
  %v285 = vld [vmem:[%s0 + $0x858] sm:$0xff]
  %v286 = vld [vmem:[%s0 + $0x860] sm:$0xff]
  %v287 = vld [vmem:[%s0 + $0x868] sm:$0xff]
  %v288 = vld [vmem:[%s0 + $0x870] sm:$0xff]
  %v289 = vld [vmem:[%s0 + $0x878] sm:$0xff]
  %v290 = vld [vmem:[%s0 + $0x880] sm:$0xff]
  %v291 = vld [vmem:[%s0 + $0x888] sm:$0xff]
  %v292 = vld [vmem:[%s0 + $0x890] sm:$0xff]
  %v293 = vld [vmem:[%s0 + $0x898] sm:$0xff]
  %v294 = vld [vmem:[%s0 + $0x8a0] sm:$0xff]
  %v295 = vld [vmem:[%s0 + $0x8a8] sm:$0xff]
  %v296 = vld [vmem:[%s0 + $0x8b0] sm:$0xff]
  %v297 = vld [vmem:[%s0 + $0x8b8] sm:$0xff]
  %v298 = vld [vmem:[%s0 + $0x8c0] sm:$0xff]
  %v299 = vld [vmem:[%s0 + $0x8c8] sm:$0xff]
  %v300 = vld [vmem:[%s0 + $0x8d0] sm:$0xff]
  %v301 = vld [vmem:[%s0 + $0x8d8] sm:$0xff]
  %v302 = vld [vmem:[%s0 + $0x8e0] sm:$0xff]
  %v303 = vld [vmem:[%s0 + $0x8e8] sm:$0xff]
  %v304 = vld [vmem:[%s0 + $0x8f0] sm:$0xff]
  %v305 = vld [vmem:[%s0 + $0x8f8] sm:$0xff]
  %v306 = vld [vmem:[%s0 + $0x900] sm:$0xff]
  %v307 = vld [vmem:[%s0 + $0x908] sm:$0xff]
  %v308 = vld [vmem:[%s0 + $0x910] sm:$0xff]
  %v309 = vld [vmem:[%s0 + $0x918] sm:$0xff]
  %v310 = vld [vmem:[%s0 + $0x920] sm:$0xff]
  %v311 = vld [vmem:[%s0 + $0x928] sm:$0xff]
  %v312 = vld [vmem:[%s0 + $0x930] sm:$0xff]
  %v313 = vld [vmem:[%s0 + $0x938] sm:$0xff]
  %v314 = vld [vmem:[%s0 + $0x940] sm:$0xff]
  %v315 = vld [vmem:[%s0 + $0x948] sm:$0xff]
  %v316 = vld [vmem:[%s0 + $0x950] sm:$0xff]
  %v317 = vld [vmem:[%s0 + $0x958] sm:$0xff]
  %v318 = vld [vmem:[%s0 + $0x960] sm:$0xff]
  %v319 = vld [vmem:[%s0 + $0x968] sm:$0xff]
  %v320 = vld [vmem:[%s0 + $0x970] sm:$0xff]
  %v321 = vld [vmem:[%s0 + $0x978] sm:$0xff]
  %v322 = vld [vmem:[%s0 + $0x980] sm:$0xff]
  %v323 = vld [vmem:[%s0 + $0x988] sm:$0xff]
  %v324 = vld [vmem:[%s0 + $0x990] sm:$0xff]
  %v325 = vld [vmem:[%s0 + $0x998] sm:$0xff]
  %v326 = vld [vmem:[%s0 + $0x9a0] sm:$0xff]
  %v327 = vld [vmem:[%s0 + $0x9a8] sm:$0xff]
  %v328 = vld [vmem:[%s0 + $0x9b0] sm:$0xff]
  %v329 = vld [vmem:[%s0 + $0x9b8] sm:$0xff]
  %v330 = vld [vmem:[%s0 + $0x9c0] sm:$0xff]
  %v331 = vld [vmem:[%s0 + $0x9c8] sm:$0xff]
  %v332 = vld [vmem:[%s0 + $0x9d0] sm:$0xff]
  %v333 = vld [vmem:[%s0 + $0x9d8] sm:$0xff]
  %v334 = vld [vmem:[%s0 + $0x9e0] sm:$0xff]
  %v335 = vld [vmem:[%s0 + $0x9e8] sm:$0xff]
  %v336 = vld [vmem:[%s0 + $0x9f0] sm:$0xff]
  %v337 = vld [vmem:[%s0 + $0x9f8] sm:$0xff]
  %v338 = vld [vmem:[%s0 + $0xa00] sm:$0xff]
  %v339 = vld [vmem:[%s0 + $0xa08] sm:$0xff]
  %v340 = vld [vmem:[%s0 + $0xa10] sm:$0xff]
  %v341 = vld [vmem:[%s0 + $0xa18] sm:$0xff]
  %v342 = vld [vmem:[%s0 + $0xa20] sm:$0xff]
  %v343 = vld [vmem:[%s0 + $0xa28] sm:$0xff]
  %v344 = vld [vmem:[%s0 + $0xa30] sm:$0xff]
  %v345 = vld [vmem:[%s0 + $0xa38] sm:$0xff]
  %v346 = vld [vmem:[%s0 + $0xa40] sm:$0xff]
  %v347 = vld [vmem:[%s0 + $0xa48] sm:$0xff]
  %v348 = vld [vmem:[%s0 + $0xa50] sm:$0xff]
  %v349 = vld [vmem:[%s0 + $0xa58] sm:$0xff]
  %v350 = vld [vmem:[%s0 + $0xa60] sm:$0xff]
  %v351 = vld [vmem:[%s0 + $0xa68] sm:$0xff]
  %v352 = vld [vmem:[%s0 + $0xa70] sm:$0xff]
  %v353 = vld [vmem:[%s0 + $0xa78] sm:$0xff]
  %v354 = vld [vmem:[%s0 + $0xa80] sm:$0xff]
  %v355 = vld [vmem:[%s0 + $0xa88] sm:$0xff]
  %v356 = vld [vmem:[%s0 + $0xa90] sm:$0xff]
  %v357 = vld [vmem:[%s0 + $0xa98] sm:$0xff]
  %v358 = vld [vmem:[%s0 + $0xaa0] sm:$0xff]
  %v359 = vld [vmem:[%s0 + $0xaa8] sm:$0xff]
  %v360 = vld [vmem:[%s0 + $0xab0] sm:$0xff]
  %v361 = vld [vmem:[%s0 + $0xab8] sm:$0xff]
  %v362 = vld [vmem:[%s0 + $0xac0] sm:$0xff]
  %v363 = vld [vmem:[%s0 + $0xac8] sm:$0xff]
  %v364 = vld [vmem:[%s0 + $0xad0] sm:$0xff]
  %v365 = vld [vmem:[%s0 + $0xad8] sm:$0xff]
  %v366 = vld [vmem:[%s0 + $0xae0] sm:$0xff]
  %v367 = vld [vmem:[%s0 + $0xae8] sm:$0xff]
  %v368 = vld [vmem:[%s0 + $0xaf0] sm:$0xff]
  %v369 = vld [vmem:[%s0 + $0xaf8] sm:$0xff]
  %v370 = vld [vmem:[%s0 + $0xb00] sm:$0xff]
  %v371 = vld [vmem:[%s0 + $0xb08] sm:$0xff]
  %v372 = vld [vmem:[%s0 + $0xb10] sm:$0xff]
  %v373 = vld [vmem:[%s0 + $0xb18] sm:$0xff]
  %v374 = vld [vmem:[%s0 + $0xb20] sm:$0xff]
  %v375 = vld [vmem:[%s0 + $0xb28] sm:$0xff]
  %v376 = vld [vmem:[%s0 + $0xb30] sm:$0xff]
  %v377 = vld [vmem:[%s0 + $0xb38] sm:$0xff]
  %v378 = vld [vmem:[%s0 + $0xb40] sm:$0xff]
  %v379 = vld [vmem:[%s0 + $0xb48] sm:$0xff]
  %v380 = vld [vmem:[%s0 + $0xb50] sm:$0xff]
  %v381 = vld [vmem:[%s0 + $0xb58] sm:$0xff]
  %v382 = vld [vmem:[%s0 + $0xb60] sm:$0xff]
  %v383 = vld [vmem:[%s0 + $0xb68] sm:$0xff]
  %v384 = vld [vmem:[%s0 + $0xb70] sm:$0xff]
  %v385 = vld [vmem:[%s0 + $0xb78] sm:$0xff]
  %v386 = vld [vmem:[%s0 + $0xb80] sm:$0xff]
  %v387 = vld [vmem:[%s0 + $0xb88] sm:$0xff]
  %v388 = vld [vmem:[%s0 + $0xb90] sm:$0xff]
  %v389 = vld [vmem:[%s0 + $0xb98] sm:$0xff]
  %v390 = vld [vmem:[%s0 + $0xba0] sm:$0xff]
  %v391 = vld [vmem:[%s0 + $0xba8] sm:$0xff]
  %v392 = vld [vmem:[%s0 + $0xbb0] sm:$0xff]
  %v393 = vld [vmem:[%s0 + $0xbb8] sm:$0xff]
  %v394 = vld [vmem:[%s0 + $0xbc0] sm:$0xff]
  %v395 = vld [vmem:[%s0 + $0xbc8] sm:$0xff]
  %v396 = vld [vmem:[%s0 + $0xbd0] sm:$0xff]
  %v397 = vld [vmem:[%s0 + $0xbd8] sm:$0xff]
  %v398 = vld [vmem:[%s0 + $0xbe0] sm:$0xff]
  %v399 = vld [vmem:[%s0 + $0xbe8] sm:$0xff]
  %v400 = vld [vmem:[%s0 + $0xbf0] sm:$0xff]
  %v401 = vld [vmem:[%s0 + $0xbf8] sm:$0xff]
  %v402 = vld [vmem:[%s0 + $0xc00] sm:$0xff]
  %v403 = vld [vmem:[%s0 + $0xc08] sm:$0xff]
  %v404 = vld [vmem:[%s0 + $0xc10] sm:$0xff]
  %v405 = vld [vmem:[%s0 + $0xc18] sm:$0xff]
  %v406 = vld [vmem:[%s0 + $0xc20] sm:$0xff]
  %v407 = vld [vmem:[%s0 + $0xc28] sm:$0xff]
  %v408 = vld [vmem:[%s0 + $0xc30] sm:$0xff]
  %v409 = vld [vmem:[%s0 + $0xc38] sm:$0xff]
  %v410 = vld [vmem:[%s0 + $0xc40] sm:$0xff]
  %v411 = vld [vmem:[%s0 + $0xc48] sm:$0xff]
  %v412 = vld [vmem:[%s0 + $0xc50] sm:$0xff]
  %v413 = vld [vmem:[%s0 + $0xc58] sm:$0xff]
  %v414 = vld [vmem:[%s0 + $0xc60] sm:$0xff]
  %v415 = vld [vmem:[%s0 + $0xc68] sm:$0xff]
  %v416 = vld [vmem:[%s0 + $0xc70] sm:$0xff]
  %v417 = vld [vmem:[%s0 + $0xc78] sm:$0xff]
  %v418 = vld [vmem:[%s0 + $0xc80] sm:$0xff]
  %v419 = vld [vmem:[%s0 + $0xc88] sm:$0xff]
  %v420 = vld [vmem:[%s0 + $0xc90] sm:$0xff]
  %v421 = vld [vmem:[%s0 + $0xc98] sm:$0xff]
  %v422 = vld [vmem:[%s0 + $0xca0] sm:$0xff]
  %v423 = vld [vmem:[%s0 + $0xca8] sm:$0xff]
  %v424 = vld [vmem:[%s0 + $0xcb0] sm:$0xff]
  %v425 = vld [vmem:[%s0 + $0xcb8] sm:$0xff]
  %v426 = vld [vmem:[%s0 + $0xcc0] sm:$0xff]
  %v427 = vld [vmem:[%s0 + $0xcc8] sm:$0xff]
  %v428 = vld [vmem:[%s0 + $0xcd0] sm:$0xff]
  %v429 = vld [vmem:[%s0 + $0xcd8] sm:$0xff]
  %v430 = vld [vmem:[%s0 + $0xce0] sm:$0xff]
  %v431 = vld [vmem:[%s0 + $0xce8] sm:$0xff]
  %v432 = vld [vmem:[%s0 + $0xcf0] sm:$0xff]
  %v433 = vld [vmem:[%s0 + $0xcf8] sm:$0xff]
  %v434 = vld [vmem:[%s0 + $0xd00] sm:$0xff]
  %v435 = vld [vmem:[%s0 + $0xd08] sm:$0xff]
  %v436 = vld [vmem:[%s0 + $0xd10] sm:$0xff]
  %v437 = vld [vmem:[%s0 + $0xd18] sm:$0xff]
  %v438 = vld [vmem:[%s0 + $0xd20] sm:$0xff]
  %v439 = vld [vmem:[%s0 + $0xd28] sm:$0xff]
  %v440 = vld [vmem:[%s0 + $0xd30] sm:$0xff]
  %v441 = vld [vmem:[%s0 + $0xd38] sm:$0xff]
  %v442 = vld [vmem:[%s0 + $0xd40] sm:$0xff]
  %v443 = vld [vmem:[%s0 + $0xd48] sm:$0xff]
  %v444 = vld [vmem:[%s0 + $0xd50] sm:$0xff]
  %v445 = vld [vmem:[%s0 + $0xd58] sm:$0xff]
  %v446 = vld [vmem:[%s0 + $0xd60] sm:$0xff]
  %v447 = vld [vmem:[%s0 + $0xd68] sm:$0xff]
  %v448 = vld [vmem:[%s0 + $0xd70] sm:$0xff]
  %v449 = vld [vmem:[%s0 + $0xd78] sm:$0xff]
  %v450 = vld [vmem:[%s0 + $0xd80] sm:$0xff]
  %v451 = vld [vmem:[%s0 + $0xd88] sm:$0xff]
  %v452 = vld [vmem:[%s0 + $0xd90] sm:$0xff]
  %v453 = vld [vmem:[%s0 + $0xd98] sm:$0xff]
  %v454 = vld [vmem:[%s0 + $0xda0] sm:$0xff]
  %v455 = vld [vmem:[%s0 + $0xda8] sm:$0xff]
  %v456 = vld [vmem:[%s0 + $0xdb0] sm:$0xff]
  %v457 = vld [vmem:[%s0 + $0xdb8] sm:$0xff]
  %v458 = vld [vmem:[%s0 + $0xdc0] sm:$0xff]
  %v459 = vld [vmem:[%s0 + $0xdc8] sm:$0xff]
  %v460 = vld [vmem:[%s0 + $0xdd0] sm:$0xff]
  %v461 = vld [vmem:[%s0 + $0xdd8] sm:$0xff]
  %v462 = vld [vmem:[%s0 + $0xde0] sm:$0xff]
  %v463 = vld [vmem:[%s0 + $0xde8] sm:$0xff]
  %v464 = vld [vmem:[%s0 + $0xdf0] sm:$0xff]
  %v465 = vld [vmem:[%s0 + $0xdf8] sm:$0xff]
  %v466 = vld [vmem:[%s0 + $0xe00] sm:$0xff]
  %v467 = vld [vmem:[%s0 + $0xe08] sm:$0xff]
  %v468 = vld [vmem:[%s0 + $0xe10] sm:$0xff]
  %v469 = vld [vmem:[%s0 + $0xe18] sm:$0xff]
  %v470 = vld [vmem:[%s0 + $0xe20] sm:$0xff]
  %v471 = vld [vmem:[%s0 + $0xe28] sm:$0xff]
  %v472 = vld [vmem:[%s0 + $0xe30] sm:$0xff]
  %v473 = vld [vmem:[%s0 + $0xe38] sm:$0xff]
  %v474 = vld [vmem:[%s0 + $0xe40] sm:$0xff]
  %v475 = vld [vmem:[%s0 + $0xe48] sm:$0xff]
  %v476 = vld [vmem:[%s0 + $0xe50] sm:$0xff]
  %v477 = vld [vmem:[%s0 + $0xe58] sm:$0xff]
  %v478 = vld [vmem:[%s0 + $0xe60] sm:$0xff]
  %v479 = vld [vmem:[%s0 + $0xe68] sm:$0xff]
  %v480 = vld [vmem:[%s0 + $0xe70] sm:$0xff]
  %v481 = vld [vmem:[%s0 + $0xe78] sm:$0xff]
  %v482 = vld [vmem:[%s0 + $0xe80] sm:$0xff]
  %v483 = vld [vmem:[%s0 + $0xe88] sm:$0xff]
  %v484 = vld [vmem:[%s0 + $0xe90] sm:$0xff]
  %v485 = vld [vmem:[%s0 + $0xe98] sm:$0xff]
  %v486 = vld [vmem:[%s0 + $0xea0] sm:$0xff]
  %v487 = vld [vmem:[%s0 + $0xea8] sm:$0xff]
  %v488 = vld [vmem:[%s0 + $0xeb0] sm:$0xff]
  %v489 = vld [vmem:[%s0 + $0xeb8] sm:$0xff]
  %v490 = vld [vmem:[%s0 + $0xec0] sm:$0xff]
  %v491 = vld [vmem:[%s0 + $0xec8] sm:$0xff]
  %v492 = vld [vmem:[%s0 + $0xed0] sm:$0xff]
  %v493 = vld [vmem:[%s0 + $0xed8] sm:$0xff]
  %v494 = vld [vmem:[%s0 + $0xee0] sm:$0xff]
  %v495 = vld [vmem:[%s0 + $0xee8] sm:$0xff]
  %v496 = vld [vmem:[%s0 + $0xef0] sm:$0xff]
  %v497 = vld [vmem:[%s0 + $0xef8] sm:$0xff]
  %v498 = vld [vmem:[%s0 + $0xf00] sm:$0xff]
  %v499 = vld [vmem:[%s0 + $0xf08] sm:$0xff]
  %v500 = vld [vmem:[%s0 + $0xf10] sm:$0xff]
  %v501 = vld [vmem:[%s0 + $0xf18] sm:$0xff]
  %v502 = vld [vmem:[%s0 + $0xf20] sm:$0xff]
  %v503 = vld [vmem:[%s0 + $0xf28] sm:$0xff]
  %v504 = vld [vmem:[%s0 + $0xf30] sm:$0xff]
  %v505 = vld [vmem:[%s0 + $0xf38] sm:$0xff]
  %v506 = vld [vmem:[%s0 + $0xf40] sm:$0xff]
  %v507 = vld [vmem:[%s0 + $0xf48] sm:$0xff]
  %v508 = vld [vmem:[%s0 + $0xf50] sm:$0xff]
  %v509 = vld [vmem:[%s0 + $0xf58] sm:$0xff]
  %v510 = vld [vmem:[%s0 + $0xf60] sm:$0xff]
  %v511 = vld [vmem:[%s0 + $0xf68] sm:$0xff]
  %v512 = vld [vmem:[%s0 + $0xf70] sm:$0xff]
  %v513 = vld [vmem:[%s0 + $0xf78] sm:$0xff]
  %v514 = vld [vmem:[%s0 + $0xf80] sm:$0xff]
  %v515 = vld [vmem:[%s0 + $0xf88] sm:$0xff]
  %v516 = vld [vmem:[%s0 + $0xf90] sm:$0xff]
  %v517 = vld [vmem:[%s0 + $0xf98] sm:$0xff]
  %v518 = vld [vmem:[%s0 + $0xfa0] sm:$0xff]
  %v519 = vld [vmem:[%s0 + $0xfa8] sm:$0xff]
  %v520 = vld [vmem:[%s0 + $0xfb0] sm:$0xff]
  %v521 = vld [vmem:[%s0 + $0xfb8] sm:$0xff]
  %v522 = vld [vmem:[%s0 + $0xfc0] sm:$0xff]
  %v523 = vld [vmem:[%s0 + $0xfc8] sm:$0xff]
  %v524 = vld [vmem:[%s0 + $0xfd0] sm:$0xff]
  %v525 = vld [vmem:[%s0 + $0xfd8] sm:$0xff]
  %v526 = vld [vmem:[%s0 + $0xfe0] sm:$0xff]
  %v527 = vld [vmem:[%s0 + $0xfe8] sm:$0xff]
  %v528 = vld [vmem:[%s0 + $0xff0] sm:$0xff]
  %v529 = vld [vmem:[%s0 + $0xff8] sm:$0xff]
  %v530 = vld [vmem:[%s0 + $0x1000] sm:$0xff]
  %v531 = vld [vmem:[%s0 + $0x1008] sm:$0xff]
  %v532 = vld [vmem:[%s0 + $0x1010] sm:$0xff]
  %v533 = vld [vmem:[%s0 + $0x1018] sm:$0xff]
  %v534 = vld [vmem:[%s0 + $0x1020] sm:$0xff]
  %v535 = vld [vmem:[%s0 + $0x1028] sm:$0xff]
  %v536 = vld [vmem:[%s0 + $0x1030] sm:$0xff]
  %v537 = vld [vmem:[%s0 + $0x1038] sm:$0xff]
  %v538 = vld [vmem:[%s0 + $0x1040] sm:$0xff]
  %v539 = vld [vmem:[%s0 + $0x1048] sm:$0xff]
  %v540 = vld [vmem:[%s0 + $0x1050] sm:$0xff]
  %v541 = vld [vmem:[%s0 + $0x1058] sm:$0xff]
  %v542 = vld [vmem:[%s0 + $0x1060] sm:$0xff]
  %v543 = vld [vmem:[%s0 + $0x1068] sm:$0xff]
  %v544 = vld [vmem:[%s0 + $0x1070] sm:$0xff]
  %v545 = vld [vmem:[%s0 + $0x1078] sm:$0xff]
  %v546 = vld [vmem:[%s0 + $0x1080] sm:$0xff]
  %v547 = vld [vmem:[%s0 + $0x1088] sm:$0xff]
  %v548 = vld [vmem:[%s0 + $0x1090] sm:$0xff]
  %v549 = vld [vmem:[%s0 + $0x1098] sm:$0xff]
  %v550 = vld [vmem:[%s0 + $0x10a0] sm:$0xff]
  %v551 = vld [vmem:[%s0 + $0x10a8] sm:$0xff]
  %v552 = vld [vmem:[%s0 + $0x10b0] sm:$0xff]
  %v553 = vld [vmem:[%s0 + $0x10b8] sm:$0xff]
  %v554 = vld [vmem:[%s0 + $0x10c0] sm:$0xff]
  %v555 = vld [vmem:[%s0 + $0x10c8] sm:$0xff]
  %v556 = vld [vmem:[%s0 + $0x10d0] sm:$0xff]
  %v557 = vld [vmem:[%s0 + $0x10d8] sm:$0xff]
  %v558 = vld [vmem:[%s0 + $0x10e0] sm:$0xff]
  %v559 = vld [vmem:[%s0 + $0x10e8] sm:$0xff]
  %v560 = vld [vmem:[%s0 + $0x10f0] sm:$0xff]
  %v561 = vld [vmem:[%s0 + $0x10f8] sm:$0xff]
  %v562 = vld [vmem:[%s0 + $0x1100] sm:$0xff]
  %v563 = vld [vmem:[%s0 + $0x1108] sm:$0xff]
  %v564 = vld [vmem:[%s0 + $0x1110] sm:$0xff]
  %v565 = vld [vmem:[%s0 + $0x1118] sm:$0xff]
  %v566 = vld [vmem:[%s0 + $0x1120] sm:$0xff]
  %v567 = vld [vmem:[%s0 + $0x1128] sm:$0xff]
  %v568 = vld [vmem:[%s0 + $0x1130] sm:$0xff]
  %v569 = vld [vmem:[%s0 + $0x1138] sm:$0xff]
  %v570 = vld [vmem:[%s0 + $0x1140] sm:$0xff]
  %v571 = vld [vmem:[%s0 + $0x1148] sm:$0xff]
  %v572 = vld [vmem:[%s0 + $0x1150] sm:$0xff]
  %v573 = vld [vmem:[%s0 + $0x1158] sm:$0xff]
  %v574 = vld [vmem:[%s0 + $0x1160] sm:$0xff]
  %v575 = vld [vmem:[%s0 + $0x1168] sm:$0xff]
  %v576 = vld [vmem:[%s0 + $0x1170] sm:$0xff]
  %v577 = vld [vmem:[%s0 + $0x1178] sm:$0xff]
  %v578 = vld [vmem:[%s0 + $0x1180] sm:$0xff]
  %v579 = vld [vmem:[%s0 + $0x1188] sm:$0xff]
  %v580 = vld [vmem:[%s0 + $0x1190] sm:$0xff]
  %v581 = vld [vmem:[%s0 + $0x1198] sm:$0xff]
  %v582 = vld [vmem:[%s0 + $0x11a0] sm:$0xff]
  %v583 = vld [vmem:[%s0 + $0x11a8] sm:$0xff]
  %v584 = vld [vmem:[%s0 + $0x11b0] sm:$0xff]
  %v585 = vld [vmem:[%s0 + $0x11b8] sm:$0xff]
  %v586 = vld [vmem:[%s0 + $0x11c0] sm:$0xff]
  %v587 = vld [vmem:[%s0 + $0x11c8] sm:$0xff]
  %v588 = vld [vmem:[%s0 + $0x11d0] sm:$0xff]
  %v589 = vld [vmem:[%s0 + $0x11d8] sm:$0xff]
  %v590 = vld [vmem:[%s0 + $0x11e0] sm:$0xff]
  %v591 = vld [vmem:[%s0 + $0x11e8] sm:$0xff]
  %v592 = vld [vmem:[%s0 + $0x11f0] sm:$0xff]
  %v593 = vld [vmem:[%s0 + $0x11f8] sm:$0xff]
  %vm594 = vcmask 588800
  %v596 = vsel %vm594, %v17, 0
  %598 = vmatprep.subr.mxu0 0.0
  %599 = vmatpush1.msra.mxu0 0.0
  %600 = vmatprep.subr.mxu0 0.0
  %601 = vmatpush1.msra.mxu0 0.0
  %602 = vmatprep.subr.mxu0 0.0
  %603 = vmatpush1.msra.mxu0 0.0
  %604 = vmatprep.subr.mxu0 0.0
  %605 = vmatpush1.msra.mxu0 0.0
  %606 = vmatprep.subr.mxu0 0.0
  %607 = vmatpush1.msra.mxu0 0.0
  %608 = vmatprep.subr.mxu0 0.0
  %609 = vmatpush1.msra.mxu0 0.0
  %610 = vmatprep.subr.mxu0 0.0
  %611 = vmatpush1.msra.mxu0 0.0
  %612 = vmatprep.subr.mxu0 %v531
  %613 = vmatpush1.msra.mxu0 %v530
  %614 = vmatprep.subr.mxu0 %v467
  %615 = vmatpush1.msra.mxu0 %v466
  %616 = vmatprep.subr.mxu0 %v403
  %617 = vmatpush1.msra.mxu0 %v402
  %618 = vmatprep.subr.mxu0 %v339
  %619 = vmatpush1.msra.mxu0 %v338
  %620 = vmatprep.subr.mxu0 %v275
  %621 = vmatpush1.msra.mxu0 %v274
  %622 = vmatprep.subr.mxu0 %v211
  %623 = vmatpush1.msra.mxu0 %v210
  %624 = vmatprep.subr.mxu0 %v147
  %625 = vmatpush1.msra.mxu0 %v146
  %626 = vmatprep.subr.mxu0 %v83
  %627 = vmatpush1.msra.mxu0 %v82
  %628 = vmatprep.subr.mxu0 %v19
  %629 = vmatpush1.msra.mxu0 %v18
  %630 = vmatprep.subr.mxu0 0.0
  %631 = vmatpush2.msra.mxu0 0.0
  %632 = vmatprep.subr.mxu0 0.0
  %633 = vmatpush2.msra.mxu0 0.0
  %634 = vmatprep.subr.mxu0 0.0
  %635 = vmatpush2.msra.mxu0 0.0
  %636 = vmatprep.subr.mxu0 0.0
  %637 = vmatpush2.msra.mxu0 0.0
  %638 = vmatprep.subr.mxu0 0.0
  %639 = vmatpush2.msra.mxu0 0.0
  %640 = vmatprep.subr.mxu0 0.0
  %641 = vmatpush2.msra.mxu0 0.0
  %642 = vmatprep.subr.mxu0 0.0
  %643 = vmatpush2.msra.mxu0 0.0
  %644 = vmatprep.subr.mxu0 0.0
  %645 = vmatpush2.msra.mxu0 0.0
  %646 = vmatprep.subr.mxu0 0.0
  %647 = vmatpush2.msra.mxu0 0.0
  %648 = vmatprep.subr.mxu0 0.0
  %649 = vmatpush2.msra.mxu0 0.0
  %650 = vmatprep.subr.mxu0 0.0
  %651 = vmatpush2.msra.mxu0 0.0
  %652 = vmatprep.subr.mxu0 0.0
  %653 = vmatpush2.msra.mxu0 0.0
  %654 = vmatprep.subr.mxu0 0.0
  %655 = vmatpush2.msra.mxu0 0.0
  %656 = vmatprep.subr.mxu0 0.0
  %657 = vmatpush2.msra.mxu0 0.0
  %658 = vmatprep.subr.mxu0 0.0
  %659 = vmatpush2.msra.mxu0 0.0
  %660 = vmatprep.subr.mxu0 0.0
  %661 = vmatpush2.msra.mxu0 0.0
  %662 = vmatprep.mubr.f32.mxu0 0.0
  %663 = vmatmul.mubr.f32.gmra.mxu0 %v596
  %v664 = vpop.f32.mrf.mxu0
  %v665 = vadd.f32 0.0, %v664
  %v666 = vpop.f32.mrf.mxu0
  %v667 = vadd.f32 0.0, %v666
  %668 = vdwg.mxu0
  %669 = vmatprep.subr.mxu0 0.0
  %670 = vmatpush1.msra.mxu0 0.0
  %671 = vmatprep.subr.mxu0 0.0
  %672 = vmatpush1.msra.mxu0 0.0
  %673 = vmatprep.subr.mxu0 0.0
  %674 = vmatpush1.msra.mxu0 0.0
  %675 = vmatprep.subr.mxu0 0.0
  %676 = vmatpush1.msra.mxu0 0.0
  %677 = vmatprep.subr.mxu0 0.0
  %678 = vmatpush1.msra.mxu0 0.0
  %679 = vmatprep.subr.mxu0 0.0
  %680 = vmatpush1.msra.mxu0 0.0
  %681 = vmatprep.subr.mxu0 0.0
  %682 = vmatpush1.msra.mxu0 0.0
  %683 = vmatprep.subr.mxu0 %v533
  %684 = vmatpush1.msra.mxu0 %v532
  %685 = vmatprep.subr.mxu0 %v469
  %686 = vmatpush1.msra.mxu0 %v468
  %687 = vmatprep.subr.mxu0 %v405
  %688 = vmatpush1.msra.mxu0 %v404
  %689 = vmatprep.subr.mxu0 %v341
  %690 = vmatpush1.msra.mxu0 %v340
  %691 = vmatprep.subr.mxu0 %v277
  %692 = vmatpush1.msra.mxu0 %v276
  %693 = vmatprep.subr.mxu0 %v213
  %694 = vmatpush1.msra.mxu0 %v212
  %695 = vmatprep.subr.mxu0 %v149
  %696 = vmatpush1.msra.mxu0 %v148
  %697 = vmatprep.subr.mxu0 %v85
  %698 = vmatpush1.msra.mxu0 %v84
  %699 = vmatprep.subr.mxu0 %v21
  %700 = vmatpush1.msra.mxu0 %v20
  %701 = vmatprep.subr.mxu0 0.0
  %702 = vmatpush2.msra.mxu0 0.0
  %703 = vmatprep.subr.mxu0 0.0
  %704 = vmatpush2.msra.mxu0 0.0
  %705 = vmatprep.subr.mxu0 0.0
  %706 = vmatpush2.msra.mxu0 0.0
  %707 = vmatprep.subr.mxu0 0.0
  %708 = vmatpush2.msra.mxu0 0.0
  %709 = vmatprep.subr.mxu0 0.0
  %710 = vmatpush2.msra.mxu0 0.0
  %711 = vmatprep.subr.mxu0 0.0
  %712 = vmatpush2.msra.mxu0 0.0
  %713 = vmatprep.subr.mxu0 0.0
  %714 = vmatpush2.msra.mxu0 0.0
  %715 = vmatprep.subr.mxu0 0.0
  %716 = vmatpush2.msra.mxu0 0.0
  %717 = vmatprep.subr.mxu0 0.0
  %718 = vmatpush2.msra.mxu0 0.0
  %719 = vmatprep.subr.mxu0 0.0
  %720 = vmatpush2.msra.mxu0 0.0
  %721 = vmatprep.subr.mxu0 0.0
  %722 = vmatpush2.msra.mxu0 0.0
  %723 = vmatprep.subr.mxu0 0.0
  %724 = vmatpush2.msra.mxu0 0.0
  %725 = vmatprep.subr.mxu0 0.0
  %726 = vmatpush2.msra.mxu0 0.0
  %727 = vmatprep.subr.mxu0 0.0
  %728 = vmatpush2.msra.mxu0 0.0
  %729 = vmatprep.subr.mxu0 0.0
  %730 = vmatpush2.msra.mxu0 0.0
  %731 = vmatprep.subr.mxu0 0.0
  %732 = vmatpush2.msra.mxu0 0.0
  %733 = vmatprep.mubr.f32.mxu0 0.0
  %734 = vmatmul.mubr.f32.gmra.mxu0 %v596
  %v735 = vpop.f32.mrf.mxu0
  %v736 = vadd.f32 0.0, %v735
  %v737 = vpop.f32.mrf.mxu0
  %v738 = vadd.f32 0.0, %v737
  %739 = vdwg.mxu0
  %740 = vmatprep.subr.mxu0 0.0
  %741 = vmatpush1.msra.mxu0 0.0
  %742 = vmatprep.subr.mxu0 0.0
  %743 = vmatpush1.msra.mxu0 0.0
  %744 = vmatprep.subr.mxu0 0.0
  %745 = vmatpush1.msra.mxu0 0.0
  %746 = vmatprep.subr.mxu0 0.0
  %747 = vmatpush1.msra.mxu0 0.0
  %748 = vmatprep.subr.mxu0 0.0
  %749 = vmatpush1.msra.mxu0 0.0
  %750 = vmatprep.subr.mxu0 0.0
  %751 = vmatpush1.msra.mxu0 0.0
  %752 = vmatprep.subr.mxu0 0.0
  %753 = vmatpush1.msra.mxu0 0.0
  %754 = vmatprep.subr.mxu0 %v535
  %755 = vmatpush1.msra.mxu0 %v534
  %756 = vmatprep.subr.mxu0 %v471
  %757 = vmatpush1.msra.mxu0 %v470
  %758 = vmatprep.subr.mxu0 %v407
  %759 = vmatpush1.msra.mxu0 %v406
  %760 = vmatprep.subr.mxu0 %v343
  %761 = vmatpush1.msra.mxu0 %v342
  %762 = vmatprep.subr.mxu0 %v279
  %763 = vmatpush1.msra.mxu0 %v278
  %764 = vmatprep.subr.mxu0 %v215
  %765 = vmatpush1.msra.mxu0 %v214
  %766 = vmatprep.subr.mxu0 %v151
  %767 = vmatpush1.msra.mxu0 %v150
  %768 = vmatprep.subr.mxu0 %v87
  %769 = vmatpush1.msra.mxu0 %v86
  %770 = vmatprep.subr.mxu0 %v23
  %771 = vmatpush1.msra.mxu0 %v22
  %772 = vmatprep.subr.mxu0 0.0
  %773 = vmatpush2.msra.mxu0 0.0
  %774 = vmatprep.subr.mxu0 0.0
  %775 = vmatpush2.msra.mxu0 0.0
  %776 = vmatprep.subr.mxu0 0.0
  %777 = vmatpush2.msra.mxu0 0.0
  %778 = vmatprep.subr.mxu0 0.0
  %779 = vmatpush2.msra.mxu0 0.0
  %780 = vmatprep.subr.mxu0 0.0
  %781 = vmatpush2.msra.mxu0 0.0
  %782 = vmatprep.subr.mxu0 0.0
  %783 = vmatpush2.msra.mxu0 0.0
  %784 = vmatprep.subr.mxu0 0.0
  %785 = vmatpush2.msra.mxu0 0.0
  %786 = vmatprep.subr.mxu0 0.0
  %787 = vmatpush2.msra.mxu0 0.0
  %788 = vmatprep.subr.mxu0 0.0
  %789 = vmatpush2.msra.mxu0 0.0
  %790 = vmatprep.subr.mxu0 0.0
  %791 = vmatpush2.msra.mxu0 0.0
  %792 = vmatprep.subr.mxu0 0.0
  %793 = vmatpush2.msra.mxu0 0.0
  %794 = vmatprep.subr.mxu0 0.0
  %795 = vmatpush2.msra.mxu0 0.0
  %796 = vmatprep.subr.mxu0 0.0
  %797 = vmatpush2.msra.mxu0 0.0
  %798 = vmatprep.subr.mxu0 0.0
  %799 = vmatpush2.msra.mxu0 0.0
  %800 = vmatprep.subr.mxu0 0.0
  %801 = vmatpush2.msra.mxu0 0.0
  %802 = vmatprep.subr.mxu0 0.0
  %803 = vmatpush2.msra.mxu0 0.0
  %804 = vmatprep.mubr.f32.mxu0 0.0
  %805 = vmatmul.mubr.f32.gmra.mxu0 %v596
  %v806 = vpop.f32.mrf.mxu0
  %v807 = vadd.f32 0.0, %v806
  %v808 = vpop.f32.mrf.mxu0
  %v809 = vadd.f32 0.0, %v808
  %810 = vdwg.mxu0
  %811 = vmatprep.subr.mxu0 0.0
  %812 = vmatpush1.msra.mxu0 0.0
  %813 = vmatprep.subr.mxu0 0.0
  %814 = vmatpush1.msra.mxu0 0.0
  %815 = vmatprep.subr.mxu0 0.0
  %816 = vmatpush1.msra.mxu0 0.0
  %817 = vmatprep.subr.mxu0 0.0
  %818 = vmatpush1.msra.mxu0 0.0
  %819 = vmatprep.subr.mxu0 0.0
  %820 = vmatpush1.msra.mxu0 0.0
  %821 = vmatprep.subr.mxu0 0.0
  %822 = vmatpush1.msra.mxu0 0.0
  %823 = vmatprep.subr.mxu0 0.0
  %824 = vmatpush1.msra.mxu0 0.0
  %825 = vmatprep.subr.mxu0 %v537
  %826 = vmatpush1.msra.mxu0 %v536
  %827 = vmatprep.subr.mxu0 %v473
  %828 = vmatpush1.msra.mxu0 %v472
  %829 = vmatprep.subr.mxu0 %v409
  %830 = vmatpush1.msra.mxu0 %v408
  %831 = vmatprep.subr.mxu0 %v345
  %832 = vmatpush1.msra.mxu0 %v344
  %833 = vmatprep.subr.mxu0 %v281
  %834 = vmatpush1.msra.mxu0 %v280
  %835 = vmatprep.subr.mxu0 %v217
  %836 = vmatpush1.msra.mxu0 %v216
  %837 = vmatprep.subr.mxu0 %v153
  %838 = vmatpush1.msra.mxu0 %v152
  %839 = vmatprep.subr.mxu0 %v89
  %840 = vmatpush1.msra.mxu0 %v88
  %841 = vmatprep.subr.mxu0 %v25
  %842 = vmatpush1.msra.mxu0 %v24
  %843 = vmatprep.subr.mxu0 0.0
  %844 = vmatpush2.msra.mxu0 0.0
  %845 = vmatprep.subr.mxu0 0.0
  %846 = vmatpush2.msra.mxu0 0.0
  %847 = vmatprep.subr.mxu0 0.0
  %848 = vmatpush2.msra.mxu0 0.0
  %849 = vmatprep.subr.mxu0 0.0
  %850 = vmatpush2.msra.mxu0 0.0
  %851 = vmatprep.subr.mxu0 0.0
  %852 = vmatpush2.msra.mxu0 0.0
  %853 = vmatprep.subr.mxu0 0.0
  %854 = vmatpush2.msra.mxu0 0.0
  %855 = vmatprep.subr.mxu0 0.0
  %856 = vmatpush2.msra.mxu0 0.0
  %857 = vmatprep.subr.mxu0 0.0
  %858 = vmatpush2.msra.mxu0 0.0
  %859 = vmatprep.subr.mxu0 0.0
  %860 = vmatpush2.msra.mxu0 0.0
  %861 = vmatprep.subr.mxu0 0.0
  %862 = vmatpush2.msra.mxu0 0.0
  %863 = vmatprep.subr.mxu0 0.0
  %864 = vmatpush2.msra.mxu0 0.0
  %865 = vmatprep.subr.mxu0 0.0
  %866 = vmatpush2.msra.mxu0 0.0
  %867 = vmatprep.subr.mxu0 0.0
  %868 = vmatpush2.msra.mxu0 0.0
  %869 = vmatprep.subr.mxu0 0.0
  %870 = vmatpush2.msra.mxu0 0.0
  %871 = vmatprep.subr.mxu0 0.0
  %872 = vmatpush2.msra.mxu0 0.0
  %873 = vmatprep.subr.mxu0 0.0
  %874 = vmatpush2.msra.mxu0 0.0
  %875 = vmatprep.mubr.f32.mxu0 0.0
  %876 = vmatmul.mubr.f32.gmra.mxu0 %v596
  %v877 = vpop.f32.mrf.mxu0
  %v878 = vadd.f32 0.0, %v877
  %v879 = vpop.f32.mrf.mxu0
  %v880 = vadd.f32 0.0, %v879
  %881 = vdwg.mxu0
  %882 = vmatprep.subr.mxu0 0.0
  %883 = vmatpush1.msra.mxu0 0.0
  %884 = vmatprep.subr.mxu0 0.0
  %885 = vmatpush1.msra.mxu0 0.0
  %886 = vmatprep.subr.mxu0 0.0
  %887 = vmatpush1.msra.mxu0 0.0
  %888 = vmatprep.subr.mxu0 0.0
  %889 = vmatpush1.msra.mxu0 0.0
  %890 = vmatprep.subr.mxu0 0.0
  %891 = vmatpush1.msra.mxu0 0.0
  %892 = vmatprep.subr.mxu0 0.0
  %893 = vmatpush1.msra.mxu0 0.0
  %894 = vmatprep.subr.mxu0 0.0
  %895 = vmatpush1.msra.mxu0 0.0
  %896 = vmatprep.subr.mxu0 %v539
  %897 = vmatpush1.msra.mxu0 %v538
  %898 = vmatprep.subr.mxu0 %v475
  %899 = vmatpush1.msra.mxu0 %v474
  %900 = vmatprep.subr.mxu0 %v411
  %901 = vmatpush1.msra.mxu0 %v410
  %902 = vmatprep.subr.mxu0 %v347
  %903 = vmatpush1.msra.mxu0 %v346
  %904 = vmatprep.subr.mxu0 %v283
  %905 = vmatpush1.msra.mxu0 %v282
  %906 = vmatprep.subr.mxu0 %v219
  %907 = vmatpush1.msra.mxu0 %v218
  %908 = vmatprep.subr.mxu0 %v155
  %909 = vmatpush1.msra.mxu0 %v154
  %910 = vmatprep.subr.mxu0 %v91
  %911 = vmatpush1.msra.mxu0 %v90
  %912 = vmatprep.subr.mxu0 %v27
  %913 = vmatpush1.msra.mxu0 %v26
  %914 = vmatprep.subr.mxu0 0.0
  %915 = vmatpush2.msra.mxu0 0.0
  %916 = vmatprep.subr.mxu0 0.0
  %917 = vmatpush2.msra.mxu0 0.0
  %918 = vmatprep.subr.mxu0 0.0
  %919 = vmatpush2.msra.mxu0 0.0
  %920 = vmatprep.subr.mxu0 0.0
  %921 = vmatpush2.msra.mxu0 0.0
  %922 = vmatprep.subr.mxu0 0.0
  %923 = vmatpush2.msra.mxu0 0.0
  %924 = vmatprep.subr.mxu0 0.0
  %925 = vmatpush2.msra.mxu0 0.0
  %926 = vmatprep.subr.mxu0 0.0
  %927 = vmatpush2.msra.mxu0 0.0
  %928 = vmatprep.subr.mxu0 0.0
  %929 = vmatpush2.msra.mxu0 0.0
  %930 = vmatprep.subr.mxu0 0.0
  %931 = vmatpush2.msra.mxu0 0.0
  %932 = vmatprep.subr.mxu0 0.0
  %933 = vmatpush2.msra.mxu0 0.0
  %934 = vmatprep.subr.mxu0 0.0
  %935 = vmatpush2.msra.mxu0 0.0
  %936 = vmatprep.subr.mxu0 0.0
  %937 = vmatpush2.msra.mxu0 0.0
  %938 = vmatprep.subr.mxu0 0.0
  %939 = vmatpush2.msra.mxu0 0.0
  %940 = vmatprep.subr.mxu0 0.0
  %941 = vmatpush2.msra.mxu0 0.0
  %942 = vmatprep.subr.mxu0 0.0
  %943 = vmatpush2.msra.mxu0 0.0
  %944 = vmatprep.subr.mxu0 0.0
  %945 = vmatpush2.msra.mxu0 0.0
  %946 = vmatprep.mubr.f32.mxu0 0.0
  %947 = vmatmul.mubr.f32.gmra.mxu0 %v596
  %v948 = vpop.f32.mrf.mxu0
  %v949 = vadd.f32 0.0, %v948
  %v950 = vpop.f32.mrf.mxu0
  %v951 = vadd.f32 0.0, %v950
  %952 = vdwg.mxu0
  %953 = vmatprep.subr.mxu0 0.0
  %954 = vmatpush1.msra.mxu0 0.0
  %955 = vmatprep.subr.mxu0 0.0
  %956 = vmatpush1.msra.mxu0 0.0
  %957 = vmatprep.subr.mxu0 0.0
  %958 = vmatpush1.msra.mxu0 0.0
  %959 = vmatprep.subr.mxu0 0.0
  %960 = vmatpush1.msra.mxu0 0.0
  %961 = vmatprep.subr.mxu0 0.0
  %962 = vmatpush1.msra.mxu0 0.0
  %963 = vmatprep.subr.mxu0 0.0
  %964 = vmatpush1.msra.mxu0 0.0
  %965 = vmatprep.subr.mxu0 0.0
  %966 = vmatpush1.msra.mxu0 0.0
  %967 = vmatprep.subr.mxu0 %v541
  %968 = vmatpush1.msra.mxu0 %v540
  %969 = vmatprep.subr.mxu0 %v477
  %970 = vmatpush1.msra.mxu0 %v476
  %971 = vmatprep.subr.mxu0 %v413
  %972 = vmatpush1.msra.mxu0 %v412
  %973 = vmatprep.subr.mxu0 %v349
  %974 = vmatpush1.msra.mxu0 %v348
  %975 = vmatprep.subr.mxu0 %v285
  %976 = vmatpush1.msra.mxu0 %v284
  %977 = vmatprep.subr.mxu0 %v221
  %978 = vmatpush1.msra.mxu0 %v220
  %979 = vmatprep.subr.mxu0 %v157
  %980 = vmatpush1.msra.mxu0 %v156
  %981 = vmatprep.subr.mxu0 %v93
  %982 = vmatpush1.msra.mxu0 %v92
  %983 = vmatprep.subr.mxu0 %v29
  %984 = vmatpush1.msra.mxu0 %v28
  %985 = vmatprep.subr.mxu0 0.0
  %986 = vmatpush2.msra.mxu0 0.0
  %987 = vmatprep.subr.mxu0 0.0
  %988 = vmatpush2.msra.mxu0 0.0
  %989 = vmatprep.subr.mxu0 0.0
  %990 = vmatpush2.msra.mxu0 0.0
  %991 = vmatprep.subr.mxu0 0.0
  %992 = vmatpush2.msra.mxu0 0.0
  %993 = vmatprep.subr.mxu0 0.0
  %994 = vmatpush2.msra.mxu0 0.0
  %995 = vmatprep.subr.mxu0 0.0
  %996 = vmatpush2.msra.mxu0 0.0
  %997 = vmatprep.subr.mxu0 0.0
  %998 = vmatpush2.msra.mxu0 0.0
  %999 = vmatprep.subr.mxu0 0.0
  %1000 = vmatpush2.msra.mxu0 0.0
  %1001 = vmatprep.subr.mxu0 0.0
  %1002 = vmatpush2.msra.mxu0 0.0
  %1003 = vmatprep.subr.mxu0 0.0
  %1004 = vmatpush2.msra.mxu0 0.0
  %1005 = vmatprep.subr.mxu0 0.0
  %1006 = vmatpush2.msra.mxu0 0.0
  %1007 = vmatprep.subr.mxu0 0.0
  %1008 = vmatpush2.msra.mxu0 0.0
  %1009 = vmatprep.subr.mxu0 0.0
  %1010 = vmatpush2.msra.mxu0 0.0
  %1011 = vmatprep.subr.mxu0 0.0
  %1012 = vmatpush2.msra.mxu0 0.0
  %1013 = vmatprep.subr.mxu0 0.0
  %1014 = vmatpush2.msra.mxu0 0.0
  %1015 = vmatprep.subr.mxu0 0.0
  %1016 = vmatpush2.msra.mxu0 0.0
  %1017 = vmatprep.mubr.f32.mxu0 0.0
  %1018 = vmatmul.mubr.f32.gmra.mxu0 %v596
  %v1019 = vpop.f32.mrf.mxu0
  %v1020 = vadd.f32 0.0, %v1019
  %v1021 = vpop.f32.mrf.mxu0
  %v1022 = vadd.f32 0.0, %v1021
  %1023 = vdwg.mxu0
  %1024 = vmatprep.subr.mxu0 0.0
  %1025 = vmatpush1.msra.mxu0 0.0
  %1026 = vmatprep.subr.mxu0 0.0
  %1027 = vmatpush1.msra.mxu0 0.0
  %1028 = vmatprep.subr.mxu0 0.0
  %1029 = vmatpush1.msra.mxu0 0.0
  %1030 = vmatprep.subr.mxu0 0.0
  %1031 = vmatpush1.msra.mxu0 0.0
  %1032 = vmatprep.subr.mxu0 0.0
  %1033 = vmatpush1.msra.mxu0 0.0
  %1034 = vmatprep.subr.mxu0 0.0
  %1035 = vmatpush1.msra.mxu0 0.0
  %1036 = vmatprep.subr.mxu0 0.0
  %1037 = vmatpush1.msra.mxu0 0.0
  %1038 = vmatprep.subr.mxu0 %v543
  %1039 = vmatpush1.msra.mxu0 %v542
  %1040 = vmatprep.subr.mxu0 %v479
  %1041 = vmatpush1.msra.mxu0 %v478
  %1042 = vmatprep.subr.mxu0 %v415
  %1043 = vmatpush1.msra.mxu0 %v414
  %1044 = vmatprep.subr.mxu0 %v351
  %1045 = vmatpush1.msra.mxu0 %v350
  %1046 = vmatprep.subr.mxu0 %v287
  %1047 = vmatpush1.msra.mxu0 %v286
  %1048 = vmatprep.subr.mxu0 %v223
  %1049 = vmatpush1.msra.mxu0 %v222
  %1050 = vmatprep.subr.mxu0 %v159
  %1051 = vmatpush1.msra.mxu0 %v158
  %1052 = vmatprep.subr.mxu0 %v95
  %1053 = vmatpush1.msra.mxu0 %v94
  %1054 = vmatprep.subr.mxu0 %v31
  %1055 = vmatpush1.msra.mxu0 %v30
  %1056 = vmatprep.subr.mxu0 0.0
  %1057 = vmatpush2.msra.mxu0 0.0
  %1058 = vmatprep.subr.mxu0 0.0
  %1059 = vmatpush2.msra.mxu0 0.0
  %1060 = vmatprep.subr.mxu0 0.0
  %1061 = vmatpush2.msra.mxu0 0.0
  %1062 = vmatprep.subr.mxu0 0.0
  %1063 = vmatpush2.msra.mxu0 0.0
  %1064 = vmatprep.subr.mxu0 0.0
  %1065 = vmatpush2.msra.mxu0 0.0
  %1066 = vmatprep.subr.mxu0 0.0
  %1067 = vmatpush2.msra.mxu0 0.0
  %1068 = vmatprep.subr.mxu0 0.0
  %1069 = vmatpush2.msra.mxu0 0.0
  %1070 = vmatprep.subr.mxu0 0.0
  %1071 = vmatpush2.msra.mxu0 0.0
  %1072 = vmatprep.subr.mxu0 0.0
  %1073 = vmatpush2.msra.mxu0 0.0
  %1074 = vmatprep.subr.mxu0 0.0
  %1075 = vmatpush2.msra.mxu0 0.0
  %1076 = vmatprep.subr.mxu0 0.0
  %1077 = vmatpush2.msra.mxu0 0.0
  %1078 = vmatprep.subr.mxu0 0.0
  %1079 = vmatpush2.msra.mxu0 0.0
  %1080 = vmatprep.subr.mxu0 0.0
  %1081 = vmatpush2.msra.mxu0 0.0
  %1082 = vmatprep.subr.mxu0 0.0
  %1083 = vmatpush2.msra.mxu0 0.0
  %1084 = vmatprep.subr.mxu0 0.0
  %1085 = vmatpush2.msra.mxu0 0.0
  %1086 = vmatprep.subr.mxu0 0.0
  %1087 = vmatpush2.msra.mxu0 0.0
  %1088 = vmatprep.mubr.f32.mxu0 0.0
  %1089 = vmatmul.mubr.f32.gmra.mxu0 %v596
  %v1090 = vpop.f32.mrf.mxu0
  %v1091 = vadd.f32 0.0, %v1090
  %v1092 = vpop.f32.mrf.mxu0
  %v1093 = vadd.f32 0.0, %v1092
  %1094 = vdwg.mxu0
  %1095 = vmatprep.subr.mxu0 0.0
  %1096 = vmatpush1.msra.mxu0 0.0
  %1097 = vmatprep.subr.mxu0 0.0
  %1098 = vmatpush1.msra.mxu0 0.0
  %1099 = vmatprep.subr.mxu0 0.0
  %1100 = vmatpush1.msra.mxu0 0.0
  %1101 = vmatprep.subr.mxu0 0.0
  %1102 = vmatpush1.msra.mxu0 0.0
  %1103 = vmatprep.subr.mxu0 0.0
  %1104 = vmatpush1.msra.mxu0 0.0
  %1105 = vmatprep.subr.mxu0 0.0
  %1106 = vmatpush1.msra.mxu0 0.0
  %1107 = vmatprep.subr.mxu0 0.0
  %1108 = vmatpush1.msra.mxu0 0.0
  %1109 = vmatprep.subr.mxu0 %v545
  %1110 = vmatpush1.msra.mxu0 %v544
  %1111 = vmatprep.subr.mxu0 %v481
  %1112 = vmatpush1.msra.mxu0 %v480
  %1113 = vmatprep.subr.mxu0 %v417
  %1114 = vmatpush1.msra.mxu0 %v416
  %1115 = vmatprep.subr.mxu0 %v353
  %1116 = vmatpush1.msra.mxu0 %v352
  %1117 = vmatprep.subr.mxu0 %v289
  %1118 = vmatpush1.msra.mxu0 %v288
  %1119 = vmatprep.subr.mxu0 %v225
  %1120 = vmatpush1.msra.mxu0 %v224
  %1121 = vmatprep.subr.mxu0 %v161
  %1122 = vmatpush1.msra.mxu0 %v160
  %1123 = vmatprep.subr.mxu0 %v97
  %1124 = vmatpush1.msra.mxu0 %v96
  %1125 = vmatprep.subr.mxu0 %v33
  %1126 = vmatpush1.msra.mxu0 %v32
  %1127 = vmatprep.subr.mxu0 0.0
  %1128 = vmatpush2.msra.mxu0 0.0
  %1129 = vmatprep.subr.mxu0 0.0
  %1130 = vmatpush2.msra.mxu0 0.0
  %1131 = vmatprep.subr.mxu0 0.0
  %1132 = vmatpush2.msra.mxu0 0.0
  %1133 = vmatprep.subr.mxu0 0.0
  %1134 = vmatpush2.msra.mxu0 0.0
  %1135 = vmatprep.subr.mxu0 0.0
  %1136 = vmatpush2.msra.mxu0 0.0
  %1137 = vmatprep.subr.mxu0 0.0
  %1138 = vmatpush2.msra.mxu0 0.0
  %1139 = vmatprep.subr.mxu0 0.0
  %1140 = vmatpush2.msra.mxu0 0.0
  %1141 = vmatprep.subr.mxu0 0.0
  %1142 = vmatpush2.msra.mxu0 0.0
  %1143 = vmatprep.subr.mxu0 0.0
  %1144 = vmatpush2.msra.mxu0 0.0
  %1145 = vmatprep.subr.mxu0 0.0
  %1146 = vmatpush2.msra.mxu0 0.0
  %1147 = vmatprep.subr.mxu0 0.0
  %1148 = vmatpush2.msra.mxu0 0.0
  %1149 = vmatprep.subr.mxu0 0.0
  %1150 = vmatpush2.msra.mxu0 0.0
  %1151 = vmatprep.subr.mxu0 0.0
  %1152 = vmatpush2.msra.mxu0 0.0
  %1153 = vmatprep.subr.mxu0 0.0
  %1154 = vmatpush2.msra.mxu0 0.0
  %1155 = vmatprep.subr.mxu0 0.0
  %1156 = vmatpush2.msra.mxu0 0.0
  %1157 = vmatprep.subr.mxu0 0.0
  %1158 = vmatpush2.msra.mxu0 0.0
  %1159 = vmatprep.mubr.f32.mxu0 0.0
  %1160 = vmatmul.mubr.f32.gmra.mxu0 %v596
  %v1161 = vpop.f32.mrf.mxu0
  %v1162 = vadd.f32 0.0, %v1161
  %v1163 = vpop.f32.mrf.mxu0
  %v1164 = vadd.f32 0.0, %v1163
  %1165 = vdwg.mxu0
  %1166 = vmatprep.subr.mxu0 0.0
  %1167 = vmatpush1.msra.mxu0 0.0
  %1168 = vmatprep.subr.mxu0 0.0
  %1169 = vmatpush1.msra.mxu0 0.0
  %1170 = vmatprep.subr.mxu0 0.0
  %1171 = vmatpush1.msra.mxu0 0.0
  %1172 = vmatprep.subr.mxu0 0.0
  %1173 = vmatpush1.msra.mxu0 0.0
  %1174 = vmatprep.subr.mxu0 0.0
  %1175 = vmatpush1.msra.mxu0 0.0
  %1176 = vmatprep.subr.mxu0 0.0
  %1177 = vmatpush1.msra.mxu0 0.0
  %1178 = vmatprep.subr.mxu0 0.0
  %1179 = vmatpush1.msra.mxu0 0.0
  %1180 = vmatprep.subr.mxu0 %v547
  %1181 = vmatpush1.msra.mxu0 %v546
  %1182 = vmatprep.subr.mxu0 %v483
  %1183 = vmatpush1.msra.mxu0 %v482
  %1184 = vmatprep.subr.mxu0 %v419
  %1185 = vmatpush1.msra.mxu0 %v418
  %1186 = vmatprep.subr.mxu0 %v355
  %1187 = vmatpush1.msra.mxu0 %v354
  %1188 = vmatprep.subr.mxu0 %v291
  %1189 = vmatpush1.msra.mxu0 %v290
  %1190 = vmatprep.subr.mxu0 %v227
  %1191 = vmatpush1.msra.mxu0 %v226
  %1192 = vmatprep.subr.mxu0 %v163
  %1193 = vmatpush1.msra.mxu0 %v162
  %1194 = vmatprep.subr.mxu0 %v99
  %1195 = vmatpush1.msra.mxu0 %v98
  %1196 = vmatprep.subr.mxu0 %v35
  %1197 = vmatpush1.msra.mxu0 %v34
  %1198 = vmatprep.subr.mxu0 0.0
  %1199 = vmatpush2.msra.mxu0 0.0
  %1200 = vmatprep.subr.mxu0 0.0
  %1201 = vmatpush2.msra.mxu0 0.0
  %1202 = vmatprep.subr.mxu0 0.0
  %1203 = vmatpush2.msra.mxu0 0.0
  %1204 = vmatprep.subr.mxu0 0.0
  %1205 = vmatpush2.msra.mxu0 0.0
  %1206 = vmatprep.subr.mxu0 0.0
  %1207 = vmatpush2.msra.mxu0 0.0
  %1208 = vmatprep.subr.mxu0 0.0
  %1209 = vmatpush2.msra.mxu0 0.0
  %1210 = vmatprep.subr.mxu0 0.0
  %1211 = vmatpush2.msra.mxu0 0.0
  %1212 = vmatprep.subr.mxu0 0.0
  %1213 = vmatpush2.msra.mxu0 0.0
  %1214 = vmatprep.subr.mxu0 0.0
  %1215 = vmatpush2.msra.mxu0 0.0
  %1216 = vmatprep.subr.mxu0 0.0
  %1217 = vmatpush2.msra.mxu0 0.0
  %1218 = vmatprep.subr.mxu0 0.0
  %1219 = vmatpush2.msra.mxu0 0.0
  %1220 = vmatprep.subr.mxu0 0.0
  %1221 = vmatpush2.msra.mxu0 0.0
  %1222 = vmatprep.subr.mxu0 0.0
  %1223 = vmatpush2.msra.mxu0 0.0
  %1224 = vmatprep.subr.mxu0 0.0
  %1225 = vmatpush2.msra.mxu0 0.0
  %1226 = vmatprep.subr.mxu0 0.0
  %1227 = vmatpush2.msra.mxu0 0.0
  %1228 = vmatprep.subr.mxu0 0.0
  %1229 = vmatpush2.msra.mxu0 0.0
  %1230 = vmatprep.mubr.f32.mxu0 0.0
  %1231 = vmatmul.mubr.f32.gmra.mxu0 %v596
  %v1232 = vpop.f32.mrf.mxu0
  %v1233 = vadd.f32 0.0, %v1232
  %v1234 = vpop.f32.mrf.mxu0
  %v1235 = vadd.f32 0.0, %v1234
  %1236 = vdwg.mxu0
  %1237 = vmatprep.subr.mxu0 0.0
  %1238 = vmatpush1.msra.mxu0 0.0
  %1239 = vmatprep.subr.mxu0 0.0
  %1240 = vmatpush1.msra.mxu0 0.0
  %1241 = vmatprep.subr.mxu0 0.0
  %1242 = vmatpush1.msra.mxu0 0.0
  %1243 = vmatprep.subr.mxu0 0.0
  %1244 = vmatpush1.msra.mxu0 0.0
  %1245 = vmatprep.subr.mxu0 0.0
  %1246 = vmatpush1.msra.mxu0 0.0
  %1247 = vmatprep.subr.mxu0 0.0
  %1248 = vmatpush1.msra.mxu0 0.0
  %1249 = vmatprep.subr.mxu0 0.0
  %1250 = vmatpush1.msra.mxu0 0.0
  %1251 = vmatprep.subr.mxu0 %v549
  %1252 = vmatpush1.msra.mxu0 %v548
  %1253 = vmatprep.subr.mxu0 %v485
  %1254 = vmatpush1.msra.mxu0 %v484
  %1255 = vmatprep.subr.mxu0 %v421
  %1256 = vmatpush1.msra.mxu0 %v420
  %1257 = vmatprep.subr.mxu0 %v357
  %1258 = vmatpush1.msra.mxu0 %v356
  %1259 = vmatprep.subr.mxu0 %v293
  %1260 = vmatpush1.msra.mxu0 %v292
  %1261 = vmatprep.subr.mxu0 %v229
  %1262 = vmatpush1.msra.mxu0 %v228
  %1263 = vmatprep.subr.mxu0 %v165
  %1264 = vmatpush1.msra.mxu0 %v164
  %1265 = vmatprep.subr.mxu0 %v101
  %1266 = vmatpush1.msra.mxu0 %v100
  %1267 = vmatprep.subr.mxu0 %v37
  %1268 = vmatpush1.msra.mxu0 %v36
  %1269 = vmatprep.subr.mxu0 0.0
  %1270 = vmatpush2.msra.mxu0 0.0
  %1271 = vmatprep.subr.mxu0 0.0
  %1272 = vmatpush2.msra.mxu0 0.0
  %1273 = vmatprep.subr.mxu0 0.0
  %1274 = vmatpush2.msra.mxu0 0.0
  %1275 = vmatprep.subr.mxu0 0.0
  %1276 = vmatpush2.msra.mxu0 0.0
  %1277 = vmatprep.subr.mxu0 0.0
  %1278 = vmatpush2.msra.mxu0 0.0
  %1279 = vmatprep.subr.mxu0 0.0
  %1280 = vmatpush2.msra.mxu0 0.0
  %1281 = vmatprep.subr.mxu0 0.0
  %1282 = vmatpush2.msra.mxu0 0.0
  %1283 = vmatprep.subr.mxu0 0.0
  %1284 = vmatpush2.msra.mxu0 0.0
  %1285 = vmatprep.subr.mxu0 0.0
  %1286 = vmatpush2.msra.mxu0 0.0
  %1287 = vmatprep.subr.mxu0 0.0
  %1288 = vmatpush2.msra.mxu0 0.0
  %1289 = vmatprep.subr.mxu0 0.0
  %1290 = vmatpush2.msra.mxu0 0.0
  %1291 = vmatprep.subr.mxu0 0.0
  %1292 = vmatpush2.msra.mxu0 0.0
  %1293 = vmatprep.subr.mxu0 0.0
  %1294 = vmatpush2.msra.mxu0 0.0
  %1295 = vmatprep.subr.mxu0 0.0
  %1296 = vmatpush2.msra.mxu0 0.0
  %1297 = vmatprep.subr.mxu0 0.0
  %1298 = vmatpush2.msra.mxu0 0.0
  %1299 = vmatprep.subr.mxu0 0.0
  %1300 = vmatpush2.msra.mxu0 0.0
  %1301 = vmatprep.mubr.f32.mxu0 0.0
  %1302 = vmatmul.mubr.f32.gmra.mxu0 %v596
  %v1303 = vpop.f32.mrf.mxu0
  %v1304 = vadd.f32 0.0, %v1303
  %v1305 = vpop.f32.mrf.mxu0
  %v1306 = vadd.f32 0.0, %v1305
  %1307 = vdwg.mxu0
  %1308 = vmatprep.subr.mxu0 0.0
  %1309 = vmatpush1.msra.mxu0 0.0
  %1310 = vmatprep.subr.mxu0 0.0
  %1311 = vmatpush1.msra.mxu0 0.0
  %1312 = vmatprep.subr.mxu0 0.0
  %1313 = vmatpush1.msra.mxu0 0.0
  %1314 = vmatprep.subr.mxu0 0.0
  %1315 = vmatpush1.msra.mxu0 0.0
  %1316 = vmatprep.subr.mxu0 0.0
  %1317 = vmatpush1.msra.mxu0 0.0
  %1318 = vmatprep.subr.mxu0 0.0
  %1319 = vmatpush1.msra.mxu0 0.0
  %1320 = vmatprep.subr.mxu0 0.0
  %1321 = vmatpush1.msra.mxu0 0.0
  %1322 = vmatprep.subr.mxu0 %v551
  %1323 = vmatpush1.msra.mxu0 %v550
  %1324 = vmatprep.subr.mxu0 %v487
  %1325 = vmatpush1.msra.mxu0 %v486
  %1326 = vmatprep.subr.mxu0 %v423
  %1327 = vmatpush1.msra.mxu0 %v422
  %1328 = vmatprep.subr.mxu0 %v359
  %1329 = vmatpush1.msra.mxu0 %v358
  %1330 = vmatprep.subr.mxu0 %v295
  %1331 = vmatpush1.msra.mxu0 %v294
  %1332 = vmatprep.subr.mxu0 %v231
  %1333 = vmatpush1.msra.mxu0 %v230
  %1334 = vmatprep.subr.mxu0 %v167
  %1335 = vmatpush1.msra.mxu0 %v166
  %1336 = vmatprep.subr.mxu0 %v103
  %1337 = vmatpush1.msra.mxu0 %v102
  %1338 = vmatprep.subr.mxu0 %v39
  %1339 = vmatpush1.msra.mxu0 %v38
  %1340 = vmatprep.subr.mxu0 0.0
  %1341 = vmatpush2.msra.mxu0 0.0
  %1342 = vmatprep.subr.mxu0 0.0
  %1343 = vmatpush2.msra.mxu0 0.0
  %1344 = vmatprep.subr.mxu0 0.0
  %1345 = vmatpush2.msra.mxu0 0.0
  %1346 = vmatprep.subr.mxu0 0.0
  %1347 = vmatpush2.msra.mxu0 0.0
  %1348 = vmatprep.subr.mxu0 0.0
  %1349 = vmatpush2.msra.mxu0 0.0
  %1350 = vmatprep.subr.mxu0 0.0
  %1351 = vmatpush2.msra.mxu0 0.0
  %1352 = vmatprep.subr.mxu0 0.0
  %1353 = vmatpush2.msra.mxu0 0.0
  %1354 = vmatprep.subr.mxu0 0.0
  %1355 = vmatpush2.msra.mxu0 0.0
  %1356 = vmatprep.subr.mxu0 0.0
  %1357 = vmatpush2.msra.mxu0 0.0
  %1358 = vmatprep.subr.mxu0 0.0
  %1359 = vmatpush2.msra.mxu0 0.0
  %1360 = vmatprep.subr.mxu0 0.0
  %1361 = vmatpush2.msra.mxu0 0.0
  %1362 = vmatprep.subr.mxu0 0.0
  %1363 = vmatpush2.msra.mxu0 0.0
  %1364 = vmatprep.subr.mxu0 0.0
  %1365 = vmatpush2.msra.mxu0 0.0
  %1366 = vmatprep.subr.mxu0 0.0
  %1367 = vmatpush2.msra.mxu0 0.0
  %1368 = vmatprep.subr.mxu0 0.0
  %1369 = vmatpush2.msra.mxu0 0.0
  %1370 = vmatprep.subr.mxu0 0.0
  %1371 = vmatpush2.msra.mxu0 0.0
  %1372 = vmatprep.mubr.f32.mxu0 0.0
  %1373 = vmatmul.mubr.f32.gmra.mxu0 %v596
  %v1374 = vpop.f32.mrf.mxu0
  %v1375 = vadd.f32 0.0, %v1374
  %v1376 = vpop.f32.mrf.mxu0
  %v1377 = vadd.f32 0.0, %v1376
  %1378 = vdwg.mxu0
  %1379 = vmatprep.subr.mxu0 0.0
  %1380 = vmatpush1.msra.mxu0 0.0
  %1381 = vmatprep.subr.mxu0 0.0
  %1382 = vmatpush1.msra.mxu0 0.0
  %1383 = vmatprep.subr.mxu0 0.0
  %1384 = vmatpush1.msra.mxu0 0.0
  %1385 = vmatprep.subr.mxu0 0.0
  %1386 = vmatpush1.msra.mxu0 0.0
  %1387 = vmatprep.subr.mxu0 0.0
  %1388 = vmatpush1.msra.mxu0 0.0
  %1389 = vmatprep.subr.mxu0 0.0
  %1390 = vmatpush1.msra.mxu0 0.0
  %1391 = vmatprep.subr.mxu0 0.0
  %1392 = vmatpush1.msra.mxu0 0.0
  %1393 = vmatprep.subr.mxu0 %v553
  %1394 = vmatpush1.msra.mxu0 %v552
  %1395 = vmatprep.subr.mxu0 %v489
  %1396 = vmatpush1.msra.mxu0 %v488
  %1397 = vmatprep.subr.mxu0 %v425
  %1398 = vmatpush1.msra.mxu0 %v424
  %1399 = vmatprep.subr.mxu0 %v361
  %1400 = vmatpush1.msra.mxu0 %v360
  %1401 = vmatprep.subr.mxu0 %v297
  %1402 = vmatpush1.msra.mxu0 %v296
  %1403 = vmatprep.subr.mxu0 %v233
  %1404 = vmatpush1.msra.mxu0 %v232
  %1405 = vmatprep.subr.mxu0 %v169
  %1406 = vmatpush1.msra.mxu0 %v168
  %1407 = vmatprep.subr.mxu0 %v105
  %1408 = vmatpush1.msra.mxu0 %v104
  %1409 = vmatprep.subr.mxu0 %v41
  %1410 = vmatpush1.msra.mxu0 %v40
  %1411 = vmatprep.subr.mxu0 0.0
  %1412 = vmatpush2.msra.mxu0 0.0
  %1413 = vmatprep.subr.mxu0 0.0
  %1414 = vmatpush2.msra.mxu0 0.0
  %1415 = vmatprep.subr.mxu0 0.0
  %1416 = vmatpush2.msra.mxu0 0.0
  %1417 = vmatprep.subr.mxu0 0.0
  %1418 = vmatpush2.msra.mxu0 0.0
  %1419 = vmatprep.subr.mxu0 0.0
  %1420 = vmatpush2.msra.mxu0 0.0
  %1421 = vmatprep.subr.mxu0 0.0
  %1422 = vmatpush2.msra.mxu0 0.0
  %1423 = vmatprep.subr.mxu0 0.0
  %1424 = vmatpush2.msra.mxu0 0.0
  %1425 = vmatprep.subr.mxu0 0.0
  %1426 = vmatpush2.msra.mxu0 0.0
  %1427 = vmatprep.subr.mxu0 0.0
  %1428 = vmatpush2.msra.mxu0 0.0
  %1429 = vmatprep.subr.mxu0 0.0
  %1430 = vmatpush2.msra.mxu0 0.0
  %1431 = vmatprep.subr.mxu0 0.0
  %1432 = vmatpush2.msra.mxu0 0.0
  %1433 = vmatprep.subr.mxu0 0.0
  %1434 = vmatpush2.msra.mxu0 0.0
  %1435 = vmatprep.subr.mxu0 0.0
  %1436 = vmatpush2.msra.mxu0 0.0
  %1437 = vmatprep.subr.mxu0 0.0
  %1438 = vmatpush2.msra.mxu0 0.0
  %1439 = vmatprep.subr.mxu0 0.0
  %1440 = vmatpush2.msra.mxu0 0.0
  %1441 = vmatprep.subr.mxu0 0.0
  %1442 = vmatpush2.msra.mxu0 0.0
  %1443 = vmatprep.mubr.f32.mxu0 0.0
  %1444 = vmatmul.mubr.f32.gmra.mxu0 %v596
  %v1445 = vpop.f32.mrf.mxu0
  %v1446 = vadd.f32 0.0, %v1445
  %v1447 = vpop.f32.mrf.mxu0
  %v1448 = vadd.f32 0.0, %v1447
  %1449 = vdwg.mxu0
  %1450 = vmatprep.subr.mxu0 0.0
  %1451 = vmatpush1.msra.mxu0 0.0
  %1452 = vmatprep.subr.mxu0 0.0
  %1453 = vmatpush1.msra.mxu0 0.0
  %1454 = vmatprep.subr.mxu0 0.0
  %1455 = vmatpush1.msra.mxu0 0.0
  %1456 = vmatprep.subr.mxu0 0.0
  %1457 = vmatpush1.msra.mxu0 0.0
  %1458 = vmatprep.subr.mxu0 0.0
  %1459 = vmatpush1.msra.mxu0 0.0
  %1460 = vmatprep.subr.mxu0 0.0
  %1461 = vmatpush1.msra.mxu0 0.0
  %1462 = vmatprep.subr.mxu0 0.0
  %1463 = vmatpush1.msra.mxu0 0.0
  %1464 = vmatprep.subr.mxu0 %v555
  %1465 = vmatpush1.msra.mxu0 %v554
  %1466 = vmatprep.subr.mxu0 %v491
  %1467 = vmatpush1.msra.mxu0 %v490
  %1468 = vmatprep.subr.mxu0 %v427
  %1469 = vmatpush1.msra.mxu0 %v426
  %1470 = vmatprep.subr.mxu0 %v363
  %1471 = vmatpush1.msra.mxu0 %v362
  %1472 = vmatprep.subr.mxu0 %v299
  %1473 = vmatpush1.msra.mxu0 %v298
  %1474 = vmatprep.subr.mxu0 %v235
  %1475 = vmatpush1.msra.mxu0 %v234
  %1476 = vmatprep.subr.mxu0 %v171
  %1477 = vmatpush1.msra.mxu0 %v170
  %1478 = vmatprep.subr.mxu0 %v107
  %1479 = vmatpush1.msra.mxu0 %v106
  %1480 = vmatprep.subr.mxu0 %v43
  %1481 = vmatpush1.msra.mxu0 %v42
  %1482 = vmatprep.subr.mxu0 0.0
  %1483 = vmatpush2.msra.mxu0 0.0
  %1484 = vmatprep.subr.mxu0 0.0
  %1485 = vmatpush2.msra.mxu0 0.0
  %1486 = vmatprep.subr.mxu0 0.0
  %1487 = vmatpush2.msra.mxu0 0.0
  %1488 = vmatprep.subr.mxu0 0.0
  %1489 = vmatpush2.msra.mxu0 0.0
  %1490 = vmatprep.subr.mxu0 0.0
  %1491 = vmatpush2.msra.mxu0 0.0
  %1492 = vmatprep.subr.mxu0 0.0
  %1493 = vmatpush2.msra.mxu0 0.0
  %1494 = vmatprep.subr.mxu0 0.0
  %1495 = vmatpush2.msra.mxu0 0.0
  %1496 = vmatprep.subr.mxu0 0.0
  %1497 = vmatpush2.msra.mxu0 0.0
  %1498 = vmatprep.subr.mxu0 0.0
  %1499 = vmatpush2.msra.mxu0 0.0
  %1500 = vmatprep.subr.mxu0 0.0
  %1501 = vmatpush2.msra.mxu0 0.0
  %1502 = vmatprep.subr.mxu0 0.0
  %1503 = vmatpush2.msra.mxu0 0.0
  %1504 = vmatprep.subr.mxu0 0.0
  %1505 = vmatpush2.msra.mxu0 0.0
  %1506 = vmatprep.subr.mxu0 0.0
  %1507 = vmatpush2.msra.mxu0 0.0
  %1508 = vmatprep.subr.mxu0 0.0
  %1509 = vmatpush2.msra.mxu0 0.0
  %1510 = vmatprep.subr.mxu0 0.0
  %1511 = vmatpush2.msra.mxu0 0.0
  %1512 = vmatprep.subr.mxu0 0.0
  %1513 = vmatpush2.msra.mxu0 0.0
  %1514 = vmatprep.mubr.f32.mxu0 0.0
  %1515 = vmatmul.mubr.f32.gmra.mxu0 %v596
  %v1516 = vpop.f32.mrf.mxu0
  %v1517 = vadd.f32 0.0, %v1516
  %v1518 = vpop.f32.mrf.mxu0
  %v1519 = vadd.f32 0.0, %v1518
  %1520 = vdwg.mxu0
  %1521 = vmatprep.subr.mxu0 0.0
  %1522 = vmatpush1.msra.mxu0 0.0
  %1523 = vmatprep.subr.mxu0 0.0
  %1524 = vmatpush1.msra.mxu0 0.0
  %1525 = vmatprep.subr.mxu0 0.0
  %1526 = vmatpush1.msra.mxu0 0.0
  %1527 = vmatprep.subr.mxu0 0.0
  %1528 = vmatpush1.msra.mxu0 0.0
  %1529 = vmatprep.subr.mxu0 0.0
  %1530 = vmatpush1.msra.mxu0 0.0
  %1531 = vmatprep.subr.mxu0 0.0
  %1532 = vmatpush1.msra.mxu0 0.0
  %1533 = vmatprep.subr.mxu0 0.0
  %1534 = vmatpush1.msra.mxu0 0.0
  %1535 = vmatprep.subr.mxu0 %v557
  %1536 = vmatpush1.msra.mxu0 %v556
  %1537 = vmatprep.subr.mxu0 %v493
  %1538 = vmatpush1.msra.mxu0 %v492
  %1539 = vmatprep.subr.mxu0 %v429
  %1540 = vmatpush1.msra.mxu0 %v428
  %1541 = vmatprep.subr.mxu0 %v365
  %1542 = vmatpush1.msra.mxu0 %v364
  %1543 = vmatprep.subr.mxu0 %v301
  %1544 = vmatpush1.msra.mxu0 %v300
  %1545 = vmatprep.subr.mxu0 %v237
  %1546 = vmatpush1.msra.mxu0 %v236
  %1547 = vmatprep.subr.mxu0 %v173
  %1548 = vmatpush1.msra.mxu0 %v172
  %1549 = vmatprep.subr.mxu0 %v109
  %1550 = vmatpush1.msra.mxu0 %v108
  %1551 = vmatprep.subr.mxu0 %v45
  %1552 = vmatpush1.msra.mxu0 %v44
  %1553 = vmatprep.subr.mxu0 0.0
  %1554 = vmatpush2.msra.mxu0 0.0
  %1555 = vmatprep.subr.mxu0 0.0
  %1556 = vmatpush2.msra.mxu0 0.0
  %1557 = vmatprep.subr.mxu0 0.0
  %1558 = vmatpush2.msra.mxu0 0.0
  %1559 = vmatprep.subr.mxu0 0.0
  %1560 = vmatpush2.msra.mxu0 0.0
  %1561 = vmatprep.subr.mxu0 0.0
  %1562 = vmatpush2.msra.mxu0 0.0
  %1563 = vmatprep.subr.mxu0 0.0
  %1564 = vmatpush2.msra.mxu0 0.0
  %1565 = vmatprep.subr.mxu0 0.0
  %1566 = vmatpush2.msra.mxu0 0.0
  %1567 = vmatprep.subr.mxu0 0.0
  %1568 = vmatpush2.msra.mxu0 0.0
  %1569 = vmatprep.subr.mxu0 0.0
  %1570 = vmatpush2.msra.mxu0 0.0
  %1571 = vmatprep.subr.mxu0 0.0
  %1572 = vmatpush2.msra.mxu0 0.0
  %1573 = vmatprep.subr.mxu0 0.0
  %1574 = vmatpush2.msra.mxu0 0.0
  %1575 = vmatprep.subr.mxu0 0.0
  %1576 = vmatpush2.msra.mxu0 0.0
  %1577 = vmatprep.subr.mxu0 0.0
  %1578 = vmatpush2.msra.mxu0 0.0
  %1579 = vmatprep.subr.mxu0 0.0
  %1580 = vmatpush2.msra.mxu0 0.0
  %1581 = vmatprep.subr.mxu0 0.0
  %1582 = vmatpush2.msra.mxu0 0.0
  %1583 = vmatprep.subr.mxu0 0.0
  %1584 = vmatpush2.msra.mxu0 0.0
  %1585 = vmatprep.mubr.f32.mxu0 0.0
  %1586 = vmatmul.mubr.f32.gmra.mxu0 %v596
  %v1587 = vpop.f32.mrf.mxu0
  %v1588 = vadd.f32 0.0, %v1587
  %v1589 = vpop.f32.mrf.mxu0
  %v1590 = vadd.f32 0.0, %v1589
  %1591 = vdwg.mxu0
  %1592 = vmatprep.subr.mxu0 0.0
  %1593 = vmatpush1.msra.mxu0 0.0
  %1594 = vmatprep.subr.mxu0 0.0
  %1595 = vmatpush1.msra.mxu0 0.0
  %1596 = vmatprep.subr.mxu0 0.0
  %1597 = vmatpush1.msra.mxu0 0.0
  %1598 = vmatprep.subr.mxu0 0.0
  %1599 = vmatpush1.msra.mxu0 0.0
  %1600 = vmatprep.subr.mxu0 0.0
  %1601 = vmatpush1.msra.mxu0 0.0
  %1602 = vmatprep.subr.mxu0 0.0
  %1603 = vmatpush1.msra.mxu0 0.0
  %1604 = vmatprep.subr.mxu0 0.0
  %1605 = vmatpush1.msra.mxu0 0.0
  %1606 = vmatprep.subr.mxu0 %v559
  %1607 = vmatpush1.msra.mxu0 %v558
  %1608 = vmatprep.subr.mxu0 %v495
  %1609 = vmatpush1.msra.mxu0 %v494
  %1610 = vmatprep.subr.mxu0 %v431
  %1611 = vmatpush1.msra.mxu0 %v430
  %1612 = vmatprep.subr.mxu0 %v367
  %1613 = vmatpush1.msra.mxu0 %v366
  %1614 = vmatprep.subr.mxu0 %v303
  %1615 = vmatpush1.msra.mxu0 %v302
  %1616 = vmatprep.subr.mxu0 %v239
  %1617 = vmatpush1.msra.mxu0 %v238
  %1618 = vmatprep.subr.mxu0 %v175
  %1619 = vmatpush1.msra.mxu0 %v174
  %1620 = vmatprep.subr.mxu0 %v111
  %1621 = vmatpush1.msra.mxu0 %v110
  %1622 = vmatprep.subr.mxu0 %v47
  %1623 = vmatpush1.msra.mxu0 %v46
  %1624 = vmatprep.subr.mxu0 0.0
  %1625 = vmatpush2.msra.mxu0 0.0
  %1626 = vmatprep.subr.mxu0 0.0
  %1627 = vmatpush2.msra.mxu0 0.0
  %1628 = vmatprep.subr.mxu0 0.0
  %1629 = vmatpush2.msra.mxu0 0.0
  %1630 = vmatprep.subr.mxu0 0.0
  %1631 = vmatpush2.msra.mxu0 0.0
  %1632 = vmatprep.subr.mxu0 0.0
  %1633 = vmatpush2.msra.mxu0 0.0
  %1634 = vmatprep.subr.mxu0 0.0
  %1635 = vmatpush2.msra.mxu0 0.0
  %1636 = vmatprep.subr.mxu0 0.0
  %1637 = vmatpush2.msra.mxu0 0.0
  %1638 = vmatprep.subr.mxu0 0.0
  %1639 = vmatpush2.msra.mxu0 0.0
  %1640 = vmatprep.subr.mxu0 0.0
  %1641 = vmatpush2.msra.mxu0 0.0
  %1642 = vmatprep.subr.mxu0 0.0
  %1643 = vmatpush2.msra.mxu0 0.0
  %1644 = vmatprep.subr.mxu0 0.0
  %1645 = vmatpush2.msra.mxu0 0.0
  %1646 = vmatprep.subr.mxu0 0.0
  %1647 = vmatpush2.msra.mxu0 0.0
  %1648 = vmatprep.subr.mxu0 0.0
  %1649 = vmatpush2.msra.mxu0 0.0
  %1650 = vmatprep.subr.mxu0 0.0
  %1651 = vmatpush2.msra.mxu0 0.0
  %1652 = vmatprep.subr.mxu0 0.0
  %1653 = vmatpush2.msra.mxu0 0.0
  %1654 = vmatprep.subr.mxu0 0.0
  %1655 = vmatpush2.msra.mxu0 0.0
  %1656 = vmatprep.mubr.f32.mxu0 0.0
  %1657 = vmatmul.mubr.f32.gmra.mxu0 %v596
  %v1658 = vpop.f32.mrf.mxu0
  %v1659 = vadd.f32 0.0, %v1658
  %v1660 = vpop.f32.mrf.mxu0
  %v1661 = vadd.f32 0.0, %v1660
  %1662 = vdwg.mxu0
  %1663 = vmatprep.subr.mxu0 0.0
  %1664 = vmatpush1.msra.mxu0 0.0
  %1665 = vmatprep.subr.mxu0 0.0
  %1666 = vmatpush1.msra.mxu0 0.0
  %1667 = vmatprep.subr.mxu0 0.0
  %1668 = vmatpush1.msra.mxu0 0.0
  %1669 = vmatprep.subr.mxu0 0.0
  %1670 = vmatpush1.msra.mxu0 0.0
  %1671 = vmatprep.subr.mxu0 0.0
  %1672 = vmatpush1.msra.mxu0 0.0
  %1673 = vmatprep.subr.mxu0 0.0
  %1674 = vmatpush1.msra.mxu0 0.0
  %1675 = vmatprep.subr.mxu0 0.0
  %1676 = vmatpush1.msra.mxu0 0.0
  %1677 = vmatprep.subr.mxu0 %v561
  %1678 = vmatpush1.msra.mxu0 %v560
  %1679 = vmatprep.subr.mxu0 %v497
  %1680 = vmatpush1.msra.mxu0 %v496
  %1681 = vmatprep.subr.mxu0 %v433
  %1682 = vmatpush1.msra.mxu0 %v432
  %1683 = vmatprep.subr.mxu0 %v369
  %1684 = vmatpush1.msra.mxu0 %v368
  %1685 = vmatprep.subr.mxu0 %v305
  %1686 = vmatpush1.msra.mxu0 %v304
  %1687 = vmatprep.subr.mxu0 %v241
  %1688 = vmatpush1.msra.mxu0 %v240
  %1689 = vmatprep.subr.mxu0 %v177
  %1690 = vmatpush1.msra.mxu0 %v176
  %1691 = vmatprep.subr.mxu0 %v113
  %1692 = vmatpush1.msra.mxu0 %v112
  %1693 = vmatprep.subr.mxu0 %v49
  %1694 = vmatpush1.msra.mxu0 %v48
  %1695 = vmatprep.subr.mxu0 0.0
  %1696 = vmatpush2.msra.mxu0 0.0
  %1697 = vmatprep.subr.mxu0 0.0
  %1698 = vmatpush2.msra.mxu0 0.0
  %1699 = vmatprep.subr.mxu0 0.0
  %1700 = vmatpush2.msra.mxu0 0.0
  %1701 = vmatprep.subr.mxu0 0.0
  %1702 = vmatpush2.msra.mxu0 0.0
  %1703 = vmatprep.subr.mxu0 0.0
  %1704 = vmatpush2.msra.mxu0 0.0
  %1705 = vmatprep.subr.mxu0 0.0
  %1706 = vmatpush2.msra.mxu0 0.0
  %1707 = vmatprep.subr.mxu0 0.0
  %1708 = vmatpush2.msra.mxu0 0.0
  %1709 = vmatprep.subr.mxu0 0.0
  %1710 = vmatpush2.msra.mxu0 0.0
  %1711 = vmatprep.subr.mxu0 0.0
  %1712 = vmatpush2.msra.mxu0 0.0
  %1713 = vmatprep.subr.mxu0 0.0
  %1714 = vmatpush2.msra.mxu0 0.0
  %1715 = vmatprep.subr.mxu0 0.0
  %1716 = vmatpush2.msra.mxu0 0.0
  %1717 = vmatprep.subr.mxu0 0.0
  %1718 = vmatpush2.msra.mxu0 0.0
  %1719 = vmatprep.subr.mxu0 0.0
  %1720 = vmatpush2.msra.mxu0 0.0
  %1721 = vmatprep.subr.mxu0 0.0
  %1722 = vmatpush2.msra.mxu0 0.0
  %1723 = vmatprep.subr.mxu0 0.0
  %1724 = vmatpush2.msra.mxu0 0.0
  %1725 = vmatprep.subr.mxu0 0.0
  %1726 = vmatpush2.msra.mxu0 0.0
  %1727 = vmatprep.mubr.f32.mxu0 0.0
  %1728 = vmatmul.mubr.f32.gmra.mxu0 %v596
  %v1729 = vpop.f32.mrf.mxu0
  %v1730 = vadd.f32 0.0, %v1729
  %v1731 = vpop.f32.mrf.mxu0
  %v1732 = vadd.f32 0.0, %v1731
  %1733 = vdwg.mxu0
  %1734 = vmatprep.subr.mxu0 0.0
  %1735 = vmatpush1.msra.mxu0 0.0
  %1736 = vmatprep.subr.mxu0 0.0
  %1737 = vmatpush1.msra.mxu0 0.0
  %1738 = vmatprep.subr.mxu0 0.0
  %1739 = vmatpush1.msra.mxu0 0.0
  %1740 = vmatprep.subr.mxu0 0.0
  %1741 = vmatpush1.msra.mxu0 0.0
  %1742 = vmatprep.subr.mxu0 0.0
  %1743 = vmatpush1.msra.mxu0 0.0
  %1744 = vmatprep.subr.mxu0 0.0
  %1745 = vmatpush1.msra.mxu0 0.0
  %1746 = vmatprep.subr.mxu0 0.0
  %1747 = vmatpush1.msra.mxu0 0.0
  %1748 = vmatprep.subr.mxu0 %v563
  %1749 = vmatpush1.msra.mxu0 %v562
  %1750 = vmatprep.subr.mxu0 %v499
  %1751 = vmatpush1.msra.mxu0 %v498
  %1752 = vmatprep.subr.mxu0 %v435
  %1753 = vmatpush1.msra.mxu0 %v434
  %1754 = vmatprep.subr.mxu0 %v371
  %1755 = vmatpush1.msra.mxu0 %v370
  %1756 = vmatprep.subr.mxu0 %v307
  %1757 = vmatpush1.msra.mxu0 %v306
  %1758 = vmatprep.subr.mxu0 %v243
  %1759 = vmatpush1.msra.mxu0 %v242
  %1760 = vmatprep.subr.mxu0 %v179
  %1761 = vmatpush1.msra.mxu0 %v178
  %1762 = vmatprep.subr.mxu0 %v115
  %1763 = vmatpush1.msra.mxu0 %v114
  %1764 = vmatprep.subr.mxu0 %v51
  %1765 = vmatpush1.msra.mxu0 %v50
  %1766 = vmatprep.subr.mxu0 0.0
  %1767 = vmatpush2.msra.mxu0 0.0
  %1768 = vmatprep.subr.mxu0 0.0
  %1769 = vmatpush2.msra.mxu0 0.0
  %1770 = vmatprep.subr.mxu0 0.0
  %1771 = vmatpush2.msra.mxu0 0.0
  %1772 = vmatprep.subr.mxu0 0.0
  %1773 = vmatpush2.msra.mxu0 0.0
  %1774 = vmatprep.subr.mxu0 0.0
  %1775 = vmatpush2.msra.mxu0 0.0
  %1776 = vmatprep.subr.mxu0 0.0
  %1777 = vmatpush2.msra.mxu0 0.0
  %1778 = vmatprep.subr.mxu0 0.0
  %1779 = vmatpush2.msra.mxu0 0.0
  %1780 = vmatprep.subr.mxu0 0.0
  %1781 = vmatpush2.msra.mxu0 0.0
  %1782 = vmatprep.subr.mxu0 0.0
  %1783 = vmatpush2.msra.mxu0 0.0
  %1784 = vmatprep.subr.mxu0 0.0
  %1785 = vmatpush2.msra.mxu0 0.0
  %1786 = vmatprep.subr.mxu0 0.0
  %1787 = vmatpush2.msra.mxu0 0.0
  %1788 = vmatprep.subr.mxu0 0.0
  %1789 = vmatpush2.msra.mxu0 0.0
  %1790 = vmatprep.subr.mxu0 0.0
  %1791 = vmatpush2.msra.mxu0 0.0
  %1792 = vmatprep.subr.mxu0 0.0
  %1793 = vmatpush2.msra.mxu0 0.0
  %1794 = vmatprep.subr.mxu0 0.0
  %1795 = vmatpush2.msra.mxu0 0.0
  %1796 = vmatprep.subr.mxu0 0.0
  %1797 = vmatpush2.msra.mxu0 0.0
  %1798 = vmatprep.mubr.f32.mxu0 0.0
  %1799 = vmatmul.mubr.f32.gmra.mxu0 %v596
  %v1800 = vpop.f32.mrf.mxu0
  %v1801 = vadd.f32 0.0, %v1800
  %v1802 = vpop.f32.mrf.mxu0
  %v1803 = vadd.f32 0.0, %v1802
  %1804 = vdwg.mxu0
  %1805 = vmatprep.subr.mxu0 0.0
  %1806 = vmatpush1.msra.mxu0 0.0
  %1807 = vmatprep.subr.mxu0 0.0
  %1808 = vmatpush1.msra.mxu0 0.0
  %1809 = vmatprep.subr.mxu0 0.0
  %1810 = vmatpush1.msra.mxu0 0.0
  %1811 = vmatprep.subr.mxu0 0.0
  %1812 = vmatpush1.msra.mxu0 0.0
  %1813 = vmatprep.subr.mxu0 0.0
  %1814 = vmatpush1.msra.mxu0 0.0
  %1815 = vmatprep.subr.mxu0 0.0
  %1816 = vmatpush1.msra.mxu0 0.0
  %1817 = vmatprep.subr.mxu0 0.0
  %1818 = vmatpush1.msra.mxu0 0.0
  %1819 = vmatprep.subr.mxu0 %v565
  %1820 = vmatpush1.msra.mxu0 %v564
  %1821 = vmatprep.subr.mxu0 %v501
  %1822 = vmatpush1.msra.mxu0 %v500
  %1823 = vmatprep.subr.mxu0 %v437
  %1824 = vmatpush1.msra.mxu0 %v436
  %1825 = vmatprep.subr.mxu0 %v373
  %1826 = vmatpush1.msra.mxu0 %v372
  %1827 = vmatprep.subr.mxu0 %v309
  %1828 = vmatpush1.msra.mxu0 %v308
  %1829 = vmatprep.subr.mxu0 %v245
  %1830 = vmatpush1.msra.mxu0 %v244
  %1831 = vmatprep.subr.mxu0 %v181
  %1832 = vmatpush1.msra.mxu0 %v180
  %1833 = vmatprep.subr.mxu0 %v117
  %1834 = vmatpush1.msra.mxu0 %v116
  %1835 = vmatprep.subr.mxu0 %v53
  %1836 = vmatpush1.msra.mxu0 %v52
  %1837 = vmatprep.subr.mxu0 0.0
  %1838 = vmatpush2.msra.mxu0 0.0
  %1839 = vmatprep.subr.mxu0 0.0
  %1840 = vmatpush2.msra.mxu0 0.0
  %1841 = vmatprep.subr.mxu0 0.0
  %1842 = vmatpush2.msra.mxu0 0.0
  %1843 = vmatprep.subr.mxu0 0.0
  %1844 = vmatpush2.msra.mxu0 0.0
  %1845 = vmatprep.subr.mxu0 0.0
  %1846 = vmatpush2.msra.mxu0 0.0
  %1847 = vmatprep.subr.mxu0 0.0
  %1848 = vmatpush2.msra.mxu0 0.0
  %1849 = vmatprep.subr.mxu0 0.0
  %1850 = vmatpush2.msra.mxu0 0.0
  %1851 = vmatprep.subr.mxu0 0.0
  %1852 = vmatpush2.msra.mxu0 0.0
  %1853 = vmatprep.subr.mxu0 0.0
  %1854 = vmatpush2.msra.mxu0 0.0
  %1855 = vmatprep.subr.mxu0 0.0
  %1856 = vmatpush2.msra.mxu0 0.0
  %1857 = vmatprep.subr.mxu0 0.0
  %1858 = vmatpush2.msra.mxu0 0.0
  %1859 = vmatprep.subr.mxu0 0.0
  %1860 = vmatpush2.msra.mxu0 0.0
  %1861 = vmatprep.subr.mxu0 0.0
  %1862 = vmatpush2.msra.mxu0 0.0
  %1863 = vmatprep.subr.mxu0 0.0
  %1864 = vmatpush2.msra.mxu0 0.0
  %1865 = vmatprep.subr.mxu0 0.0
  %1866 = vmatpush2.msra.mxu0 0.0
  %1867 = vmatprep.subr.mxu0 0.0
  %1868 = vmatpush2.msra.mxu0 0.0
  %1869 = vmatprep.mubr.f32.mxu0 0.0
  %1870 = vmatmul.mubr.f32.gmra.mxu0 %v596
  %v1871 = vpop.f32.mrf.mxu0
  %v1872 = vadd.f32 0.0, %v1871
  %v1873 = vpop.f32.mrf.mxu0
  %v1874 = vadd.f32 0.0, %v1873
  %1875 = vdwg.mxu0
  %1876 = vmatprep.subr.mxu0 0.0
  %1877 = vmatpush1.msra.mxu0 0.0
  %1878 = vmatprep.subr.mxu0 0.0
  %1879 = vmatpush1.msra.mxu0 0.0
  %1880 = vmatprep.subr.mxu0 0.0
  %1881 = vmatpush1.msra.mxu0 0.0
  %1882 = vmatprep.subr.mxu0 0.0
  %1883 = vmatpush1.msra.mxu0 0.0
  %1884 = vmatprep.subr.mxu0 0.0
  %1885 = vmatpush1.msra.mxu0 0.0
  %1886 = vmatprep.subr.mxu0 0.0
  %1887 = vmatpush1.msra.mxu0 0.0
  %1888 = vmatprep.subr.mxu0 0.0
  %1889 = vmatpush1.msra.mxu0 0.0
  %1890 = vmatprep.subr.mxu0 %v567
  %1891 = vmatpush1.msra.mxu0 %v566
  %1892 = vmatprep.subr.mxu0 %v503
  %1893 = vmatpush1.msra.mxu0 %v502
  %1894 = vmatprep.subr.mxu0 %v439
  %1895 = vmatpush1.msra.mxu0 %v438
  %1896 = vmatprep.subr.mxu0 %v375
  %1897 = vmatpush1.msra.mxu0 %v374
  %1898 = vmatprep.subr.mxu0 %v311
  %1899 = vmatpush1.msra.mxu0 %v310
  %1900 = vmatprep.subr.mxu0 %v247
  %1901 = vmatpush1.msra.mxu0 %v246
  %1902 = vmatprep.subr.mxu0 %v183
  %1903 = vmatpush1.msra.mxu0 %v182
  %1904 = vmatprep.subr.mxu0 %v119
  %1905 = vmatpush1.msra.mxu0 %v118
  %1906 = vmatprep.subr.mxu0 %v55
  %1907 = vmatpush1.msra.mxu0 %v54
  %1908 = vmatprep.subr.mxu0 0.0
  %1909 = vmatpush2.msra.mxu0 0.0
  %1910 = vmatprep.subr.mxu0 0.0
  %1911 = vmatpush2.msra.mxu0 0.0
  %1912 = vmatprep.subr.mxu0 0.0
  %1913 = vmatpush2.msra.mxu0 0.0
  %1914 = vmatprep.subr.mxu0 0.0
  %1915 = vmatpush2.msra.mxu0 0.0
  %1916 = vmatprep.subr.mxu0 0.0
  %1917 = vmatpush2.msra.mxu0 0.0
  %1918 = vmatprep.subr.mxu0 0.0
  %1919 = vmatpush2.msra.mxu0 0.0
  %1920 = vmatprep.subr.mxu0 0.0
  %1921 = vmatpush2.msra.mxu0 0.0
  %1922 = vmatprep.subr.mxu0 0.0
  %1923 = vmatpush2.msra.mxu0 0.0
  %1924 = vmatprep.subr.mxu0 0.0
  %1925 = vmatpush2.msra.mxu0 0.0
  %1926 = vmatprep.subr.mxu0 0.0
  %1927 = vmatpush2.msra.mxu0 0.0
  %1928 = vmatprep.subr.mxu0 0.0
  %1929 = vmatpush2.msra.mxu0 0.0
  %1930 = vmatprep.subr.mxu0 0.0
  %1931 = vmatpush2.msra.mxu0 0.0
  %1932 = vmatprep.subr.mxu0 0.0
  %1933 = vmatpush2.msra.mxu0 0.0
  %1934 = vmatprep.subr.mxu0 0.0
  %1935 = vmatpush2.msra.mxu0 0.0
  %1936 = vmatprep.subr.mxu0 0.0
  %1937 = vmatpush2.msra.mxu0 0.0
  %1938 = vmatprep.subr.mxu0 0.0
  %1939 = vmatpush2.msra.mxu0 0.0
  %1940 = vmatprep.mubr.f32.mxu0 0.0
  %1941 = vmatmul.mubr.f32.gmra.mxu0 %v596
  %v1942 = vpop.f32.mrf.mxu0
  %v1943 = vadd.f32 0.0, %v1942
  %v1944 = vpop.f32.mrf.mxu0
  %v1945 = vadd.f32 0.0, %v1944
  %1946 = vdwg.mxu0
  %1947 = vmatprep.subr.mxu0 0.0
  %1948 = vmatpush1.msra.mxu0 0.0
  %1949 = vmatprep.subr.mxu0 0.0
  %1950 = vmatpush1.msra.mxu0 0.0
  %1951 = vmatprep.subr.mxu0 0.0
  %1952 = vmatpush1.msra.mxu0 0.0
  %1953 = vmatprep.subr.mxu0 0.0
  %1954 = vmatpush1.msra.mxu0 0.0
  %1955 = vmatprep.subr.mxu0 0.0
  %1956 = vmatpush1.msra.mxu0 0.0
  %1957 = vmatprep.subr.mxu0 0.0
  %1958 = vmatpush1.msra.mxu0 0.0
  %1959 = vmatprep.subr.mxu0 0.0
  %1960 = vmatpush1.msra.mxu0 0.0
  %1961 = vmatprep.subr.mxu0 %v569
  %1962 = vmatpush1.msra.mxu0 %v568
  %1963 = vmatprep.subr.mxu0 %v505
  %1964 = vmatpush1.msra.mxu0 %v504
  %1965 = vmatprep.subr.mxu0 %v441
  %1966 = vmatpush1.msra.mxu0 %v440
  %1967 = vmatprep.subr.mxu0 %v377
  %1968 = vmatpush1.msra.mxu0 %v376
  %1969 = vmatprep.subr.mxu0 %v313
  %1970 = vmatpush1.msra.mxu0 %v312
  %1971 = vmatprep.subr.mxu0 %v249
  %1972 = vmatpush1.msra.mxu0 %v248
  %1973 = vmatprep.subr.mxu0 %v185
  %1974 = vmatpush1.msra.mxu0 %v184
  %1975 = vmatprep.subr.mxu0 %v121
  %1976 = vmatpush1.msra.mxu0 %v120
  %1977 = vmatprep.subr.mxu0 %v57
  %1978 = vmatpush1.msra.mxu0 %v56
  %1979 = vmatprep.subr.mxu0 0.0
  %1980 = vmatpush2.msra.mxu0 0.0
  %1981 = vmatprep.subr.mxu0 0.0
  %1982 = vmatpush2.msra.mxu0 0.0
  %1983 = vmatprep.subr.mxu0 0.0
  %1984 = vmatpush2.msra.mxu0 0.0
  %1985 = vmatprep.subr.mxu0 0.0
  %1986 = vmatpush2.msra.mxu0 0.0
  %1987 = vmatprep.subr.mxu0 0.0
  %1988 = vmatpush2.msra.mxu0 0.0
  %1989 = vmatprep.subr.mxu0 0.0
  %1990 = vmatpush2.msra.mxu0 0.0
  %1991 = vmatprep.subr.mxu0 0.0
  %1992 = vmatpush2.msra.mxu0 0.0
  %1993 = vmatprep.subr.mxu0 0.0
  %1994 = vmatpush2.msra.mxu0 0.0
  %1995 = vmatprep.subr.mxu0 0.0
  %1996 = vmatpush2.msra.mxu0 0.0
  %1997 = vmatprep.subr.mxu0 0.0
  %1998 = vmatpush2.msra.mxu0 0.0
  %1999 = vmatprep.subr.mxu0 0.0
  %2000 = vmatpush2.msra.mxu0 0.0
  %2001 = vmatprep.subr.mxu0 0.0
  %2002 = vmatpush2.msra.mxu0 0.0
  %2003 = vmatprep.subr.mxu0 0.0
  %2004 = vmatpush2.msra.mxu0 0.0
  %2005 = vmatprep.subr.mxu0 0.0
  %2006 = vmatpush2.msra.mxu0 0.0
  %2007 = vmatprep.subr.mxu0 0.0
  %2008 = vmatpush2.msra.mxu0 0.0
  %2009 = vmatprep.subr.mxu0 0.0
  %2010 = vmatpush2.msra.mxu0 0.0
  %2011 = vmatprep.mubr.f32.mxu0 0.0
  %2012 = vmatmul.mubr.f32.gmra.mxu0 %v596
  %v2013 = vpop.f32.mrf.mxu0
  %v2014 = vadd.f32 0.0, %v2013
  %v2015 = vpop.f32.mrf.mxu0
  %v2016 = vadd.f32 0.0, %v2015
  %2017 = vdwg.mxu0
  %2018 = vmatprep.subr.mxu0 0.0
  %2019 = vmatpush1.msra.mxu0 0.0
  %2020 = vmatprep.subr.mxu0 0.0
  %2021 = vmatpush1.msra.mxu0 0.0
  %2022 = vmatprep.subr.mxu0 0.0
  %2023 = vmatpush1.msra.mxu0 0.0
  %2024 = vmatprep.subr.mxu0 0.0
  %2025 = vmatpush1.msra.mxu0 0.0
  %2026 = vmatprep.subr.mxu0 0.0
  %2027 = vmatpush1.msra.mxu0 0.0
  %2028 = vmatprep.subr.mxu0 0.0
  %2029 = vmatpush1.msra.mxu0 0.0
  %2030 = vmatprep.subr.mxu0 0.0
  %2031 = vmatpush1.msra.mxu0 0.0
  %2032 = vmatprep.subr.mxu0 %v571
  %2033 = vmatpush1.msra.mxu0 %v570
  %2034 = vmatprep.subr.mxu0 %v507
  %2035 = vmatpush1.msra.mxu0 %v506
  %2036 = vmatprep.subr.mxu0 %v443
  %2037 = vmatpush1.msra.mxu0 %v442
  %2038 = vmatprep.subr.mxu0 %v379
  %2039 = vmatpush1.msra.mxu0 %v378
  %2040 = vmatprep.subr.mxu0 %v315
  %2041 = vmatpush1.msra.mxu0 %v314
  %2042 = vmatprep.subr.mxu0 %v251
  %2043 = vmatpush1.msra.mxu0 %v250
  %2044 = vmatprep.subr.mxu0 %v187
  %2045 = vmatpush1.msra.mxu0 %v186
  %2046 = vmatprep.subr.mxu0 %v123
  %2047 = vmatpush1.msra.mxu0 %v122
  %2048 = vmatprep.subr.mxu0 %v59
  %2049 = vmatpush1.msra.mxu0 %v58
  %2050 = vmatprep.subr.mxu0 0.0
  %2051 = vmatpush2.msra.mxu0 0.0
  %2052 = vmatprep.subr.mxu0 0.0
  %2053 = vmatpush2.msra.mxu0 0.0
  %2054 = vmatprep.subr.mxu0 0.0
  %2055 = vmatpush2.msra.mxu0 0.0
  %2056 = vmatprep.subr.mxu0 0.0
  %2057 = vmatpush2.msra.mxu0 0.0
  %2058 = vmatprep.subr.mxu0 0.0
  %2059 = vmatpush2.msra.mxu0 0.0
  %2060 = vmatprep.subr.mxu0 0.0
  %2061 = vmatpush2.msra.mxu0 0.0
  %2062 = vmatprep.subr.mxu0 0.0
  %2063 = vmatpush2.msra.mxu0 0.0
  %2064 = vmatprep.subr.mxu0 0.0
  %2065 = vmatpush2.msra.mxu0 0.0
  %2066 = vmatprep.subr.mxu0 0.0
  %2067 = vmatpush2.msra.mxu0 0.0
  %2068 = vmatprep.subr.mxu0 0.0
  %2069 = vmatpush2.msra.mxu0 0.0
  %2070 = vmatprep.subr.mxu0 0.0
  %2071 = vmatpush2.msra.mxu0 0.0
  %2072 = vmatprep.subr.mxu0 0.0
  %2073 = vmatpush2.msra.mxu0 0.0
  %2074 = vmatprep.subr.mxu0 0.0
  %2075 = vmatpush2.msra.mxu0 0.0
  %2076 = vmatprep.subr.mxu0 0.0
  %2077 = vmatpush2.msra.mxu0 0.0
  %2078 = vmatprep.subr.mxu0 0.0
  %2079 = vmatpush2.msra.mxu0 0.0
  %2080 = vmatprep.subr.mxu0 0.0
  %2081 = vmatpush2.msra.mxu0 0.0
  %2082 = vmatprep.mubr.f32.mxu0 0.0
  %2083 = vmatmul.mubr.f32.gmra.mxu0 %v596
  %v2084 = vpop.f32.mrf.mxu0
  %v2085 = vadd.f32 0.0, %v2084
  %v2086 = vpop.f32.mrf.mxu0
  %v2087 = vadd.f32 0.0, %v2086
  %2088 = vdwg.mxu0
  %2089 = vmatprep.subr.mxu0 0.0
  %2090 = vmatpush1.msra.mxu0 0.0
  %2091 = vmatprep.subr.mxu0 0.0
  %2092 = vmatpush1.msra.mxu0 0.0
  %2093 = vmatprep.subr.mxu0 0.0
  %2094 = vmatpush1.msra.mxu0 0.0
  %2095 = vmatprep.subr.mxu0 0.0
  %2096 = vmatpush1.msra.mxu0 0.0
  %2097 = vmatprep.subr.mxu0 0.0
  %2098 = vmatpush1.msra.mxu0 0.0
  %2099 = vmatprep.subr.mxu0 0.0
  %2100 = vmatpush1.msra.mxu0 0.0
  %2101 = vmatprep.subr.mxu0 0.0
  %2102 = vmatpush1.msra.mxu0 0.0
  %2103 = vmatprep.subr.mxu0 %v573
  %2104 = vmatpush1.msra.mxu0 %v572
  %2105 = vmatprep.subr.mxu0 %v509
  %2106 = vmatpush1.msra.mxu0 %v508
  %2107 = vmatprep.subr.mxu0 %v445
  %2108 = vmatpush1.msra.mxu0 %v444
  %2109 = vmatprep.subr.mxu0 %v381
  %2110 = vmatpush1.msra.mxu0 %v380
  %2111 = vmatprep.subr.mxu0 %v317
  %2112 = vmatpush1.msra.mxu0 %v316
  %2113 = vmatprep.subr.mxu0 %v253
  %2114 = vmatpush1.msra.mxu0 %v252
  %2115 = vmatprep.subr.mxu0 %v189
  %2116 = vmatpush1.msra.mxu0 %v188
  %2117 = vmatprep.subr.mxu0 %v125
  %2118 = vmatpush1.msra.mxu0 %v124
  %2119 = vmatprep.subr.mxu0 %v61
  %2120 = vmatpush1.msra.mxu0 %v60
  %2121 = vmatprep.subr.mxu0 0.0
  %2122 = vmatpush2.msra.mxu0 0.0
  %2123 = vmatprep.subr.mxu0 0.0
  %2124 = vmatpush2.msra.mxu0 0.0
  %2125 = vmatprep.subr.mxu0 0.0
  %2126 = vmatpush2.msra.mxu0 0.0
  %2127 = vmatprep.subr.mxu0 0.0
  %2128 = vmatpush2.msra.mxu0 0.0
  %2129 = vmatprep.subr.mxu0 0.0
  %2130 = vmatpush2.msra.mxu0 0.0
  %2131 = vmatprep.subr.mxu0 0.0
  %2132 = vmatpush2.msra.mxu0 0.0
  %2133 = vmatprep.subr.mxu0 0.0
  %2134 = vmatpush2.msra.mxu0 0.0
  %2135 = vmatprep.subr.mxu0 0.0
  %2136 = vmatpush2.msra.mxu0 0.0
  %2137 = vmatprep.subr.mxu0 0.0
  %2138 = vmatpush2.msra.mxu0 0.0
  %2139 = vmatprep.subr.mxu0 0.0
  %2140 = vmatpush2.msra.mxu0 0.0
  %2141 = vmatprep.subr.mxu0 0.0
  %2142 = vmatpush2.msra.mxu0 0.0
  %2143 = vmatprep.subr.mxu0 0.0
  %2144 = vmatpush2.msra.mxu0 0.0
  %2145 = vmatprep.subr.mxu0 0.0
  %2146 = vmatpush2.msra.mxu0 0.0
  %2147 = vmatprep.subr.mxu0 0.0
  %2148 = vmatpush2.msra.mxu0 0.0
  %2149 = vmatprep.subr.mxu0 0.0
  %2150 = vmatpush2.msra.mxu0 0.0
  %2151 = vmatprep.subr.mxu0 0.0
  %2152 = vmatpush2.msra.mxu0 0.0
  %2153 = vmatprep.mubr.f32.mxu0 0.0
  %2154 = vmatmul.mubr.f32.gmra.mxu0 %v596
  %v2155 = vpop.f32.mrf.mxu0
  %v2156 = vadd.f32 0.0, %v2155
  %v2157 = vpop.f32.mrf.mxu0
  %v2158 = vadd.f32 0.0, %v2157
  %2159 = vdwg.mxu0
  %2160 = vmatprep.subr.mxu0 0.0
  %2161 = vmatpush1.msra.mxu0 0.0
  %2162 = vmatprep.subr.mxu0 0.0
  %2163 = vmatpush1.msra.mxu0 0.0
  %2164 = vmatprep.subr.mxu0 0.0
  %2165 = vmatpush1.msra.mxu0 0.0
  %2166 = vmatprep.subr.mxu0 0.0
  %2167 = vmatpush1.msra.mxu0 0.0
  %2168 = vmatprep.subr.mxu0 0.0
  %2169 = vmatpush1.msra.mxu0 0.0
  %2170 = vmatprep.subr.mxu0 0.0
  %2171 = vmatpush1.msra.mxu0 0.0
  %2172 = vmatprep.subr.mxu0 0.0
  %2173 = vmatpush1.msra.mxu0 0.0
  %2174 = vmatprep.subr.mxu0 %v575
  %2175 = vmatpush1.msra.mxu0 %v574
  %2176 = vmatprep.subr.mxu0 %v511
  %2177 = vmatpush1.msra.mxu0 %v510
  %2178 = vmatprep.subr.mxu0 %v447
  %2179 = vmatpush1.msra.mxu0 %v446
  %2180 = vmatprep.subr.mxu0 %v383
  %2181 = vmatpush1.msra.mxu0 %v382
  %2182 = vmatprep.subr.mxu0 %v319
  %2183 = vmatpush1.msra.mxu0 %v318
  %2184 = vmatprep.subr.mxu0 %v255
  %2185 = vmatpush1.msra.mxu0 %v254
  %2186 = vmatprep.subr.mxu0 %v191
  %2187 = vmatpush1.msra.mxu0 %v190
  %2188 = vmatprep.subr.mxu0 %v127
  %2189 = vmatpush1.msra.mxu0 %v126
  %2190 = vmatprep.subr.mxu0 %v63
  %2191 = vmatpush1.msra.mxu0 %v62
  %2192 = vmatprep.subr.mxu0 0.0
  %2193 = vmatpush2.msra.mxu0 0.0
  %2194 = vmatprep.subr.mxu0 0.0
  %2195 = vmatpush2.msra.mxu0 0.0
  %2196 = vmatprep.subr.mxu0 0.0
  %2197 = vmatpush2.msra.mxu0 0.0
  %2198 = vmatprep.subr.mxu0 0.0
  %2199 = vmatpush2.msra.mxu0 0.0
  %2200 = vmatprep.subr.mxu0 0.0
  %2201 = vmatpush2.msra.mxu0 0.0
  %2202 = vmatprep.subr.mxu0 0.0
  %2203 = vmatpush2.msra.mxu0 0.0
  %2204 = vmatprep.subr.mxu0 0.0
  %2205 = vmatpush2.msra.mxu0 0.0
  %2206 = vmatprep.subr.mxu0 0.0
  %2207 = vmatpush2.msra.mxu0 0.0
  %2208 = vmatprep.subr.mxu0 0.0
  %2209 = vmatpush2.msra.mxu0 0.0
  %2210 = vmatprep.subr.mxu0 0.0
  %2211 = vmatpush2.msra.mxu0 0.0
  %2212 = vmatprep.subr.mxu0 0.0
  %2213 = vmatpush2.msra.mxu0 0.0
  %2214 = vmatprep.subr.mxu0 0.0
  %2215 = vmatpush2.msra.mxu0 0.0
  %2216 = vmatprep.subr.mxu0 0.0
  %2217 = vmatpush2.msra.mxu0 0.0
  %2218 = vmatprep.subr.mxu0 0.0
  %2219 = vmatpush2.msra.mxu0 0.0
  %2220 = vmatprep.subr.mxu0 0.0
  %2221 = vmatpush2.msra.mxu0 0.0
  %2222 = vmatprep.subr.mxu0 0.0
  %2223 = vmatpush2.msra.mxu0 0.0
  %2224 = vmatprep.mubr.f32.mxu0 0.0
  %2225 = vmatmul.mubr.f32.gmra.mxu0 %v596
  %v2226 = vpop.f32.mrf.mxu0
  %v2227 = vadd.f32 0.0, %v2226
  %v2228 = vpop.f32.mrf.mxu0
  %v2229 = vadd.f32 0.0, %v2228
  %2230 = vdwg.mxu0
  %2231 = vmatprep.subr.mxu0 0.0
  %2232 = vmatpush1.msra.mxu0 0.0
  %2233 = vmatprep.subr.mxu0 0.0
  %2234 = vmatpush1.msra.mxu0 0.0
  %2235 = vmatprep.subr.mxu0 0.0
  %2236 = vmatpush1.msra.mxu0 0.0
  %2237 = vmatprep.subr.mxu0 0.0
  %2238 = vmatpush1.msra.mxu0 0.0
  %2239 = vmatprep.subr.mxu0 0.0
  %2240 = vmatpush1.msra.mxu0 0.0
  %2241 = vmatprep.subr.mxu0 0.0
  %2242 = vmatpush1.msra.mxu0 0.0
  %2243 = vmatprep.subr.mxu0 0.0
  %2244 = vmatpush1.msra.mxu0 0.0
  %2245 = vmatprep.subr.mxu0 %v577
  %2246 = vmatpush1.msra.mxu0 %v576
  %2247 = vmatprep.subr.mxu0 %v513
  %2248 = vmatpush1.msra.mxu0 %v512
  %2249 = vmatprep.subr.mxu0 %v449
  %2250 = vmatpush1.msra.mxu0 %v448
  %2251 = vmatprep.subr.mxu0 %v385
  %2252 = vmatpush1.msra.mxu0 %v384
  %2253 = vmatprep.subr.mxu0 %v321
  %2254 = vmatpush1.msra.mxu0 %v320
  %2255 = vmatprep.subr.mxu0 %v257
  %2256 = vmatpush1.msra.mxu0 %v256
  %2257 = vmatprep.subr.mxu0 %v193
  %2258 = vmatpush1.msra.mxu0 %v192
  %2259 = vmatprep.subr.mxu0 %v129
  %2260 = vmatpush1.msra.mxu0 %v128
  %2261 = vmatprep.subr.mxu0 %v65
  %2262 = vmatpush1.msra.mxu0 %v64
  %2263 = vmatprep.subr.mxu0 0.0
  %2264 = vmatpush2.msra.mxu0 0.0
  %2265 = vmatprep.subr.mxu0 0.0
  %2266 = vmatpush2.msra.mxu0 0.0
  %2267 = vmatprep.subr.mxu0 0.0
  %2268 = vmatpush2.msra.mxu0 0.0
  %2269 = vmatprep.subr.mxu0 0.0
  %2270 = vmatpush2.msra.mxu0 0.0
  %2271 = vmatprep.subr.mxu0 0.0
  %2272 = vmatpush2.msra.mxu0 0.0
  %2273 = vmatprep.subr.mxu0 0.0
  %2274 = vmatpush2.msra.mxu0 0.0
  %2275 = vmatprep.subr.mxu0 0.0
  %2276 = vmatpush2.msra.mxu0 0.0
  %2277 = vmatprep.subr.mxu0 0.0
  %2278 = vmatpush2.msra.mxu0 0.0
  %2279 = vmatprep.subr.mxu0 0.0
  %2280 = vmatpush2.msra.mxu0 0.0
  %2281 = vmatprep.subr.mxu0 0.0
  %2282 = vmatpush2.msra.mxu0 0.0
  %2283 = vmatprep.subr.mxu0 0.0
  %2284 = vmatpush2.msra.mxu0 0.0
  %2285 = vmatprep.subr.mxu0 0.0
  %2286 = vmatpush2.msra.mxu0 0.0
  %2287 = vmatprep.subr.mxu0 0.0
  %2288 = vmatpush2.msra.mxu0 0.0
  %2289 = vmatprep.subr.mxu0 0.0
  %2290 = vmatpush2.msra.mxu0 0.0
  %2291 = vmatprep.subr.mxu0 0.0
  %2292 = vmatpush2.msra.mxu0 0.0
  %2293 = vmatprep.subr.mxu0 0.0
  %2294 = vmatpush2.msra.mxu0 0.0
  %2295 = vmatprep.mubr.f32.mxu0 0.0
  %2296 = vmatmul.mubr.f32.gmra.mxu0 %v596
  %v2297 = vpop.f32.mrf.mxu0
  %v2298 = vadd.f32 0.0, %v2297
  %v2299 = vpop.f32.mrf.mxu0
  %v2300 = vadd.f32 0.0, %v2299
  %2301 = vdwg.mxu0
  %2302 = vmatprep.subr.mxu0 0.0
  %2303 = vmatpush1.msra.mxu0 0.0
  %2304 = vmatprep.subr.mxu0 0.0
  %2305 = vmatpush1.msra.mxu0 0.0
  %2306 = vmatprep.subr.mxu0 0.0
  %2307 = vmatpush1.msra.mxu0 0.0
  %2308 = vmatprep.subr.mxu0 0.0
  %2309 = vmatpush1.msra.mxu0 0.0
  %2310 = vmatprep.subr.mxu0 0.0
  %2311 = vmatpush1.msra.mxu0 0.0
  %2312 = vmatprep.subr.mxu0 0.0
  %2313 = vmatpush1.msra.mxu0 0.0
  %2314 = vmatprep.subr.mxu0 0.0
  %2315 = vmatpush1.msra.mxu0 0.0
  %2316 = vmatprep.subr.mxu0 %v579
  %2317 = vmatpush1.msra.mxu0 %v578
  %2318 = vmatprep.subr.mxu0 %v515
  %2319 = vmatpush1.msra.mxu0 %v514
  %2320 = vmatprep.subr.mxu0 %v451
  %2321 = vmatpush1.msra.mxu0 %v450
  %2322 = vmatprep.subr.mxu0 %v387
  %2323 = vmatpush1.msra.mxu0 %v386
  %2324 = vmatprep.subr.mxu0 %v323
  %2325 = vmatpush1.msra.mxu0 %v322
  %2326 = vmatprep.subr.mxu0 %v259
  %2327 = vmatpush1.msra.mxu0 %v258
  %2328 = vmatprep.subr.mxu0 %v195
  %2329 = vmatpush1.msra.mxu0 %v194
  %2330 = vmatprep.subr.mxu0 %v131
  %2331 = vmatpush1.msra.mxu0 %v130
  %2332 = vmatprep.subr.mxu0 %v67
  %2333 = vmatpush1.msra.mxu0 %v66
  %2334 = vmatprep.subr.mxu0 0.0
  %2335 = vmatpush2.msra.mxu0 0.0
  %2336 = vmatprep.subr.mxu0 0.0
  %2337 = vmatpush2.msra.mxu0 0.0
  %2338 = vmatprep.subr.mxu0 0.0
  %2339 = vmatpush2.msra.mxu0 0.0
  %2340 = vmatprep.subr.mxu0 0.0
  %2341 = vmatpush2.msra.mxu0 0.0
  %2342 = vmatprep.subr.mxu0 0.0
  %2343 = vmatpush2.msra.mxu0 0.0
  %2344 = vmatprep.subr.mxu0 0.0
  %2345 = vmatpush2.msra.mxu0 0.0
  %2346 = vmatprep.subr.mxu0 0.0
  %2347 = vmatpush2.msra.mxu0 0.0
  %2348 = vmatprep.subr.mxu0 0.0
  %2349 = vmatpush2.msra.mxu0 0.0
  %2350 = vmatprep.subr.mxu0 0.0
  %2351 = vmatpush2.msra.mxu0 0.0
  %2352 = vmatprep.subr.mxu0 0.0
  %2353 = vmatpush2.msra.mxu0 0.0
  %2354 = vmatprep.subr.mxu0 0.0
  %2355 = vmatpush2.msra.mxu0 0.0
  %2356 = vmatprep.subr.mxu0 0.0
  %2357 = vmatpush2.msra.mxu0 0.0
  %2358 = vmatprep.subr.mxu0 0.0
  %2359 = vmatpush2.msra.mxu0 0.0
  %2360 = vmatprep.subr.mxu0 0.0
  %2361 = vmatpush2.msra.mxu0 0.0
  %2362 = vmatprep.subr.mxu0 0.0
  %2363 = vmatpush2.msra.mxu0 0.0
  %2364 = vmatprep.subr.mxu0 0.0
  %2365 = vmatpush2.msra.mxu0 0.0
  %2366 = vmatprep.mubr.f32.mxu0 0.0
  %2367 = vmatmul.mubr.f32.gmra.mxu0 %v596
  %v2368 = vpop.f32.mrf.mxu0
  %v2369 = vadd.f32 0.0, %v2368
  %v2370 = vpop.f32.mrf.mxu0
  %v2371 = vadd.f32 0.0, %v2370
  %2372 = vdwg.mxu0
  %2373 = vmatprep.subr.mxu0 0.0
  %2374 = vmatpush1.msra.mxu0 0.0
  %2375 = vmatprep.subr.mxu0 0.0
  %2376 = vmatpush1.msra.mxu0 0.0
  %2377 = vmatprep.subr.mxu0 0.0
  %2378 = vmatpush1.msra.mxu0 0.0
  %2379 = vmatprep.subr.mxu0 0.0
  %2380 = vmatpush1.msra.mxu0 0.0
  %2381 = vmatprep.subr.mxu0 0.0
  %2382 = vmatpush1.msra.mxu0 0.0
  %2383 = vmatprep.subr.mxu0 0.0
  %2384 = vmatpush1.msra.mxu0 0.0
  %2385 = vmatprep.subr.mxu0 0.0
  %2386 = vmatpush1.msra.mxu0 0.0
  %2387 = vmatprep.subr.mxu0 %v581
  %2388 = vmatpush1.msra.mxu0 %v580
  %2389 = vmatprep.subr.mxu0 %v517
  %2390 = vmatpush1.msra.mxu0 %v516
  %2391 = vmatprep.subr.mxu0 %v453
  %2392 = vmatpush1.msra.mxu0 %v452
  %2393 = vmatprep.subr.mxu0 %v389
  %2394 = vmatpush1.msra.mxu0 %v388
  %2395 = vmatprep.subr.mxu0 %v325
  %2396 = vmatpush1.msra.mxu0 %v324
  %2397 = vmatprep.subr.mxu0 %v261
  %2398 = vmatpush1.msra.mxu0 %v260
  %2399 = vmatprep.subr.mxu0 %v197
  %2400 = vmatpush1.msra.mxu0 %v196
  %2401 = vmatprep.subr.mxu0 %v133
  %2402 = vmatpush1.msra.mxu0 %v132
  %2403 = vmatprep.subr.mxu0 %v69
  %2404 = vmatpush1.msra.mxu0 %v68
  %2405 = vmatprep.subr.mxu0 0.0
  %2406 = vmatpush2.msra.mxu0 0.0
  %2407 = vmatprep.subr.mxu0 0.0
  %2408 = vmatpush2.msra.mxu0 0.0
  %2409 = vmatprep.subr.mxu0 0.0
  %2410 = vmatpush2.msra.mxu0 0.0
  %2411 = vmatprep.subr.mxu0 0.0
  %2412 = vmatpush2.msra.mxu0 0.0
  %2413 = vmatprep.subr.mxu0 0.0
  %2414 = vmatpush2.msra.mxu0 0.0
  %2415 = vmatprep.subr.mxu0 0.0
  %2416 = vmatpush2.msra.mxu0 0.0
  %2417 = vmatprep.subr.mxu0 0.0
  %2418 = vmatpush2.msra.mxu0 0.0
  %2419 = vmatprep.subr.mxu0 0.0
  %2420 = vmatpush2.msra.mxu0 0.0
  %2421 = vmatprep.subr.mxu0 0.0
  %2422 = vmatpush2.msra.mxu0 0.0
  %2423 = vmatprep.subr.mxu0 0.0
  %2424 = vmatpush2.msra.mxu0 0.0
  %2425 = vmatprep.subr.mxu0 0.0
  %2426 = vmatpush2.msra.mxu0 0.0
  %2427 = vmatprep.subr.mxu0 0.0
  %2428 = vmatpush2.msra.mxu0 0.0
  %2429 = vmatprep.subr.mxu0 0.0
  %2430 = vmatpush2.msra.mxu0 0.0
  %2431 = vmatprep.subr.mxu0 0.0
  %2432 = vmatpush2.msra.mxu0 0.0
  %2433 = vmatprep.subr.mxu0 0.0
  %2434 = vmatpush2.msra.mxu0 0.0
  %2435 = vmatprep.subr.mxu0 0.0
  %2436 = vmatpush2.msra.mxu0 0.0
  %2437 = vmatprep.mubr.f32.mxu0 0.0
  %2438 = vmatmul.mubr.f32.gmra.mxu0 %v596
  %v2439 = vpop.f32.mrf.mxu0
  %v2440 = vadd.f32 0.0, %v2439
  %v2441 = vpop.f32.mrf.mxu0
  %v2442 = vadd.f32 0.0, %v2441
  %2443 = vdwg.mxu0
  %2444 = vmatprep.subr.mxu0 0.0
  %2445 = vmatpush1.msra.mxu0 0.0
  %2446 = vmatprep.subr.mxu0 0.0
  %2447 = vmatpush1.msra.mxu0 0.0
  %2448 = vmatprep.subr.mxu0 0.0
  %2449 = vmatpush1.msra.mxu0 0.0
  %2450 = vmatprep.subr.mxu0 0.0
  %2451 = vmatpush1.msra.mxu0 0.0
  %2452 = vmatprep.subr.mxu0 0.0
  %2453 = vmatpush1.msra.mxu0 0.0
  %2454 = vmatprep.subr.mxu0 0.0
  %2455 = vmatpush1.msra.mxu0 0.0
  %2456 = vmatprep.subr.mxu0 0.0
  %2457 = vmatpush1.msra.mxu0 0.0
  %2458 = vmatprep.subr.mxu0 %v583
  %2459 = vmatpush1.msra.mxu0 %v582
  %2460 = vmatprep.subr.mxu0 %v519
  %2461 = vmatpush1.msra.mxu0 %v518
  %2462 = vmatprep.subr.mxu0 %v455
  %2463 = vmatpush1.msra.mxu0 %v454
  %2464 = vmatprep.subr.mxu0 %v391
  %2465 = vmatpush1.msra.mxu0 %v390
  %2466 = vmatprep.subr.mxu0 %v327
  %2467 = vmatpush1.msra.mxu0 %v326
  %2468 = vmatprep.subr.mxu0 %v263
  %2469 = vmatpush1.msra.mxu0 %v262
  %2470 = vmatprep.subr.mxu0 %v199
  %2471 = vmatpush1.msra.mxu0 %v198
  %2472 = vmatprep.subr.mxu0 %v135
  %2473 = vmatpush1.msra.mxu0 %v134
  %2474 = vmatprep.subr.mxu0 %v71
  %2475 = vmatpush1.msra.mxu0 %v70
  %2476 = vmatprep.subr.mxu0 0.0
  %2477 = vmatpush2.msra.mxu0 0.0
  %2478 = vmatprep.subr.mxu0 0.0
  %2479 = vmatpush2.msra.mxu0 0.0
  %2480 = vmatprep.subr.mxu0 0.0
  %2481 = vmatpush2.msra.mxu0 0.0
  %2482 = vmatprep.subr.mxu0 0.0
  %2483 = vmatpush2.msra.mxu0 0.0
  %2484 = vmatprep.subr.mxu0 0.0
  %2485 = vmatpush2.msra.mxu0 0.0
  %2486 = vmatprep.subr.mxu0 0.0
  %2487 = vmatpush2.msra.mxu0 0.0
  %2488 = vmatprep.subr.mxu0 0.0
  %2489 = vmatpush2.msra.mxu0 0.0
  %2490 = vmatprep.subr.mxu0 0.0
  %2491 = vmatpush2.msra.mxu0 0.0
  %2492 = vmatprep.subr.mxu0 0.0
  %2493 = vmatpush2.msra.mxu0 0.0
  %2494 = vmatprep.subr.mxu0 0.0
  %2495 = vmatpush2.msra.mxu0 0.0
  %2496 = vmatprep.subr.mxu0 0.0
  %2497 = vmatpush2.msra.mxu0 0.0
  %2498 = vmatprep.subr.mxu0 0.0
  %2499 = vmatpush2.msra.mxu0 0.0
  %2500 = vmatprep.subr.mxu0 0.0
  %2501 = vmatpush2.msra.mxu0 0.0
  %2502 = vmatprep.subr.mxu0 0.0
  %2503 = vmatpush2.msra.mxu0 0.0
  %2504 = vmatprep.subr.mxu0 0.0
  %2505 = vmatpush2.msra.mxu0 0.0
  %2506 = vmatprep.subr.mxu0 0.0
  %2507 = vmatpush2.msra.mxu0 0.0
  %2508 = vmatprep.mubr.f32.mxu0 0.0
  %2509 = vmatmul.mubr.f32.gmra.mxu0 %v596
  %v2510 = vpop.f32.mrf.mxu0
  %v2511 = vadd.f32 0.0, %v2510
  %v2512 = vpop.f32.mrf.mxu0
  %v2513 = vadd.f32 0.0, %v2512
  %2514 = vdwg.mxu0
  %2515 = vmatprep.subr.mxu0 0.0
  %2516 = vmatpush1.msra.mxu0 0.0
  %2517 = vmatprep.subr.mxu0 0.0
  %2518 = vmatpush1.msra.mxu0 0.0
  %2519 = vmatprep.subr.mxu0 0.0
  %2520 = vmatpush1.msra.mxu0 0.0
  %2521 = vmatprep.subr.mxu0 0.0
  %2522 = vmatpush1.msra.mxu0 0.0
  %2523 = vmatprep.subr.mxu0 0.0
  %2524 = vmatpush1.msra.mxu0 0.0
  %2525 = vmatprep.subr.mxu0 0.0
  %2526 = vmatpush1.msra.mxu0 0.0
  %2527 = vmatprep.subr.mxu0 0.0
  %2528 = vmatpush1.msra.mxu0 0.0
  %2529 = vmatprep.subr.mxu0 %v585
  %2530 = vmatpush1.msra.mxu0 %v584
  %2531 = vmatprep.subr.mxu0 %v521
  %2532 = vmatpush1.msra.mxu0 %v520
  %2533 = vmatprep.subr.mxu0 %v457
  %2534 = vmatpush1.msra.mxu0 %v456
  %2535 = vmatprep.subr.mxu0 %v393
  %2536 = vmatpush1.msra.mxu0 %v392
  %2537 = vmatprep.subr.mxu0 %v329
  %2538 = vmatpush1.msra.mxu0 %v328
  %2539 = vmatprep.subr.mxu0 %v265
  %2540 = vmatpush1.msra.mxu0 %v264
  %2541 = vmatprep.subr.mxu0 %v201
  %2542 = vmatpush1.msra.mxu0 %v200
  %2543 = vmatprep.subr.mxu0 %v137
  %2544 = vmatpush1.msra.mxu0 %v136
  %2545 = vmatprep.subr.mxu0 %v73
  %2546 = vmatpush1.msra.mxu0 %v72
  %2547 = vmatprep.subr.mxu0 0.0
  %2548 = vmatpush2.msra.mxu0 0.0
  %2549 = vmatprep.subr.mxu0 0.0
  %2550 = vmatpush2.msra.mxu0 0.0
  %2551 = vmatprep.subr.mxu0 0.0
  %2552 = vmatpush2.msra.mxu0 0.0
  %2553 = vmatprep.subr.mxu0 0.0
  %2554 = vmatpush2.msra.mxu0 0.0
  %2555 = vmatprep.subr.mxu0 0.0
  %2556 = vmatpush2.msra.mxu0 0.0
  %2557 = vmatprep.subr.mxu0 0.0
  %2558 = vmatpush2.msra.mxu0 0.0
  %2559 = vmatprep.subr.mxu0 0.0
  %2560 = vmatpush2.msra.mxu0 0.0
  %2561 = vmatprep.subr.mxu0 0.0
  %2562 = vmatpush2.msra.mxu0 0.0
  %2563 = vmatprep.subr.mxu0 0.0
  %2564 = vmatpush2.msra.mxu0 0.0
  %2565 = vmatprep.subr.mxu0 0.0
  %2566 = vmatpush2.msra.mxu0 0.0
  %2567 = vmatprep.subr.mxu0 0.0
  %2568 = vmatpush2.msra.mxu0 0.0
  %2569 = vmatprep.subr.mxu0 0.0
  %2570 = vmatpush2.msra.mxu0 0.0
  %2571 = vmatprep.subr.mxu0 0.0
  %2572 = vmatpush2.msra.mxu0 0.0
  %2573 = vmatprep.subr.mxu0 0.0
  %2574 = vmatpush2.msra.mxu0 0.0
  %2575 = vmatprep.subr.mxu0 0.0
  %2576 = vmatpush2.msra.mxu0 0.0
  %2577 = vmatprep.subr.mxu0 0.0
  %2578 = vmatpush2.msra.mxu0 0.0
  %2579 = vmatprep.mubr.f32.mxu0 0.0
  %2580 = vmatmul.mubr.f32.gmra.mxu0 %v596
  %v2581 = vpop.f32.mrf.mxu0
  %v2582 = vadd.f32 0.0, %v2581
  %v2583 = vpop.f32.mrf.mxu0
  %v2584 = vadd.f32 0.0, %v2583
  %2585 = vdwg.mxu0
  %2586 = vmatprep.subr.mxu0 0.0
  %2587 = vmatpush1.msra.mxu0 0.0
  %2588 = vmatprep.subr.mxu0 0.0
  %2589 = vmatpush1.msra.mxu0 0.0
  %2590 = vmatprep.subr.mxu0 0.0
  %2591 = vmatpush1.msra.mxu0 0.0
  %2592 = vmatprep.subr.mxu0 0.0
  %2593 = vmatpush1.msra.mxu0 0.0
  %2594 = vmatprep.subr.mxu0 0.0
  %2595 = vmatpush1.msra.mxu0 0.0
  %2596 = vmatprep.subr.mxu0 0.0
  %2597 = vmatpush1.msra.mxu0 0.0
  %2598 = vmatprep.subr.mxu0 0.0
  %2599 = vmatpush1.msra.mxu0 0.0
  %2600 = vmatprep.subr.mxu0 %v587
  %2601 = vmatpush1.msra.mxu0 %v586
  %2602 = vmatprep.subr.mxu0 %v523
  %2603 = vmatpush1.msra.mxu0 %v522
  %2604 = vmatprep.subr.mxu0 %v459
  %2605 = vmatpush1.msra.mxu0 %v458
  %2606 = vmatprep.subr.mxu0 %v395
  %2607 = vmatpush1.msra.mxu0 %v394
  %2608 = vmatprep.subr.mxu0 %v331
  %2609 = vmatpush1.msra.mxu0 %v330
  %2610 = vmatprep.subr.mxu0 %v267
  %2611 = vmatpush1.msra.mxu0 %v266
  %2612 = vmatprep.subr.mxu0 %v203
  %2613 = vmatpush1.msra.mxu0 %v202
  %2614 = vmatprep.subr.mxu0 %v139
  %2615 = vmatpush1.msra.mxu0 %v138
  %2616 = vmatprep.subr.mxu0 %v75
  %2617 = vmatpush1.msra.mxu0 %v74
  %2618 = vmatprep.subr.mxu0 0.0
  %2619 = vmatpush2.msra.mxu0 0.0
  %2620 = vmatprep.subr.mxu0 0.0
  %2621 = vmatpush2.msra.mxu0 0.0
  %2622 = vmatprep.subr.mxu0 0.0
  %2623 = vmatpush2.msra.mxu0 0.0
  %2624 = vmatprep.subr.mxu0 0.0
  %2625 = vmatpush2.msra.mxu0 0.0
  %2626 = vmatprep.subr.mxu0 0.0
  %2627 = vmatpush2.msra.mxu0 0.0
  %2628 = vmatprep.subr.mxu0 0.0
  %2629 = vmatpush2.msra.mxu0 0.0
  %2630 = vmatprep.subr.mxu0 0.0
  %2631 = vmatpush2.msra.mxu0 0.0
  %2632 = vmatprep.subr.mxu0 0.0
  %2633 = vmatpush2.msra.mxu0 0.0
  %2634 = vmatprep.subr.mxu0 0.0
  %2635 = vmatpush2.msra.mxu0 0.0
  %2636 = vmatprep.subr.mxu0 0.0
  %2637 = vmatpush2.msra.mxu0 0.0
  %2638 = vmatprep.subr.mxu0 0.0
  %2639 = vmatpush2.msra.mxu0 0.0
  %2640 = vmatprep.subr.mxu0 0.0
  %2641 = vmatpush2.msra.mxu0 0.0
  %2642 = vmatprep.subr.mxu0 0.0
  %2643 = vmatpush2.msra.mxu0 0.0
  %2644 = vmatprep.subr.mxu0 0.0
  %2645 = vmatpush2.msra.mxu0 0.0
  %2646 = vmatprep.subr.mxu0 0.0
  %2647 = vmatpush2.msra.mxu0 0.0
  %2648 = vmatprep.subr.mxu0 0.0
  %2649 = vmatpush2.msra.mxu0 0.0
  %2650 = vmatprep.mubr.f32.mxu0 0.0
  %2651 = vmatmul.mubr.f32.gmra.mxu0 %v596
  %v2652 = vpop.f32.mrf.mxu0
  %v2653 = vadd.f32 0.0, %v2652
  %v2654 = vpop.f32.mrf.mxu0
  %v2655 = vadd.f32 0.0, %v2654
  %2656 = vdwg.mxu0
  %2657 = vmatprep.subr.mxu0 0.0
  %2658 = vmatpush1.msra.mxu0 0.0
  %2659 = vmatprep.subr.mxu0 0.0
  %2660 = vmatpush1.msra.mxu0 0.0
  %2661 = vmatprep.subr.mxu0 0.0
  %2662 = vmatpush1.msra.mxu0 0.0
  %2663 = vmatprep.subr.mxu0 0.0
  %2664 = vmatpush1.msra.mxu0 0.0
  %2665 = vmatprep.subr.mxu0 0.0
  %2666 = vmatpush1.msra.mxu0 0.0
  %2667 = vmatprep.subr.mxu0 0.0
  %2668 = vmatpush1.msra.mxu0 0.0
  %2669 = vmatprep.subr.mxu0 0.0
  %2670 = vmatpush1.msra.mxu0 0.0
  %2671 = vmatprep.subr.mxu0 %v589
  %2672 = vmatpush1.msra.mxu0 %v588
  %2673 = vmatprep.subr.mxu0 %v525
  %2674 = vmatpush1.msra.mxu0 %v524
  %2675 = vmatprep.subr.mxu0 %v461
  %2676 = vmatpush1.msra.mxu0 %v460
  %2677 = vmatprep.subr.mxu0 %v397
  %2678 = vmatpush1.msra.mxu0 %v396
  %2679 = vmatprep.subr.mxu0 %v333
  %2680 = vmatpush1.msra.mxu0 %v332
  %2681 = vmatprep.subr.mxu0 %v269
  %2682 = vmatpush1.msra.mxu0 %v268
  %2683 = vmatprep.subr.mxu0 %v205
  %2684 = vmatpush1.msra.mxu0 %v204
  %2685 = vmatprep.subr.mxu0 %v141
  %2686 = vmatpush1.msra.mxu0 %v140
  %2687 = vmatprep.subr.mxu0 %v77
  %2688 = vmatpush1.msra.mxu0 %v76
  %2689 = vmatprep.subr.mxu0 0.0
  %2690 = vmatpush2.msra.mxu0 0.0
  %2691 = vmatprep.subr.mxu0 0.0
  %2692 = vmatpush2.msra.mxu0 0.0
  %2693 = vmatprep.subr.mxu0 0.0
  %2694 = vmatpush2.msra.mxu0 0.0
  %2695 = vmatprep.subr.mxu0 0.0
  %2696 = vmatpush2.msra.mxu0 0.0
  %2697 = vmatprep.subr.mxu0 0.0
  %2698 = vmatpush2.msra.mxu0 0.0
  %2699 = vmatprep.subr.mxu0 0.0
  %2700 = vmatpush2.msra.mxu0 0.0
  %2701 = vmatprep.subr.mxu0 0.0
  %2702 = vmatpush2.msra.mxu0 0.0
  %2703 = vmatprep.subr.mxu0 0.0
  %2704 = vmatpush2.msra.mxu0 0.0
  %2705 = vmatprep.subr.mxu0 0.0
  %2706 = vmatpush2.msra.mxu0 0.0
  %2707 = vmatprep.subr.mxu0 0.0
  %2708 = vmatpush2.msra.mxu0 0.0
  %2709 = vmatprep.subr.mxu0 0.0
  %2710 = vmatpush2.msra.mxu0 0.0
  %2711 = vmatprep.subr.mxu0 0.0
  %2712 = vmatpush2.msra.mxu0 0.0
  %2713 = vmatprep.subr.mxu0 0.0
  %2714 = vmatpush2.msra.mxu0 0.0
  %2715 = vmatprep.subr.mxu0 0.0
  %2716 = vmatpush2.msra.mxu0 0.0
  %2717 = vmatprep.subr.mxu0 0.0
  %2718 = vmatpush2.msra.mxu0 0.0
  %2719 = vmatprep.subr.mxu0 0.0
  %2720 = vmatpush2.msra.mxu0 0.0
  %2721 = vmatprep.mubr.f32.mxu0 0.0
  %2722 = vmatmul.mubr.f32.gmra.mxu0 %v596
  %v2723 = vpop.f32.mrf.mxu0
  %v2724 = vadd.f32 0.0, %v2723
  %v2725 = vpop.f32.mrf.mxu0
  %v2726 = vadd.f32 0.0, %v2725
  %2727 = vdwg.mxu0
  %2728 = vmatprep.subr.mxu0 0.0
  %2729 = vmatpush1.msra.mxu0 0.0
  %2730 = vmatprep.subr.mxu0 0.0
  %2731 = vmatpush1.msra.mxu0 0.0
  %2732 = vmatprep.subr.mxu0 0.0
  %2733 = vmatpush1.msra.mxu0 0.0
  %2734 = vmatprep.subr.mxu0 0.0
  %2735 = vmatpush1.msra.mxu0 0.0
  %2736 = vmatprep.subr.mxu0 0.0
  %2737 = vmatpush1.msra.mxu0 0.0
  %2738 = vmatprep.subr.mxu0 0.0
  %2739 = vmatpush1.msra.mxu0 0.0
  %2740 = vmatprep.subr.mxu0 0.0
  %2741 = vmatpush1.msra.mxu0 0.0
  %2742 = vmatprep.subr.mxu0 %v591
  %2743 = vmatpush1.msra.mxu0 %v590
  %2744 = vmatprep.subr.mxu0 %v527
  %2745 = vmatpush1.msra.mxu0 %v526
  %2746 = vmatprep.subr.mxu0 %v463
  %2747 = vmatpush1.msra.mxu0 %v462
  %2748 = vmatprep.subr.mxu0 %v399
  %2749 = vmatpush1.msra.mxu0 %v398
  %2750 = vmatprep.subr.mxu0 %v335
  %2751 = vmatpush1.msra.mxu0 %v334
  %2752 = vmatprep.subr.mxu0 %v271
  %2753 = vmatpush1.msra.mxu0 %v270
  %2754 = vmatprep.subr.mxu0 %v207
  %2755 = vmatpush1.msra.mxu0 %v206
  %2756 = vmatprep.subr.mxu0 %v143
  %2757 = vmatpush1.msra.mxu0 %v142
  %2758 = vmatprep.subr.mxu0 %v79
  %2759 = vmatpush1.msra.mxu0 %v78
  %2760 = vmatprep.subr.mxu0 0.0
  %2761 = vmatpush2.msra.mxu0 0.0
  %2762 = vmatprep.subr.mxu0 0.0
  %2763 = vmatpush2.msra.mxu0 0.0
  %2764 = vmatprep.subr.mxu0 0.0
  %2765 = vmatpush2.msra.mxu0 0.0
  %2766 = vmatprep.subr.mxu0 0.0
  %2767 = vmatpush2.msra.mxu0 0.0
  %2768 = vmatprep.subr.mxu0 0.0
  %2769 = vmatpush2.msra.mxu0 0.0
  %2770 = vmatprep.subr.mxu0 0.0
  %2771 = vmatpush2.msra.mxu0 0.0
  %2772 = vmatprep.subr.mxu0 0.0
  %2773 = vmatpush2.msra.mxu0 0.0
  %2774 = vmatprep.subr.mxu0 0.0
  %2775 = vmatpush2.msra.mxu0 0.0
  %2776 = vmatprep.subr.mxu0 0.0
  %2777 = vmatpush2.msra.mxu0 0.0
  %2778 = vmatprep.subr.mxu0 0.0
  %2779 = vmatpush2.msra.mxu0 0.0
  %2780 = vmatprep.subr.mxu0 0.0
  %2781 = vmatpush2.msra.mxu0 0.0
  %2782 = vmatprep.subr.mxu0 0.0
  %2783 = vmatpush2.msra.mxu0 0.0
  %2784 = vmatprep.subr.mxu0 0.0
  %2785 = vmatpush2.msra.mxu0 0.0
  %2786 = vmatprep.subr.mxu0 0.0
  %2787 = vmatpush2.msra.mxu0 0.0
  %2788 = vmatprep.subr.mxu0 0.0
  %2789 = vmatpush2.msra.mxu0 0.0
  %2790 = vmatprep.subr.mxu0 0.0
  %2791 = vmatpush2.msra.mxu0 0.0
  %2792 = vmatprep.mubr.f32.mxu0 0.0
  %2793 = vmatmul.mubr.f32.gmra.mxu0 %v596
  %v2794 = vpop.f32.mrf.mxu0
  %v2795 = vadd.f32 0.0, %v2794
  %v2796 = vpop.f32.mrf.mxu0
  %v2797 = vadd.f32 0.0, %v2796
  %2798 = vdwg.mxu0
  %2799 = vmatprep.subr.mxu0 0.0
  %2800 = vmatpush1.msra.mxu0 0.0
  %2801 = vmatprep.subr.mxu0 0.0
  %2802 = vmatpush1.msra.mxu0 0.0
  %2803 = vmatprep.subr.mxu0 0.0
  %2804 = vmatpush1.msra.mxu0 0.0
  %2805 = vmatprep.subr.mxu0 0.0
  %2806 = vmatpush1.msra.mxu0 0.0
  %2807 = vmatprep.subr.mxu0 0.0
  %2808 = vmatpush1.msra.mxu0 0.0
  %2809 = vmatprep.subr.mxu0 0.0
  %2810 = vmatpush1.msra.mxu0 0.0
  %2811 = vmatprep.subr.mxu0 0.0
  %2812 = vmatpush1.msra.mxu0 0.0
  %2813 = vmatprep.subr.mxu0 %v593
  %2814 = vmatpush1.msra.mxu0 %v592
  %2815 = vmatprep.subr.mxu0 %v529
  %2816 = vmatpush1.msra.mxu0 %v528
  %2817 = vmatprep.subr.mxu0 %v465
  %2818 = vmatpush1.msra.mxu0 %v464
  %2819 = vmatprep.subr.mxu0 %v401
  %2820 = vmatpush1.msra.mxu0 %v400
  %2821 = vmatprep.subr.mxu0 %v337
  %2822 = vmatpush1.msra.mxu0 %v336
  %2823 = vmatprep.subr.mxu0 %v273
  %2824 = vmatpush1.msra.mxu0 %v272
  %2825 = vmatprep.subr.mxu0 %v209
  %2826 = vmatpush1.msra.mxu0 %v208
  %2827 = vmatprep.subr.mxu0 %v145
  %2828 = vmatpush1.msra.mxu0 %v144
  %2829 = vmatprep.subr.mxu0 %v81
  %2830 = vmatpush1.msra.mxu0 %v80
  %2831 = vmatprep.subr.mxu0 0.0
  %2832 = vmatpush2.msra.mxu0 0.0
  %2833 = vmatprep.subr.mxu0 0.0
  %2834 = vmatpush2.msra.mxu0 0.0
  %2835 = vmatprep.subr.mxu0 0.0
  %2836 = vmatpush2.msra.mxu0 0.0
  %2837 = vmatprep.subr.mxu0 0.0
  %2838 = vmatpush2.msra.mxu0 0.0
  %2839 = vmatprep.subr.mxu0 0.0
  %2840 = vmatpush2.msra.mxu0 0.0
  %2841 = vmatprep.subr.mxu0 0.0
  %2842 = vmatpush2.msra.mxu0 0.0
  %2843 = vmatprep.subr.mxu0 0.0
  %2844 = vmatpush2.msra.mxu0 0.0
  %2845 = vmatprep.subr.mxu0 0.0
  %2846 = vmatpush2.msra.mxu0 0.0
  %2847 = vmatprep.subr.mxu0 0.0
  %2848 = vmatpush2.msra.mxu0 0.0
  %2849 = vmatprep.subr.mxu0 0.0
  %2850 = vmatpush2.msra.mxu0 0.0
  %2851 = vmatprep.subr.mxu0 0.0
  %2852 = vmatpush2.msra.mxu0 0.0
  %2853 = vmatprep.subr.mxu0 0.0
  %2854 = vmatpush2.msra.mxu0 0.0
  %2855 = vmatprep.subr.mxu0 0.0
  %2856 = vmatpush2.msra.mxu0 0.0
  %2857 = vmatprep.subr.mxu0 0.0
  %2858 = vmatpush2.msra.mxu0 0.0
  %2859 = vmatprep.subr.mxu0 0.0
  %2860 = vmatpush2.msra.mxu0 0.0
  %2861 = vmatprep.subr.mxu0 0.0
  %2862 = vmatpush2.msra.mxu0 0.0
  %2863 = vmatprep.mubr.f32.mxu0 0.0
  %2864 = vmatmul.mubr.f32.gmra.mxu0 %v596
  %v2865 = vpop.f32.mrf.mxu0
  %v2866 = vadd.f32 0.0, %v2865
  %v2867 = vpop.f32.mrf.mxu0
  %v2868 = vadd.f32 0.0, %v2867
  %2869 = vdwg.mxu0
  %v2870 = vadd.f32 %v665, %v667
  %v2871 = vadd.f32 %v2870, %v736
  %v2872 = vadd.f32 %v2871, %v738
  %v2873 = vadd.f32 %v2872, %v807
  %v2874 = vadd.f32 %v2873, %v809
  %v2875 = vadd.f32 %v2874, %v878
  %v2876 = vadd.f32 %v2875, %v880
  %v2877 = vadd.f32 %v2876, %v949
  %v2878 = vadd.f32 %v2877, %v951
  %v2879 = vadd.f32 %v2878, %v1020
  %v2880 = vadd.f32 %v2879, %v1022
  %v2881 = vadd.f32 %v2880, %v1091
  %v2882 = vadd.f32 %v2881, %v1093
  %v2883 = vadd.f32 %v2882, %v1162
  %v2884 = vadd.f32 %v2883, %v1164
  %v2885 = vadd.f32 %v2884, %v1233
  %v2886 = vadd.f32 %v2885, %v1235
  %v2887 = vadd.f32 %v2886, %v1304
  %v2888 = vadd.f32 %v2887, %v1306
  %v2889 = vadd.f32 %v2888, %v1375
  %v2890 = vadd.f32 %v2889, %v1377
  %v2891 = vadd.f32 %v2890, %v1446
  %v2892 = vadd.f32 %v2891, %v1448
  %v2893 = vadd.f32 %v2892, %v1517
  %v2894 = vadd.f32 %v2893, %v1519
  %v2895 = vadd.f32 %v2894, %v1588
  %v2896 = vadd.f32 %v2895, %v1590
  %v2897 = vadd.f32 %v2896, %v1659
  %v2898 = vadd.f32 %v2897, %v1661
  %v2899 = vadd.f32 %v2898, %v1730
  %v2900 = vadd.f32 %v2899, %v1732
  %v2901 = vadd.f32 %v2900, %v1801
  %v2902 = vadd.f32 %v2901, %v1803
  %v2903 = vadd.f32 %v2902, %v1872
  %v2904 = vadd.f32 %v2903, %v1874
  %v2905 = vadd.f32 %v2904, %v1943
  %v2906 = vadd.f32 %v2905, %v1945
  %v2907 = vadd.f32 %v2906, %v2014
  %v2908 = vadd.f32 %v2907, %v2016
  %v2909 = vadd.f32 %v2908, %v2085
  %v2910 = vadd.f32 %v2909, %v2087
  %v2911 = vadd.f32 %v2910, %v2156
  %v2912 = vadd.f32 %v2911, %v2158
  %v2913 = vadd.f32 %v2912, %v2227
  %v2914 = vadd.f32 %v2913, %v2229
  %v2915 = vadd.f32 %v2914, %v2298
  %v2916 = vadd.f32 %v2915, %v2300
  %v2917 = vadd.f32 %v2916, %v2369
  %v2918 = vadd.f32 %v2917, %v2371
  %v2919 = vadd.f32 %v2918, %v2440
  %v2920 = vadd.f32 %v2919, %v2442
  %v2921 = vadd.f32 %v2920, %v2511
  %v2922 = vadd.f32 %v2921, %v2513
  %v2923 = vadd.f32 %v2922, %v2582
  %v2924 = vadd.f32 %v2923, %v2584
  %v2925 = vadd.f32 %v2924, %v2653
  %v2926 = vadd.f32 %v2925, %v2655
  %v2927 = vadd.f32 %v2926, %v2724
  %v2928 = vadd.f32 %v2927, %v2726
  %v2929 = vadd.f32 %v2928, %v2795
  %v2930 = vadd.f32 %v2929, %v2797
  %v2931 = vadd.f32 %v2930, %v2866
  %v2932 = vadd.f32 %v2931, %v2868
  %2933 = vadd.xlane.f32.xlu0 %v2932
  %v2934 = vpop.xlane.xlu0 %2933
  %v2935 = vmul.f32 %v2934, 0.00012207031
  %v2936 = vsub.f32 %v665, %v2935
  %v2937 = vsub.f32 %v667, %v2935
  %v2938 = vsub.f32 %v736, %v2935
  %v2939 = vsub.f32 %v738, %v2935
  %v2940 = vsub.f32 %v807, %v2935
  %v2941 = vsub.f32 %v809, %v2935
  %v2942 = vsub.f32 %v878, %v2935
  %v2943 = vsub.f32 %v880, %v2935
  %v2944 = vsub.f32 %v949, %v2935
  %v2945 = vsub.f32 %v951, %v2935
  %v2946 = vsub.f32 %v1020, %v2935
  %v2947 = vsub.f32 %v1022, %v2935
  %v2948 = vsub.f32 %v1091, %v2935
  %v2949 = vsub.f32 %v1093, %v2935
  %v2950 = vsub.f32 %v1162, %v2935
  %v2951 = vsub.f32 %v1164, %v2935
  %v2952 = vsub.f32 %v1233, %v2935
  %v2953 = vsub.f32 %v1235, %v2935
  %v2954 = vsub.f32 %v1304, %v2935
  %v2955 = vsub.f32 %v1306, %v2935
  %v2956 = vsub.f32 %v1375, %v2935
  %v2957 = vsub.f32 %v1377, %v2935
  %v2958 = vsub.f32 %v1446, %v2935
  %v2959 = vsub.f32 %v1448, %v2935
  %v2960 = vsub.f32 %v1517, %v2935
  %v2961 = vsub.f32 %v1519, %v2935
  %v2962 = vsub.f32 %v1588, %v2935
  %v2963 = vsub.f32 %v1590, %v2935
  %v2964 = vsub.f32 %v1659, %v2935
  %v2965 = vsub.f32 %v1661, %v2935
  %v2966 = vsub.f32 %v1730, %v2935
  %v2967 = vsub.f32 %v1732, %v2935
  %v2968 = vsub.f32 %v1801, %v2935
  %v2969 = vsub.f32 %v1803, %v2935
  %v2970 = vsub.f32 %v1872, %v2935
  %v2971 = vsub.f32 %v1874, %v2935
  %v2972 = vsub.f32 %v1943, %v2935
  %v2973 = vsub.f32 %v1945, %v2935
  %v2974 = vsub.f32 %v2014, %v2935
  %v2975 = vsub.f32 %v2016, %v2935
  %v2976 = vsub.f32 %v2085, %v2935
  %v2977 = vsub.f32 %v2087, %v2935
  %v2978 = vsub.f32 %v2156, %v2935
  %v2979 = vsub.f32 %v2158, %v2935
  %v2980 = vsub.f32 %v2227, %v2935
  %v2981 = vsub.f32 %v2229, %v2935
  %v2982 = vsub.f32 %v2298, %v2935
  %v2983 = vsub.f32 %v2300, %v2935
  %v2984 = vsub.f32 %v2369, %v2935
  %v2985 = vsub.f32 %v2371, %v2935
  %v2986 = vsub.f32 %v2440, %v2935
  %v2987 = vsub.f32 %v2442, %v2935
  %v2988 = vsub.f32 %v2511, %v2935
  %v2989 = vsub.f32 %v2513, %v2935
  %v2990 = vsub.f32 %v2582, %v2935
  %v2991 = vsub.f32 %v2584, %v2935
  %v2992 = vsub.f32 %v2653, %v2935
  %v2993 = vsub.f32 %v2655, %v2935
  %v2994 = vsub.f32 %v2724, %v2935
  %v2995 = vsub.f32 %v2726, %v2935
  %v2996 = vsub.f32 %v2795, %v2935
  %v2997 = vsub.f32 %v2797, %v2935
  %v2998 = vsub.f32 %v2866, %v2935
  %v2999 = vsub.f32 %v2868, %v2935
  %v3000 = vmul.f32 %v2936, %v2936
  %v3001 = vmul.f32 %v2937, %v2937
  %v3002 = vmul.f32 %v2938, %v2938
  %v3003 = vmul.f32 %v2939, %v2939
  %v3004 = vmul.f32 %v2940, %v2940
  %v3005 = vmul.f32 %v2941, %v2941
  %v3006 = vmul.f32 %v2942, %v2942
  %v3007 = vmul.f32 %v2943, %v2943
  %v3008 = vmul.f32 %v2944, %v2944
  %v3009 = vmul.f32 %v2945, %v2945
  %v3010 = vmul.f32 %v2946, %v2946
  %v3011 = vmul.f32 %v2947, %v2947
  %v3012 = vmul.f32 %v2948, %v2948
  %v3013 = vmul.f32 %v2949, %v2949
  %v3014 = vmul.f32 %v2950, %v2950
  %v3015 = vmul.f32 %v2951, %v2951
  %v3016 = vmul.f32 %v2952, %v2952
  %v3017 = vmul.f32 %v2953, %v2953
  %v3018 = vmul.f32 %v2954, %v2954
  %v3019 = vmul.f32 %v2955, %v2955
  %v3020 = vmul.f32 %v2956, %v2956
  %v3021 = vmul.f32 %v2957, %v2957
  %v3022 = vmul.f32 %v2958, %v2958
  %v3023 = vmul.f32 %v2959, %v2959
  %v3024 = vmul.f32 %v2960, %v2960
  %v3025 = vmul.f32 %v2961, %v2961
  %v3026 = vmul.f32 %v2962, %v2962
  %v3027 = vmul.f32 %v2963, %v2963
  %v3028 = vmul.f32 %v2964, %v2964
  %v3029 = vmul.f32 %v2965, %v2965
  %v3030 = vmul.f32 %v2966, %v2966
  %v3031 = vmul.f32 %v2967, %v2967
  %v3032 = vmul.f32 %v2968, %v2968
  %v3033 = vmul.f32 %v2969, %v2969
  %v3034 = vmul.f32 %v2970, %v2970
  %v3035 = vmul.f32 %v2971, %v2971
  %v3036 = vmul.f32 %v2972, %v2972
  %v3037 = vmul.f32 %v2973, %v2973
  %v3038 = vmul.f32 %v2974, %v2974
  %v3039 = vmul.f32 %v2975, %v2975
  %v3040 = vmul.f32 %v2976, %v2976
  %v3041 = vmul.f32 %v2977, %v2977
  %v3042 = vmul.f32 %v2978, %v2978
  %v3043 = vmul.f32 %v2979, %v2979
  %v3044 = vmul.f32 %v2980, %v2980
  %v3045 = vmul.f32 %v2981, %v2981
  %v3046 = vmul.f32 %v2982, %v2982
  %v3047 = vmul.f32 %v2983, %v2983
  %v3048 = vmul.f32 %v2984, %v2984
  %v3049 = vmul.f32 %v2985, %v2985
  %v3050 = vmul.f32 %v2986, %v2986
  %v3051 = vmul.f32 %v2987, %v2987
  %v3052 = vmul.f32 %v2988, %v2988
  %v3053 = vmul.f32 %v2989, %v2989
  %v3054 = vmul.f32 %v2990, %v2990
  %v3055 = vmul.f32 %v2991, %v2991
  %v3056 = vmul.f32 %v2992, %v2992
  %v3057 = vmul.f32 %v2993, %v2993
  %v3058 = vmul.f32 %v2994, %v2994
  %v3059 = vmul.f32 %v2995, %v2995
  %v3060 = vmul.f32 %v2996, %v2996
  %v3061 = vmul.f32 %v2997, %v2997
  %v3062 = vmul.f32 %v2998, %v2998
  %v3063 = vmul.f32 %v2999, %v2999
  %v3064 = vadd.f32 %v3000, %v3001
  %v3065 = vadd.f32 %v3064, %v3002
  %v3066 = vadd.f32 %v3065, %v3003
  %v3067 = vadd.f32 %v3066, %v3004
  %v3068 = vadd.f32 %v3067, %v3005
  %v3069 = vadd.f32 %v3068, %v3006
  %v3070 = vadd.f32 %v3069, %v3007
  %v3071 = vadd.f32 %v3070, %v3008
  %v3072 = vadd.f32 %v3071, %v3009
  %v3073 = vadd.f32 %v3072, %v3010
  %v3074 = vadd.f32 %v3073, %v3011
  %v3075 = vadd.f32 %v3074, %v3012
  %v3076 = vadd.f32 %v3075, %v3013
  %v3077 = vadd.f32 %v3076, %v3014
  %v3078 = vadd.f32 %v3077, %v3015
  %v3079 = vadd.f32 %v3078, %v3016
  %v3080 = vadd.f32 %v3079, %v3017
  %v3081 = vadd.f32 %v3080, %v3018
  %v3082 = vadd.f32 %v3081, %v3019
  %v3083 = vadd.f32 %v3082, %v3020
  %v3084 = vadd.f32 %v3083, %v3021
  %v3085 = vadd.f32 %v3084, %v3022
  %v3086 = vadd.f32 %v3085, %v3023
  %v3087 = vadd.f32 %v3086, %v3024
  %v3088 = vadd.f32 %v3087, %v3025
  %v3089 = vadd.f32 %v3088, %v3026
  %v3090 = vadd.f32 %v3089, %v3027
  %v3091 = vadd.f32 %v3090, %v3028
  %v3092 = vadd.f32 %v3091, %v3029
  %v3093 = vadd.f32 %v3092, %v3030
  %v3094 = vadd.f32 %v3093, %v3031
  %v3095 = vadd.f32 %v3094, %v3032
  %v3096 = vadd.f32 %v3095, %v3033
  %v3097 = vadd.f32 %v3096, %v3034
  %v3098 = vadd.f32 %v3097, %v3035
  %v3099 = vadd.f32 %v3098, %v3036
  %v3100 = vadd.f32 %v3099, %v3037
  %v3101 = vadd.f32 %v3100, %v3038
  %v3102 = vadd.f32 %v3101, %v3039
  %v3103 = vadd.f32 %v3102, %v3040
  %v3104 = vadd.f32 %v3103, %v3041
  %v3105 = vadd.f32 %v3104, %v3042
  %v3106 = vadd.f32 %v3105, %v3043
  %v3107 = vadd.f32 %v3106, %v3044
  %v3108 = vadd.f32 %v3107, %v3045
  %v3109 = vadd.f32 %v3108, %v3046
  %v3110 = vadd.f32 %v3109, %v3047
  %v3111 = vadd.f32 %v3110, %v3048
  %v3112 = vadd.f32 %v3111, %v3049
  %v3113 = vadd.f32 %v3112, %v3050
  %v3114 = vadd.f32 %v3113, %v3051
  %v3115 = vadd.f32 %v3114, %v3052
  %v3116 = vadd.f32 %v3115, %v3053
  %v3117 = vadd.f32 %v3116, %v3054
  %v3118 = vadd.f32 %v3117, %v3055
  %v3119 = vadd.f32 %v3118, %v3056
  %v3120 = vadd.f32 %v3119, %v3057
  %v3121 = vadd.f32 %v3120, %v3058
  %v3122 = vadd.f32 %v3121, %v3059
  %v3123 = vadd.f32 %v3122, %v3060
  %v3124 = vadd.f32 %v3123, %v3061
  %v3125 = vadd.f32 %v3124, %v3062
  %v3126 = vadd.f32 %v3125, %v3063
  %3127 = vadd.xlane.f32.xlu0 %v3126
  %v3128 = vpop.xlane.xlu0 %3127
  %v3129 = vmul.f32 %v3128, 0.00012207031
  %v3130 = vadd.f32 %v3129, 1e-05
  %v3131 = vrsqrt.pop %v3130
  %v3132 = vmul.f32 %v2936, %v3131
  %v3133 = vmul.f32 %v2937, %v3131
  %v3134 = vmul.f32 %v2938, %v3131
  %v3135 = vmul.f32 %v2939, %v3131
  %v3136 = vmul.f32 %v2940, %v3131
  %v3137 = vmul.f32 %v2941, %v3131
  %v3138 = vmul.f32 %v2942, %v3131
  %v3139 = vmul.f32 %v2943, %v3131
  %v3140 = vmul.f32 %v2944, %v3131
  %v3141 = vmul.f32 %v2945, %v3131
  %v3142 = vmul.f32 %v2946, %v3131
  %v3143 = vmul.f32 %v2947, %v3131
  %v3144 = vmul.f32 %v2948, %v3131
  %v3145 = vmul.f32 %v2949, %v3131
  %v3146 = vmul.f32 %v2950, %v3131
  %v3147 = vmul.f32 %v2951, %v3131
  %v3148 = vmul.f32 %v2952, %v3131
  %v3149 = vmul.f32 %v2953, %v3131
  %v3150 = vmul.f32 %v2954, %v3131
  %v3151 = vmul.f32 %v2955, %v3131
  %v3152 = vmul.f32 %v2956, %v3131
  %v3153 = vmul.f32 %v2957, %v3131
  %v3154 = vmul.f32 %v2958, %v3131
  %v3155 = vmul.f32 %v2959, %v3131
  %v3156 = vmul.f32 %v2960, %v3131
  %v3157 = vmul.f32 %v2961, %v3131
  %v3158 = vmul.f32 %v2962, %v3131
  %v3159 = vmul.f32 %v2963, %v3131
  %v3160 = vmul.f32 %v2964, %v3131
  %v3161 = vmul.f32 %v2965, %v3131
  %v3162 = vmul.f32 %v2966, %v3131
  %v3163 = vmul.f32 %v2967, %v3131
  %v3164 = vmul.f32 %v2968, %v3131
  %v3165 = vmul.f32 %v2969, %v3131
  %v3166 = vmul.f32 %v2970, %v3131
  %v3167 = vmul.f32 %v2971, %v3131
  %v3168 = vmul.f32 %v2972, %v3131
  %v3169 = vmul.f32 %v2973, %v3131
  %v3170 = vmul.f32 %v2974, %v3131
  %v3171 = vmul.f32 %v2975, %v3131
  %v3172 = vmul.f32 %v2976, %v3131
  %v3173 = vmul.f32 %v2977, %v3131
  %v3174 = vmul.f32 %v2978, %v3131
  %v3175 = vmul.f32 %v2979, %v3131
  %v3176 = vmul.f32 %v2980, %v3131
  %v3177 = vmul.f32 %v2981, %v3131
  %v3178 = vmul.f32 %v2982, %v3131
  %v3179 = vmul.f32 %v2983, %v3131
  %v3180 = vmul.f32 %v2984, %v3131
  %v3181 = vmul.f32 %v2985, %v3131
  %v3182 = vmul.f32 %v2986, %v3131
  %v3183 = vmul.f32 %v2987, %v3131
  %v3184 = vmul.f32 %v2988, %v3131
  %v3185 = vmul.f32 %v2989, %v3131
  %v3186 = vmul.f32 %v2990, %v3131
  %v3187 = vmul.f32 %v2991, %v3131
  %v3188 = vmul.f32 %v2992, %v3131
  %v3189 = vmul.f32 %v2993, %v3131
  %v3190 = vmul.f32 %v2994, %v3131
  %v3191 = vmul.f32 %v2995, %v3131
  %v3192 = vmul.f32 %v2996, %v3131
  %v3193 = vmul.f32 %v2997, %v3131
  %v3194 = vmul.f32 %v2998, %v3131
  %v3195 = vmul.f32 %v2999, %v3131
  %v3196 = vld [vmem:[%s2] sm:$0xff]
  %3198 = vset.pattern.permute.xlu0 0
  %3199 = vperm.xlu0 %3198, %v3196
  %v3200 = vpop.permute.xlu0 %3199
  %v3202 = vmul.f32 %v3132, %v3200
  %v3203 = vmul.f32 %v3133, %v3200
  %v3204 = vmul.f32 %v3134, %v3200
  %v3205 = vmul.f32 %v3135, %v3200
  %v3206 = vmul.f32 %v3136, %v3200
  %v3207 = vmul.f32 %v3137, %v3200
  %v3208 = vmul.f32 %v3138, %v3200
  %v3209 = vmul.f32 %v3139, %v3200
  %v3210 = vmul.f32 %v3140, %v3200
  %v3211 = vmul.f32 %v3141, %v3200
  %v3212 = vmul.f32 %v3142, %v3200
  %v3213 = vmul.f32 %v3143, %v3200
  %v3214 = vmul.f32 %v3144, %v3200
  %v3215 = vmul.f32 %v3145, %v3200
  %v3216 = vmul.f32 %v3146, %v3200
  %v3217 = vmul.f32 %v3147, %v3200
  %v3218 = vmul.f32 %v3148, %v3200
  %v3219 = vmul.f32 %v3149, %v3200
  %v3220 = vmul.f32 %v3150, %v3200
  %v3221 = vmul.f32 %v3151, %v3200
  %v3222 = vmul.f32 %v3152, %v3200
  %v3223 = vmul.f32 %v3153, %v3200
  %v3224 = vmul.f32 %v3154, %v3200
  %v3225 = vmul.f32 %v3155, %v3200
  %v3226 = vmul.f32 %v3156, %v3200
  %v3227 = vmul.f32 %v3157, %v3200
  %v3228 = vmul.f32 %v3158, %v3200
  %v3229 = vmul.f32 %v3159, %v3200
  %v3230 = vmul.f32 %v3160, %v3200
  %v3231 = vmul.f32 %v3161, %v3200
  %v3232 = vmul.f32 %v3162, %v3200
  %v3233 = vmul.f32 %v3163, %v3200
  %v3234 = vmul.f32 %v3164, %v3200
  %v3235 = vmul.f32 %v3165, %v3200
  %v3236 = vmul.f32 %v3166, %v3200
  %v3237 = vmul.f32 %v3167, %v3200
  %v3238 = vmul.f32 %v3168, %v3200
  %v3239 = vmul.f32 %v3169, %v3200
  %v3240 = vmul.f32 %v3170, %v3200
  %v3241 = vmul.f32 %v3171, %v3200
  %v3242 = vmul.f32 %v3172, %v3200
  %v3243 = vmul.f32 %v3173, %v3200
  %v3244 = vmul.f32 %v3174, %v3200
  %v3245 = vmul.f32 %v3175, %v3200
  %v3246 = vmul.f32 %v3176, %v3200
  %v3247 = vmul.f32 %v3177, %v3200
  %v3248 = vmul.f32 %v3178, %v3200
  %v3249 = vmul.f32 %v3179, %v3200
  %v3250 = vmul.f32 %v3180, %v3200
  %v3251 = vmul.f32 %v3181, %v3200
  %v3252 = vmul.f32 %v3182, %v3200
  %v3253 = vmul.f32 %v3183, %v3200
  %v3254 = vmul.f32 %v3184, %v3200
  %v3255 = vmul.f32 %v3185, %v3200
  %v3256 = vmul.f32 %v3186, %v3200
  %v3257 = vmul.f32 %v3187, %v3200
  %v3258 = vmul.f32 %v3188, %v3200
  %v3259 = vmul.f32 %v3189, %v3200
  %v3260 = vmul.f32 %v3190, %v3200
  %v3261 = vmul.f32 %v3191, %v3200
  %v3262 = vmul.f32 %v3192, %v3200
  %v3263 = vmul.f32 %v3193, %v3200
  %v3264 = vmul.f32 %v3194, %v3200
  %v3265 = vmul.f32 %v3195, %v3200
  %v3266 = vld [vmem:[%s3] sm:$0xff]
  %3268 = vset.pattern.permute.xlu0 0
  %3269 = vperm.xlu0 %3268, %v3266
  %v3270 = vpop.permute.xlu0 %3269
  %v3272 = vadd.f32 %v3202, %v3270
  %v3273 = vadd.f32 %v3203, %v3270
  %v3274 = vadd.f32 %v3204, %v3270
  %v3275 = vadd.f32 %v3205, %v3270
  %v3276 = vadd.f32 %v3206, %v3270
  %v3277 = vadd.f32 %v3207, %v3270
  %v3278 = vadd.f32 %v3208, %v3270
  %v3279 = vadd.f32 %v3209, %v3270
  %v3280 = vadd.f32 %v3210, %v3270
  %v3281 = vadd.f32 %v3211, %v3270
  %v3282 = vadd.f32 %v3212, %v3270
  %v3283 = vadd.f32 %v3213, %v3270
  %v3284 = vadd.f32 %v3214, %v3270
  %v3285 = vadd.f32 %v3215, %v3270
  %v3286 = vadd.f32 %v3216, %v3270
  %v3287 = vadd.f32 %v3217, %v3270
  %v3288 = vadd.f32 %v3218, %v3270
  %v3289 = vadd.f32 %v3219, %v3270
  %v3290 = vadd.f32 %v3220, %v3270
  %v3291 = vadd.f32 %v3221, %v3270
  %v3292 = vadd.f32 %v3222, %v3270
  %v3293 = vadd.f32 %v3223, %v3270
  %v3294 = vadd.f32 %v3224, %v3270
  %v3295 = vadd.f32 %v3225, %v3270
  %v3296 = vadd.f32 %v3226, %v3270
  %v3297 = vadd.f32 %v3227, %v3270
  %v3298 = vadd.f32 %v3228, %v3270
  %v3299 = vadd.f32 %v3229, %v3270
  %v3300 = vadd.f32 %v3230, %v3270
  %v3301 = vadd.f32 %v3231, %v3270
  %v3302 = vadd.f32 %v3232, %v3270
  %v3303 = vadd.f32 %v3233, %v3270
  %v3304 = vadd.f32 %v3234, %v3270
  %v3305 = vadd.f32 %v3235, %v3270
  %v3306 = vadd.f32 %v3236, %v3270
  %v3307 = vadd.f32 %v3237, %v3270
  %v3308 = vadd.f32 %v3238, %v3270
  %v3309 = vadd.f32 %v3239, %v3270
  %v3310 = vadd.f32 %v3240, %v3270
  %v3311 = vadd.f32 %v3241, %v3270
  %v3312 = vadd.f32 %v3242, %v3270
  %v3313 = vadd.f32 %v3243, %v3270
  %v3314 = vadd.f32 %v3244, %v3270
  %v3315 = vadd.f32 %v3245, %v3270
  %v3316 = vadd.f32 %v3246, %v3270
  %v3317 = vadd.f32 %v3247, %v3270
  %v3318 = vadd.f32 %v3248, %v3270
  %v3319 = vadd.f32 %v3249, %v3270
  %v3320 = vadd.f32 %v3250, %v3270
  %v3321 = vadd.f32 %v3251, %v3270
  %v3322 = vadd.f32 %v3252, %v3270
  %v3323 = vadd.f32 %v3253, %v3270
  %v3324 = vadd.f32 %v3254, %v3270
  %v3325 = vadd.f32 %v3255, %v3270
  %v3326 = vadd.f32 %v3256, %v3270
  %v3327 = vadd.f32 %v3257, %v3270
  %v3328 = vadd.f32 %v3258, %v3270
  %v3329 = vadd.f32 %v3259, %v3270
  %v3330 = vadd.f32 %v3260, %v3270
  %v3331 = vadd.f32 %v3261, %v3270
  %v3332 = vadd.f32 %v3262, %v3270
  %v3333 = vadd.f32 %v3263, %v3270
  %v3334 = vadd.f32 %v3264, %v3270
  %v3335 = vadd.f32 %v3265, %v3270
  %v3336 = vmul.f32 %v3272, 0.5
  %v3337 = vmul.f32 %v3273, 0.5
  %v3338 = vmul.f32 %v3274, 0.5
  %v3339 = vmul.f32 %v3275, 0.5
  %v3340 = vmul.f32 %v3276, 0.5
  %v3341 = vmul.f32 %v3277, 0.5
  %v3342 = vmul.f32 %v3278, 0.5
  %v3343 = vmul.f32 %v3279, 0.5
  %v3344 = vmul.f32 %v3280, 0.5
  %v3345 = vmul.f32 %v3281, 0.5
  %v3346 = vmul.f32 %v3282, 0.5
  %v3347 = vmul.f32 %v3283, 0.5
  %v3348 = vmul.f32 %v3284, 0.5
  %v3349 = vmul.f32 %v3285, 0.5
  %v3350 = vmul.f32 %v3286, 0.5
  %v3351 = vmul.f32 %v3287, 0.5
  %v3352 = vmul.f32 %v3288, 0.5
  %v3353 = vmul.f32 %v3289, 0.5
  %v3354 = vmul.f32 %v3290, 0.5
  %v3355 = vmul.f32 %v3291, 0.5
  %v3356 = vmul.f32 %v3292, 0.5
  %v3357 = vmul.f32 %v3293, 0.5
  %v3358 = vmul.f32 %v3294, 0.5
  %v3359 = vmul.f32 %v3295, 0.5
  %v3360 = vmul.f32 %v3296, 0.5
  %v3361 = vmul.f32 %v3297, 0.5
  %v3362 = vmul.f32 %v3298, 0.5
  %v3363 = vmul.f32 %v3299, 0.5
  %v3364 = vmul.f32 %v3300, 0.5
  %v3365 = vmul.f32 %v3301, 0.5
  %v3366 = vmul.f32 %v3302, 0.5
  %v3367 = vmul.f32 %v3303, 0.5
  %v3368 = vmul.f32 %v3304, 0.5
  %v3369 = vmul.f32 %v3305, 0.5
  %v3370 = vmul.f32 %v3306, 0.5
  %v3371 = vmul.f32 %v3307, 0.5
  %v3372 = vmul.f32 %v3308, 0.5
  %v3373 = vmul.f32 %v3309, 0.5
  %v3374 = vmul.f32 %v3310, 0.5
  %v3375 = vmul.f32 %v3311, 0.5
  %v3376 = vmul.f32 %v3312, 0.5
  %v3377 = vmul.f32 %v3313, 0.5
  %v3378 = vmul.f32 %v3314, 0.5
  %v3379 = vmul.f32 %v3315, 0.5
  %v3380 = vmul.f32 %v3316, 0.5
  %v3381 = vmul.f32 %v3317, 0.5
  %v3382 = vmul.f32 %v3318, 0.5
  %v3383 = vmul.f32 %v3319, 0.5
  %v3384 = vmul.f32 %v3320, 0.5
  %v3385 = vmul.f32 %v3321, 0.5
  %v3386 = vmul.f32 %v3322, 0.5
  %v3387 = vmul.f32 %v3323, 0.5
  %v3388 = vmul.f32 %v3324, 0.5
  %v3389 = vmul.f32 %v3325, 0.5
  %v3390 = vmul.f32 %v3326, 0.5
  %v3391 = vmul.f32 %v3327, 0.5
  %v3392 = vmul.f32 %v3328, 0.5
  %v3393 = vmul.f32 %v3329, 0.5
  %v3394 = vmul.f32 %v3330, 0.5
  %v3395 = vmul.f32 %v3331, 0.5
  %v3396 = vmul.f32 %v3332, 0.5
  %v3397 = vmul.f32 %v3333, 0.5
  %v3398 = vmul.f32 %v3334, 0.5
  %v3399 = vmul.f32 %v3335, 0.5
  %v3400 = vtanh.pop %v3336
  %v3401 = vtanh.pop %v3337
  %v3402 = vtanh.pop %v3338
  %v3403 = vtanh.pop %v3339
  %v3404 = vtanh.pop %v3340
  %v3405 = vtanh.pop %v3341
  %v3406 = vtanh.pop %v3342
  %v3407 = vtanh.pop %v3343
  %v3408 = vtanh.pop %v3344
  %v3409 = vtanh.pop %v3345
  %v3410 = vtanh.pop %v3346
  %v3411 = vtanh.pop %v3347
  %v3412 = vtanh.pop %v3348
  %v3413 = vtanh.pop %v3349
  %v3414 = vtanh.pop %v3350
  %v3415 = vtanh.pop %v3351
  %v3416 = vtanh.pop %v3352
  %v3417 = vtanh.pop %v3353
  %v3418 = vtanh.pop %v3354
  %v3419 = vtanh.pop %v3355
  %v3420 = vtanh.pop %v3356
  %v3421 = vtanh.pop %v3357
  %v3422 = vtanh.pop %v3358
  %v3423 = vtanh.pop %v3359
  %v3424 = vtanh.pop %v3360
  %v3425 = vtanh.pop %v3361
  %v3426 = vtanh.pop %v3362
  %v3427 = vtanh.pop %v3363
  %v3428 = vtanh.pop %v3364
  %v3429 = vtanh.pop %v3365
  %v3430 = vtanh.pop %v3366
  %v3431 = vtanh.pop %v3367
  %v3432 = vtanh.pop %v3368
  %v3433 = vtanh.pop %v3369
  %v3434 = vtanh.pop %v3370
  %v3435 = vtanh.pop %v3371
  %v3436 = vtanh.pop %v3372
  %v3437 = vtanh.pop %v3373
  %v3438 = vtanh.pop %v3374
  %v3439 = vtanh.pop %v3375
  %v3440 = vtanh.pop %v3376
  %v3441 = vtanh.pop %v3377
  %v3442 = vtanh.pop %v3378
  %v3443 = vtanh.pop %v3379
  %v3444 = vtanh.pop %v3380
  %v3445 = vtanh.pop %v3381
  %v3446 = vtanh.pop %v3382
  %v3447 = vtanh.pop %v3383
  %v3448 = vtanh.pop %v3384
  %v3449 = vtanh.pop %v3385
  %v3450 = vtanh.pop %v3386
  %v3451 = vtanh.pop %v3387
  %v3452 = vtanh.pop %v3388
  %v3453 = vtanh.pop %v3389
  %v3454 = vtanh.pop %v3390
  %v3455 = vtanh.pop %v3391
  %v3456 = vtanh.pop %v3392
  %v3457 = vtanh.pop %v3393
  %v3458 = vtanh.pop %v3394
  %v3459 = vtanh.pop %v3395
  %v3460 = vtanh.pop %v3396
  %v3461 = vtanh.pop %v3397
  %v3462 = vtanh.pop %v3398
  %v3463 = vtanh.pop %v3399
  %v3464 = vadd.f32 %v3400, 1.0
  %v3465 = vadd.f32 %v3401, 1.0
  %v3466 = vadd.f32 %v3402, 1.0
  %v3467 = vadd.f32 %v3403, 1.0
  %v3468 = vadd.f32 %v3404, 1.0
  %v3469 = vadd.f32 %v3405, 1.0
  %v3470 = vadd.f32 %v3406, 1.0
  %v3471 = vadd.f32 %v3407, 1.0
  %v3472 = vadd.f32 %v3408, 1.0
  %v3473 = vadd.f32 %v3409, 1.0
  %v3474 = vadd.f32 %v3410, 1.0
  %v3475 = vadd.f32 %v3411, 1.0
  %v3476 = vadd.f32 %v3412, 1.0
  %v3477 = vadd.f32 %v3413, 1.0
  %v3478 = vadd.f32 %v3414, 1.0
  %v3479 = vadd.f32 %v3415, 1.0
  %v3480 = vadd.f32 %v3416, 1.0
  %v3481 = vadd.f32 %v3417, 1.0
  %v3482 = vadd.f32 %v3418, 1.0
  %v3483 = vadd.f32 %v3419, 1.0
  %v3484 = vadd.f32 %v3420, 1.0
  %v3485 = vadd.f32 %v3421, 1.0
  %v3486 = vadd.f32 %v3422, 1.0
  %v3487 = vadd.f32 %v3423, 1.0
  %v3488 = vadd.f32 %v3424, 1.0
  %v3489 = vadd.f32 %v3425, 1.0
  %v3490 = vadd.f32 %v3426, 1.0
  %v3491 = vadd.f32 %v3427, 1.0
  %v3492 = vadd.f32 %v3428, 1.0
  %v3493 = vadd.f32 %v3429, 1.0
  %v3494 = vadd.f32 %v3430, 1.0
  %v3495 = vadd.f32 %v3431, 1.0
  %v3496 = vadd.f32 %v3432, 1.0
  %v3497 = vadd.f32 %v3433, 1.0
  %v3498 = vadd.f32 %v3434, 1.0
  %v3499 = vadd.f32 %v3435, 1.0
  %v3500 = vadd.f32 %v3436, 1.0
  %v3501 = vadd.f32 %v3437, 1.0
  %v3502 = vadd.f32 %v3438, 1.0
  %v3503 = vadd.f32 %v3439, 1.0
  %v3504 = vadd.f32 %v3440, 1.0
  %v3505 = vadd.f32 %v3441, 1.0
  %v3506 = vadd.f32 %v3442, 1.0
  %v3507 = vadd.f32 %v3443, 1.0
  %v3508 = vadd.f32 %v3444, 1.0
  %v3509 = vadd.f32 %v3445, 1.0
  %v3510 = vadd.f32 %v3446, 1.0
  %v3511 = vadd.f32 %v3447, 1.0
  %v3512 = vadd.f32 %v3448, 1.0
  %v3513 = vadd.f32 %v3449, 1.0
  %v3514 = vadd.f32 %v3450, 1.0
  %v3515 = vadd.f32 %v3451, 1.0
  %v3516 = vadd.f32 %v3452, 1.0
  %v3517 = vadd.f32 %v3453, 1.0
  %v3518 = vadd.f32 %v3454, 1.0
  %v3519 = vadd.f32 %v3455, 1.0
  %v3520 = vadd.f32 %v3456, 1.0
  %v3521 = vadd.f32 %v3457, 1.0
  %v3522 = vadd.f32 %v3458, 1.0
  %v3523 = vadd.f32 %v3459, 1.0
  %v3524 = vadd.f32 %v3460, 1.0
  %v3525 = vadd.f32 %v3461, 1.0
  %v3526 = vadd.f32 %v3462, 1.0
  %v3527 = vadd.f32 %v3463, 1.0
  %v3528 = vmul.f32 %v3464, 0.5
  %v3529 = vmul.f32 %v3465, 0.5
  %v3530 = vmul.f32 %v3466, 0.5
  %v3531 = vmul.f32 %v3467, 0.5
  %v3532 = vmul.f32 %v3468, 0.5
  %v3533 = vmul.f32 %v3469, 0.5
  %v3534 = vmul.f32 %v3470, 0.5
  %v3535 = vmul.f32 %v3471, 0.5
  %v3536 = vmul.f32 %v3472, 0.5
  %v3537 = vmul.f32 %v3473, 0.5
  %v3538 = vmul.f32 %v3474, 0.5
  %v3539 = vmul.f32 %v3475, 0.5
  %v3540 = vmul.f32 %v3476, 0.5
  %v3541 = vmul.f32 %v3477, 0.5
  %v3542 = vmul.f32 %v3478, 0.5
  %v3543 = vmul.f32 %v3479, 0.5
  %v3544 = vmul.f32 %v3480, 0.5
  %v3545 = vmul.f32 %v3481, 0.5
  %v3546 = vmul.f32 %v3482, 0.5
  %v3547 = vmul.f32 %v3483, 0.5
  %v3548 = vmul.f32 %v3484, 0.5
  %v3549 = vmul.f32 %v3485, 0.5
  %v3550 = vmul.f32 %v3486, 0.5
  %v3551 = vmul.f32 %v3487, 0.5
  %v3552 = vmul.f32 %v3488, 0.5
  %v3553 = vmul.f32 %v3489, 0.5
  %v3554 = vmul.f32 %v3490, 0.5
  %v3555 = vmul.f32 %v3491, 0.5
  %v3556 = vmul.f32 %v3492, 0.5
  %v3557 = vmul.f32 %v3493, 0.5
  %v3558 = vmul.f32 %v3494, 0.5
  %v3559 = vmul.f32 %v3495, 0.5
  %v3560 = vmul.f32 %v3496, 0.5
  %v3561 = vmul.f32 %v3497, 0.5
  %v3562 = vmul.f32 %v3498, 0.5
  %v3563 = vmul.f32 %v3499, 0.5
  %v3564 = vmul.f32 %v3500, 0.5
  %v3565 = vmul.f32 %v3501, 0.5
  %v3566 = vmul.f32 %v3502, 0.5
  %v3567 = vmul.f32 %v3503, 0.5
  %v3568 = vmul.f32 %v3504, 0.5
  %v3569 = vmul.f32 %v3505, 0.5
  %v3570 = vmul.f32 %v3506, 0.5
  %v3571 = vmul.f32 %v3507, 0.5
  %v3572 = vmul.f32 %v3508, 0.5
  %v3573 = vmul.f32 %v3509, 0.5
  %v3574 = vmul.f32 %v3510, 0.5
  %v3575 = vmul.f32 %v3511, 0.5
  %v3576 = vmul.f32 %v3512, 0.5
  %v3577 = vmul.f32 %v3513, 0.5
  %v3578 = vmul.f32 %v3514, 0.5
  %v3579 = vmul.f32 %v3515, 0.5
  %v3580 = vmul.f32 %v3516, 0.5
  %v3581 = vmul.f32 %v3517, 0.5
  %v3582 = vmul.f32 %v3518, 0.5
  %v3583 = vmul.f32 %v3519, 0.5
  %v3584 = vmul.f32 %v3520, 0.5
  %v3585 = vmul.f32 %v3521, 0.5
  %v3586 = vmul.f32 %v3522, 0.5
  %v3587 = vmul.f32 %v3523, 0.5
  %v3588 = vmul.f32 %v3524, 0.5
  %v3589 = vmul.f32 %v3525, 0.5
  %v3590 = vmul.f32 %v3526, 0.5
  %v3591 = vmul.f32 %v3527, 0.5
  %v3656 = vrot.slane %v3528, 4
  %v3657 = vrot.slane %v3529, 4
  %v3658 = vrot.slane %v3530, 4
  %v3659 = vrot.slane %v3531, 4
  %v3660 = vrot.slane %v3532, 4
  %v3661 = vrot.slane %v3533, 4
  %v3662 = vrot.slane %v3534, 4
  %v3663 = vrot.slane %v3535, 4
  %v3664 = vrot.slane %v3536, 4
  %v3665 = vrot.slane %v3537, 4
  %v3666 = vrot.slane %v3538, 4
  %v3667 = vrot.slane %v3539, 4
  %v3668 = vrot.slane %v3540, 4
  %v3669 = vrot.slane %v3541, 4
  %v3670 = vrot.slane %v3542, 4
  %v3671 = vrot.slane %v3543, 4
  %v3672 = vrot.slane %v3544, 4
  %v3673 = vrot.slane %v3545, 4
  %v3674 = vrot.slane %v3546, 4
  %v3675 = vrot.slane %v3547, 4
  %v3676 = vrot.slane %v3548, 4
  %v3677 = vrot.slane %v3549, 4
  %v3678 = vrot.slane %v3550, 4
  %v3679 = vrot.slane %v3551, 4
  %v3680 = vrot.slane %v3552, 4
  %v3681 = vrot.slane %v3553, 4
  %v3682 = vrot.slane %v3554, 4
  %v3683 = vrot.slane %v3555, 4
  %v3684 = vrot.slane %v3556, 4
  %v3685 = vrot.slane %v3557, 4
  %v3686 = vrot.slane %v3558, 4
  %v3687 = vrot.slane %v3559, 4
  %v3688 = vrot.slane %v3560, 4
  %v3689 = vrot.slane %v3561, 4
  %v3690 = vrot.slane %v3562, 4
  %v3691 = vrot.slane %v3563, 4
  %v3692 = vrot.slane %v3564, 4
  %v3693 = vrot.slane %v3565, 4
  %v3694 = vrot.slane %v3566, 4
  %v3695 = vrot.slane %v3567, 4
  %v3696 = vrot.slane %v3568, 4
  %v3697 = vrot.slane %v3569, 4
  %v3698 = vrot.slane %v3570, 4
  %v3699 = vrot.slane %v3571, 4
  %v3700 = vrot.slane %v3572, 4
  %v3701 = vrot.slane %v3573, 4
  %v3702 = vrot.slane %v3574, 4
  %v3703 = vrot.slane %v3575, 4
  %v3704 = vrot.slane %v3576, 4
  %v3705 = vrot.slane %v3577, 4
  %v3706 = vrot.slane %v3578, 4
  %v3707 = vrot.slane %v3579, 4
  %v3708 = vrot.slane %v3580, 4
  %v3709 = vrot.slane %v3581, 4
  %v3710 = vrot.slane %v3582, 4
  %v3711 = vrot.slane %v3583, 4
  %v3712 = vrot.slane %v3584, 4
  %v3713 = vrot.slane %v3585, 4
  %v3714 = vrot.slane %v3586, 4
  %v3715 = vrot.slane %v3587, 4
  %v3716 = vrot.slane %v3588, 4
  %v3717 = vrot.slane %v3589, 4
  %v3718 = vrot.slane %v3590, 4
  %v3719 = vrot.slane %v3591, 4
  %v3784 = vmul.f32 %v3272, %v3656
  %v3785 = vmul.f32 %v3273, %v3657
  %v3786 = vmul.f32 %v3274, %v3658
  %v3787 = vmul.f32 %v3275, %v3659
  %v3788 = vmul.f32 %v3276, %v3660
  %v3789 = vmul.f32 %v3277, %v3661
  %v3790 = vmul.f32 %v3278, %v3662
  %v3791 = vmul.f32 %v3279, %v3663
  %v3792 = vmul.f32 %v3280, %v3664
  %v3793 = vmul.f32 %v3281, %v3665
  %v3794 = vmul.f32 %v3282, %v3666
  %v3795 = vmul.f32 %v3283, %v3667
  %v3796 = vmul.f32 %v3284, %v3668
  %v3797 = vmul.f32 %v3285, %v3669
  %v3798 = vmul.f32 %v3286, %v3670
  %v3799 = vmul.f32 %v3287, %v3671
  %v3800 = vmul.f32 %v3288, %v3672
  %v3801 = vmul.f32 %v3289, %v3673
  %v3802 = vmul.f32 %v3290, %v3674
  %v3803 = vmul.f32 %v3291, %v3675
  %v3804 = vmul.f32 %v3292, %v3676
  %v3805 = vmul.f32 %v3293, %v3677
  %v3806 = vmul.f32 %v3294, %v3678
  %v3807 = vmul.f32 %v3295, %v3679
  %v3808 = vmul.f32 %v3296, %v3680
  %v3809 = vmul.f32 %v3297, %v3681
  %v3810 = vmul.f32 %v3298, %v3682
  %v3811 = vmul.f32 %v3299, %v3683
  %v3812 = vmul.f32 %v3300, %v3684
  %v3813 = vmul.f32 %v3301, %v3685
  %v3814 = vmul.f32 %v3302, %v3686
  %v3815 = vmul.f32 %v3303, %v3687
  %v3816 = vmul.f32 %v3304, %v3688
  %v3817 = vmul.f32 %v3305, %v3689
  %v3818 = vmul.f32 %v3306, %v3690
  %v3819 = vmul.f32 %v3307, %v3691
  %v3820 = vmul.f32 %v3308, %v3692
  %v3821 = vmul.f32 %v3309, %v3693
  %v3822 = vmul.f32 %v3310, %v3694
  %v3823 = vmul.f32 %v3311, %v3695
  %v3824 = vmul.f32 %v3312, %v3696
  %v3825 = vmul.f32 %v3313, %v3697
  %v3826 = vmul.f32 %v3314, %v3698
  %v3827 = vmul.f32 %v3315, %v3699
  %v3828 = vmul.f32 %v3316, %v3700
  %v3829 = vmul.f32 %v3317, %v3701
  %v3830 = vmul.f32 %v3318, %v3702
  %v3831 = vmul.f32 %v3319, %v3703
  %v3832 = vmul.f32 %v3320, %v3704
  %v3833 = vmul.f32 %v3321, %v3705
  %v3834 = vmul.f32 %v3322, %v3706
  %v3835 = vmul.f32 %v3323, %v3707
  %v3836 = vmul.f32 %v3324, %v3708
  %v3837 = vmul.f32 %v3325, %v3709
  %v3838 = vmul.f32 %v3326, %v3710
  %v3839 = vmul.f32 %v3327, %v3711
  %v3840 = vmul.f32 %v3328, %v3712
  %v3841 = vmul.f32 %v3329, %v3713
  %v3842 = vmul.f32 %v3330, %v3714
  %v3843 = vmul.f32 %v3331, %v3715
  %v3844 = vmul.f32 %v3332, %v3716
  %v3845 = vmul.f32 %v3333, %v3717
  %v3846 = vmul.f32 %v3334, %v3718
  %v3847 = vmul.f32 %v3335, %v3719
  %v3912 = vcombine.low %v3784, %v3785
  %v3913 = vcombine.low %v3786, %v3787
  %v3914 = vcombine.low %v3788, %v3789
  %v3915 = vcombine.low %v3790, %v3791
  %v3916 = vcombine.low %v3792, %v3793
  %v3917 = vcombine.low %v3794, %v3795
  %v3918 = vcombine.low %v3796, %v3797
  %v3919 = vcombine.low %v3798, %v3799
  %v3920 = vcombine.low %v3800, %v3801
  %v3921 = vcombine.low %v3802, %v3803
  %v3922 = vcombine.low %v3804, %v3805
  %v3923 = vcombine.low %v3806, %v3807
  %v3924 = vcombine.low %v3808, %v3809
  %v3925 = vcombine.low %v3810, %v3811
  %v3926 = vcombine.low %v3812, %v3813
  %v3927 = vcombine.low %v3814, %v3815
  %v3928 = vcombine.low %v3816, %v3817
  %v3929 = vcombine.low %v3818, %v3819
  %v3930 = vcombine.low %v3820, %v3821
  %v3931 = vcombine.low %v3822, %v3823
  %v3932 = vcombine.low %v3824, %v3825
  %v3933 = vcombine.low %v3826, %v3827
  %v3934 = vcombine.low %v3828, %v3829
  %v3935 = vcombine.low %v3830, %v3831
  %v3936 = vcombine.low %v3832, %v3833
  %v3937 = vcombine.low %v3834, %v3835
  %v3938 = vcombine.low %v3836, %v3837
  %v3939 = vcombine.low %v3838, %v3839
  %v3940 = vcombine.low %v3840, %v3841
  %v3941 = vcombine.low %v3842, %v3843
  %v3942 = vcombine.low %v3844, %v3845
  %v3943 = vcombine.low %v3846, %v3847
  %3976 = vst [vmem:[%s4] sm:$0xff] %v3912
  %3977 = vst [vmem:[%s4 + $0x8] sm:$0xff] %v3913
  %3978 = vst [vmem:[%s4 + $0x10] sm:$0xff] %v3914
  %3979 = vst [vmem:[%s4 + $0x18] sm:$0xff] %v3915
  %3980 = vst [vmem:[%s4 + $0x20] sm:$0xff] %v3916
  %3981 = vst [vmem:[%s4 + $0x28] sm:$0xff] %v3917
  %3982 = vst [vmem:[%s4 + $0x30] sm:$0xff] %v3918
  %3983 = vst [vmem:[%s4 + $0x38] sm:$0xff] %v3919
  %3984 = vst [vmem:[%s4 + $0x40] sm:$0xff] %v3920
  %3985 = vst [vmem:[%s4 + $0x48] sm:$0xff] %v3921
  %3986 = vst [vmem:[%s4 + $0x50] sm:$0xff] %v3922
  %3987 = vst [vmem:[%s4 + $0x58] sm:$0xff] %v3923
  %3988 = vst [vmem:[%s4 + $0x60] sm:$0xff] %v3924
  %3989 = vst [vmem:[%s4 + $0x68] sm:$0xff] %v3925
  %3990 = vst [vmem:[%s4 + $0x70] sm:$0xff] %v3926
  %3991 = vst [vmem:[%s4 + $0x78] sm:$0xff] %v3927
  %3992 = vst [vmem:[%s4 + $0x80] sm:$0xff] %v3928
  %3993 = vst [vmem:[%s4 + $0x88] sm:$0xff] %v3929
  %3994 = vst [vmem:[%s4 + $0x90] sm:$0xff] %v3930
  %3995 = vst [vmem:[%s4 + $0x98] sm:$0xff] %v3931
  %3996 = vst [vmem:[%s4 + $0xa0] sm:$0xff] %v3932
  %3997 = vst [vmem:[%s4 + $0xa8] sm:$0xff] %v3933
  %3998 = vst [vmem:[%s4 + $0xb0] sm:$0xff] %v3934
  %3999 = vst [vmem:[%s4 + $0xb8] sm:$0xff] %v3935
  %4000 = vst [vmem:[%s4 + $0xc0] sm:$0xff] %v3936
  %4001 = vst [vmem:[%s4 + $0xc8] sm:$0xff] %v3937
  %4002 = vst [vmem:[%s4 + $0xd0] sm:$0xff] %v3938
  %4003 = vst [vmem:[%s4 + $0xd8] sm:$0xff] %v3939
  %4004 = vst [vmem:[%s4 + $0xe0] sm:$0xff] %v3940
  %4005 = vst [vmem:[%s4 + $0xe8] sm:$0xff] %v3941
  %4006 = vst [vmem:[%s4 + $0xf0] sm:$0xff] %v3942
  %4007 = vst [vmem:[%s4 + $0xf8] sm:$0xff] %v3943
  // Predicated region
  $region18: #{init_stage_g_forward.9} parent=0 // pred_check
    _
  $region19: #{init_stage_g_forward.9} parent=0 // pred_check_branch
    %4009 = sbr.rel (0) target = $region21
  $region20: #{init_stage_g_forward.9} parent=0 // pred_region
    _
  $region21: #{init_stage_g_forward.9} parent=0 // pred_fallthru
    _
  // Predicated region
  $region22: #{init_stage_g_forward.9} parent=0 // pred_check
    _
  $region23: #{init_stage_g_forward.9} parent=0 // pred_check_branch
    %4011 = sbr.rel (0) target = $region25
  $region24: #{init_stage_g_forward.9} parent=0 // pred_region
    _
  $region25: #{init_stage_g_forward.9} parent=0 // pred_fallthru
    _

</llo_original>
